<compile_context>
chip_gen: v7x
topology: tpu7x:2x2x1
jax: 0.10.0
libtpu: 0.0.40
codegen_flags: <defaults>
</compile_context>

<pallas_src>
import functools

import jax
import jax.numpy as jnp
from jax.experimental import pallas as pl
from jax.experimental.pallas import tpu as pltpu


# ----------------------------------------------------------------------------
# Tiled matmul Pallas kernel with fused bias + epilogue
# ----------------------------------------------------------------------------
# Conservative tiles that fit the scoped-VMEM defaults of v5e / v6e / v7x with
# double buffering (bf16 A/W tiles + f32 accumulator + f32 output ~ 3-4 MiB).
_TM, _TK, _TN = 512, 512, 256


def _matmul_fused_kernel(a_ref, w_ref, b_ref, o_ref, acc_ref, *, epilogue):
    """o[i,j] = sum_k A[i,k] @ W[k,j] + b[j], then optional fused epilogue.

    A/W tiles are bf16 (MXU inputs); accumulation, bias and epilogue are f32.
    """
    k = pl.program_id(2)

    @pl.when(k == 0)
    def _init():
        acc_ref[...] = jnp.zeros_like(acc_ref)

    acc_ref[...] += jnp.dot(a_ref[...], w_ref[...],
                            preferred_element_type=jnp.float32)

    @pl.when(k == pl.num_programs(2) - 1)
    def _finalize():
        out = acc_ref[...] + b_ref[...]          # bias once per output tile
        if epilogue == "relu":
            out = jnp.maximum(out, 0.0)
        elif epilogue == "sigmoid_clamp":
            # sigmoid followed by TRANS.clamp_trans.
            out = 1.0 / (1.0 + jnp.exp(-out))
            out = jnp.where(out > 0.0, out, 1e-8)
            # NOTE: 1 - 1e-8 rounds to exactly 1.0 in float32, identical to the
            # PyTorch reference running in float32.
            out = jnp.where(out < 1.0, out, 1.0 - 1e-8)
        o_ref[...] = out.astype(o_ref.dtype)


def _round_up(x, m):
    return (x + m - 1) // m * m


def _tile(dim, align, max_tile):
    """Return (tile, padded_dim): tile is `align`-aligned and <= max_tile."""
    p = _round_up(dim, align)
    if p <= max_tile:
        return p, p
    return max_tile, _round_up(dim, max_tile)


def _pallas_matmul_fused(a, w, b, epilogue="none"):
    """a:(M,K) f32 @ w:(K,N) f32 + b:(N,) f32 with a fused epilogue.

    Inputs are cast to bf16 for the MXU; accumulation / bias / epilogue in f32.
    """
    M, K = a.shape
    _, N = w.shape
    tm, Mp = _tile(M, 8, _TM)        # sublane-aligned rows, padded to tile
    tk, Kp = _tile(K, 128, _TK)      # 128-aligned contraction
    tn, Np = _tile(N, 128, _TN)      # lane-dense (unmasked vst) output tiles

    a_p = jnp.pad(a, ((0, Mp - M), (0, Kp - K))).astype(jnp.bfloat16)
    w_p = jnp.pad(w, ((0, Kp - K), (0, Np - N))).astype(jnp.bfloat16)
    b_p = jnp.pad(b.reshape(1, -1).astype(jnp.float32), ((0, 0), (0, Np - N)))

    grid = (Mp // tm, Np // tn, Kp // tk)
    cost = pl.CostEstimate(
        flops=2 * Mp * Kp * Np,
        transcendentals=Mp * Np if epilogue == "sigmoid_clamp" else 0,
        bytes_accessed=a_p.size * 2 + w_p.size * 2 + b_p.size * 4 + Mp * Np * 4,
    )

    out = pl.pallas_call(
        functools.partial(_matmul_fused_kernel, epilogue=epilogue),
        out_shape=jax.ShapeDtypeStruct((Mp, Np), jnp.float32),
        grid_spec=pltpu.PrefetchScalarGridSpec(
            num_scalar_prefetch=0,
            grid=grid,
            in_specs=[
                pl.BlockSpec((tm, tk), lambda i, j, k: (i, k)),
                pl.BlockSpec((tk, tn), lambda i, j, k: (k, j)),
                pl.BlockSpec((1, tn), lambda i, j, k: (0, j)),
            ],
            out_specs=pl.BlockSpec((tm, tn), lambda i, j, k: (i, j)),
            scratch_shapes=[pltpu.VMEM((tm, tn), jnp.float32)],
        ),
        compiler_params=pltpu.CompilerParams(
            dimension_semantics=("parallel", "parallel", "arbitrary")),
        cost_estimate=cost,
    )(a_p, w_p, b_p)
    return out[:M, :N]


# ----------------------------------------------------------------------------
# Conv / transposed-conv built on the Pallas matmul
# ----------------------------------------------------------------------------
def _im2col(x, k, stride, pad):
    """x: (N,H,W,C) -> (N*Ho*Wo, k*k*C), patch channel layout (di*k+dj)*C + c."""
    if pad > 0:
        x = jnp.pad(x, ((0, 0), (pad, pad), (pad, pad), (0, 0)))
    n, hp, wp, c = x.shape
    ho = (hp - k) // stride + 1
    wo = (wp - k) // stride + 1
    cols = []
    for di in range(k):
        for dj in range(k):
            cols.append(x[:, di:di + stride * ho:stride,
                           dj:dj + stride * wo:stride, :])
    patches = jnp.concatenate(cols, axis=-1)          # (N, Ho, Wo, k*k*C)
    return patches.reshape(n * ho * wo, k * k * c), (n, ho, wo)


def conv2d(x, params, stride=1, epilogue="none"):
    """'same'-padded kxk conv, NHWC in / NHWC out, fused bias+epilogue."""
    w, b = params                                      # w: (k,k,Cin,Cout)
    k, _, cin, cout = w.shape
    pad = (k - 1) // 2
    patches, (n, ho, wo) = _im2col(x, k, stride, pad)
    w_mat = w.reshape(k * k * cin, cout)
    out = _pallas_matmul_fused(patches, w_mat, b, epilogue)
    return out.reshape(n, ho, wo, cout)


def deconv2d_x2(x, params, epilogue="none"):
    """ConvTranspose2d(k=3, stride=2, padding=1, output_padding=1) equivalent.

    The 3x3 weight is stored in direct-conv-over-zero-dilated-input form
    (HWIO, as initialized below).  Decomposed into the 4 output polyphases so
    no zero-dilated tensor is ever materialized or multiplied on the MXU.
    """
    w, b = params                                      # w: (3,3,Cin,Cout)
    n, h, wd, c = x.shape
    cout = w.shape[-1]
    m = n * h * wd

    # Shifted copies (zero-padded at the far edge), matching the zero-dilated
    # + pad(1,2) direct-conv formulation.
    x_r = jnp.pad(x, ((0, 0), (0, 0), (0, 1), (0, 0)))[:, :, 1:, :]    # x[i, j+1]
    x_d = jnp.pad(x, ((0, 0), (0, 1), (0, 0), (0, 0)))[:, 1:, :, :]    # x[i+1, j]
    x_dr = jnp.pad(x, ((0, 0), (0, 1), (0, 1), (0, 0)))[:, 1:, 1:, :]  # x[i+1, j+1]

    x_f, x_r_f = x.reshape(m, c), x_r.reshape(m, c)
    x_d_f, x_dr_f = x_d.reshape(m, c), x_dr.reshape(m, c)

    # phase (0,0): out[2i, 2j]
    p00 = _pallas_matmul_fused(x_f, w[1, 1], b, epilogue)
    # phase (0,1): out[2i, 2j+1]
    a01 = jnp.concatenate([x_f, x_r_f], axis=1)
    w01 = jnp.concatenate([w[1, 0], w[1, 2]], axis=0)
    p01 = _pallas_matmul_fused(a01, w01, b, epilogue)
    # phase (1,0): out[2i+1, 2j]
    a10 = jnp.concatenate([x_f, x_d_f], axis=1)
    w10 = jnp.concatenate([w[0, 1], w[2, 1]], axis=0)
    p10 = _pallas_matmul_fused(a10, w10, b, epilogue)
    # phase (1,1): out[2i+1, 2j+1]
    a11 = jnp.concatenate([x_f, x_r_f, x_d_f, x_dr_f], axis=1)
    w11 = jnp.concatenate([w[0, 0], w[0, 2], w[2, 0], w[2, 2]], axis=0)
    p11 = _pallas_matmul_fused(a11, w11, b, epilogue)

    # Interleave phases: out[:, 2i+a, 2j+b, :] = phase_{a,b}[:, i, j, :]
    row0 = jnp.stack([p00.reshape(n, h, wd, cout),
                      p01.reshape(n, h, wd, cout)], axis=3)   # (n,h,wd,2,co)
    row1 = jnp.stack([p10.reshape(n, h, wd, cout),
                      p11.reshape(n, h, wd, cout)], axis=3)
    ph = jnp.stack([row0, row1], axis=2)                      # (n,h,2,wd,2,co)
    return ph.reshape(n, 2 * h, 2 * wd, cout)


def _resblock(x, p1, p2, conv):
    y = conv(x, p1, 1, "relu")
    y = conv(y, p2, 1, "none")
    return x + y


# ----------------------------------------------------------------------------
# Parameter init (deterministic, synthetic)
# ----------------------------------------------------------------------------
def _init_conv(key, k, cin, cout):
    fan_in = k * k * cin
    w = jax.random.normal(key, (k, k, cin, cout), jnp.float32) * (2.0 / fan_in) ** 0.5
    b = jnp.zeros((cout,), jnp.float32)
    return (w, b)


def init_trans_params(key, in_channels=3, out_channels=1, n_resblock=3, n_feat=32):
    n_convs = 6 + 12 * n_resblock
    keys = iter(jax.random.split(key, n_convs))

    def conv(k, cin, cout):
        return _init_conv(next(keys), k, cin, cout)

    def res_stack(c):
        return [(conv(3, c, c), conv(3, c, c)) for _ in range(n_resblock)]

    p = {}
    p["in_conv"] = conv(5, in_channels, n_feat)
    p["in_res"] = res_stack(n_feat)
    p["down1_conv"] = conv(5, n_feat, 2 * n_feat)
    p["down1_res"] = res_stack(2 * n_feat)
    p["down2_conv"] = conv(5, 2 * n_feat, 4 * n_feat)
    p["down2_res"] = res_stack(4 * n_feat)
    p["up2_res"] = res_stack(4 * n_feat)
    p["up2_deconv"] = conv(3, 4 * n_feat, 2 * n_feat)
    p["up1_res"] = res_stack(2 * n_feat)
    p["up1_deconv"] = conv(3, 2 * n_feat, n_feat)
    p["out_res"] = res_stack(n_feat)
    p["out_conv"] = conv(5, n_feat, out_channels)
    return p


# ----------------------------------------------------------------------------
# UNet body + TRANS forward (shared skeleton for Pallas and reference paths)
# ----------------------------------------------------------------------------
def _unet_trans_body(params, x, conv, deconv):
    f = conv(x, params["in_conv"], 1, "relu")
    for p1, p2 in params["in_res"]:
        f = _resblock(f, p1, p2, conv)
    x_in = f

    d1 = conv(x_in, params["down1_conv"], 2, "relu")
    for p1, p2 in params["down1_res"]:
        d1 = _resblock(d1, p1, p2, conv)

    d2 = conv(d1, params["down2_conv"], 2, "relu")
    for p1, p2 in params["down2_res"]:
        d2 = _resblock(d2, p1, p2, conv)

    u2 = d2
    for p1, p2 in params["up2_res"]:
        u2 = _resblock(u2, p1, p2, conv)
    u2 = deconv(u2, params["up2_deconv"], "relu") + d1

    u1 = u2
    for p1, p2 in params["up1_res"]:
        u1 = _resblock(u1, p1, p2, conv)
    u1 = deconv(u1, params["up1_deconv"], "relu") + x_in

    o = u1
    for p1, p2 in params["out_res"]:
        o = _resblock(o, p1, p2, conv)
    # Final conv: sigmoid + clamp_trans fused into the matmul epilogue.
    return conv(o, params["out_conv"], 1, "sigmoid_clamp")


def trans_forward(params, x_nchw):
    """TRANS.forward: returns (clamped_est_trans [NCHW], mid_loss=None)."""
    x = jnp.transpose(x_nchw, (0, 2, 3, 1))            # NCHW -> NHWC
    out = _unet_trans_body(params, x, conv2d, deconv2d_x2)
    out_nchw = jnp.transpose(out, (0, 3, 1, 2))        # back to NCHW
    return out_nchw, None


# ----------------------------------------------------------------------------
# Pure-lax reference (same bf16 quantization points) for correctness checking
# ----------------------------------------------------------------------------
def _ref_epilogue(out, epilogue):
    if epilogue == "relu":
        return jnp.maximum(out, 0.0)
    if epilogue == "sigmoid_clamp":
        t = 1.0 / (1.0 + jnp.exp(-out))
        t = jnp.where(t > 0.0, t, 1e-8)
        t = jnp.where(t < 1.0, t, 1.0 - 1e-8)
        return t
    return out


def _ref_conv2d(x, params, stride=1, epilogue="none"):
    w, b = params
    k = w.shape[0]
    pad = (k - 1) // 2
    out = jax.lax.conv_general_dilated(
        x.astype(jnp.bfloat16), w.astype(jnp.bfloat16),
        window_strides=(stride, stride), padding=[(pad, pad), (pad, pad)],
        dimension_numbers=("NHWC", "HWIO", "NHWC"),
        preferred_element_type=jnp.float32)
    return _ref_epilogue(out + b, epilogue)


def _ref_deconv2d_x2(x, params, epilogue="none"):
    w, b = params
    out = jax.lax.conv_general_dilated(
        x.astype(jnp.bfloat16), w.astype(jnp.bfloat16),
        window_strides=(1, 1), padding=[(1, 2), (1, 2)], lhs_dilation=(2, 2),
        dimension_numbers=("NHWC", "HWIO", "NHWC"),
        preferred_element_type=jnp.float32)
    return _ref_epilogue(out + b, epilogue)


def trans_forward_ref(params, x_nchw):
    x = jnp.transpose(x_nchw, (0, 2, 3, 1))
    out = _unet_trans_body(params, x, _ref_conv2d, _ref_deconv2d_x2)
    return jnp.transpose(out, (0, 3, 1, 2)), None


# ----------------------------------------------------------------------------
if __name__ == "__main__":
    key = jax.random.PRNGKey(0)
    kp, kx = jax.random.split(key)

    in_channels, out_channels, n_resblock, n_feat = 3, 1, 2, 8   # small config
    params = init_trans_params(kp, in_channels, out_channels, n_resblock, n_feat)

    x = jax.random.normal(kx, (2, in_channels, 16, 16), jnp.float32)  # NCHW

    fwd = jax.jit(lambda p, xx: trans_forward(p, xx)[0])
    out = fwd(params, x)
    jax.block_until_ready(out)

    ref = jax.jit(lambda p, xx: trans_forward_ref(p, xx)[0])(params, x)
    jax.block_until_ready(ref)

    assert out.shape == (2, out_channels, 16, 16), out.shape
    assert bool(jnp.all(jnp.isfinite(out)))
    # clamp_trans in float32: lower bound strictly > 0; the upper clamp value
    # (1 - 1e-8) rounds to exactly 1.0 in f32, matching the PyTorch reference,
    # so the correct invariant is out <= 1.0 (not out < 1.0).
    assert bool(jnp.all(out > 0.0)) and bool(jnp.all(out <= 1.0))
    max_err = float(jnp.max(jnp.abs(out - ref)))
    assert max_err < 2e-2, f"max |pallas - ref| = {max_err}"
    print("KERNEL_OK")
</pallas_src>

<mosaic_0001>
module attributes {stable_mosaic.version = 11 : i64} {
  func.func @_matmul_fused_kernel(%arg0: i32, %arg1: i32, %arg2: i32, %arg3: memref<512x128xbf16, #tpu.memory_space<vmem>>, %arg4: memref<128x128xbf16, #tpu.memory_space<vmem>>, %arg5: memref<1x128xf32, #tpu.memory_space<vmem>>, %arg6: memref<512x128xf32, #tpu.memory_space<vmem>>, %arg7: memref<512x128xf32, #tpu.memory_space<vmem>>) attributes {dimension_semantics = [#tpu.dimension_semantics<parallel>, #tpu.dimension_semantics<parallel>, #tpu.dimension_semantics<arbitrary>], iteration_bounds = array<i64: 1, 1, 1>, scalar_prefetch = 0 : i64, scratch_operands = 1 : i64, tpu.core_type = #tpu.core_type<tc>, window_params = [{transform_indices = @transform_0, window_bounds = array<i64: 512, 128>}, {transform_indices = @transform_1, window_bounds = array<i64: 128, 128>}, {transform_indices = @transform_2, window_bounds = array<i64: 1, 128>}, {transform_indices = @transform_3, window_bounds = array<i64: 512, 128>}]} {
    %c0_i32 = arith.constant 0 : i32
    %0 = arith.cmpi eq, %arg2, %c0_i32 : i32
    %1 = arith.extui %0 : i1 to i32
    %c0_i32_0 = arith.constant 0 : i32
    %2 = arith.cmpi ne, %1, %c0_i32_0 : i32
    scf.if %2 {
      %cst_10 = arith.constant 0.000000e+00 : f32
      %12 = vector.broadcast %cst_10 : f32 to vector<512x128xf32>
      %c0_11 = arith.constant 0 : index
      %c0_12 = arith.constant 0 : index
      %13 = vector.load %arg7[%c0_11, %c0_12] : memref<512x128xf32, #tpu.memory_space<vmem>>, vector<512x128xf32>
      tpu.vector_store %arg7[%c0_11, %c0_12], %12 {strides = array<i32>} : memref<512x128xf32, #tpu.memory_space<vmem>>, vector<512x128xf32>,
    } else {
    }
    %c0 = arith.constant 0 : index
    %c0_1 = arith.constant 0 : index
    %3 = vector.load %arg7[%c0, %c0_1] : memref<512x128xf32, #tpu.memory_space<vmem>>, vector<512x128xf32>
    %c0_2 = arith.constant 0 : index
    %c0_3 = arith.constant 0 : index
    %4 = vector.load %arg3[%c0_2, %c0_3] : memref<512x128xbf16, #tpu.memory_space<vmem>>, vector<512x128xbf16>
    %c0_4 = arith.constant 0 : index
    %c0_5 = arith.constant 0 : index
    %5 = vector.load %arg4[%c0_4, %c0_5] : memref<128x128xbf16, #tpu.memory_space<vmem>>, vector<128x128xbf16>
    %cst = arith.constant dense<0.000000e+00> : vector<512x128xf32>
    %6 = tpu.matmul %4, %5, %cst {dimension_numbers = #tpu.dot_dimension_numbers<[1], [0], [0], [1], [0, 0, 1, 1], [], []>} : vector<512x128xbf16>, vector<128x128xbf16>, vector<512x128xf32> -> vector<512x128xf32>
    %7 = arith.addf %3, %6 : vector<512x128xf32>
    %c0_6 = arith.constant 0 : index
    %c0_7 = arith.constant 0 : index
    %8 = vector.load %arg7[%c0_6, %c0_7] : memref<512x128xf32, #tpu.memory_space<vmem>>, vector<512x128xf32>
    tpu.vector_store %arg7[%c0_6, %c0_7], %7 {strides = array<i32>} : memref<512x128xf32, #tpu.memory_space<vmem>>, vector<512x128xf32>,
    %c0_i32_8 = arith.constant 0 : i32
    %9 = arith.cmpi eq, %arg2, %c0_i32_8 : i32
    %10 = arith.extui %9 : i1 to i32
    %c0_i32_9 = arith.constant 0 : i32
    %11 = arith.cmpi ne, %10, %c0_i32_9 : i32
    scf.if %11 {
      %c0_10 = arith.constant 0 : index
      %c0_11 = arith.constant 0 : index
      %12 = vector.load %arg7[%c0_10, %c0_11] : memref<512x128xf32, #tpu.memory_space<vmem>>, vector<512x128xf32>
      %c0_12 = arith.constant 0 : index
      %c0_13 = arith.constant 0 : index
      %13 = vector.load %arg5[%c0_12, %c0_13] : memref<1x128xf32, #tpu.memory_space<vmem>>, vector<1x128xf32>
      %14 = vector.broadcast %13 : vector<1x128xf32> to vector<512x128xf32>
      %15 = arith.addf %12, %14 : vector<512x128xf32>
      %cst_14 = arith.constant 0.000000e+00 : f32
      %16 = vector.broadcast %cst_14 : f32 to vector<512x128xf32>
      %17 = arith.maximumf %15, %16 : vector<512x128xf32>
      %c0_15 = arith.constant 0 : index
      %c0_16 = arith.constant 0 : index
      %18 = vector.load %arg6[%c0_15, %c0_16] : memref<512x128xf32, #tpu.memory_space<vmem>>, vector<512x128xf32>
      tpu.vector_store %arg6[%c0_15, %c0_16], %17 {strides = array<i32>} : memref<512x128xf32, #tpu.memory_space<vmem>>, vector<512x128xf32>,
    } else {
    }
    return
  }
  func.func @transform_0(%arg0: i32, %arg1: i32, %arg2: i32) -> (i32, i32) {
    %c0_i32 = arith.constant 0 : i32
    return %arg0, %arg2 : i32, i32
  }
  func.func @transform_1(%arg0: i32, %arg1: i32, %arg2: i32) -> (i32, i32) {
    %c0_i32 = arith.constant 0 : i32
    return %arg2, %arg1 : i32, i32
  }
  func.func @transform_2(%arg0: i32, %arg1: i32, %arg2: i32) -> (i32, i32) {
    %c0_i32 = arith.constant 0 : i32
    %c0_i32_0 = arith.constant 0 : i32
    return %c0_i32, %arg1 : i32, i32
  }
  func.func @transform_3(%arg0: i32, %arg1: i32, %arg2: i32) -> (i32, i32) {
    %c0_i32 = arith.constant 0 : i32
    return %arg0, %arg1 : i32, i32
  }
}

module attributes {stable_mosaic.version = 11 : i64} {
  func.func @_matmul_fused_kernel(%arg0: i32, %arg1: i32, %arg2: i32, %arg3: memref<512x128xbf16, #tpu.memory_space<vmem>>, %arg4: memref<128x128xbf16, #tpu.memory_space<vmem>>, %arg5: memref<1x128xf32, #tpu.memory_space<vmem>>, %arg6: memref<512x128xf32, #tpu.memory_space<vmem>>, %arg7: memref<512x128xf32, #tpu.memory_space<vmem>>) attributes {dimension_semantics = [#tpu.dimension_semantics<parallel>, #tpu.dimension_semantics<parallel>, #tpu.dimension_semantics<arbitrary>], iteration_bounds = array<i64: 1, 1, 1>, scalar_prefetch = 0 : i64, scratch_operands = 1 : i64, tpu.core_type = #tpu.core_type<tc>, window_params = [{transform_indices = @transform_0, window_bounds = array<i64: 512, 128>}, {transform_indices = @transform_1, window_bounds = array<i64: 128, 128>}, {transform_indices = @transform_2, window_bounds = array<i64: 1, 128>}, {transform_indices = @transform_3, window_bounds = array<i64: 512, 128>}]} {
    %c0_i32 = arith.constant 0 : i32
    %0 = arith.cmpi eq, %arg2, %c0_i32 : i32
    %1 = arith.extui %0 : i1 to i32
    %c0_i32_0 = arith.constant 0 : i32
    %2 = arith.cmpi ne, %1, %c0_i32_0 : i32
    scf.if %2 {
      %cst_10 = arith.constant 0.000000e+00 : f32
      %12 = vector.broadcast %cst_10 : f32 to vector<512x128xf32>
      %c0_11 = arith.constant 0 : index
      %c0_12 = arith.constant 0 : index
      %13 = vector.load %arg7[%c0_11, %c0_12] : memref<512x128xf32, #tpu.memory_space<vmem>>, vector<512x128xf32>
      tpu.vector_store %arg7[%c0_11, %c0_12], %12 {strides = array<i32>} : memref<512x128xf32, #tpu.memory_space<vmem>>, vector<512x128xf32>,
    } else {
    }
    %c0 = arith.constant 0 : index
    %c0_1 = arith.constant 0 : index
    %3 = vector.load %arg7[%c0, %c0_1] : memref<512x128xf32, #tpu.memory_space<vmem>>, vector<512x128xf32>
    %c0_2 = arith.constant 0 : index
    %c0_3 = arith.constant 0 : index
    %4 = vector.load %arg3[%c0_2, %c0_3] : memref<512x128xbf16, #tpu.memory_space<vmem>>, vector<512x128xbf16>
    %c0_4 = arith.constant 0 : index
    %c0_5 = arith.constant 0 : index
    %5 = vector.load %arg4[%c0_4, %c0_5] : memref<128x128xbf16, #tpu.memory_space<vmem>>, vector<128x128xbf16>
    %cst = arith.constant dense<0.000000e+00> : vector<512x128xf32>
    %6 = tpu.matmul %4, %5, %cst {dimension_numbers = #tpu.dot_dimension_numbers<[1], [0], [0], [1], [0, 0, 1, 1], [], []>} : vector<512x128xbf16>, vector<128x128xbf16>, vector<512x128xf32> -> vector<512x128xf32>
    %7 = arith.addf %3, %6 : vector<512x128xf32>
    %c0_6 = arith.constant 0 : index
    %c0_7 = arith.constant 0 : index
    %8 = vector.load %arg7[%c0_6, %c0_7] : memref<512x128xf32, #tpu.memory_space<vmem>>, vector<512x128xf32>
    tpu.vector_store %arg7[%c0_6, %c0_7], %7 {strides = array<i32>} : memref<512x128xf32, #tpu.memory_space<vmem>>, vector<512x128xf32>,
    %c0_i32_8 = arith.constant 0 : i32
    %9 = arith.cmpi eq, %arg2, %c0_i32_8 : i32
    %10 = arith.extui %9 : i1 to i32
    %c0_i32_9 = arith.constant 0 : i32
    %11 = arith.cmpi ne, %10, %c0_i32_9 : i32
    scf.if %11 {
      %c0_10 = arith.constant 0 : index
      %c0_11 = arith.constant 0 : index
      %12 = vector.load %arg7[%c0_10, %c0_11] : memref<512x128xf32, #tpu.memory_space<vmem>>, vector<512x128xf32>
      %c0_12 = arith.constant 0 : index
      %c0_13 = arith.constant 0 : index
      %13 = vector.load %arg5[%c0_12, %c0_13] : memref<1x128xf32, #tpu.memory_space<vmem>>, vector<1x128xf32>
      %14 = vector.broadcast %13 : vector<1x128xf32> to vector<512x128xf32>
      %15 = arith.addf %12, %14 : vector<512x128xf32>
      %c0_14 = arith.constant 0 : index
      %c0_15 = arith.constant 0 : index
      %16 = vector.load %arg6[%c0_14, %c0_15] : memref<512x128xf32, #tpu.memory_space<vmem>>, vector<512x128xf32>
      tpu.vector_store %arg6[%c0_14, %c0_15], %15 {strides = array<i32>} : memref<512x128xf32, #tpu.memory_space<vmem>>, vector<512x128xf32>,
    } else {
    }
    return
  }
  func.func @transform_0(%arg0: i32, %arg1: i32, %arg2: i32) -> (i32, i32) {
    %c0_i32 = arith.constant 0 : i32
    return %arg0, %arg2 : i32, i32
  }
  func.func @transform_1(%arg0: i32, %arg1: i32, %arg2: i32) -> (i32, i32) {
    %c0_i32 = arith.constant 0 : i32
    return %arg2, %arg1 : i32, i32
  }
  func.func @transform_2(%arg0: i32, %arg1: i32, %arg2: i32) -> (i32, i32) {
    %c0_i32 = arith.constant 0 : i32
    %c0_i32_0 = arith.constant 0 : i32
    return %c0_i32, %arg1 : i32, i32
  }
  func.func @transform_3(%arg0: i32, %arg1: i32, %arg2: i32) -> (i32, i32) {
    %c0_i32 = arith.constant 0 : i32
    return %arg0, %arg1 : i32, i32
  }
}

module attributes {stable_mosaic.version = 11 : i64} {
  func.func @_matmul_fused_kernel(%arg0: i32, %arg1: i32, %arg2: i32, %arg3: memref<128x256xbf16, #tpu.memory_space<vmem>>, %arg4: memref<256x128xbf16, #tpu.memory_space<vmem>>, %arg5: memref<1x128xf32, #tpu.memory_space<vmem>>, %arg6: memref<128x128xf32, #tpu.memory_space<vmem>>, %arg7: memref<128x128xf32, #tpu.memory_space<vmem>>) attributes {dimension_semantics = [#tpu.dimension_semantics<parallel>, #tpu.dimension_semantics<parallel>, #tpu.dimension_semantics<arbitrary>], iteration_bounds = array<i64: 1, 1, 1>, scalar_prefetch = 0 : i64, scratch_operands = 1 : i64, tpu.core_type = #tpu.core_type<tc>, window_params = [{transform_indices = @transform_0, window_bounds = array<i64: 128, 256>}, {transform_indices = @transform_1, window_bounds = array<i64: 256, 128>}, {transform_indices = @transform_2, window_bounds = array<i64: 1, 128>}, {transform_indices = @transform_3, window_bounds = array<i64: 128, 128>}]} {
    %c0_i32 = arith.constant 0 : i32
    %0 = arith.cmpi eq, %arg2, %c0_i32 : i32
    %1 = arith.extui %0 : i1 to i32
    %c0_i32_0 = arith.constant 0 : i32
    %2 = arith.cmpi ne, %1, %c0_i32_0 : i32
    scf.if %2 {
      %cst_10 = arith.constant 0.000000e+00 : f32
      %12 = vector.broadcast %cst_10 : f32 to vector<128x128xf32>
      %c0_11 = arith.constant 0 : index
      %c0_12 = arith.constant 0 : index
      %13 = vector.load %arg7[%c0_11, %c0_12] : memref<128x128xf32, #tpu.memory_space<vmem>>, vector<128x128xf32>
      tpu.vector_store %arg7[%c0_11, %c0_12], %12 {strides = array<i32>} : memref<128x128xf32, #tpu.memory_space<vmem>>, vector<128x128xf32>,
    } else {
    }
    %c0 = arith.constant 0 : index
    %c0_1 = arith.constant 0 : index
    %3 = vector.load %arg7[%c0, %c0_1] : memref<128x128xf32, #tpu.memory_space<vmem>>, vector<128x128xf32>
    %c0_2 = arith.constant 0 : index
    %c0_3 = arith.constant 0 : index
    %4 = vector.load %arg3[%c0_2, %c0_3] : memref<128x256xbf16, #tpu.memory_space<vmem>>, vector<128x256xbf16>
    %c0_4 = arith.constant 0 : index
    %c0_5 = arith.constant 0 : index
    %5 = vector.load %arg4[%c0_4, %c0_5] : memref<256x128xbf16, #tpu.memory_space<vmem>>, vector<256x128xbf16>
    %cst = arith.constant dense<0.000000e+00> : vector<128x128xf32>
    %6 = tpu.matmul %4, %5, %cst {dimension_numbers = #tpu.dot_dimension_numbers<[1], [0], [0], [1], [0, 0, 1, 1], [], []>} : vector<128x256xbf16>, vector<256x128xbf16>, vector<128x128xf32> -> vector<128x128xf32>
    %7 = arith.addf %3, %6 : vector<128x128xf32>
    %c0_6 = arith.constant 0 : index
    %c0_7 = arith.constant 0 : index
    %8 = vector.load %arg7[%c0_6, %c0_7] : memref<128x128xf32, #tpu.memory_space<vmem>>, vector<128x128xf32>
    tpu.vector_store %arg7[%c0_6, %c0_7], %7 {strides = array<i32>} : memref<128x128xf32, #tpu.memory_space<vmem>>, vector<128x128xf32>,
    %c0_i32_8 = arith.constant 0 : i32
    %9 = arith.cmpi eq, %arg2, %c0_i32_8 : i32
    %10 = arith.extui %9 : i1 to i32
    %c0_i32_9 = arith.constant 0 : i32
    %11 = arith.cmpi ne, %10, %c0_i32_9 : i32
    scf.if %11 {
      %c0_10 = arith.constant 0 : index
      %c0_11 = arith.constant 0 : index
      %12 = vector.load %arg7[%c0_10, %c0_11] : memref<128x128xf32, #tpu.memory_space<vmem>>, vector<128x128xf32>
      %c0_12 = arith.constant 0 : index
      %c0_13 = arith.constant 0 : index
      %13 = vector.load %arg5[%c0_12, %c0_13] : memref<1x128xf32, #tpu.memory_space<vmem>>, vector<1x128xf32>
      %14 = vector.broadcast %13 : vector<1x128xf32> to vector<128x128xf32>
      %15 = arith.addf %12, %14 : vector<128x128xf32>
      %cst_14 = arith.constant 0.000000e+00 : f32
      %16 = vector.broadcast %cst_14 : f32 to vector<128x128xf32>
      %17 = arith.maximumf %15, %16 : vector<128x128xf32>
      %c0_15 = arith.constant 0 : index
      %c0_16 = arith.constant 0 : index
      %18 = vector.load %arg6[%c0_15, %c0_16] : memref<128x128xf32, #tpu.memory_space<vmem>>, vector<128x128xf32>
      tpu.vector_store %arg6[%c0_15, %c0_16], %17 {strides = array<i32>} : memref<128x128xf32, #tpu.memory_space<vmem>>, vector<128x128xf32>,
    } else {
    }
    return
  }
  func.func @transform_0(%arg0: i32, %arg1: i32, %arg2: i32) -> (i32, i32) {
    %c0_i32 = arith.constant 0 : i32
    return %arg0, %arg2 : i32, i32
  }
  func.func @transform_1(%arg0: i32, %arg1: i32, %arg2: i32) -> (i32, i32) {
    %c0_i32 = arith.constant 0 : i32
    return %arg2, %arg1 : i32, i32
  }
  func.func @transform_2(%arg0: i32, %arg1: i32, %arg2: i32) -> (i32, i32) {
    %c0_i32 = arith.constant 0 : i32
    %c0_i32_0 = arith.constant 0 : i32
    return %c0_i32, %arg1 : i32, i32
  }
  func.func @transform_3(%arg0: i32, %arg1: i32, %arg2: i32) -> (i32, i32) {
    %c0_i32 = arith.constant 0 : i32
    return %arg0, %arg1 : i32, i32
  }
}

module attributes {stable_mosaic.version = 11 : i64} {
  func.func @_matmul_fused_kernel(%arg0: i32, %arg1: i32, %arg2: i32, %arg3: memref<128x256xbf16, #tpu.memory_space<vmem>>, %arg4: memref<256x128xbf16, #tpu.memory_space<vmem>>, %arg5: memref<1x128xf32, #tpu.memory_space<vmem>>, %arg6: memref<128x128xf32, #tpu.memory_space<vmem>>, %arg7: memref<128x128xf32, #tpu.memory_space<vmem>>) attributes {dimension_semantics = [#tpu.dimension_semantics<parallel>, #tpu.dimension_semantics<parallel>, #tpu.dimension_semantics<arbitrary>], iteration_bounds = array<i64: 1, 1, 1>, scalar_prefetch = 0 : i64, scratch_operands = 1 : i64, tpu.core_type = #tpu.core_type<tc>, window_params = [{transform_indices = @transform_0, window_bounds = array<i64: 128, 256>}, {transform_indices = @transform_1, window_bounds = array<i64: 256, 128>}, {transform_indices = @transform_2, window_bounds = array<i64: 1, 128>}, {transform_indices = @transform_3, window_bounds = array<i64: 128, 128>}]} {
    %c0_i32 = arith.constant 0 : i32
    %0 = arith.cmpi eq, %arg2, %c0_i32 : i32
    %1 = arith.extui %0 : i1 to i32
    %c0_i32_0 = arith.constant 0 : i32
    %2 = arith.cmpi ne, %1, %c0_i32_0 : i32
    scf.if %2 {
      %cst_10 = arith.constant 0.000000e+00 : f32
      %12 = vector.broadcast %cst_10 : f32 to vector<128x128xf32>
      %c0_11 = arith.constant 0 : index
      %c0_12 = arith.constant 0 : index
      %13 = vector.load %arg7[%c0_11, %c0_12] : memref<128x128xf32, #tpu.memory_space<vmem>>, vector<128x128xf32>
      tpu.vector_store %arg7[%c0_11, %c0_12], %12 {strides = array<i32>} : memref<128x128xf32, #tpu.memory_space<vmem>>, vector<128x128xf32>,
    } else {
    }
    %c0 = arith.constant 0 : index
    %c0_1 = arith.constant 0 : index
    %3 = vector.load %arg7[%c0, %c0_1] : memref<128x128xf32, #tpu.memory_space<vmem>>, vector<128x128xf32>
    %c0_2 = arith.constant 0 : index
    %c0_3 = arith.constant 0 : index
    %4 = vector.load %arg3[%c0_2, %c0_3] : memref<128x256xbf16, #tpu.memory_space<vmem>>, vector<128x256xbf16>
    %c0_4 = arith.constant 0 : index
    %c0_5 = arith.constant 0 : index
    %5 = vector.load %arg4[%c0_4, %c0_5] : memref<256x128xbf16, #tpu.memory_space<vmem>>, vector<256x128xbf16>
    %cst = arith.constant dense<0.000000e+00> : vector<128x128xf32>
    %6 = tpu.matmul %4, %5, %cst {dimension_numbers = #tpu.dot_dimension_numbers<[1], [0], [0], [1], [0, 0, 1, 1], [], []>} : vector<128x256xbf16>, vector<256x128xbf16>, vector<128x128xf32> -> vector<128x128xf32>
    %7 = arith.addf %3, %6 : vector<128x128xf32>
    %c0_6 = arith.constant 0 : index
    %c0_7 = arith.constant 0 : index
    %8 = vector.load %arg7[%c0_6, %c0_7] : memref<128x128xf32, #tpu.memory_space<vmem>>, vector<128x128xf32>
    tpu.vector_store %arg7[%c0_6, %c0_7], %7 {strides = array<i32>} : memref<128x128xf32, #tpu.memory_space<vmem>>, vector<128x128xf32>,
    %c0_i32_8 = arith.constant 0 : i32
    %9 = arith.cmpi eq, %arg2, %c0_i32_8 : i32
    %10 = arith.extui %9 : i1 to i32
    %c0_i32_9 = arith.constant 0 : i32
    %11 = arith.cmpi ne, %10, %c0_i32_9 : i32
    scf.if %11 {
      %c0_10 = arith.constant 0 : index
      %c0_11 = arith.constant 0 : index
      %12 = vector.load %arg7[%c0_10, %c0_11] : memref<128x128xf32, #tpu.memory_space<vmem>>, vector<128x128xf32>
      %c0_12 = arith.constant 0 : index
      %c0_13 = arith.constant 0 : index
      %13 = vector.load %arg5[%c0_12, %c0_13] : memref<1x128xf32, #tpu.memory_space<vmem>>, vector<1x128xf32>
      %14 = vector.broadcast %13 : vector<1x128xf32> to vector<128x128xf32>
      %15 = arith.addf %12, %14 : vector<128x128xf32>
      %c0_14 = arith.constant 0 : index
      %c0_15 = arith.constant 0 : index
      %16 = vector.load %arg6[%c0_14, %c0_15] : memref<128x128xf32, #tpu.memory_space<vmem>>, vector<128x128xf32>
      tpu.vector_store %arg6[%c0_14, %c0_15], %15 {strides = array<i32>} : memref<128x128xf32, #tpu.memory_space<vmem>>, vector<128x128xf32>,
    } else {
    }
    return
  }
  func.func @transform_0(%arg0: i32, %arg1: i32, %arg2: i32) -> (i32, i32) {
    %c0_i32 = arith.constant 0 : i32
    return %arg0, %arg2 : i32, i32
  }
  func.func @transform_1(%arg0: i32, %arg1: i32, %arg2: i32) -> (i32, i32) {
    %c0_i32 = arith.constant 0 : i32
    return %arg2, %arg1 : i32, i32
  }
  func.func @transform_2(%arg0: i32, %arg1: i32, %arg2: i32) -> (i32, i32) {
    %c0_i32 = arith.constant 0 : i32
    %c0_i32_0 = arith.constant 0 : i32
    return %c0_i32, %arg1 : i32, i32
  }
  func.func @transform_3(%arg0: i32, %arg1: i32, %arg2: i32) -> (i32, i32) {
    %c0_i32 = arith.constant 0 : i32
    return %arg0, %arg1 : i32, i32
  }
}

module attributes {stable_mosaic.version = 11 : i64} {
  func.func @_matmul_fused_kernel(%arg0: i32, %arg1: i32, %arg2: i32, %arg3: memref<32x512xbf16, #tpu.memory_space<vmem>>, %arg4: memref<512x128xbf16, #tpu.memory_space<vmem>>, %arg5: memref<1x128xf32, #tpu.memory_space<vmem>>, %arg6: memref<32x128xf32, #tpu.memory_space<vmem>>, %arg7: memref<32x128xf32, #tpu.memory_space<vmem>>) attributes {dimension_semantics = [#tpu.dimension_semantics<parallel>, #tpu.dimension_semantics<parallel>, #tpu.dimension_semantics<arbitrary>], iteration_bounds = array<i64: 1, 1, 1>, scalar_prefetch = 0 : i64, scratch_operands = 1 : i64, tpu.core_type = #tpu.core_type<tc>, window_params = [{transform_indices = @transform_0, window_bounds = array<i64: 32, 512>}, {transform_indices = @transform_1, window_bounds = array<i64: 512, 128>}, {transform_indices = @transform_2, window_bounds = array<i64: 1, 128>}, {transform_indices = @transform_3, window_bounds = array<i64: 32, 128>}]} {
    %c0_i32 = arith.constant 0 : i32
    %0 = arith.cmpi eq, %arg2, %c0_i32 : i32
    %1 = arith.extui %0 : i1 to i32
    %c0_i32_0 = arith.constant 0 : i32
    %2 = arith.cmpi ne, %1, %c0_i32_0 : i32
    scf.if %2 {
      %cst_10 = arith.constant 0.000000e+00 : f32
      %12 = vector.broadcast %cst_10 : f32 to vector<32x128xf32>
      %c0_11 = arith.constant 0 : index
      %c0_12 = arith.constant 0 : index
      %13 = vector.load %arg7[%c0_11, %c0_12] : memref<32x128xf32, #tpu.memory_space<vmem>>, vector<32x128xf32>
      tpu.vector_store %arg7[%c0_11, %c0_12], %12 {strides = array<i32>} : memref<32x128xf32, #tpu.memory_space<vmem>>, vector<32x128xf32>,
    } else {
    }
    %c0 = arith.constant 0 : index
    %c0_1 = arith.constant 0 : index
    %3 = vector.load %arg7[%c0, %c0_1] : memref<32x128xf32, #tpu.memory_space<vmem>>, vector<32x128xf32>
    %c0_2 = arith.constant 0 : index
    %c0_3 = arith.constant 0 : index
    %4 = vector.load %arg3[%c0_2, %c0_3] : memref<32x512xbf16, #tpu.memory_space<vmem>>, vector<32x512xbf16>
    %c0_4 = arith.constant 0 : index
    %c0_5 = arith.constant 0 : index
    %5 = vector.load %arg4[%c0_4, %c0_5] : memref<512x128xbf16, #tpu.memory_space<vmem>>, vector<512x128xbf16>
    %cst = arith.constant dense<0.000000e+00> : vector<32x128xf32>
    %6 = tpu.matmul %4, %5, %cst {dimension_numbers = #tpu.dot_dimension_numbers<[1], [0], [0], [1], [0, 0, 1, 1], [], []>} : vector<32x512xbf16>, vector<512x128xbf16>, vector<32x128xf32> -> vector<32x128xf32>
    %7 = arith.addf %3, %6 : vector<32x128xf32>
    %c0_6 = arith.constant 0 : index
    %c0_7 = arith.constant 0 : index
    %8 = vector.load %arg7[%c0_6, %c0_7] : memref<32x128xf32, #tpu.memory_space<vmem>>, vector<32x128xf32>
    tpu.vector_store %arg7[%c0_6, %c0_7], %7 {strides = array<i32>} : memref<32x128xf32, #tpu.memory_space<vmem>>, vector<32x128xf32>,
    %c0_i32_8 = arith.constant 0 : i32
    %9 = arith.cmpi eq, %arg2, %c0_i32_8 : i32
    %10 = arith.extui %9 : i1 to i32
    %c0_i32_9 = arith.constant 0 : i32
    %11 = arith.cmpi ne, %10, %c0_i32_9 : i32
    scf.if %11 {
      %c0_10 = arith.constant 0 : index
      %c0_11 = arith.constant 0 : index
      %12 = vector.load %arg7[%c0_10, %c0_11] : memref<32x128xf32, #tpu.memory_space<vmem>>, vector<32x128xf32>
      %c0_12 = arith.constant 0 : index
      %c0_13 = arith.constant 0 : index
      %13 = vector.load %arg5[%c0_12, %c0_13] : memref<1x128xf32, #tpu.memory_space<vmem>>, vector<1x128xf32>
      %14 = vector.broadcast %13 : vector<1x128xf32> to vector<32x128xf32>
      %15 = arith.addf %12, %14 : vector<32x128xf32>
      %cst_14 = arith.constant 0.000000e+00 : f32
      %16 = vector.broadcast %cst_14 : f32 to vector<32x128xf32>
      %17 = arith.maximumf %15, %16 : vector<32x128xf32>
      %c0_15 = arith.constant 0 : index
      %c0_16 = arith.constant 0 : index
      %18 = vector.load %arg6[%c0_15, %c0_16] : memref<32x128xf32, #tpu.memory_space<vmem>>, vector<32x128xf32>
      tpu.vector_store %arg6[%c0_15, %c0_16], %17 {strides = array<i32>} : memref<32x128xf32, #tpu.memory_space<vmem>>, vector<32x128xf32>,
    } else {
    }
    return
  }
  func.func @transform_0(%arg0: i32, %arg1: i32, %arg2: i32) -> (i32, i32) {
    %c0_i32 = arith.constant 0 : i32
    return %arg0, %arg2 : i32, i32
  }
  func.func @transform_1(%arg0: i32, %arg1: i32, %arg2: i32) -> (i32, i32) {
    %c0_i32 = arith.constant 0 : i32
    return %arg2, %arg1 : i32, i32
  }
  func.func @transform_2(%arg0: i32, %arg1: i32, %arg2: i32) -> (i32, i32) {
    %c0_i32 = arith.constant 0 : i32
    %c0_i32_0 = arith.constant 0 : i32
    return %c0_i32, %arg1 : i32, i32
  }
  func.func @transform_3(%arg0: i32, %arg1: i32, %arg2: i32) -> (i32, i32) {
    %c0_i32 = arith.constant 0 : i32
    return %arg0, %arg1 : i32, i32
  }
}

module attributes {stable_mosaic.version = 11 : i64} {
  func.func @_matmul_fused_kernel(%arg0: i32, %arg1: i32, %arg2: i32, %arg3: memref<32x384xbf16, #tpu.memory_space<vmem>>, %arg4: memref<384x128xbf16, #tpu.memory_space<vmem>>, %arg5: memref<1x128xf32, #tpu.memory_space<vmem>>, %arg6: memref<32x128xf32, #tpu.memory_space<vmem>>, %arg7: memref<32x128xf32, #tpu.memory_space<vmem>>) attributes {dimension_semantics = [#tpu.dimension_semantics<parallel>, #tpu.dimension_semantics<parallel>, #tpu.dimension_semantics<arbitrary>], iteration_bounds = array<i64: 1, 1, 1>, scalar_prefetch = 0 : i64, scratch_operands = 1 : i64, tpu.core_type = #tpu.core_type<tc>, window_params = [{transform_indices = @transform_0, window_bounds = array<i64: 32, 384>}, {transform_indices = @transform_1, window_bounds = array<i64: 384, 128>}, {transform_indices = @transform_2, window_bounds = array<i64: 1, 128>}, {transform_indices = @transform_3, window_bounds = array<i64: 32, 128>}]} {
    %c0_i32 = arith.constant 0 : i32
    %0 = arith.cmpi eq, %arg2, %c0_i32 : i32
    %1 = arith.extui %0 : i1 to i32
    %c0_i32_0 = arith.constant 0 : i32
    %2 = arith.cmpi ne, %1, %c0_i32_0 : i32
    scf.if %2 {
      %cst_10 = arith.constant 0.000000e+00 : f32
      %12 = vector.broadcast %cst_10 : f32 to vector<32x128xf32>
      %c0_11 = arith.constant 0 : index
      %c0_12 = arith.constant 0 : index
      %13 = vector.load %arg7[%c0_11, %c0_12] : memref<32x128xf32, #tpu.memory_space<vmem>>, vector<32x128xf32>
      tpu.vector_store %arg7[%c0_11, %c0_12], %12 {strides = array<i32>} : memref<32x128xf32, #tpu.memory_space<vmem>>, vector<32x128xf32>,
    } else {
    }
    %c0 = arith.constant 0 : index
    %c0_1 = arith.constant 0 : index
    %3 = vector.load %arg7[%c0, %c0_1] : memref<32x128xf32, #tpu.memory_space<vmem>>, vector<32x128xf32>
    %c0_2 = arith.constant 0 : index
    %c0_3 = arith.constant 0 : index
    %4 = vector.load %arg3[%c0_2, %c0_3] : memref<32x384xbf16, #tpu.memory_space<vmem>>, vector<32x384xbf16>
    %c0_4 = arith.constant 0 : index
    %c0_5 = arith.constant 0 : index
    %5 = vector.load %arg4[%c0_4, %c0_5] : memref<384x128xbf16, #tpu.memory_space<vmem>>, vector<384x128xbf16>
    %cst = arith.constant dense<0.000000e+00> : vector<32x128xf32>
    %6 = tpu.matmul %4, %5, %cst {dimension_numbers = #tpu.dot_dimension_numbers<[1], [0], [0], [1], [0, 0, 1, 1], [], []>} : vector<32x384xbf16>, vector<384x128xbf16>, vector<32x128xf32> -> vector<32x128xf32>
    %7 = arith.addf %3, %6 : vector<32x128xf32>
    %c0_6 = arith.constant 0 : index
    %c0_7 = arith.constant 0 : index
    %8 = vector.load %arg7[%c0_6, %c0_7] : memref<32x128xf32, #tpu.memory_space<vmem>>, vector<32x128xf32>
    tpu.vector_store %arg7[%c0_6, %c0_7], %7 {strides = array<i32>} : memref<32x128xf32, #tpu.memory_space<vmem>>, vector<32x128xf32>,
    %c0_i32_8 = arith.constant 0 : i32
    %9 = arith.cmpi eq, %arg2, %c0_i32_8 : i32
    %10 = arith.extui %9 : i1 to i32
    %c0_i32_9 = arith.constant 0 : i32
    %11 = arith.cmpi ne, %10, %c0_i32_9 : i32
    scf.if %11 {
      %c0_10 = arith.constant 0 : index
      %c0_11 = arith.constant 0 : index
      %12 = vector.load %arg7[%c0_10, %c0_11] : memref<32x128xf32, #tpu.memory_space<vmem>>, vector<32x128xf32>
      %c0_12 = arith.constant 0 : index
      %c0_13 = arith.constant 0 : index
      %13 = vector.load %arg5[%c0_12, %c0_13] : memref<1x128xf32, #tpu.memory_space<vmem>>, vector<1x128xf32>
      %14 = vector.broadcast %13 : vector<1x128xf32> to vector<32x128xf32>
      %15 = arith.addf %12, %14 : vector<32x128xf32>
      %cst_14 = arith.constant 0.000000e+00 : f32
      %16 = vector.broadcast %cst_14 : f32 to vector<32x128xf32>
      %17 = arith.maximumf %15, %16 : vector<32x128xf32>
      %c0_15 = arith.constant 0 : index
      %c0_16 = arith.constant 0 : index
      %18 = vector.load %arg6[%c0_15, %c0_16] : memref<32x128xf32, #tpu.memory_space<vmem>>, vector<32x128xf32>
      tpu.vector_store %arg6[%c0_15, %c0_16], %17 {strides = array<i32>} : memref<32x128xf32, #tpu.memory_space<vmem>>, vector<32x128xf32>,
    } else {
    }
    return
  }
  func.func @transform_0(%arg0: i32, %arg1: i32, %arg2: i32) -> (i32, i32) {
    %c0_i32 = arith.constant 0 : i32
    return %arg0, %arg2 : i32, i32
  }
  func.func @transform_1(%arg0: i32, %arg1: i32, %arg2: i32) -> (i32, i32) {
    %c0_i32 = arith.constant 0 : i32
    return %arg2, %arg1 : i32, i32
  }
  func.func @transform_2(%arg0: i32, %arg1: i32, %arg2: i32) -> (i32, i32) {
    %c0_i32 = arith.constant 0 : i32
    %c0_i32_0 = arith.constant 0 : i32
    return %c0_i32, %arg1 : i32, i32
  }
  func.func @transform_3(%arg0: i32, %arg1: i32, %arg2: i32) -> (i32, i32) {
    %c0_i32 = arith.constant 0 : i32
    return %arg0, %arg1 : i32, i32
  }
}

module attributes {stable_mosaic.version = 11 : i64} {
  func.func @_matmul_fused_kernel(%arg0: i32, %arg1: i32, %arg2: i32, %arg3: memref<32x384xbf16, #tpu.memory_space<vmem>>, %arg4: memref<384x128xbf16, #tpu.memory_space<vmem>>, %arg5: memref<1x128xf32, #tpu.memory_space<vmem>>, %arg6: memref<32x128xf32, #tpu.memory_space<vmem>>, %arg7: memref<32x128xf32, #tpu.memory_space<vmem>>) attributes {dimension_semantics = [#tpu.dimension_semantics<parallel>, #tpu.dimension_semantics<parallel>, #tpu.dimension_semantics<arbitrary>], iteration_bounds = array<i64: 1, 1, 1>, scalar_prefetch = 0 : i64, scratch_operands = 1 : i64, tpu.core_type = #tpu.core_type<tc>, window_params = [{transform_indices = @transform_0, window_bounds = array<i64: 32, 384>}, {transform_indices = @transform_1, window_bounds = array<i64: 384, 128>}, {transform_indices = @transform_2, window_bounds = array<i64: 1, 128>}, {transform_indices = @transform_3, window_bounds = array<i64: 32, 128>}]} {
    %c0_i32 = arith.constant 0 : i32
    %0 = arith.cmpi eq, %arg2, %c0_i32 : i32
    %1 = arith.extui %0 : i1 to i32
    %c0_i32_0 = arith.constant 0 : i32
    %2 = arith.cmpi ne, %1, %c0_i32_0 : i32
    scf.if %2 {
      %cst_10 = arith.constant 0.000000e+00 : f32
      %12 = vector.broadcast %cst_10 : f32 to vector<32x128xf32>
      %c0_11 = arith.constant 0 : index
      %c0_12 = arith.constant 0 : index
      %13 = vector.load %arg7[%c0_11, %c0_12] : memref<32x128xf32, #tpu.memory_space<vmem>>, vector<32x128xf32>
      tpu.vector_store %arg7[%c0_11, %c0_12], %12 {strides = array<i32>} : memref<32x128xf32, #tpu.memory_space<vmem>>, vector<32x128xf32>,
    } else {
    }
    %c0 = arith.constant 0 : index
    %c0_1 = arith.constant 0 : index
    %3 = vector.load %arg7[%c0, %c0_1] : memref<32x128xf32, #tpu.memory_space<vmem>>, vector<32x128xf32>
    %c0_2 = arith.constant 0 : index
    %c0_3 = arith.constant 0 : index
    %4 = vector.load %arg3[%c0_2, %c0_3] : memref<32x384xbf16, #tpu.memory_space<vmem>>, vector<32x384xbf16>
    %c0_4 = arith.constant 0 : index
    %c0_5 = arith.constant 0 : index
    %5 = vector.load %arg4[%c0_4, %c0_5] : memref<384x128xbf16, #tpu.memory_space<vmem>>, vector<384x128xbf16>
    %cst = arith.constant dense<0.000000e+00> : vector<32x128xf32>
    %6 = tpu.matmul %4, %5, %cst {dimension_numbers = #tpu.dot_dimension_numbers<[1], [0], [0], [1], [0, 0, 1, 1], [], []>} : vector<32x384xbf16>, vector<384x128xbf16>, vector<32x128xf32> -> vector<32x128xf32>
    %7 = arith.addf %3, %6 : vector<32x128xf32>
    %c0_6 = arith.constant 0 : index
    %c0_7 = arith.constant 0 : index
    %8 = vector.load %arg7[%c0_6, %c0_7] : memref<32x128xf32, #tpu.memory_space<vmem>>, vector<32x128xf32>
    tpu.vector_store %arg7[%c0_6, %c0_7], %7 {strides = array<i32>} : memref<32x128xf32, #tpu.memory_space<vmem>>, vector<32x128xf32>,
    %c0_i32_8 = arith.constant 0 : i32
    %9 = arith.cmpi eq, %arg2, %c0_i32_8 : i32
    %10 = arith.extui %9 : i1 to i32
    %c0_i32_9 = arith.constant 0 : i32
    %11 = arith.cmpi ne, %10, %c0_i32_9 : i32
    scf.if %11 {
      %c0_10 = arith.constant 0 : index
      %c0_11 = arith.constant 0 : index
      %12 = vector.load %arg7[%c0_10, %c0_11] : memref<32x128xf32, #tpu.memory_space<vmem>>, vector<32x128xf32>
      %c0_12 = arith.constant 0 : index
      %c0_13 = arith.constant 0 : index
      %13 = vector.load %arg5[%c0_12, %c0_13] : memref<1x128xf32, #tpu.memory_space<vmem>>, vector<1x128xf32>
      %14 = vector.broadcast %13 : vector<1x128xf32> to vector<32x128xf32>
      %15 = arith.addf %12, %14 : vector<32x128xf32>
      %c0_14 = arith.constant 0 : index
      %c0_15 = arith.constant 0 : index
      %16 = vector.load %arg6[%c0_14, %c0_15] : memref<32x128xf32, #tpu.memory_space<vmem>>, vector<32x128xf32>
      tpu.vector_store %arg6[%c0_14, %c0_15], %15 {strides = array<i32>} : memref<32x128xf32, #tpu.memory_space<vmem>>, vector<32x128xf32>,
    } else {
    }
    return
  }
  func.func @transform_0(%arg0: i32, %arg1: i32, %arg2: i32) -> (i32, i32) {
    %c0_i32 = arith.constant 0 : i32
    return %arg0, %arg2 : i32, i32
  }
  func.func @transform_1(%arg0: i32, %arg1: i32, %arg2: i32) -> (i32, i32) {
    %c0_i32 = arith.constant 0 : i32
    return %arg2, %arg1 : i32, i32
  }
  func.func @transform_2(%arg0: i32, %arg1: i32, %arg2: i32) -> (i32, i32) {
    %c0_i32 = arith.constant 0 : i32
    %c0_i32_0 = arith.constant 0 : i32
    return %c0_i32, %arg1 : i32, i32
  }
  func.func @transform_3(%arg0: i32, %arg1: i32, %arg2: i32) -> (i32, i32) {
    %c0_i32 = arith.constant 0 : i32
    return %arg0, %arg1 : i32, i32
  }
}

module attributes {stable_mosaic.version = 11 : i64} {
  func.func @_matmul_fused_kernel(%arg0: i32, %arg1: i32, %arg2: i32, %arg3: memref<32x128xbf16, #tpu.memory_space<vmem>>, %arg4: memref<128x128xbf16, #tpu.memory_space<vmem>>, %arg5: memref<1x128xf32, #tpu.memory_space<vmem>>, %arg6: memref<32x128xf32, #tpu.memory_space<vmem>>, %arg7: memref<32x128xf32, #tpu.memory_space<vmem>>) attributes {dimension_semantics = [#tpu.dimension_semantics<parallel>, #tpu.dimension_semantics<parallel>, #tpu.dimension_semantics<arbitrary>], iteration_bounds = array<i64: 1, 1, 1>, scalar_prefetch = 0 : i64, scratch_operands = 1 : i64, tpu.core_type = #tpu.core_type<tc>, window_params = [{transform_indices = @transform_0, window_bounds = array<i64: 32, 128>}, {transform_indices = @transform_1, window_bounds = array<i64: 128, 128>}, {transform_indices = @transform_2, window_bounds = array<i64: 1, 128>}, {transform_indices = @transform_3, window_bounds = array<i64: 32, 128>}]} {
    %c0_i32 = arith.constant 0 : i32
    %0 = arith.cmpi eq, %arg2, %c0_i32 : i32
    %1 = arith.extui %0 : i1 to i32
    %c0_i32_0 = arith.constant 0 : i32
    %2 = arith.cmpi ne, %1, %c0_i32_0 : i32
    scf.if %2 {
      %cst_10 = arith.constant 0.000000e+00 : f32
      %12 = vector.broadcast %cst_10 : f32 to vector<32x128xf32>
      %c0_11 = arith.constant 0 : index
      %c0_12 = arith.constant 0 : index
      %13 = vector.load %arg7[%c0_11, %c0_12] : memref<32x128xf32, #tpu.memory_space<vmem>>, vector<32x128xf32>
      tpu.vector_store %arg7[%c0_11, %c0_12], %12 {strides = array<i32>} : memref<32x128xf32, #tpu.memory_space<vmem>>, vector<32x128xf32>,
    } else {
    }
    %c0 = arith.constant 0 : index
    %c0_1 = arith.constant 0 : index
    %3 = vector.load %arg7[%c0, %c0_1] : memref<32x128xf32, #tpu.memory_space<vmem>>, vector<32x128xf32>
    %c0_2 = arith.constant 0 : index
    %c0_3 = arith.constant 0 : index
    %4 = vector.load %arg3[%c0_2, %c0_3] : memref<32x128xbf16, #tpu.memory_space<vmem>>, vector<32x128xbf16>
    %c0_4 = arith.constant 0 : index
    %c0_5 = arith.constant 0 : index
    %5 = vector.load %arg4[%c0_4, %c0_5] : memref<128x128xbf16, #tpu.memory_space<vmem>>, vector<128x128xbf16>
    %cst = arith.constant dense<0.000000e+00> : vector<32x128xf32>
    %6 = tpu.matmul %4, %5, %cst {dimension_numbers = #tpu.dot_dimension_numbers<[1], [0], [0], [1], [0, 0, 1, 1], [], []>} : vector<32x128xbf16>, vector<128x128xbf16>, vector<32x128xf32> -> vector<32x128xf32>
    %7 = arith.addf %3, %6 : vector<32x128xf32>
    %c0_6 = arith.constant 0 : index
    %c0_7 = arith.constant 0 : index
    %8 = vector.load %arg7[%c0_6, %c0_7] : memref<32x128xf32, #tpu.memory_space<vmem>>, vector<32x128xf32>
    tpu.vector_store %arg7[%c0_6, %c0_7], %7 {strides = array<i32>} : memref<32x128xf32, #tpu.memory_space<vmem>>, vector<32x128xf32>,
    %c0_i32_8 = arith.constant 0 : i32
    %9 = arith.cmpi eq, %arg2, %c0_i32_8 : i32
    %10 = arith.extui %9 : i1 to i32
    %c0_i32_9 = arith.constant 0 : i32
    %11 = arith.cmpi ne, %10, %c0_i32_9 : i32
    scf.if %11 {
      %c0_10 = arith.constant 0 : index
      %c0_11 = arith.constant 0 : index
      %12 = vector.load %arg7[%c0_10, %c0_11] : memref<32x128xf32, #tpu.memory_space<vmem>>, vector<32x128xf32>
      %c0_12 = arith.constant 0 : index
      %c0_13 = arith.constant 0 : index
      %13 = vector.load %arg5[%c0_12, %c0_13] : memref<1x128xf32, #tpu.memory_space<vmem>>, vector<1x128xf32>
      %14 = vector.broadcast %13 : vector<1x128xf32> to vector<32x128xf32>
      %15 = arith.addf %12, %14 : vector<32x128xf32>
      %cst_14 = arith.constant 0.000000e+00 : f32
      %16 = vector.broadcast %cst_14 : f32 to vector<32x128xf32>
      %17 = arith.maximumf %15, %16 : vector<32x128xf32>
      %c0_15 = arith.constant 0 : index
      %c0_16 = arith.constant 0 : index
      %18 = vector.load %arg6[%c0_15, %c0_16] : memref<32x128xf32, #tpu.memory_space<vmem>>, vector<32x128xf32>
      tpu.vector_store %arg6[%c0_15, %c0_16], %17 {strides = array<i32>} : memref<32x128xf32, #tpu.memory_space<vmem>>, vector<32x128xf32>,
    } else {
    }
    return
  }
  func.func @transform_0(%arg0: i32, %arg1: i32, %arg2: i32) -> (i32, i32) {
    %c0_i32 = arith.constant 0 : i32
    return %arg0, %arg2 : i32, i32
  }
  func.func @transform_1(%arg0: i32, %arg1: i32, %arg2: i32) -> (i32, i32) {
    %c0_i32 = arith.constant 0 : i32
    return %arg2, %arg1 : i32, i32
  }
  func.func @transform_2(%arg0: i32, %arg1: i32, %arg2: i32) -> (i32, i32) {
    %c0_i32 = arith.constant 0 : i32
    %c0_i32_0 = arith.constant 0 : i32
    return %c0_i32, %arg1 : i32, i32
  }
  func.func @transform_3(%arg0: i32, %arg1: i32, %arg2: i32) -> (i32, i32) {
    %c0_i32 = arith.constant 0 : i32
    return %arg0, %arg1 : i32, i32
  }
}

module attributes {stable_mosaic.version = 11 : i64} {
  func.func @_matmul_fused_kernel(%arg0: i32, %arg1: i32, %arg2: i32, %arg3: memref<128x128xbf16, #tpu.memory_space<vmem>>, %arg4: memref<128x128xbf16, #tpu.memory_space<vmem>>, %arg5: memref<1x128xf32, #tpu.memory_space<vmem>>, %arg6: memref<128x128xf32, #tpu.memory_space<vmem>>, %arg7: memref<128x128xf32, #tpu.memory_space<vmem>>) attributes {dimension_semantics = [#tpu.dimension_semantics<parallel>, #tpu.dimension_semantics<parallel>, #tpu.dimension_semantics<arbitrary>], iteration_bounds = array<i64: 1, 1, 1>, scalar_prefetch = 0 : i64, scratch_operands = 1 : i64, tpu.core_type = #tpu.core_type<tc>, window_params = [{transform_indices = @transform_0, window_bounds = array<i64: 128, 128>}, {transform_indices = @transform_1, window_bounds = array<i64: 128, 128>}, {transform_indices = @transform_2, window_bounds = array<i64: 1, 128>}, {transform_indices = @transform_3, window_bounds = array<i64: 128, 128>}]} {
    %c0_i32 = arith.constant 0 : i32
    %0 = arith.cmpi eq, %arg2, %c0_i32 : i32
    %1 = arith.extui %0 : i1 to i32
    %c0_i32_0 = arith.constant 0 : i32
    %2 = arith.cmpi ne, %1, %c0_i32_0 : i32
    scf.if %2 {
      %cst_10 = arith.constant 0.000000e+00 : f32
      %12 = vector.broadcast %cst_10 : f32 to vector<128x128xf32>
      %c0_11 = arith.constant 0 : index
      %c0_12 = arith.constant 0 : index
      %13 = vector.load %arg7[%c0_11, %c0_12] : memref<128x128xf32, #tpu.memory_space<vmem>>, vector<128x128xf32>
      tpu.vector_store %arg7[%c0_11, %c0_12], %12 {strides = array<i32>} : memref<128x128xf32, #tpu.memory_space<vmem>>, vector<128x128xf32>,
    } else {
    }
    %c0 = arith.constant 0 : index
    %c0_1 = arith.constant 0 : index
    %3 = vector.load %arg7[%c0, %c0_1] : memref<128x128xf32, #tpu.memory_space<vmem>>, vector<128x128xf32>
    %c0_2 = arith.constant 0 : index
    %c0_3 = arith.constant 0 : index
    %4 = vector.load %arg3[%c0_2, %c0_3] : memref<128x128xbf16, #tpu.memory_space<vmem>>, vector<128x128xbf16>
    %c0_4 = arith.constant 0 : index
    %c0_5 = arith.constant 0 : index
    %5 = vector.load %arg4[%c0_4, %c0_5] : memref<128x128xbf16, #tpu.memory_space<vmem>>, vector<128x128xbf16>
    %cst = arith.constant dense<0.000000e+00> : vector<128x128xf32>
    %6 = tpu.matmul %4, %5, %cst {dimension_numbers = #tpu.dot_dimension_numbers<[1], [0], [0], [1], [0, 0, 1, 1], [], []>} : vector<128x128xbf16>, vector<128x128xbf16>, vector<128x128xf32> -> vector<128x128xf32>
    %7 = arith.addf %3, %6 : vector<128x128xf32>
    %c0_6 = arith.constant 0 : index
    %c0_7 = arith.constant 0 : index
    %8 = vector.load %arg7[%c0_6, %c0_7] : memref<128x128xf32, #tpu.memory_space<vmem>>, vector<128x128xf32>
    tpu.vector_store %arg7[%c0_6, %c0_7], %7 {strides = array<i32>} : memref<128x128xf32, #tpu.memory_space<vmem>>, vector<128x128xf32>,
    %c0_i32_8 = arith.constant 0 : i32
    %9 = arith.cmpi eq, %arg2, %c0_i32_8 : i32
    %10 = arith.extui %9 : i1 to i32
    %c0_i32_9 = arith.constant 0 : i32
    %11 = arith.cmpi ne, %10, %c0_i32_9 : i32
    scf.if %11 {
      %c0_10 = arith.constant 0 : index
      %c0_11 = arith.constant 0 : index
      %12 = vector.load %arg7[%c0_10, %c0_11] : memref<128x128xf32, #tpu.memory_space<vmem>>, vector<128x128xf32>
      %c0_12 = arith.constant 0 : index
      %c0_13 = arith.constant 0 : index
      %13 = vector.load %arg5[%c0_12, %c0_13] : memref<1x128xf32, #tpu.memory_space<vmem>>, vector<1x128xf32>
      %14 = vector.broadcast %13 : vector<1x128xf32> to vector<128x128xf32>
      %15 = arith.addf %12, %14 : vector<128x128xf32>
      %cst_14 = arith.constant 0.000000e+00 : f32
      %16 = vector.broadcast %cst_14 : f32 to vector<128x128xf32>
      %17 = arith.maximumf %15, %16 : vector<128x128xf32>
      %c0_15 = arith.constant 0 : index
      %c0_16 = arith.constant 0 : index
      %18 = vector.load %arg6[%c0_15, %c0_16] : memref<128x128xf32, #tpu.memory_space<vmem>>, vector<128x128xf32>
      tpu.vector_store %arg6[%c0_15, %c0_16], %17 {strides = array<i32>} : memref<128x128xf32, #tpu.memory_space<vmem>>, vector<128x128xf32>,
    } else {
    }
    return
  }
  func.func @transform_0(%arg0: i32, %arg1: i32, %arg2: i32) -> (i32, i32) {
    %c0_i32 = arith.constant 0 : i32
    return %arg0, %arg2 : i32, i32
  }
  func.func @transform_1(%arg0: i32, %arg1: i32, %arg2: i32) -> (i32, i32) {
    %c0_i32 = arith.constant 0 : i32
    return %arg2, %arg1 : i32, i32
  }
  func.func @transform_2(%arg0: i32, %arg1: i32, %arg2: i32) -> (i32, i32) {
    %c0_i32 = arith.constant 0 : i32
    %c0_i32_0 = arith.constant 0 : i32
    return %c0_i32, %arg1 : i32, i32
  }
  func.func @transform_3(%arg0: i32, %arg1: i32, %arg2: i32) -> (i32, i32) {
    %c0_i32 = arith.constant 0 : i32
    return %arg0, %arg1 : i32, i32
  }
}

module attributes {stable_mosaic.version = 11 : i64} {
  func.func @_matmul_fused_kernel(%arg0: i32, %arg1: i32, %arg2: i32, %arg3: memref<512x256xbf16, #tpu.memory_space<vmem>>, %arg4: memref<256x128xbf16, #tpu.memory_space<vmem>>, %arg5: memref<1x128xf32, #tpu.memory_space<vmem>>, %arg6: memref<512x128xf32, #tpu.memory_space<vmem>>, %arg7: memref<512x128xf32, #tpu.memory_space<vmem>>) attributes {dimension_semantics = [#tpu.dimension_semantics<parallel>, #tpu.dimension_semantics<parallel>, #tpu.dimension_semantics<arbitrary>], iteration_bounds = array<i64: 1, 1, 1>, scalar_prefetch = 0 : i64, scratch_operands = 1 : i64, tpu.core_type = #tpu.core_type<tc>, window_params = [{transform_indices = @transform_0, window_bounds = array<i64: 512, 256>}, {transform_indices = @transform_1, window_bounds = array<i64: 256, 128>}, {transform_indices = @transform_2, window_bounds = array<i64: 1, 128>}, {transform_indices = @transform_3, window_bounds = array<i64: 512, 128>}]} {
    %c0_i32 = arith.constant 0 : i32
    %0 = arith.cmpi eq, %arg2, %c0_i32 : i32
    %1 = arith.extui %0 : i1 to i32
    %c0_i32_0 = arith.constant 0 : i32
    %2 = arith.cmpi ne, %1, %c0_i32_0 : i32
    scf.if %2 {
      %cst_10 = arith.constant 0.000000e+00 : f32
      %12 = vector.broadcast %cst_10 : f32 to vector<512x128xf32>
      %c0_11 = arith.constant 0 : index
      %c0_12 = arith.constant 0 : index
      %13 = vector.load %arg7[%c0_11, %c0_12] : memref<512x128xf32, #tpu.memory_space<vmem>>, vector<512x128xf32>
      tpu.vector_store %arg7[%c0_11, %c0_12], %12 {strides = array<i32>} : memref<512x128xf32, #tpu.memory_space<vmem>>, vector<512x128xf32>,
    } else {
    }
    %c0 = arith.constant 0 : index
    %c0_1 = arith.constant 0 : index
    %3 = vector.load %arg7[%c0, %c0_1] : memref<512x128xf32, #tpu.memory_space<vmem>>, vector<512x128xf32>
    %c0_2 = arith.constant 0 : index
    %c0_3 = arith.constant 0 : index
    %4 = vector.load %arg3[%c0_2, %c0_3] : memref<512x256xbf16, #tpu.memory_space<vmem>>, vector<512x256xbf16>
    %c0_4 = arith.constant 0 : index
    %c0_5 = arith.constant 0 : index
    %5 = vector.load %arg4[%c0_4, %c0_5] : memref<256x128xbf16, #tpu.memory_space<vmem>>, vector<256x128xbf16>
    %cst = arith.constant dense<0.000000e+00> : vector<512x128xf32>
    %6 = tpu.matmul %4, %5, %cst {dimension_numbers = #tpu.dot_dimension_numbers<[1], [0], [0], [1], [0, 0, 1, 1], [], []>} : vector<512x256xbf16>, vector<256x128xbf16>, vector<512x128xf32> -> vector<512x128xf32>
    %7 = arith.addf %3, %6 : vector<512x128xf32>
    %c0_6 = arith.constant 0 : index
    %c0_7 = arith.constant 0 : index
    %8 = vector.load %arg7[%c0_6, %c0_7] : memref<512x128xf32, #tpu.memory_space<vmem>>, vector<512x128xf32>
    tpu.vector_store %arg7[%c0_6, %c0_7], %7 {strides = array<i32>} : memref<512x128xf32, #tpu.memory_space<vmem>>, vector<512x128xf32>,
    %c0_i32_8 = arith.constant 0 : i32
    %9 = arith.cmpi eq, %arg2, %c0_i32_8 : i32
    %10 = arith.extui %9 : i1 to i32
    %c0_i32_9 = arith.constant 0 : i32
    %11 = arith.cmpi ne, %10, %c0_i32_9 : i32
    scf.if %11 {
      %c0_10 = arith.constant 0 : index
      %c0_11 = arith.constant 0 : index
      %12 = vector.load %arg7[%c0_10, %c0_11] : memref<512x128xf32, #tpu.memory_space<vmem>>, vector<512x128xf32>
      %c0_12 = arith.constant 0 : index
      %c0_13 = arith.constant 0 : index
      %13 = vector.load %arg5[%c0_12, %c0_13] : memref<1x128xf32, #tpu.memory_space<vmem>>, vector<1x128xf32>
      %14 = vector.broadcast %13 : vector<1x128xf32> to vector<512x128xf32>
      %15 = arith.addf %12, %14 : vector<512x128xf32>
      %cst_14 = arith.constant 0.000000e+00 : f32
      %16 = vector.broadcast %cst_14 : f32 to vector<512x128xf32>
      %17 = arith.subf %16, %15 : vector<512x128xf32>
      %18 = math.exp %17 : vector<512x128xf32>
      %cst_15 = arith.constant 1.000000e+00 : f32
      %19 = vector.broadcast %cst_15 : f32 to vector<512x128xf32>
      %20 = arith.addf %19, %18 : vector<512x128xf32>
      %cst_16 = arith.constant 1.000000e+00 : f32
      %21 = vector.broadcast %cst_16 : f32 to vector<512x128xf32>
      %22 = arith.divf %21, %20 : vector<512x128xf32>
      %cst_17 = arith.constant 0.000000e+00 : f32
      %23 = vector.broadcast %cst_17 : f32 to vector<512x128xf32>
      %24 = arith.cmpf ogt, %22, %23 : vector<512x128xf32>
      %cst_18 = arith.constant 9.99999993E-9 : f32
      %25 = vector.broadcast %cst_18 : f32 to vector<512x128xf32>
      %26 = arith.select %24, %22, %25 : vector<512x128xi1>, vector<512x128xf32>
      %cst_19 = arith.constant 1.000000e+00 : f32
      %27 = vector.broadcast %cst_19 : f32 to vector<512x128xf32>
      %28 = arith.cmpf olt, %26, %27 : vector<512x128xf32>
      %cst_20 = arith.constant 1.000000e+00 : f32
      %29 = vector.broadcast %cst_20 : f32 to vector<512x128xf32>
      %30 = arith.select %28, %26, %29 : vector<512x128xi1>, vector<512x128xf32>
      %c0_21 = arith.constant 0 : index
      %c0_22 = arith.constant 0 : index
      %31 = vector.load %arg6[%c0_21, %c0_22] : memref<512x128xf32, #tpu.memory_space<vmem>>, vector<512x128xf32>
      tpu.vector_store %arg6[%c0_21, %c0_22], %30 {strides = array<i32>} : memref<512x128xf32, #tpu.memory_space<vmem>>, vector<512x128xf32>,
    } else {
    }
    return
  }
  func.func @transform_0(%arg0: i32, %arg1: i32, %arg2: i32) -> (i32, i32) {
    %c0_i32 = arith.constant 0 : i32
    return %arg0, %arg2 : i32, i32
  }
  func.func @transform_1(%arg0: i32, %arg1: i32, %arg2: i32) -> (i32, i32) {
    %c0_i32 = arith.constant 0 : i32
    return %arg2, %arg1 : i32, i32
  }
  func.func @transform_2(%arg0: i32, %arg1: i32, %arg2: i32) -> (i32, i32) {
    %c0_i32 = arith.constant 0 : i32
    %c0_i32_0 = arith.constant 0 : i32
    return %c0_i32, %arg1 : i32, i32
  }
  func.func @transform_3(%arg0: i32, %arg1: i32, %arg2: i32) -> (i32, i32) {
    %c0_i32 = arith.constant 0 : i32
    return %arg0, %arg1 : i32, i32
  }
}

</mosaic_0001>

<llo_original>
// kernel: _lambda_.36
$region0: #{_lambda_.36}
  #allocation0 [shape = 'u32[]', space=smem, size = 0x4, offset = 0x4, fixed_abs, tag = 'smem constant byte address 0x4 - core index']
  #allocation1 [shape = 'u32[144,128]{1,0:T(1,128)}', space=vmem, size = 0x12000, scoped, tag = 'internal scratch']
  #allocation2 [shape = 'f32[512,128]{1,0:T(8,128)}', space=vmem, size = 0x40000, scoped, tag = 'scratch operand']
  %s0 = inlined_call_operand.vmem [shape: bf16[512,128], index: 0, kind: input, shape index: {}]
  %s1 = inlined_call_operand.vmem [shape: bf16[128,128], index: 1, kind: input, shape index: {}]
  %s2 = inlined_call_operand.vmem [shape: f32[1,128], index: 2, kind: input, shape index: {}]
  %s3 = inlined_call_operand.vmem [shape: f32[512,128], index: 3, kind: output, shape index: {}]
  %s4 = sld [smem:[#allocation0]]
  $region30: #{_lambda_.36} parent=0
    _
  %s6 = ssub.s32 1, %s4
  %s7 = scalar_select 0, %s6, %s4
  // Predicated region
  $region2: #{_lambda_.36} parent=0 // pred_check
    _
  $region3: #{_lambda_.36} parent=0 // pred_check_branch
    %9 = sbr.rel (0) target = $region5
  $region4: #{_lambda_.36} parent=0 // pred_region
    _
  $region5: #{_lambda_.36} parent=0 // pred_fallthru
    _
  // Predicated region
  $region6: #{_lambda_.36} parent=0 // pred_check
    _
  $region7: #{_lambda_.36} parent=0 // pred_check_branch
    %11 = sbr.rel (0) target = $region9
  $region8: #{_lambda_.36} parent=0 // pred_region
    _
  $region9: #{_lambda_.36} parent=0 // pred_fallthru
    _
  // Predicated region
  $region10: #{_lambda_.36} parent=0 // pred_check
    _
  $region11: #{_lambda_.36} parent=0 // pred_check_branch
    %13 = sbr.rel (0) target = $region13
  $region12: #{_lambda_.36} parent=0 // pred_region
    _
  $region13: #{_lambda_.36} parent=0 // pred_fallthru
    _
  %p15 = scmp.eq.s32.totalorder 0, 0
  // Predicated region
  $region14: #{_lambda_.36} parent=0 // pred_check
    %p16 = pneg %p15
  $region15: #{_lambda_.36} parent=0 // pred_check_branch
    %18 = sbr.rel (%p16) target = $region17
  $region16: #{_lambda_.36} parent=0 // pred_region
    %19 = vst [vmem:[#allocation2] sm:$0xff] 0.0
    %20 = vst [vmem:[#allocation2 + $0x8] sm:$0xff] 0.0
    %21 = vst [vmem:[#allocation2 + $0x10] sm:$0xff] 0.0
    %22 = vst [vmem:[#allocation2 + $0x18] sm:$0xff] 0.0
    %23 = vst [vmem:[#allocation2 + $0x20] sm:$0xff] 0.0
    %24 = vst [vmem:[#allocation2 + $0x28] sm:$0xff] 0.0
    %25 = vst [vmem:[#allocation2 + $0x30] sm:$0xff] 0.0
    %26 = vst [vmem:[#allocation2 + $0x38] sm:$0xff] 0.0
    %27 = vst [vmem:[#allocation2 + $0x40] sm:$0xff] 0.0
    %28 = vst [vmem:[#allocation2 + $0x48] sm:$0xff] 0.0
    %29 = vst [vmem:[#allocation2 + $0x50] sm:$0xff] 0.0
    %30 = vst [vmem:[#allocation2 + $0x58] sm:$0xff] 0.0
    %31 = vst [vmem:[#allocation2 + $0x60] sm:$0xff] 0.0
    %32 = vst [vmem:[#allocation2 + $0x68] sm:$0xff] 0.0
    %33 = vst [vmem:[#allocation2 + $0x70] sm:$0xff] 0.0
    %34 = vst [vmem:[#allocation2 + $0x78] sm:$0xff] 0.0
    %35 = vst [vmem:[#allocation2 + $0x80] sm:$0xff] 0.0
    %36 = vst [vmem:[#allocation2 + $0x88] sm:$0xff] 0.0
    %37 = vst [vmem:[#allocation2 + $0x90] sm:$0xff] 0.0
    %38 = vst [vmem:[#allocation2 + $0x98] sm:$0xff] 0.0
    %39 = vst [vmem:[#allocation2 + $0xa0] sm:$0xff] 0.0
    %40 = vst [vmem:[#allocation2 + $0xa8] sm:$0xff] 0.0
    %41 = vst [vmem:[#allocation2 + $0xb0] sm:$0xff] 0.0
    %42 = vst [vmem:[#allocation2 + $0xb8] sm:$0xff] 0.0
    %43 = vst [vmem:[#allocation2 + $0xc0] sm:$0xff] 0.0
    %44 = vst [vmem:[#allocation2 + $0xc8] sm:$0xff] 0.0
    %45 = vst [vmem:[#allocation2 + $0xd0] sm:$0xff] 0.0
    %46 = vst [vmem:[#allocation2 + $0xd8] sm:$0xff] 0.0
    %47 = vst [vmem:[#allocation2 + $0xe0] sm:$0xff] 0.0
    %48 = vst [vmem:[#allocation2 + $0xe8] sm:$0xff] 0.0
    %49 = vst [vmem:[#allocation2 + $0xf0] sm:$0xff] 0.0
    %50 = vst [vmem:[#allocation2 + $0xf8] sm:$0xff] 0.0
    %51 = vst [vmem:[#allocation2 + $0x100] sm:$0xff] 0.0
    %52 = vst [vmem:[#allocation2 + $0x108] sm:$0xff] 0.0
    %53 = vst [vmem:[#allocation2 + $0x110] sm:$0xff] 0.0
    %54 = vst [vmem:[#allocation2 + $0x118] sm:$0xff] 0.0
    %55 = vst [vmem:[#allocation2 + $0x120] sm:$0xff] 0.0
    %56 = vst [vmem:[#allocation2 + $0x128] sm:$0xff] 0.0
    %57 = vst [vmem:[#allocation2 + $0x130] sm:$0xff] 0.0
    %58 = vst [vmem:[#allocation2 + $0x138] sm:$0xff] 0.0
    %59 = vst [vmem:[#allocation2 + $0x140] sm:$0xff] 0.0
    %60 = vst [vmem:[#allocation2 + $0x148] sm:$0xff] 0.0
    %61 = vst [vmem:[#allocation2 + $0x150] sm:$0xff] 0.0
    %62 = vst [vmem:[#allocation2 + $0x158] sm:$0xff] 0.0
    %63 = vst [vmem:[#allocation2 + $0x160] sm:$0xff] 0.0
    %64 = vst [vmem:[#allocation2 + $0x168] sm:$0xff] 0.0
    %65 = vst [vmem:[#allocation2 + $0x170] sm:$0xff] 0.0
    %66 = vst [vmem:[#allocation2 + $0x178] sm:$0xff] 0.0
    %67 = vst [vmem:[#allocation2 + $0x180] sm:$0xff] 0.0
    %68 = vst [vmem:[#allocation2 + $0x188] sm:$0xff] 0.0
    %69 = vst [vmem:[#allocation2 + $0x190] sm:$0xff] 0.0
    %70 = vst [vmem:[#allocation2 + $0x198] sm:$0xff] 0.0
    %71 = vst [vmem:[#allocation2 + $0x1a0] sm:$0xff] 0.0
    %72 = vst [vmem:[#allocation2 + $0x1a8] sm:$0xff] 0.0
    %73 = vst [vmem:[#allocation2 + $0x1b0] sm:$0xff] 0.0
    %74 = vst [vmem:[#allocation2 + $0x1b8] sm:$0xff] 0.0
    %75 = vst [vmem:[#allocation2 + $0x1c0] sm:$0xff] 0.0
    %76 = vst [vmem:[#allocation2 + $0x1c8] sm:$0xff] 0.0
    %77 = vst [vmem:[#allocation2 + $0x1d0] sm:$0xff] 0.0
    %78 = vst [vmem:[#allocation2 + $0x1d8] sm:$0xff] 0.0
    %79 = vst [vmem:[#allocation2 + $0x1e0] sm:$0xff] 0.0
    %80 = vst [vmem:[#allocation2 + $0x1e8] sm:$0xff] 0.0
    %81 = vst [vmem:[#allocation2 + $0x1f0] sm:$0xff] 0.0
    %82 = vst [vmem:[#allocation2 + $0x1f8] sm:$0xff] 0.0
  $region17: #{_lambda_.36} parent=0 // pred_fallthru
    _
  %v83 = vld [vmem:[#allocation2] sm:$0xff]
  %v84 = vld [vmem:[#allocation2 + $0x8] sm:$0xff]
  %v85 = vld [vmem:[#allocation2 + $0x10] sm:$0xff]
  %v86 = vld [vmem:[#allocation2 + $0x18] sm:$0xff]
  %v87 = vld [vmem:[#allocation2 + $0x20] sm:$0xff]
  %v88 = vld [vmem:[#allocation2 + $0x28] sm:$0xff]
  %v89 = vld [vmem:[#allocation2 + $0x30] sm:$0xff]
  %v90 = vld [vmem:[#allocation2 + $0x38] sm:$0xff]
  %v91 = vld [vmem:[#allocation2 + $0x40] sm:$0xff]
  %v92 = vld [vmem:[#allocation2 + $0x48] sm:$0xff]
  %v93 = vld [vmem:[#allocation2 + $0x50] sm:$0xff]
  %v94 = vld [vmem:[#allocation2 + $0x58] sm:$0xff]
  %v95 = vld [vmem:[#allocation2 + $0x60] sm:$0xff]
  %v96 = vld [vmem:[#allocation2 + $0x68] sm:$0xff]
  %v97 = vld [vmem:[#allocation2 + $0x70] sm:$0xff]
  %v98 = vld [vmem:[#allocation2 + $0x78] sm:$0xff]
  %v99 = vld [vmem:[#allocation2 + $0x80] sm:$0xff]
  %v100 = vld [vmem:[#allocation2 + $0x88] sm:$0xff]
  %v101 = vld [vmem:[#allocation2 + $0x90] sm:$0xff]
  %v102 = vld [vmem:[#allocation2 + $0x98] sm:$0xff]
  %v103 = vld [vmem:[#allocation2 + $0xa0] sm:$0xff]
  %v104 = vld [vmem:[#allocation2 + $0xa8] sm:$0xff]
  %v105 = vld [vmem:[#allocation2 + $0xb0] sm:$0xff]
  %v106 = vld [vmem:[#allocation2 + $0xb8] sm:$0xff]
  %v107 = vld [vmem:[#allocation2 + $0xc0] sm:$0xff]
  %v108 = vld [vmem:[#allocation2 + $0xc8] sm:$0xff]
  %v109 = vld [vmem:[#allocation2 + $0xd0] sm:$0xff]
  %v110 = vld [vmem:[#allocation2 + $0xd8] sm:$0xff]
  %v111 = vld [vmem:[#allocation2 + $0xe0] sm:$0xff]
  %v112 = vld [vmem:[#allocation2 + $0xe8] sm:$0xff]
  %v113 = vld [vmem:[#allocation2 + $0xf0] sm:$0xff]
  %v114 = vld [vmem:[#allocation2 + $0xf8] sm:$0xff]
  %v115 = vld [vmem:[#allocation2 + $0x100] sm:$0xff]
  %v116 = vld [vmem:[#allocation2 + $0x108] sm:$0xff]
  %v117 = vld [vmem:[#allocation2 + $0x110] sm:$0xff]
  %v118 = vld [vmem:[#allocation2 + $0x118] sm:$0xff]
  %v119 = vld [vmem:[#allocation2 + $0x120] sm:$0xff]
  %v120 = vld [vmem:[#allocation2 + $0x128] sm:$0xff]
  %v121 = vld [vmem:[#allocation2 + $0x130] sm:$0xff]
  %v122 = vld [vmem:[#allocation2 + $0x138] sm:$0xff]
  %v123 = vld [vmem:[#allocation2 + $0x140] sm:$0xff]
  %v124 = vld [vmem:[#allocation2 + $0x148] sm:$0xff]
  %v125 = vld [vmem:[#allocation2 + $0x150] sm:$0xff]
  %v126 = vld [vmem:[#allocation2 + $0x158] sm:$0xff]
  %v127 = vld [vmem:[#allocation2 + $0x160] sm:$0xff]
  %v128 = vld [vmem:[#allocation2 + $0x168] sm:$0xff]
  %v129 = vld [vmem:[#allocation2 + $0x170] sm:$0xff]
  %v130 = vld [vmem:[#allocation2 + $0x178] sm:$0xff]
  %v131 = vld [vmem:[#allocation2 + $0x180] sm:$0xff]
  %v132 = vld [vmem:[#allocation2 + $0x188] sm:$0xff]
  %v133 = vld [vmem:[#allocation2 + $0x190] sm:$0xff]
  %v134 = vld [vmem:[#allocation2 + $0x198] sm:$0xff]
  %v135 = vld [vmem:[#allocation2 + $0x1a0] sm:$0xff]
  %v136 = vld [vmem:[#allocation2 + $0x1a8] sm:$0xff]
  %v137 = vld [vmem:[#allocation2 + $0x1b0] sm:$0xff]
  %v138 = vld [vmem:[#allocation2 + $0x1b8] sm:$0xff]
  %v139 = vld [vmem:[#allocation2 + $0x1c0] sm:$0xff]
  %v140 = vld [vmem:[#allocation2 + $0x1c8] sm:$0xff]
  %v141 = vld [vmem:[#allocation2 + $0x1d0] sm:$0xff]
  %v142 = vld [vmem:[#allocation2 + $0x1d8] sm:$0xff]
  %v143 = vld [vmem:[#allocation2 + $0x1e0] sm:$0xff]
  %v144 = vld [vmem:[#allocation2 + $0x1e8] sm:$0xff]
  %v145 = vld [vmem:[#allocation2 + $0x1f0] sm:$0xff]
  %v146 = vld [vmem:[#allocation2 + $0x1f8] sm:$0xff]
  %v147 = vld [vmem:[%s0] sm:$0xf]
  %v148 = vld [vmem:[%s0 + $0x4] sm:$0xf]
  %v149 = vld [vmem:[%s0 + $0x8] sm:$0xf]
  %v150 = vld [vmem:[%s0 + $0xc] sm:$0xf]
  %v151 = vld [vmem:[%s0 + $0x10] sm:$0xf]
  %v152 = vld [vmem:[%s0 + $0x14] sm:$0xf]
  %v153 = vld [vmem:[%s0 + $0x18] sm:$0xf]
  %v154 = vld [vmem:[%s0 + $0x1c] sm:$0xf]
  %v155 = vld [vmem:[%s0 + $0x20] sm:$0xf]
  %v156 = vld [vmem:[%s0 + $0x24] sm:$0xf]
  %v157 = vld [vmem:[%s0 + $0x28] sm:$0xf]
  %v158 = vld [vmem:[%s0 + $0x2c] sm:$0xf]
  %v159 = vld [vmem:[%s0 + $0x30] sm:$0xf]
  %v160 = vld [vmem:[%s0 + $0x34] sm:$0xf]
  %v161 = vld [vmem:[%s0 + $0x38] sm:$0xf]
  %v162 = vld [vmem:[%s0 + $0x3c] sm:$0xf]
  %v163 = vld [vmem:[%s0 + $0x40] sm:$0xf]
  %v164 = vld [vmem:[%s0 + $0x44] sm:$0xf]
  %v165 = vld [vmem:[%s0 + $0x48] sm:$0xf]
  %v166 = vld [vmem:[%s0 + $0x4c] sm:$0xf]
  %v167 = vld [vmem:[%s0 + $0x50] sm:$0xf]
  %v168 = vld [vmem:[%s0 + $0x54] sm:$0xf]
  %v169 = vld [vmem:[%s0 + $0x58] sm:$0xf]
  %v170 = vld [vmem:[%s0 + $0x5c] sm:$0xf]
  %v171 = vld [vmem:[%s0 + $0x60] sm:$0xf]
  %v172 = vld [vmem:[%s0 + $0x64] sm:$0xf]
  %v173 = vld [vmem:[%s0 + $0x68] sm:$0xf]
  %v174 = vld [vmem:[%s0 + $0x6c] sm:$0xf]
  %v175 = vld [vmem:[%s0 + $0x70] sm:$0xf]
  %v176 = vld [vmem:[%s0 + $0x74] sm:$0xf]
  %v177 = vld [vmem:[%s0 + $0x78] sm:$0xf]
  %v178 = vld [vmem:[%s0 + $0x7c] sm:$0xf]
  %v179 = vld [vmem:[%s0 + $0x80] sm:$0xf]
  %v180 = vld [vmem:[%s0 + $0x84] sm:$0xf]
  %v181 = vld [vmem:[%s0 + $0x88] sm:$0xf]
  %v182 = vld [vmem:[%s0 + $0x8c] sm:$0xf]
  %v183 = vld [vmem:[%s0 + $0x90] sm:$0xf]
  %v184 = vld [vmem:[%s0 + $0x94] sm:$0xf]
  %v185 = vld [vmem:[%s0 + $0x98] sm:$0xf]
  %v186 = vld [vmem:[%s0 + $0x9c] sm:$0xf]
  %v187 = vld [vmem:[%s0 + $0xa0] sm:$0xf]
  %v188 = vld [vmem:[%s0 + $0xa4] sm:$0xf]
  %v189 = vld [vmem:[%s0 + $0xa8] sm:$0xf]
  %v190 = vld [vmem:[%s0 + $0xac] sm:$0xf]
  %v191 = vld [vmem:[%s0 + $0xb0] sm:$0xf]
  %v192 = vld [vmem:[%s0 + $0xb4] sm:$0xf]
  %v193 = vld [vmem:[%s0 + $0xb8] sm:$0xf]
  %v194 = vld [vmem:[%s0 + $0xbc] sm:$0xf]
  %v195 = vld [vmem:[%s0 + $0xc0] sm:$0xf]
  %v196 = vld [vmem:[%s0 + $0xc4] sm:$0xf]
  %v197 = vld [vmem:[%s0 + $0xc8] sm:$0xf]
  %v198 = vld [vmem:[%s0 + $0xcc] sm:$0xf]
  %v199 = vld [vmem:[%s0 + $0xd0] sm:$0xf]
  %v200 = vld [vmem:[%s0 + $0xd4] sm:$0xf]
  %v201 = vld [vmem:[%s0 + $0xd8] sm:$0xf]
  %v202 = vld [vmem:[%s0 + $0xdc] sm:$0xf]
  %v203 = vld [vmem:[%s0 + $0xe0] sm:$0xf]
  %v204 = vld [vmem:[%s0 + $0xe4] sm:$0xf]
  %v205 = vld [vmem:[%s0 + $0xe8] sm:$0xf]
  %v206 = vld [vmem:[%s0 + $0xec] sm:$0xf]
  %v207 = vld [vmem:[%s0 + $0xf0] sm:$0xf]
  %v208 = vld [vmem:[%s0 + $0xf4] sm:$0xf]
  %v209 = vld [vmem:[%s0 + $0xf8] sm:$0xf]
  %v210 = vld [vmem:[%s0 + $0xfc] sm:$0xf]
  %v211 = vld [vmem:[%s1] sm:$0xf]
  %v212 = vld [vmem:[%s1 + $0x4] sm:$0xf]
  %v213 = vld [vmem:[%s1 + $0x8] sm:$0xf]
  %v214 = vld [vmem:[%s1 + $0xc] sm:$0xf]
  %v215 = vld [vmem:[%s1 + $0x10] sm:$0xf]
  %v216 = vld [vmem:[%s1 + $0x14] sm:$0xf]
  %v217 = vld [vmem:[%s1 + $0x18] sm:$0xf]
  %v218 = vld [vmem:[%s1 + $0x1c] sm:$0xf]
  %v219 = vld [vmem:[%s1 + $0x20] sm:$0xf]
  %v220 = vld [vmem:[%s1 + $0x24] sm:$0xf]
  %v221 = vld [vmem:[%s1 + $0x28] sm:$0xf]
  %v222 = vld [vmem:[%s1 + $0x2c] sm:$0xf]
  %v223 = vld [vmem:[%s1 + $0x30] sm:$0xf]
  %v224 = vld [vmem:[%s1 + $0x34] sm:$0xf]
  %v225 = vld [vmem:[%s1 + $0x38] sm:$0xf]
  %v226 = vld [vmem:[%s1 + $0x3c] sm:$0xf]
  %v291 = vunpack.c.l.b16 %v147
  %v292 = vunpack.c.l.b16 %v148
  %v293 = vunpack.c.l.b16 %v149
  %v294 = vunpack.c.l.b16 %v150
  %v295 = vunpack.c.l.b16 %v151
  %v296 = vunpack.c.l.b16 %v152
  %v297 = vunpack.c.l.b16 %v153
  %v298 = vunpack.c.l.b16 %v154
  %v299 = vunpack.c.l.b16 %v155
  %v300 = vunpack.c.l.b16 %v156
  %v301 = vunpack.c.l.b16 %v157
  %v302 = vunpack.c.l.b16 %v158
  %v303 = vunpack.c.l.b16 %v159
  %v304 = vunpack.c.l.b16 %v160
  %v305 = vunpack.c.l.b16 %v161
  %v306 = vunpack.c.l.b16 %v162
  %v307 = vunpack.c.l.b16 %v163
  %v308 = vunpack.c.l.b16 %v164
  %v309 = vunpack.c.l.b16 %v165
  %v310 = vunpack.c.l.b16 %v166
  %v311 = vunpack.c.l.b16 %v167
  %v312 = vunpack.c.l.b16 %v168
  %v313 = vunpack.c.l.b16 %v169
  %v314 = vunpack.c.l.b16 %v170
  %v315 = vunpack.c.l.b16 %v171
  %v316 = vunpack.c.l.b16 %v172
  %v317 = vunpack.c.l.b16 %v173
  %v318 = vunpack.c.l.b16 %v174
  %v319 = vunpack.c.l.b16 %v175
  %v320 = vunpack.c.l.b16 %v176
  %v321 = vunpack.c.l.b16 %v177
  %v322 = vunpack.c.l.b16 %v178
  %v323 = vunpack.c.l.b16 %v179
  %v324 = vunpack.c.l.b16 %v180
  %v325 = vunpack.c.l.b16 %v181
  %v326 = vunpack.c.l.b16 %v182
  %v327 = vunpack.c.l.b16 %v183
  %v328 = vunpack.c.l.b16 %v184
  %v329 = vunpack.c.l.b16 %v185
  %v330 = vunpack.c.l.b16 %v186
  %v331 = vunpack.c.l.b16 %v187
  %v332 = vunpack.c.l.b16 %v188
  %v333 = vunpack.c.l.b16 %v189
  %v334 = vunpack.c.l.b16 %v190
  %v335 = vunpack.c.l.b16 %v191
  %v336 = vunpack.c.l.b16 %v192
  %v337 = vunpack.c.l.b16 %v193
  %v338 = vunpack.c.l.b16 %v194
  %v339 = vunpack.c.l.b16 %v195
  %v340 = vunpack.c.l.b16 %v196
  %v341 = vunpack.c.l.b16 %v197
  %v342 = vunpack.c.l.b16 %v198
  %v343 = vunpack.c.l.b16 %v199
  %v344 = vunpack.c.l.b16 %v200
  %v345 = vunpack.c.l.b16 %v201
  %v346 = vunpack.c.l.b16 %v202
  %v347 = vunpack.c.l.b16 %v203
  %v348 = vunpack.c.l.b16 %v204
  %v349 = vunpack.c.l.b16 %v205
  %v350 = vunpack.c.l.b16 %v206
  %v351 = vunpack.c.l.b16 %v207
  %v352 = vunpack.c.l.b16 %v208
  %v353 = vunpack.c.l.b16 %v209
  %v354 = vunpack.c.l.b16 %v210
  %v355 = vpack.c.b16 %v292, %v291
  %v356 = vpack.c.b16 %v294, %v293
  %v357 = vpack.c.b16 %v296, %v295
  %v358 = vpack.c.b16 %v298, %v297
  %v359 = vpack.c.b16 %v300, %v299
  %v360 = vpack.c.b16 %v302, %v301
  %v361 = vpack.c.b16 %v304, %v303
  %v362 = vpack.c.b16 %v306, %v305
  %v363 = vpack.c.b16 %v308, %v307
  %v364 = vpack.c.b16 %v310, %v309
  %v365 = vpack.c.b16 %v312, %v311
  %v366 = vpack.c.b16 %v314, %v313
  %v367 = vpack.c.b16 %v316, %v315
  %v368 = vpack.c.b16 %v318, %v317
  %v369 = vpack.c.b16 %v320, %v319
  %v370 = vpack.c.b16 %v322, %v321
  %v371 = vpack.c.b16 %v324, %v323
  %v372 = vpack.c.b16 %v326, %v325
  %v373 = vpack.c.b16 %v328, %v327
  %v374 = vpack.c.b16 %v330, %v329
  %v375 = vpack.c.b16 %v332, %v331
  %v376 = vpack.c.b16 %v334, %v333
  %v377 = vpack.c.b16 %v336, %v335
  %v378 = vpack.c.b16 %v338, %v337
  %v379 = vpack.c.b16 %v340, %v339
  %v380 = vpack.c.b16 %v342, %v341
  %v381 = vpack.c.b16 %v344, %v343
  %v382 = vpack.c.b16 %v346, %v345
  %v383 = vpack.c.b16 %v348, %v347
  %v384 = vpack.c.b16 %v350, %v349
  %v385 = vpack.c.b16 %v352, %v351
  %v386 = vpack.c.b16 %v354, %v353
  %v435 = vunpack.c.l.b16 %v211
  %v436 = vunpack.c.l.b16 %v212
  %v437 = vunpack.c.l.b16 %v213
  %v438 = vunpack.c.l.b16 %v214
  %v439 = vunpack.c.l.b16 %v215
  %v440 = vunpack.c.l.b16 %v216
  %v441 = vunpack.c.l.b16 %v217
  %v442 = vunpack.c.l.b16 %v218
  %v443 = vunpack.c.l.b16 %v219
  %v444 = vunpack.c.l.b16 %v220
  %v445 = vunpack.c.l.b16 %v221
  %v446 = vunpack.c.l.b16 %v222
  %v447 = vunpack.c.l.b16 %v223
  %v448 = vunpack.c.l.b16 %v224
  %v449 = vunpack.c.l.b16 %v225
  %v450 = vunpack.c.l.b16 %v226
  %v451 = vpack.c.b16 %v436, %v435
  %v452 = vpack.c.b16 %v438, %v437
  %v453 = vpack.c.b16 %v440, %v439
  %v454 = vpack.c.b16 %v442, %v441
  %v455 = vpack.c.b16 %v444, %v443
  %v456 = vpack.c.b16 %v446, %v445
  %v457 = vpack.c.b16 %v448, %v447
  %v458 = vpack.c.b16 %v450, %v449
  %467 = vmatprep.subr.bf16.mxu0 0
  %468 = vmatpush1.bf16.msra.mxu0 %v451
  %469 = vmatprep.subr.bf16.mxu0 0
  %470 = vmatpush1.bf16.msra.mxu0 %v452
  %471 = vmatprep.subr.bf16.mxu0 0
  %472 = vmatpush1.bf16.msra.mxu0 %v453
  %473 = vmatprep.subr.bf16.mxu0 0
  %474 = vmatpush1.bf16.msra.mxu0 %v454
  %475 = vmatprep.subr.bf16.mxu0 0
  %476 = vmatpush1.bf16.msra.mxu0 %v455
  %477 = vmatprep.subr.bf16.mxu0 0
  %478 = vmatpush1.bf16.msra.mxu0 %v456
  %479 = vmatprep.subr.bf16.mxu0 0
  %480 = vmatpush1.bf16.msra.mxu0 %v457
  %481 = vmatprep.subr.bf16.mxu0 0
  %482 = vmatpush1.bf16.msra.mxu0 %v458
  %483 = vmatprep.subr.bf16.mxu0 0
  %484 = vmatpush1.bf16.msra.mxu0 0
  %485 = vmatprep.subr.bf16.mxu0 0
  %486 = vmatpush1.bf16.msra.mxu0 0
  %487 = vmatprep.subr.bf16.mxu0 0
  %488 = vmatpush1.bf16.msra.mxu0 0
  %489 = vmatprep.subr.bf16.mxu0 0
  %490 = vmatpush1.bf16.msra.mxu0 0
  %491 = vmatprep.subr.bf16.mxu0 0
  %492 = vmatpush1.bf16.msra.mxu0 0
  %493 = vmatprep.subr.bf16.mxu0 0
  %494 = vmatpush1.bf16.msra.mxu0 0
  %495 = vmatprep.subr.bf16.mxu0 0
  %496 = vmatpush1.bf16.msra.mxu0 0
  %497 = vmatprep.subr.bf16.mxu0 0
  %498 = vmatpush1.bf16.msra.mxu0 0
  %499 = vmatprep.mubr.bf16.mxu0 0
  %500 = vmatmul.mubr.bf16.gmra.mrb[0].mxu0 %v355
  %v501 = vpop.f32.mrb[0].mxu0
  %v502 = vadd.f32 0.0, %v501
  %v503 = vpop.f32.mrb[0].mxu0
  %v504 = vpop.f32.mrb[0].mxu0
  %v505 = vadd.f32 0.0, %v504
  %v506 = vpop.f32.mrb[0].mxu0
  %507 = vmatprep.mubr.bf16.mxu0 0
  %508 = vmatmul.mubr.bf16.gmra.mrb[0].mxu0 %v356
  %v509 = vpop.f32.mrb[0].mxu0
  %v510 = vadd.f32 0.0, %v509
  %v511 = vpop.f32.mrb[0].mxu0
  %v512 = vpop.f32.mrb[0].mxu0
  %v513 = vadd.f32 0.0, %v512
  %v514 = vpop.f32.mrb[0].mxu0
  %515 = vmatprep.mubr.bf16.mxu0 0
  %516 = vmatmul.mubr.bf16.gmra.mrb[0].mxu0 %v357
  %v517 = vpop.f32.mrb[0].mxu0
  %v518 = vadd.f32 0.0, %v517
  %v519 = vpop.f32.mrb[0].mxu0
  %v520 = vpop.f32.mrb[0].mxu0
  %v521 = vadd.f32 0.0, %v520
  %v522 = vpop.f32.mrb[0].mxu0
  %523 = vmatprep.mubr.bf16.mxu0 0
  %524 = vmatmul.mubr.bf16.gmra.mrb[0].mxu0 %v358
  %v525 = vpop.f32.mrb[0].mxu0
  %v526 = vadd.f32 0.0, %v525
  %v527 = vpop.f32.mrb[0].mxu0
  %v528 = vpop.f32.mrb[0].mxu0
  %v529 = vadd.f32 0.0, %v528
  %v530 = vpop.f32.mrb[0].mxu0
  %531 = vmatprep.mubr.bf16.mxu0 0
  %532 = vmatmul.mubr.bf16.gmra.mrb[0].mxu0 %v359
  %v533 = vpop.f32.mrb[0].mxu0
  %v534 = vadd.f32 0.0, %v533
  %v535 = vpop.f32.mrb[0].mxu0
  %v536 = vpop.f32.mrb[0].mxu0
  %v537 = vadd.f32 0.0, %v536
  %v538 = vpop.f32.mrb[0].mxu0
  %539 = vmatprep.mubr.bf16.mxu0 0
  %540 = vmatmul.mubr.bf16.gmra.mrb[0].mxu0 %v360
  %v541 = vpop.f32.mrb[0].mxu0
  %v542 = vadd.f32 0.0, %v541
  %v543 = vpop.f32.mrb[0].mxu0
  %v544 = vpop.f32.mrb[0].mxu0
  %v545 = vadd.f32 0.0, %v544
  %v546 = vpop.f32.mrb[0].mxu0
  %547 = vmatprep.mubr.bf16.mxu0 0
  %548 = vmatmul.mubr.bf16.gmra.mrb[0].mxu0 %v361
  %v549 = vpop.f32.mrb[0].mxu0
  %v550 = vadd.f32 0.0, %v549
  %v551 = vpop.f32.mrb[0].mxu0
  %v552 = vpop.f32.mrb[0].mxu0
  %v553 = vadd.f32 0.0, %v552
  %v554 = vpop.f32.mrb[0].mxu0
  %555 = vmatprep.mubr.bf16.mxu0 0
  %556 = vmatmul.mubr.bf16.gmra.mrb[0].mxu0 %v362
  %v557 = vpop.f32.mrb[0].mxu0
  %v558 = vadd.f32 0.0, %v557
  %v559 = vpop.f32.mrb[0].mxu0
  %v560 = vpop.f32.mrb[0].mxu0
  %v561 = vadd.f32 0.0, %v560
  %v562 = vpop.f32.mrb[0].mxu0
  %563 = vmatprep.mubr.bf16.mxu0 0
  %564 = vmatmul.mubr.bf16.gmra.mrb[0].mxu0 %v363
  %v565 = vpop.f32.mrb[0].mxu0
  %v566 = vadd.f32 0.0, %v565
  %v567 = vpop.f32.mrb[0].mxu0
  %v568 = vpop.f32.mrb[0].mxu0
  %v569 = vadd.f32 0.0, %v568
  %v570 = vpop.f32.mrb[0].mxu0
  %571 = vmatprep.mubr.bf16.mxu0 0
  %572 = vmatmul.mubr.bf16.gmra.mrb[0].mxu0 %v364
  %v573 = vpop.f32.mrb[0].mxu0
  %v574 = vadd.f32 0.0, %v573
  %v575 = vpop.f32.mrb[0].mxu0
  %v576 = vpop.f32.mrb[0].mxu0
  %v577 = vadd.f32 0.0, %v576
  %v578 = vpop.f32.mrb[0].mxu0
  %579 = vmatprep.mubr.bf16.mxu0 0
  %580 = vmatmul.mubr.bf16.gmra.mrb[0].mxu0 %v365
  %v581 = vpop.f32.mrb[0].mxu0
  %v582 = vadd.f32 0.0, %v581
  %v583 = vpop.f32.mrb[0].mxu0
  %v584 = vpop.f32.mrb[0].mxu0
  %v585 = vadd.f32 0.0, %v584
  %v586 = vpop.f32.mrb[0].mxu0
  %587 = vmatprep.mubr.bf16.mxu0 0
  %588 = vmatmul.mubr.bf16.gmra.mrb[0].mxu0 %v366
  %v589 = vpop.f32.mrb[0].mxu0
  %v590 = vadd.f32 0.0, %v589
  %v591 = vpop.f32.mrb[0].mxu0
  %v592 = vpop.f32.mrb[0].mxu0
  %v593 = vadd.f32 0.0, %v592
  %v594 = vpop.f32.mrb[0].mxu0
  %595 = vmatprep.mubr.bf16.mxu0 0
  %596 = vmatmul.mubr.bf16.gmra.mrb[0].mxu0 %v367
  %v597 = vpop.f32.mrb[0].mxu0
  %v598 = vadd.f32 0.0, %v597
  %v599 = vpop.f32.mrb[0].mxu0
  %v600 = vpop.f32.mrb[0].mxu0
  %v601 = vadd.f32 0.0, %v600
  %v602 = vpop.f32.mrb[0].mxu0
  %603 = vmatprep.mubr.bf16.mxu0 0
  %604 = vmatmul.mubr.bf16.gmra.mrb[0].mxu0 %v368
  %v605 = vpop.f32.mrb[0].mxu0
  %v606 = vadd.f32 0.0, %v605
  %v607 = vpop.f32.mrb[0].mxu0
  %v608 = vpop.f32.mrb[0].mxu0
  %v609 = vadd.f32 0.0, %v608
  %v610 = vpop.f32.mrb[0].mxu0
  %611 = vmatprep.mubr.bf16.mxu0 0
  %612 = vmatmul.mubr.bf16.gmra.mrb[0].mxu0 %v369
  %v613 = vpop.f32.mrb[0].mxu0
  %v614 = vadd.f32 0.0, %v613
  %v615 = vpop.f32.mrb[0].mxu0
  %v616 = vpop.f32.mrb[0].mxu0
  %v617 = vadd.f32 0.0, %v616
  %v618 = vpop.f32.mrb[0].mxu0
  %619 = vmatprep.mubr.bf16.mxu0 0
  %620 = vmatmul.mubr.bf16.gmra.mrb[0].mxu0 %v370
  %v621 = vpop.f32.mrb[0].mxu0
  %v622 = vadd.f32 0.0, %v621
  %v623 = vpop.f32.mrb[0].mxu0
  %v624 = vpop.f32.mrb[0].mxu0
  %v625 = vadd.f32 0.0, %v624
  %v626 = vpop.f32.mrb[0].mxu0
  %627 = vmatprep.mubr.bf16.mxu0 0
  %628 = vmatmul.mubr.bf16.gmra.mrb[0].mxu0 %v371
  %v629 = vpop.f32.mrb[0].mxu0
  %v630 = vadd.f32 0.0, %v629
  %v631 = vpop.f32.mrb[0].mxu0
  %v632 = vpop.f32.mrb[0].mxu0
  %v633 = vadd.f32 0.0, %v632
  %v634 = vpop.f32.mrb[0].mxu0
  %635 = vmatprep.mubr.bf16.mxu0 0
  %636 = vmatmul.mubr.bf16.gmra.mrb[0].mxu0 %v372
  %v637 = vpop.f32.mrb[0].mxu0
  %v638 = vadd.f32 0.0, %v637
  %v639 = vpop.f32.mrb[0].mxu0
  %v640 = vpop.f32.mrb[0].mxu0
  %v641 = vadd.f32 0.0, %v640
  %v642 = vpop.f32.mrb[0].mxu0
  %643 = vmatprep.mubr.bf16.mxu0 0
  %644 = vmatmul.mubr.bf16.gmra.mrb[0].mxu0 %v373
  %v645 = vpop.f32.mrb[0].mxu0
  %v646 = vadd.f32 0.0, %v645
  %v647 = vpop.f32.mrb[0].mxu0
  %v648 = vpop.f32.mrb[0].mxu0
  %v649 = vadd.f32 0.0, %v648
  %v650 = vpop.f32.mrb[0].mxu0
  %651 = vmatprep.mubr.bf16.mxu0 0
  %652 = vmatmul.mubr.bf16.gmra.mrb[0].mxu0 %v374
  %v653 = vpop.f32.mrb[0].mxu0
  %v654 = vadd.f32 0.0, %v653
  %v655 = vpop.f32.mrb[0].mxu0
  %v656 = vpop.f32.mrb[0].mxu0
  %v657 = vadd.f32 0.0, %v656
  %v658 = vpop.f32.mrb[0].mxu0
  %659 = vmatprep.mubr.bf16.mxu0 0
  %660 = vmatmul.mubr.bf16.gmra.mrb[0].mxu0 %v375
  %v661 = vpop.f32.mrb[0].mxu0
  %v662 = vadd.f32 0.0, %v661
  %v663 = vpop.f32.mrb[0].mxu0
  %v664 = vpop.f32.mrb[0].mxu0
  %v665 = vadd.f32 0.0, %v664
  %v666 = vpop.f32.mrb[0].mxu0
  %667 = vmatprep.mubr.bf16.mxu0 0
  %668 = vmatmul.mubr.bf16.gmra.mrb[0].mxu0 %v376
  %v669 = vpop.f32.mrb[0].mxu0
  %v670 = vadd.f32 0.0, %v669
  %v671 = vpop.f32.mrb[0].mxu0
  %v672 = vpop.f32.mrb[0].mxu0
  %v673 = vadd.f32 0.0, %v672
  %v674 = vpop.f32.mrb[0].mxu0
  %675 = vmatprep.mubr.bf16.mxu0 0
  %676 = vmatmul.mubr.bf16.gmra.mrb[0].mxu0 %v377
  %v677 = vpop.f32.mrb[0].mxu0
  %v678 = vadd.f32 0.0, %v677
  %v679 = vpop.f32.mrb[0].mxu0
  %v680 = vpop.f32.mrb[0].mxu0
  %v681 = vadd.f32 0.0, %v680
  %v682 = vpop.f32.mrb[0].mxu0
  %683 = vmatprep.mubr.bf16.mxu0 0
  %684 = vmatmul.mubr.bf16.gmra.mrb[0].mxu0 %v378
  %v685 = vpop.f32.mrb[0].mxu0
  %v686 = vadd.f32 0.0, %v685
  %v687 = vpop.f32.mrb[0].mxu0
  %v688 = vpop.f32.mrb[0].mxu0
  %v689 = vadd.f32 0.0, %v688
  %v690 = vpop.f32.mrb[0].mxu0
  %691 = vmatprep.mubr.bf16.mxu0 0
  %692 = vmatmul.mubr.bf16.gmra.mrb[0].mxu0 %v379
  %v693 = vpop.f32.mrb[0].mxu0
  %v694 = vadd.f32 0.0, %v693
  %v695 = vpop.f32.mrb[0].mxu0
  %v696 = vpop.f32.mrb[0].mxu0
  %v697 = vadd.f32 0.0, %v696
  %v698 = vpop.f32.mrb[0].mxu0
  %699 = vmatprep.mubr.bf16.mxu0 0
  %700 = vmatmul.mubr.bf16.gmra.mrb[0].mxu0 %v380
  %v701 = vpop.f32.mrb[0].mxu0
  %v702 = vadd.f32 0.0, %v701
  %v703 = vpop.f32.mrb[0].mxu0
  %v704 = vpop.f32.mrb[0].mxu0
  %v705 = vadd.f32 0.0, %v704
  %v706 = vpop.f32.mrb[0].mxu0
  %707 = vmatprep.mubr.bf16.mxu0 0
  %708 = vmatmul.mubr.bf16.gmra.mrb[0].mxu0 %v381
  %v709 = vpop.f32.mrb[0].mxu0
  %v710 = vadd.f32 0.0, %v709
  %v711 = vpop.f32.mrb[0].mxu0
  %v712 = vpop.f32.mrb[0].mxu0
  %v713 = vadd.f32 0.0, %v712
  %v714 = vpop.f32.mrb[0].mxu0
  %715 = vmatprep.mubr.bf16.mxu0 0
  %716 = vmatmul.mubr.bf16.gmra.mrb[0].mxu0 %v382
  %v717 = vpop.f32.mrb[0].mxu0
  %v718 = vadd.f32 0.0, %v717
  %v719 = vpop.f32.mrb[0].mxu0
  %v720 = vpop.f32.mrb[0].mxu0
  %v721 = vadd.f32 0.0, %v720
  %v722 = vpop.f32.mrb[0].mxu0
  %723 = vmatprep.mubr.bf16.mxu0 0
  %724 = vmatmul.mubr.bf16.gmra.mrb[0].mxu0 %v383
  %v725 = vpop.f32.mrb[0].mxu0
  %v726 = vadd.f32 0.0, %v725
  %v727 = vpop.f32.mrb[0].mxu0
  %v728 = vpop.f32.mrb[0].mxu0
  %v729 = vadd.f32 0.0, %v728
  %v730 = vpop.f32.mrb[0].mxu0
  %731 = vmatprep.mubr.bf16.mxu0 0
  %732 = vmatmul.mubr.bf16.gmra.mrb[0].mxu0 %v384
  %v733 = vpop.f32.mrb[0].mxu0
  %v734 = vadd.f32 0.0, %v733
  %v735 = vpop.f32.mrb[0].mxu0
  %v736 = vpop.f32.mrb[0].mxu0
  %v737 = vadd.f32 0.0, %v736
  %v738 = vpop.f32.mrb[0].mxu0
  %739 = vmatprep.mubr.bf16.mxu0 0
  %740 = vmatmul.mubr.bf16.gmra.mrb[0].mxu0 %v385
  %v741 = vpop.f32.mrb[0].mxu0
  %v742 = vadd.f32 0.0, %v741
  %v743 = vpop.f32.mrb[0].mxu0
  %v744 = vpop.f32.mrb[0].mxu0
  %v745 = vadd.f32 0.0, %v744
  %v746 = vpop.f32.mrb[0].mxu0
  %747 = vmatprep.mubr.bf16.mxu0 0
  %748 = vmatmul.mubr.bf16.gmra.mrb[0].mxu0 %v386
  %v749 = vpop.f32.mrb[0].mxu0
  %v750 = vadd.f32 0.0, %v749
  %v751 = vpop.f32.mrb[0].mxu0
  %v752 = vpop.f32.mrb[0].mxu0
  %v753 = vadd.f32 0.0, %v752
  %v754 = vpop.f32.mrb[0].mxu0
  %755 = vdwg.mxu0
  %v756 = vadd.f32 %v83, %v502
  %v757 = vadd.f32 %v84, %v505
  %v758 = vadd.f32 %v85, %v510
  %v759 = vadd.f32 %v86, %v513
  %v760 = vadd.f32 %v87, %v518
  %v761 = vadd.f32 %v88, %v521
  %v762 = vadd.f32 %v89, %v526
  %v763 = vadd.f32 %v90, %v529
  %v764 = vadd.f32 %v91, %v534
  %v765 = vadd.f32 %v92, %v537
  %v766 = vadd.f32 %v93, %v542
  %v767 = vadd.f32 %v94, %v545
  %v768 = vadd.f32 %v95, %v550
  %v769 = vadd.f32 %v96, %v553
  %v770 = vadd.f32 %v97, %v558
  %v771 = vadd.f32 %v98, %v561
  %v772 = vadd.f32 %v99, %v566
  %v773 = vadd.f32 %v100, %v569
  %v774 = vadd.f32 %v101, %v574
  %v775 = vadd.f32 %v102, %v577
  %v776 = vadd.f32 %v103, %v582
  %v777 = vadd.f32 %v104, %v585
  %v778 = vadd.f32 %v105, %v590
  %v779 = vadd.f32 %v106, %v593
  %v780 = vadd.f32 %v107, %v598
  %v781 = vadd.f32 %v108, %v601
  %v782 = vadd.f32 %v109, %v606
  %v783 = vadd.f32 %v110, %v609
  %v784 = vadd.f32 %v111, %v614
  %v785 = vadd.f32 %v112, %v617
  %v786 = vadd.f32 %v113, %v622
  %v787 = vadd.f32 %v114, %v625
  %v788 = vadd.f32 %v115, %v630
  %v789 = vadd.f32 %v116, %v633
  %v790 = vadd.f32 %v117, %v638
  %v791 = vadd.f32 %v118, %v641
  %v792 = vadd.f32 %v119, %v646
  %v793 = vadd.f32 %v120, %v649
  %v794 = vadd.f32 %v121, %v654
  %v795 = vadd.f32 %v122, %v657
  %v796 = vadd.f32 %v123, %v662
  %v797 = vadd.f32 %v124, %v665
  %v798 = vadd.f32 %v125, %v670
  %v799 = vadd.f32 %v126, %v673
  %v800 = vadd.f32 %v127, %v678
  %v801 = vadd.f32 %v128, %v681
  %v802 = vadd.f32 %v129, %v686
  %v803 = vadd.f32 %v130, %v689
  %v804 = vadd.f32 %v131, %v694
  %v805 = vadd.f32 %v132, %v697
  %v806 = vadd.f32 %v133, %v702
  %v807 = vadd.f32 %v134, %v705
  %v808 = vadd.f32 %v135, %v710
  %v809 = vadd.f32 %v136, %v713
  %v810 = vadd.f32 %v137, %v718
  %v811 = vadd.f32 %v138, %v721
  %v812 = vadd.f32 %v139, %v726
  %v813 = vadd.f32 %v140, %v729
  %v814 = vadd.f32 %v141, %v734
  %v815 = vadd.f32 %v142, %v737
  %v816 = vadd.f32 %v143, %v742
  %v817 = vadd.f32 %v144, %v745
  %v818 = vadd.f32 %v145, %v750
  %v819 = vadd.f32 %v146, %v753
  %820 = vst [vmem:[#allocation2] sm:$0xff] %v756
  %821 = vst [vmem:[#allocation2 + $0x8] sm:$0xff] %v757
  %822 = vst [vmem:[#allocation2 + $0x10] sm:$0xff] %v758
  %823 = vst [vmem:[#allocation2 + $0x18] sm:$0xff] %v759
  %824 = vst [vmem:[#allocation2 + $0x20] sm:$0xff] %v760
  %825 = vst [vmem:[#allocation2 + $0x28] sm:$0xff] %v761
  %826 = vst [vmem:[#allocation2 + $0x30] sm:$0xff] %v762
  %827 = vst [vmem:[#allocation2 + $0x38] sm:$0xff] %v763
  %828 = vst [vmem:[#allocation2 + $0x40] sm:$0xff] %v764
  %829 = vst [vmem:[#allocation2 + $0x48] sm:$0xff] %v765
  %830 = vst [vmem:[#allocation2 + $0x50] sm:$0xff] %v766
  %831 = vst [vmem:[#allocation2 + $0x58] sm:$0xff] %v767
  %832 = vst [vmem:[#allocation2 + $0x60] sm:$0xff] %v768
  %833 = vst [vmem:[#allocation2 + $0x68] sm:$0xff] %v769
  %834 = vst [vmem:[#allocation2 + $0x70] sm:$0xff] %v770
  %835 = vst [vmem:[#allocation2 + $0x78] sm:$0xff] %v771
  %836 = vst [vmem:[#allocation2 + $0x80] sm:$0xff] %v772
  %837 = vst [vmem:[#allocation2 + $0x88] sm:$0xff] %v773
  %838 = vst [vmem:[#allocation2 + $0x90] sm:$0xff] %v774
  %839 = vst [vmem:[#allocation2 + $0x98] sm:$0xff] %v775
  %840 = vst [vmem:[#allocation2 + $0xa0] sm:$0xff] %v776
  %841 = vst [vmem:[#allocation2 + $0xa8] sm:$0xff] %v777
  %842 = vst [vmem:[#allocation2 + $0xb0] sm:$0xff] %v778
  %843 = vst [vmem:[#allocation2 + $0xb8] sm:$0xff] %v779
  %844 = vst [vmem:[#allocation2 + $0xc0] sm:$0xff] %v780
  %845 = vst [vmem:[#allocation2 + $0xc8] sm:$0xff] %v781
  %846 = vst [vmem:[#allocation2 + $0xd0] sm:$0xff] %v782
  %847 = vst [vmem:[#allocation2 + $0xd8] sm:$0xff] %v783
  %848 = vst [vmem:[#allocation2 + $0xe0] sm:$0xff] %v784
  %849 = vst [vmem:[#allocation2 + $0xe8] sm:$0xff] %v785
  %850 = vst [vmem:[#allocation2 + $0xf0] sm:$0xff] %v786
  %851 = vst [vmem:[#allocation2 + $0xf8] sm:$0xff] %v787
  %852 = vst [vmem:[#allocation2 + $0x100] sm:$0xff] %v788
  %853 = vst [vmem:[#allocation2 + $0x108] sm:$0xff] %v789
  %854 = vst [vmem:[#allocation2 + $0x110] sm:$0xff] %v790
  %855 = vst [vmem:[#allocation2 + $0x118] sm:$0xff] %v791
  %856 = vst [vmem:[#allocation2 + $0x120] sm:$0xff] %v792
  %857 = vst [vmem:[#allocation2 + $0x128] sm:$0xff] %v793
  %858 = vst [vmem:[#allocation2 + $0x130] sm:$0xff] %v794
  %859 = vst [vmem:[#allocation2 + $0x138] sm:$0xff] %v795
  %860 = vst [vmem:[#allocation2 + $0x140] sm:$0xff] %v796
  %861 = vst [vmem:[#allocation2 + $0x148] sm:$0xff] %v797
  %862 = vst [vmem:[#allocation2 + $0x150] sm:$0xff] %v798
  %863 = vst [vmem:[#allocation2 + $0x158] sm:$0xff] %v799
  %864 = vst [vmem:[#allocation2 + $0x160] sm:$0xff] %v800
  %865 = vst [vmem:[#allocation2 + $0x168] sm:$0xff] %v801
  %866 = vst [vmem:[#allocation2 + $0x170] sm:$0xff] %v802
  %867 = vst [vmem:[#allocation2 + $0x178] sm:$0xff] %v803
  %868 = vst [vmem:[#allocation2 + $0x180] sm:$0xff] %v804
  %869 = vst [vmem:[#allocation2 + $0x188] sm:$0xff] %v805
  %870 = vst [vmem:[#allocation2 + $0x190] sm:$0xff] %v806
  %871 = vst [vmem:[#allocation2 + $0x198] sm:$0xff] %v807
  %872 = vst [vmem:[#allocation2 + $0x1a0] sm:$0xff] %v808
  %873 = vst [vmem:[#allocation2 + $0x1a8] sm:$0xff] %v809
  %874 = vst [vmem:[#allocation2 + $0x1b0] sm:$0xff] %v810
  %875 = vst [vmem:[#allocation2 + $0x1b8] sm:$0xff] %v811
  %876 = vst [vmem:[#allocation2 + $0x1c0] sm:$0xff] %v812
  %877 = vst [vmem:[#allocation2 + $0x1c8] sm:$0xff] %v813
  %878 = vst [vmem:[#allocation2 + $0x1d0] sm:$0xff] %v814
  %879 = vst [vmem:[#allocation2 + $0x1d8] sm:$0xff] %v815
  %880 = vst [vmem:[#allocation2 + $0x1e0] sm:$0xff] %v816
  %881 = vst [vmem:[#allocation2 + $0x1e8] sm:$0xff] %v817
  %882 = vst [vmem:[#allocation2 + $0x1f0] sm:$0xff] %v818
  %883 = vst [vmem:[#allocation2 + $0x1f8] sm:$0xff] %v819
  // Predicated region
  $region18: #{_lambda_.36} parent=0 // pred_check
    %p884 = pneg %p15
  $region19: #{_lambda_.36} parent=0 // pred_check_branch
    %886 = sbr.rel (%p884) target = $region21
  $region20: #{_lambda_.36} parent=0 // pred_region
    %v887 = vld [vmem:[#allocation2] sm:$0xff]
    %v888 = vld [vmem:[#allocation2 + $0x8] sm:$0xff]
    %v889 = vld [vmem:[#allocation2 + $0x10] sm:$0xff]
    %v890 = vld [vmem:[#allocation2 + $0x18] sm:$0xff]
    %v891 = vld [vmem:[#allocation2 + $0x20] sm:$0xff]
    %v892 = vld [vmem:[#allocation2 + $0x28] sm:$0xff]
    %v893 = vld [vmem:[#allocation2 + $0x30] sm:$0xff]
    %v894 = vld [vmem:[#allocation2 + $0x38] sm:$0xff]
    %v895 = vld [vmem:[#allocation2 + $0x40] sm:$0xff]
    %v896 = vld [vmem:[#allocation2 + $0x48] sm:$0xff]
    %v897 = vld [vmem:[#allocation2 + $0x50] sm:$0xff]
    %v898 = vld [vmem:[#allocation2 + $0x58] sm:$0xff]
    %v899 = vld [vmem:[#allocation2 + $0x60] sm:$0xff]
    %v900 = vld [vmem:[#allocation2 + $0x68] sm:$0xff]
    %v901 = vld [vmem:[#allocation2 + $0x70] sm:$0xff]
    %v902 = vld [vmem:[#allocation2 + $0x78] sm:$0xff]
    %v903 = vld [vmem:[#allocation2 + $0x80] sm:$0xff]
    %v904 = vld [vmem:[#allocation2 + $0x88] sm:$0xff]
    %v905 = vld [vmem:[#allocation2 + $0x90] sm:$0xff]
    %v906 = vld [vmem:[#allocation2 + $0x98] sm:$0xff]
    %v907 = vld [vmem:[#allocation2 + $0xa0] sm:$0xff]
    %v908 = vld [vmem:[#allocation2 + $0xa8] sm:$0xff]
    %v909 = vld [vmem:[#allocation2 + $0xb0] sm:$0xff]
    %v910 = vld [vmem:[#allocation2 + $0xb8] sm:$0xff]
    %v911 = vld [vmem:[#allocation2 + $0xc0] sm:$0xff]
    %v912 = vld [vmem:[#allocation2 + $0xc8] sm:$0xff]
    %v913 = vld [vmem:[#allocation2 + $0xd0] sm:$0xff]
    %v914 = vld [vmem:[#allocation2 + $0xd8] sm:$0xff]
    %v915 = vld [vmem:[#allocation2 + $0xe0] sm:$0xff]
    %v916 = vld [vmem:[#allocation2 + $0xe8] sm:$0xff]
    %v917 = vld [vmem:[#allocation2 + $0xf0] sm:$0xff]
    %v918 = vld [vmem:[#allocation2 + $0xf8] sm:$0xff]
    %v919 = vld [vmem:[#allocation2 + $0x100] sm:$0xff]
    %v920 = vld [vmem:[#allocation2 + $0x108] sm:$0xff]
    %v921 = vld [vmem:[#allocation2 + $0x110] sm:$0xff]
    %v922 = vld [vmem:[#allocation2 + $0x118] sm:$0xff]
    %v923 = vld [vmem:[#allocation2 + $0x120] sm:$0xff]
    %v924 = vld [vmem:[#allocation2 + $0x128] sm:$0xff]
    %v925 = vld [vmem:[#allocation2 + $0x130] sm:$0xff]
    %v926 = vld [vmem:[#allocation2 + $0x138] sm:$0xff]
    %v927 = vld [vmem:[#allocation2 + $0x140] sm:$0xff]
    %v928 = vld [vmem:[#allocation2 + $0x148] sm:$0xff]
    %v929 = vld [vmem:[#allocation2 + $0x150] sm:$0xff]
    %v930 = vld [vmem:[#allocation2 + $0x158] sm:$0xff]
    %v931 = vld [vmem:[#allocation2 + $0x160] sm:$0xff]
    %v932 = vld [vmem:[#allocation2 + $0x168] sm:$0xff]
    %v933 = vld [vmem:[#allocation2 + $0x170] sm:$0xff]
    %v934 = vld [vmem:[#allocation2 + $0x178] sm:$0xff]
    %v935 = vld [vmem:[#allocation2 + $0x180] sm:$0xff]
    %v936 = vld [vmem:[#allocation2 + $0x188] sm:$0xff]
    %v937 = vld [vmem:[#allocation2 + $0x190] sm:$0xff]
    %v938 = vld [vmem:[#allocation2 + $0x198] sm:$0xff]
    %v939 = vld [vmem:[#allocation2 + $0x1a0] sm:$0xff]
    %v940 = vld [vmem:[#allocation2 + $0x1a8] sm:$0xff]
    %v941 = vld [vmem:[#allocation2 + $0x1b0] sm:$0xff]
    %v942 = vld [vmem:[#allocation2 + $0x1b8] sm:$0xff]
    %v943 = vld [vmem:[#allocation2 + $0x1c0] sm:$0xff]
    %v944 = vld [vmem:[#allocation2 + $0x1c8] sm:$0xff]
    %v945 = vld [vmem:[#allocation2 + $0x1d0] sm:$0xff]
    %v946 = vld [vmem:[#allocation2 + $0x1d8] sm:$0xff]
    %v947 = vld [vmem:[#allocation2 + $0x1e0] sm:$0xff]
    %v948 = vld [vmem:[#allocation2 + $0x1e8] sm:$0xff]
    %v949 = vld [vmem:[#allocation2 + $0x1f0] sm:$0xff]
    %v950 = vld [vmem:[#allocation2 + $0x1f8] sm:$0xff]
    %v951 = vld [vmem:[%s2] sm:$0x1]
    %v953 = vlaneseq
    %v954 = vshrl.u32 %v953, 7
    %v955 = vsub.s32 0, %v954
    %v956 = vrot.slane %v951, %v955
    %v958 = vadd.f32 %v887, %v956
    %v959 = vadd.f32 %v888, %v956
    %v960 = vadd.f32 %v889, %v956
    %v961 = vadd.f32 %v890, %v956
    %v962 = vadd.f32 %v891, %v956
    %v963 = vadd.f32 %v892, %v956
    %v964 = vadd.f32 %v893, %v956
    %v965 = vadd.f32 %v894, %v956
    %v966 = vadd.f32 %v895, %v956
    %v967 = vadd.f32 %v896, %v956
    %v968 = vadd.f32 %v897, %v956
    %v969 = vadd.f32 %v898, %v956
    %v970 = vadd.f32 %v899, %v956
    %v971 = vadd.f32 %v900, %v956
    %v972 = vadd.f32 %v901, %v956
    %v973 = vadd.f32 %v902, %v956
    %v974 = vadd.f32 %v903, %v956
    %v975 = vadd.f32 %v904, %v956
    %v976 = vadd.f32 %v905, %v956
    %v977 = vadd.f32 %v906, %v956
    %v978 = vadd.f32 %v907, %v956
    %v979 = vadd.f32 %v908, %v956
    %v980 = vadd.f32 %v909, %v956
    %v981 = vadd.f32 %v910, %v956
    %v982 = vadd.f32 %v911, %v956
    %v983 = vadd.f32 %v912, %v956
    %v984 = vadd.f32 %v913, %v956
    %v985 = vadd.f32 %v914, %v956
    %v986 = vadd.f32 %v915, %v956
    %v987 = vadd.f32 %v916, %v956
    %v988 = vadd.f32 %v917, %v956
    %v989 = vadd.f32 %v918, %v956
    %v990 = vadd.f32 %v919, %v956
    %v991 = vadd.f32 %v920, %v956
    %v992 = vadd.f32 %v921, %v956
    %v993 = vadd.f32 %v922, %v956
    %v994 = vadd.f32 %v923, %v956
    %v995 = vadd.f32 %v924, %v956
    %v996 = vadd.f32 %v925, %v956
    %v997 = vadd.f32 %v926, %v956
    %v998 = vadd.f32 %v927, %v956
    %v999 = vadd.f32 %v928, %v956
    %v1000 = vadd.f32 %v929, %v956
    %v1001 = vadd.f32 %v930, %v956
    %v1002 = vadd.f32 %v931, %v956
    %v1003 = vadd.f32 %v932, %v956
    %v1004 = vadd.f32 %v933, %v956
    %v1005 = vadd.f32 %v934, %v956
    %v1006 = vadd.f32 %v935, %v956
    %v1007 = vadd.f32 %v936, %v956
    %v1008 = vadd.f32 %v937, %v956
    %v1009 = vadd.f32 %v938, %v956
    %v1010 = vadd.f32 %v939, %v956
    %v1011 = vadd.f32 %v940, %v956
    %v1012 = vadd.f32 %v941, %v956
    %v1013 = vadd.f32 %v942, %v956
    %v1014 = vadd.f32 %v943, %v956
    %v1015 = vadd.f32 %v944, %v956
    %v1016 = vadd.f32 %v945, %v956
    %v1017 = vadd.f32 %v946, %v956
    %v1018 = vadd.f32 %v947, %v956
    %v1019 = vadd.f32 %v948, %v956
    %v1020 = vadd.f32 %v949, %v956
    %v1021 = vadd.f32 %v950, %v956
    %v1022 = vmax.f32 %v958, 0.0
    %v1023 = vmax.f32 %v959, 0.0
    %v1024 = vmax.f32 %v960, 0.0
    %v1025 = vmax.f32 %v961, 0.0
    %v1026 = vmax.f32 %v962, 0.0
    %v1027 = vmax.f32 %v963, 0.0
    %v1028 = vmax.f32 %v964, 0.0
    %v1029 = vmax.f32 %v965, 0.0
    %v1030 = vmax.f32 %v966, 0.0
    %v1031 = vmax.f32 %v967, 0.0
    %v1032 = vmax.f32 %v968, 0.0
    %v1033 = vmax.f32 %v969, 0.0
    %v1034 = vmax.f32 %v970, 0.0
    %v1035 = vmax.f32 %v971, 0.0
    %v1036 = vmax.f32 %v972, 0.0
    %v1037 = vmax.f32 %v973, 0.0
    %v1038 = vmax.f32 %v974, 0.0
    %v1039 = vmax.f32 %v975, 0.0
    %v1040 = vmax.f32 %v976, 0.0
    %v1041 = vmax.f32 %v977, 0.0
    %v1042 = vmax.f32 %v978, 0.0
    %v1043 = vmax.f32 %v979, 0.0
    %v1044 = vmax.f32 %v980, 0.0
    %v1045 = vmax.f32 %v981, 0.0
    %v1046 = vmax.f32 %v982, 0.0
    %v1047 = vmax.f32 %v983, 0.0
    %v1048 = vmax.f32 %v984, 0.0
    %v1049 = vmax.f32 %v985, 0.0
    %v1050 = vmax.f32 %v986, 0.0
    %v1051 = vmax.f32 %v987, 0.0
    %v1052 = vmax.f32 %v988, 0.0
    %v1053 = vmax.f32 %v989, 0.0
    %v1054 = vmax.f32 %v990, 0.0
    %v1055 = vmax.f32 %v991, 0.0
    %v1056 = vmax.f32 %v992, 0.0
    %v1057 = vmax.f32 %v993, 0.0
    %v1058 = vmax.f32 %v994, 0.0
    %v1059 = vmax.f32 %v995, 0.0
    %v1060 = vmax.f32 %v996, 0.0
    %v1061 = vmax.f32 %v997, 0.0
    %v1062 = vmax.f32 %v998, 0.0
    %v1063 = vmax.f32 %v999, 0.0
    %v1064 = vmax.f32 %v1000, 0.0
    %v1065 = vmax.f32 %v1001, 0.0
    %v1066 = vmax.f32 %v1002, 0.0
    %v1067 = vmax.f32 %v1003, 0.0
    %v1068 = vmax.f32 %v1004, 0.0
    %v1069 = vmax.f32 %v1005, 0.0
    %v1070 = vmax.f32 %v1006, 0.0
    %v1071 = vmax.f32 %v1007, 0.0
    %v1072 = vmax.f32 %v1008, 0.0
    %v1073 = vmax.f32 %v1009, 0.0
    %v1074 = vmax.f32 %v1010, 0.0
    %v1075 = vmax.f32 %v1011, 0.0
    %v1076 = vmax.f32 %v1012, 0.0
    %v1077 = vmax.f32 %v1013, 0.0
    %v1078 = vmax.f32 %v1014, 0.0
    %v1079 = vmax.f32 %v1015, 0.0
    %v1080 = vmax.f32 %v1016, 0.0
    %v1081 = vmax.f32 %v1017, 0.0
    %v1082 = vmax.f32 %v1018, 0.0
    %v1083 = vmax.f32 %v1019, 0.0
    %v1084 = vmax.f32 %v1020, 0.0
    %v1085 = vmax.f32 %v1021, 0.0
    %1086 = vst [vmem:[%s3] sm:$0xff] %v1022
    %1087 = vst [vmem:[%s3 + $0x8] sm:$0xff] %v1023
    %1088 = vst [vmem:[%s3 + $0x10] sm:$0xff] %v1024
    %1089 = vst [vmem:[%s3 + $0x18] sm:$0xff] %v1025
    %1090 = vst [vmem:[%s3 + $0x20] sm:$0xff] %v1026
    %1091 = vst [vmem:[%s3 + $0x28] sm:$0xff] %v1027
    %1092 = vst [vmem:[%s3 + $0x30] sm:$0xff] %v1028
    %1093 = vst [vmem:[%s3 + $0x38] sm:$0xff] %v1029
    %1094 = vst [vmem:[%s3 + $0x40] sm:$0xff] %v1030
    %1095 = vst [vmem:[%s3 + $0x48] sm:$0xff] %v1031
    %1096 = vst [vmem:[%s3 + $0x50] sm:$0xff] %v1032
    %1097 = vst [vmem:[%s3 + $0x58] sm:$0xff] %v1033
    %1098 = vst [vmem:[%s3 + $0x60] sm:$0xff] %v1034
    %1099 = vst [vmem:[%s3 + $0x68] sm:$0xff] %v1035
    %1100 = vst [vmem:[%s3 + $0x70] sm:$0xff] %v1036
    %1101 = vst [vmem:[%s3 + $0x78] sm:$0xff] %v1037
    %1102 = vst [vmem:[%s3 + $0x80] sm:$0xff] %v1038
    %1103 = vst [vmem:[%s3 + $0x88] sm:$0xff] %v1039
    %1104 = vst [vmem:[%s3 + $0x90] sm:$0xff] %v1040
    %1105 = vst [vmem:[%s3 + $0x98] sm:$0xff] %v1041
    %1106 = vst [vmem:[%s3 + $0xa0] sm:$0xff] %v1042
    %1107 = vst [vmem:[%s3 + $0xa8] sm:$0xff] %v1043
    %1108 = vst [vmem:[%s3 + $0xb0] sm:$0xff] %v1044
    %1109 = vst [vmem:[%s3 + $0xb8] sm:$0xff] %v1045
    %1110 = vst [vmem:[%s3 + $0xc0] sm:$0xff] %v1046
    %1111 = vst [vmem:[%s3 + $0xc8] sm:$0xff] %v1047
    %1112 = vst [vmem:[%s3 + $0xd0] sm:$0xff] %v1048
    %1113 = vst [vmem:[%s3 + $0xd8] sm:$0xff] %v1049
    %1114 = vst [vmem:[%s3 + $0xe0] sm:$0xff] %v1050
    %1115 = vst [vmem:[%s3 + $0xe8] sm:$0xff] %v1051
    %1116 = vst [vmem:[%s3 + $0xf0] sm:$0xff] %v1052
    %1117 = vst [vmem:[%s3 + $0xf8] sm:$0xff] %v1053
    %1118 = vst [vmem:[%s3 + $0x100] sm:$0xff] %v1054
    %1119 = vst [vmem:[%s3 + $0x108] sm:$0xff] %v1055
    %1120 = vst [vmem:[%s3 + $0x110] sm:$0xff] %v1056
    %1121 = vst [vmem:[%s3 + $0x118] sm:$0xff] %v1057
    %1122 = vst [vmem:[%s3 + $0x120] sm:$0xff] %v1058
    %1123 = vst [vmem:[%s3 + $0x128] sm:$0xff] %v1059
    %1124 = vst [vmem:[%s3 + $0x130] sm:$0xff] %v1060
    %1125 = vst [vmem:[%s3 + $0x138] sm:$0xff] %v1061
    %1126 = vst [vmem:[%s3 + $0x140] sm:$0xff] %v1062
    %1127 = vst [vmem:[%s3 + $0x148] sm:$0xff] %v1063
    %1128 = vst [vmem:[%s3 + $0x150] sm:$0xff] %v1064
    %1129 = vst [vmem:[%s3 + $0x158] sm:$0xff] %v1065
    %1130 = vst [vmem:[%s3 + $0x160] sm:$0xff] %v1066
    %1131 = vst [vmem:[%s3 + $0x168] sm:$0xff] %v1067
    %1132 = vst [vmem:[%s3 + $0x170] sm:$0xff] %v1068
    %1133 = vst [vmem:[%s3 + $0x178] sm:$0xff] %v1069
    %1134 = vst [vmem:[%s3 + $0x180] sm:$0xff] %v1070
    %1135 = vst [vmem:[%s3 + $0x188] sm:$0xff] %v1071
    %1136 = vst [vmem:[%s3 + $0x190] sm:$0xff] %v1072
    %1137 = vst [vmem:[%s3 + $0x198] sm:$0xff] %v1073
    %1138 = vst [vmem:[%s3 + $0x1a0] sm:$0xff] %v1074
    %1139 = vst [vmem:[%s3 + $0x1a8] sm:$0xff] %v1075
    %1140 = vst [vmem:[%s3 + $0x1b0] sm:$0xff] %v1076
    %1141 = vst [vmem:[%s3 + $0x1b8] sm:$0xff] %v1077
    %1142 = vst [vmem:[%s3 + $0x1c0] sm:$0xff] %v1078
    %1143 = vst [vmem:[%s3 + $0x1c8] sm:$0xff] %v1079
    %1144 = vst [vmem:[%s3 + $0x1d0] sm:$0xff] %v1080
    %1145 = vst [vmem:[%s3 + $0x1d8] sm:$0xff] %v1081
    %1146 = vst [vmem:[%s3 + $0x1e0] sm:$0xff] %v1082
    %1147 = vst [vmem:[%s3 + $0x1e8] sm:$0xff] %v1083
    %1148 = vst [vmem:[%s3 + $0x1f0] sm:$0xff] %v1084
    %1149 = vst [vmem:[%s3 + $0x1f8] sm:$0xff] %v1085
  $region21: #{_lambda_.36} parent=0 // pred_fallthru
    _
  // Predicated region
  $region22: #{_lambda_.36} parent=0 // pred_check
    _
  $region23: #{_lambda_.36} parent=0 // pred_check_branch
    %1151 = sbr.rel (0) target = $region25
  $region24: #{_lambda_.36} parent=0 // pred_region
    _
  $region25: #{_lambda_.36} parent=0 // pred_fallthru
    _
  // Predicated region
  $region26: #{_lambda_.36} parent=0 // pred_check
    _
  $region27: #{_lambda_.36} parent=0 // pred_check_branch
    %1153 = sbr.rel (0) target = $region29
  $region28: #{_lambda_.36} parent=0 // pred_region
    _
  $region29: #{_lambda_.36} parent=0 // pred_fallthru
    _

// kernel: _lambda_.38
$region0: #{_lambda_.38}
  #allocation0 [shape = 'u32[]', space=smem, size = 0x4, offset = 0x4, fixed_abs, tag = 'smem constant byte address 0x4 - core index']
  #allocation1 [shape = 'u32[144,128]{1,0:T(1,128)}', space=vmem, size = 0x12000, scoped, tag = 'internal scratch']
  #allocation2 [shape = 'f32[512,128]{1,0:T(8,128)}', space=vmem, size = 0x40000, scoped, tag = 'scratch operand']
  %s0 = inlined_call_operand.vmem [shape: bf16[512,128], index: 0, kind: input, shape index: {}]
  %s1 = inlined_call_operand.vmem [shape: bf16[128,128], index: 1, kind: input, shape index: {}]
  %s2 = inlined_call_operand.vmem [shape: f32[1,128], index: 2, kind: input, shape index: {}]
  %s3 = inlined_call_operand.vmem [shape: f32[512,128], index: 3, kind: output, shape index: {}]
  %s4 = sld [smem:[#allocation0]]
  $region30: #{_lambda_.38} parent=0
    _
  %s6 = ssub.s32 1, %s4
  %s7 = scalar_select 0, %s6, %s4
  // Predicated region
  $region2: #{_lambda_.38} parent=0 // pred_check
    _
  $region3: #{_lambda_.38} parent=0 // pred_check_branch
    %9 = sbr.rel (0) target = $region5
  $region4: #{_lambda_.38} parent=0 // pred_region
    _
  $region5: #{_lambda_.38} parent=0 // pred_fallthru
    _
  // Predicated region
  $region6: #{_lambda_.38} parent=0 // pred_check
    _
  $region7: #{_lambda_.38} parent=0 // pred_check_branch
    %11 = sbr.rel (0) target = $region9
  $region8: #{_lambda_.38} parent=0 // pred_region
    _
  $region9: #{_lambda_.38} parent=0 // pred_fallthru
    _
  // Predicated region
  $region10: #{_lambda_.38} parent=0 // pred_check
    _
  $region11: #{_lambda_.38} parent=0 // pred_check_branch
    %13 = sbr.rel (0) target = $region13
  $region12: #{_lambda_.38} parent=0 // pred_region
    _
  $region13: #{_lambda_.38} parent=0 // pred_fallthru
    _
  %p15 = scmp.eq.s32.totalorder 0, 0
  // Predicated region
  $region14: #{_lambda_.38} parent=0 // pred_check
    %p16 = pneg %p15
  $region15: #{_lambda_.38} parent=0 // pred_check_branch
    %18 = sbr.rel (%p16) target = $region17
  $region16: #{_lambda_.38} parent=0 // pred_region
    %19 = vst [vmem:[#allocation2] sm:$0xff] 0.0
    %20 = vst [vmem:[#allocation2 + $0x8] sm:$0xff] 0.0
    %21 = vst [vmem:[#allocation2 + $0x10] sm:$0xff] 0.0
    %22 = vst [vmem:[#allocation2 + $0x18] sm:$0xff] 0.0
    %23 = vst [vmem:[#allocation2 + $0x20] sm:$0xff] 0.0
    %24 = vst [vmem:[#allocation2 + $0x28] sm:$0xff] 0.0
    %25 = vst [vmem:[#allocation2 + $0x30] sm:$0xff] 0.0
    %26 = vst [vmem:[#allocation2 + $0x38] sm:$0xff] 0.0
    %27 = vst [vmem:[#allocation2 + $0x40] sm:$0xff] 0.0
    %28 = vst [vmem:[#allocation2 + $0x48] sm:$0xff] 0.0
    %29 = vst [vmem:[#allocation2 + $0x50] sm:$0xff] 0.0
    %30 = vst [vmem:[#allocation2 + $0x58] sm:$0xff] 0.0
    %31 = vst [vmem:[#allocation2 + $0x60] sm:$0xff] 0.0
    %32 = vst [vmem:[#allocation2 + $0x68] sm:$0xff] 0.0
    %33 = vst [vmem:[#allocation2 + $0x70] sm:$0xff] 0.0
    %34 = vst [vmem:[#allocation2 + $0x78] sm:$0xff] 0.0
    %35 = vst [vmem:[#allocation2 + $0x80] sm:$0xff] 0.0
    %36 = vst [vmem:[#allocation2 + $0x88] sm:$0xff] 0.0
    %37 = vst [vmem:[#allocation2 + $0x90] sm:$0xff] 0.0
    %38 = vst [vmem:[#allocation2 + $0x98] sm:$0xff] 0.0
    %39 = vst [vmem:[#allocation2 + $0xa0] sm:$0xff] 0.0
    %40 = vst [vmem:[#allocation2 + $0xa8] sm:$0xff] 0.0
    %41 = vst [vmem:[#allocation2 + $0xb0] sm:$0xff] 0.0
    %42 = vst [vmem:[#allocation2 + $0xb8] sm:$0xff] 0.0
    %43 = vst [vmem:[#allocation2 + $0xc0] sm:$0xff] 0.0
    %44 = vst [vmem:[#allocation2 + $0xc8] sm:$0xff] 0.0
    %45 = vst [vmem:[#allocation2 + $0xd0] sm:$0xff] 0.0
    %46 = vst [vmem:[#allocation2 + $0xd8] sm:$0xff] 0.0
    %47 = vst [vmem:[#allocation2 + $0xe0] sm:$0xff] 0.0
    %48 = vst [vmem:[#allocation2 + $0xe8] sm:$0xff] 0.0
    %49 = vst [vmem:[#allocation2 + $0xf0] sm:$0xff] 0.0
    %50 = vst [vmem:[#allocation2 + $0xf8] sm:$0xff] 0.0
    %51 = vst [vmem:[#allocation2 + $0x100] sm:$0xff] 0.0
    %52 = vst [vmem:[#allocation2 + $0x108] sm:$0xff] 0.0
    %53 = vst [vmem:[#allocation2 + $0x110] sm:$0xff] 0.0
    %54 = vst [vmem:[#allocation2 + $0x118] sm:$0xff] 0.0
    %55 = vst [vmem:[#allocation2 + $0x120] sm:$0xff] 0.0
    %56 = vst [vmem:[#allocation2 + $0x128] sm:$0xff] 0.0
    %57 = vst [vmem:[#allocation2 + $0x130] sm:$0xff] 0.0
    %58 = vst [vmem:[#allocation2 + $0x138] sm:$0xff] 0.0
    %59 = vst [vmem:[#allocation2 + $0x140] sm:$0xff] 0.0
    %60 = vst [vmem:[#allocation2 + $0x148] sm:$0xff] 0.0
    %61 = vst [vmem:[#allocation2 + $0x150] sm:$0xff] 0.0
    %62 = vst [vmem:[#allocation2 + $0x158] sm:$0xff] 0.0
    %63 = vst [vmem:[#allocation2 + $0x160] sm:$0xff] 0.0
    %64 = vst [vmem:[#allocation2 + $0x168] sm:$0xff] 0.0
    %65 = vst [vmem:[#allocation2 + $0x170] sm:$0xff] 0.0
    %66 = vst [vmem:[#allocation2 + $0x178] sm:$0xff] 0.0
    %67 = vst [vmem:[#allocation2 + $0x180] sm:$0xff] 0.0
    %68 = vst [vmem:[#allocation2 + $0x188] sm:$0xff] 0.0
    %69 = vst [vmem:[#allocation2 + $0x190] sm:$0xff] 0.0
    %70 = vst [vmem:[#allocation2 + $0x198] sm:$0xff] 0.0
    %71 = vst [vmem:[#allocation2 + $0x1a0] sm:$0xff] 0.0
    %72 = vst [vmem:[#allocation2 + $0x1a8] sm:$0xff] 0.0
    %73 = vst [vmem:[#allocation2 + $0x1b0] sm:$0xff] 0.0
    %74 = vst [vmem:[#allocation2 + $0x1b8] sm:$0xff] 0.0
    %75 = vst [vmem:[#allocation2 + $0x1c0] sm:$0xff] 0.0
    %76 = vst [vmem:[#allocation2 + $0x1c8] sm:$0xff] 0.0
    %77 = vst [vmem:[#allocation2 + $0x1d0] sm:$0xff] 0.0
    %78 = vst [vmem:[#allocation2 + $0x1d8] sm:$0xff] 0.0
    %79 = vst [vmem:[#allocation2 + $0x1e0] sm:$0xff] 0.0
    %80 = vst [vmem:[#allocation2 + $0x1e8] sm:$0xff] 0.0
    %81 = vst [vmem:[#allocation2 + $0x1f0] sm:$0xff] 0.0
    %82 = vst [vmem:[#allocation2 + $0x1f8] sm:$0xff] 0.0
  $region17: #{_lambda_.38} parent=0 // pred_fallthru
    _
  %v83 = vld [vmem:[#allocation2] sm:$0xff]
  %v84 = vld [vmem:[#allocation2 + $0x8] sm:$0xff]
  %v85 = vld [vmem:[#allocation2 + $0x10] sm:$0xff]
  %v86 = vld [vmem:[#allocation2 + $0x18] sm:$0xff]
  %v87 = vld [vmem:[#allocation2 + $0x20] sm:$0xff]
  %v88 = vld [vmem:[#allocation2 + $0x28] sm:$0xff]
  %v89 = vld [vmem:[#allocation2 + $0x30] sm:$0xff]
  %v90 = vld [vmem:[#allocation2 + $0x38] sm:$0xff]
  %v91 = vld [vmem:[#allocation2 + $0x40] sm:$0xff]
  %v92 = vld [vmem:[#allocation2 + $0x48] sm:$0xff]
  %v93 = vld [vmem:[#allocation2 + $0x50] sm:$0xff]
  %v94 = vld [vmem:[#allocation2 + $0x58] sm:$0xff]
  %v95 = vld [vmem:[#allocation2 + $0x60] sm:$0xff]
  %v96 = vld [vmem:[#allocation2 + $0x68] sm:$0xff]
  %v97 = vld [vmem:[#allocation2 + $0x70] sm:$0xff]
  %v98 = vld [vmem:[#allocation2 + $0x78] sm:$0xff]
  %v99 = vld [vmem:[#allocation2 + $0x80] sm:$0xff]
  %v100 = vld [vmem:[#allocation2 + $0x88] sm:$0xff]
  %v101 = vld [vmem:[#allocation2 + $0x90] sm:$0xff]
  %v102 = vld [vmem:[#allocation2 + $0x98] sm:$0xff]
  %v103 = vld [vmem:[#allocation2 + $0xa0] sm:$0xff]
  %v104 = vld [vmem:[#allocation2 + $0xa8] sm:$0xff]
  %v105 = vld [vmem:[#allocation2 + $0xb0] sm:$0xff]
  %v106 = vld [vmem:[#allocation2 + $0xb8] sm:$0xff]
  %v107 = vld [vmem:[#allocation2 + $0xc0] sm:$0xff]
  %v108 = vld [vmem:[#allocation2 + $0xc8] sm:$0xff]
  %v109 = vld [vmem:[#allocation2 + $0xd0] sm:$0xff]
  %v110 = vld [vmem:[#allocation2 + $0xd8] sm:$0xff]
  %v111 = vld [vmem:[#allocation2 + $0xe0] sm:$0xff]
  %v112 = vld [vmem:[#allocation2 + $0xe8] sm:$0xff]
  %v113 = vld [vmem:[#allocation2 + $0xf0] sm:$0xff]
  %v114 = vld [vmem:[#allocation2 + $0xf8] sm:$0xff]
  %v115 = vld [vmem:[#allocation2 + $0x100] sm:$0xff]
  %v116 = vld [vmem:[#allocation2 + $0x108] sm:$0xff]
  %v117 = vld [vmem:[#allocation2 + $0x110] sm:$0xff]
  %v118 = vld [vmem:[#allocation2 + $0x118] sm:$0xff]
  %v119 = vld [vmem:[#allocation2 + $0x120] sm:$0xff]
  %v120 = vld [vmem:[#allocation2 + $0x128] sm:$0xff]
  %v121 = vld [vmem:[#allocation2 + $0x130] sm:$0xff]
  %v122 = vld [vmem:[#allocation2 + $0x138] sm:$0xff]
  %v123 = vld [vmem:[#allocation2 + $0x140] sm:$0xff]
  %v124 = vld [vmem:[#allocation2 + $0x148] sm:$0xff]
  %v125 = vld [vmem:[#allocation2 + $0x150] sm:$0xff]
  %v126 = vld [vmem:[#allocation2 + $0x158] sm:$0xff]
  %v127 = vld [vmem:[#allocation2 + $0x160] sm:$0xff]
  %v128 = vld [vmem:[#allocation2 + $0x168] sm:$0xff]
  %v129 = vld [vmem:[#allocation2 + $0x170] sm:$0xff]
  %v130 = vld [vmem:[#allocation2 + $0x178] sm:$0xff]
  %v131 = vld [vmem:[#allocation2 + $0x180] sm:$0xff]
  %v132 = vld [vmem:[#allocation2 + $0x188] sm:$0xff]
  %v133 = vld [vmem:[#allocation2 + $0x190] sm:$0xff]
  %v134 = vld [vmem:[#allocation2 + $0x198] sm:$0xff]
  %v135 = vld [vmem:[#allocation2 + $0x1a0] sm:$0xff]
  %v136 = vld [vmem:[#allocation2 + $0x1a8] sm:$0xff]
  %v137 = vld [vmem:[#allocation2 + $0x1b0] sm:$0xff]
  %v138 = vld [vmem:[#allocation2 + $0x1b8] sm:$0xff]
  %v139 = vld [vmem:[#allocation2 + $0x1c0] sm:$0xff]
  %v140 = vld [vmem:[#allocation2 + $0x1c8] sm:$0xff]
  %v141 = vld [vmem:[#allocation2 + $0x1d0] sm:$0xff]
  %v142 = vld [vmem:[#allocation2 + $0x1d8] sm:$0xff]
  %v143 = vld [vmem:[#allocation2 + $0x1e0] sm:$0xff]
  %v144 = vld [vmem:[#allocation2 + $0x1e8] sm:$0xff]
  %v145 = vld [vmem:[#allocation2 + $0x1f0] sm:$0xff]
  %v146 = vld [vmem:[#allocation2 + $0x1f8] sm:$0xff]
  %v147 = vld [vmem:[%s0] sm:$0xf]
  %v148 = vld [vmem:[%s0 + $0x4] sm:$0xf]
  %v149 = vld [vmem:[%s0 + $0x8] sm:$0xf]
  %v150 = vld [vmem:[%s0 + $0xc] sm:$0xf]
  %v151 = vld [vmem:[%s0 + $0x10] sm:$0xf]
  %v152 = vld [vmem:[%s0 + $0x14] sm:$0xf]
  %v153 = vld [vmem:[%s0 + $0x18] sm:$0xf]
  %v154 = vld [vmem:[%s0 + $0x1c] sm:$0xf]
  %v155 = vld [vmem:[%s0 + $0x20] sm:$0xf]
  %v156 = vld [vmem:[%s0 + $0x24] sm:$0xf]
  %v157 = vld [vmem:[%s0 + $0x28] sm:$0xf]
  %v158 = vld [vmem:[%s0 + $0x2c] sm:$0xf]
  %v159 = vld [vmem:[%s0 + $0x30] sm:$0xf]
  %v160 = vld [vmem:[%s0 + $0x34] sm:$0xf]
  %v161 = vld [vmem:[%s0 + $0x38] sm:$0xf]
  %v162 = vld [vmem:[%s0 + $0x3c] sm:$0xf]
  %v163 = vld [vmem:[%s0 + $0x40] sm:$0xf]
  %v164 = vld [vmem:[%s0 + $0x44] sm:$0xf]
  %v165 = vld [vmem:[%s0 + $0x48] sm:$0xf]
  %v166 = vld [vmem:[%s0 + $0x4c] sm:$0xf]
  %v167 = vld [vmem:[%s0 + $0x50] sm:$0xf]
  %v168 = vld [vmem:[%s0 + $0x54] sm:$0xf]
  %v169 = vld [vmem:[%s0 + $0x58] sm:$0xf]
  %v170 = vld [vmem:[%s0 + $0x5c] sm:$0xf]
  %v171 = vld [vmem:[%s0 + $0x60] sm:$0xf]
  %v172 = vld [vmem:[%s0 + $0x64] sm:$0xf]
  %v173 = vld [vmem:[%s0 + $0x68] sm:$0xf]
  %v174 = vld [vmem:[%s0 + $0x6c] sm:$0xf]
  %v175 = vld [vmem:[%s0 + $0x70] sm:$0xf]
  %v176 = vld [vmem:[%s0 + $0x74] sm:$0xf]
  %v177 = vld [vmem:[%s0 + $0x78] sm:$0xf]
  %v178 = vld [vmem:[%s0 + $0x7c] sm:$0xf]
  %v179 = vld [vmem:[%s0 + $0x80] sm:$0xf]
  %v180 = vld [vmem:[%s0 + $0x84] sm:$0xf]
  %v181 = vld [vmem:[%s0 + $0x88] sm:$0xf]
  %v182 = vld [vmem:[%s0 + $0x8c] sm:$0xf]
  %v183 = vld [vmem:[%s0 + $0x90] sm:$0xf]
  %v184 = vld [vmem:[%s0 + $0x94] sm:$0xf]
  %v185 = vld [vmem:[%s0 + $0x98] sm:$0xf]
  %v186 = vld [vmem:[%s0 + $0x9c] sm:$0xf]
  %v187 = vld [vmem:[%s0 + $0xa0] sm:$0xf]
  %v188 = vld [vmem:[%s0 + $0xa4] sm:$0xf]
  %v189 = vld [vmem:[%s0 + $0xa8] sm:$0xf]
  %v190 = vld [vmem:[%s0 + $0xac] sm:$0xf]
  %v191 = vld [vmem:[%s0 + $0xb0] sm:$0xf]
  %v192 = vld [vmem:[%s0 + $0xb4] sm:$0xf]
  %v193 = vld [vmem:[%s0 + $0xb8] sm:$0xf]
  %v194 = vld [vmem:[%s0 + $0xbc] sm:$0xf]
  %v195 = vld [vmem:[%s0 + $0xc0] sm:$0xf]
  %v196 = vld [vmem:[%s0 + $0xc4] sm:$0xf]
  %v197 = vld [vmem:[%s0 + $0xc8] sm:$0xf]
  %v198 = vld [vmem:[%s0 + $0xcc] sm:$0xf]
  %v199 = vld [vmem:[%s0 + $0xd0] sm:$0xf]
  %v200 = vld [vmem:[%s0 + $0xd4] sm:$0xf]
  %v201 = vld [vmem:[%s0 + $0xd8] sm:$0xf]
  %v202 = vld [vmem:[%s0 + $0xdc] sm:$0xf]
  %v203 = vld [vmem:[%s0 + $0xe0] sm:$0xf]
  %v204 = vld [vmem:[%s0 + $0xe4] sm:$0xf]
  %v205 = vld [vmem:[%s0 + $0xe8] sm:$0xf]
  %v206 = vld [vmem:[%s0 + $0xec] sm:$0xf]
  %v207 = vld [vmem:[%s0 + $0xf0] sm:$0xf]
  %v208 = vld [vmem:[%s0 + $0xf4] sm:$0xf]
  %v209 = vld [vmem:[%s0 + $0xf8] sm:$0xf]
  %v210 = vld [vmem:[%s0 + $0xfc] sm:$0xf]
  %v211 = vld [vmem:[%s1] sm:$0xf]
  %v212 = vld [vmem:[%s1 + $0x4] sm:$0xf]
  %v213 = vld [vmem:[%s1 + $0x8] sm:$0xf]
  %v214 = vld [vmem:[%s1 + $0xc] sm:$0xf]
  %v215 = vld [vmem:[%s1 + $0x10] sm:$0xf]
  %v216 = vld [vmem:[%s1 + $0x14] sm:$0xf]
  %v217 = vld [vmem:[%s1 + $0x18] sm:$0xf]
  %v218 = vld [vmem:[%s1 + $0x1c] sm:$0xf]
  %v219 = vld [vmem:[%s1 + $0x20] sm:$0xf]
  %v220 = vld [vmem:[%s1 + $0x24] sm:$0xf]
  %v221 = vld [vmem:[%s1 + $0x28] sm:$0xf]
  %v222 = vld [vmem:[%s1 + $0x2c] sm:$0xf]
  %v223 = vld [vmem:[%s1 + $0x30] sm:$0xf]
  %v224 = vld [vmem:[%s1 + $0x34] sm:$0xf]
  %v225 = vld [vmem:[%s1 + $0x38] sm:$0xf]
  %v226 = vld [vmem:[%s1 + $0x3c] sm:$0xf]
  %v291 = vunpack.c.l.b16 %v147
  %v292 = vunpack.c.l.b16 %v148
  %v293 = vunpack.c.l.b16 %v149
  %v294 = vunpack.c.l.b16 %v150
  %v295 = vunpack.c.l.b16 %v151
  %v296 = vunpack.c.l.b16 %v152
  %v297 = vunpack.c.l.b16 %v153
  %v298 = vunpack.c.l.b16 %v154
  %v299 = vunpack.c.l.b16 %v155
  %v300 = vunpack.c.l.b16 %v156
  %v301 = vunpack.c.l.b16 %v157
  %v302 = vunpack.c.l.b16 %v158
  %v303 = vunpack.c.l.b16 %v159
  %v304 = vunpack.c.l.b16 %v160
  %v305 = vunpack.c.l.b16 %v161
  %v306 = vunpack.c.l.b16 %v162
  %v307 = vunpack.c.l.b16 %v163
  %v308 = vunpack.c.l.b16 %v164
  %v309 = vunpack.c.l.b16 %v165
  %v310 = vunpack.c.l.b16 %v166
  %v311 = vunpack.c.l.b16 %v167
  %v312 = vunpack.c.l.b16 %v168
  %v313 = vunpack.c.l.b16 %v169
  %v314 = vunpack.c.l.b16 %v170
  %v315 = vunpack.c.l.b16 %v171
  %v316 = vunpack.c.l.b16 %v172
  %v317 = vunpack.c.l.b16 %v173
  %v318 = vunpack.c.l.b16 %v174
  %v319 = vunpack.c.l.b16 %v175
  %v320 = vunpack.c.l.b16 %v176
  %v321 = vunpack.c.l.b16 %v177
  %v322 = vunpack.c.l.b16 %v178
  %v323 = vunpack.c.l.b16 %v179
  %v324 = vunpack.c.l.b16 %v180
  %v325 = vunpack.c.l.b16 %v181
  %v326 = vunpack.c.l.b16 %v182
  %v327 = vunpack.c.l.b16 %v183
  %v328 = vunpack.c.l.b16 %v184
  %v329 = vunpack.c.l.b16 %v185
  %v330 = vunpack.c.l.b16 %v186
  %v331 = vunpack.c.l.b16 %v187
  %v332 = vunpack.c.l.b16 %v188
  %v333 = vunpack.c.l.b16 %v189
  %v334 = vunpack.c.l.b16 %v190
  %v335 = vunpack.c.l.b16 %v191
  %v336 = vunpack.c.l.b16 %v192
  %v337 = vunpack.c.l.b16 %v193
  %v338 = vunpack.c.l.b16 %v194
  %v339 = vunpack.c.l.b16 %v195
  %v340 = vunpack.c.l.b16 %v196
  %v341 = vunpack.c.l.b16 %v197
  %v342 = vunpack.c.l.b16 %v198
  %v343 = vunpack.c.l.b16 %v199
  %v344 = vunpack.c.l.b16 %v200
  %v345 = vunpack.c.l.b16 %v201
  %v346 = vunpack.c.l.b16 %v202
  %v347 = vunpack.c.l.b16 %v203
  %v348 = vunpack.c.l.b16 %v204
  %v349 = vunpack.c.l.b16 %v205
  %v350 = vunpack.c.l.b16 %v206
  %v351 = vunpack.c.l.b16 %v207
  %v352 = vunpack.c.l.b16 %v208
  %v353 = vunpack.c.l.b16 %v209
  %v354 = vunpack.c.l.b16 %v210
  %v355 = vpack.c.b16 %v292, %v291
  %v356 = vpack.c.b16 %v294, %v293
  %v357 = vpack.c.b16 %v296, %v295
  %v358 = vpack.c.b16 %v298, %v297
  %v359 = vpack.c.b16 %v300, %v299
  %v360 = vpack.c.b16 %v302, %v301
  %v361 = vpack.c.b16 %v304, %v303
  %v362 = vpack.c.b16 %v306, %v305
  %v363 = vpack.c.b16 %v308, %v307
  %v364 = vpack.c.b16 %v310, %v309
  %v365 = vpack.c.b16 %v312, %v311
  %v366 = vpack.c.b16 %v314, %v313
  %v367 = vpack.c.b16 %v316, %v315
  %v368 = vpack.c.b16 %v318, %v317
  %v369 = vpack.c.b16 %v320, %v319
  %v370 = vpack.c.b16 %v322, %v321
  %v371 = vpack.c.b16 %v324, %v323
  %v372 = vpack.c.b16 %v326, %v325
  %v373 = vpack.c.b16 %v328, %v327
  %v374 = vpack.c.b16 %v330, %v329
  %v375 = vpack.c.b16 %v332, %v331
  %v376 = vpack.c.b16 %v334, %v333
  %v377 = vpack.c.b16 %v336, %v335
  %v378 = vpack.c.b16 %v338, %v337
  %v379 = vpack.c.b16 %v340, %v339
  %v380 = vpack.c.b16 %v342, %v341
  %v381 = vpack.c.b16 %v344, %v343
  %v382 = vpack.c.b16 %v346, %v345
  %v383 = vpack.c.b16 %v348, %v347
  %v384 = vpack.c.b16 %v350, %v349
  %v385 = vpack.c.b16 %v352, %v351
  %v386 = vpack.c.b16 %v354, %v353
  %v435 = vunpack.c.l.b16 %v211
  %v436 = vunpack.c.l.b16 %v212
  %v437 = vunpack.c.l.b16 %v213
  %v438 = vunpack.c.l.b16 %v214
  %v439 = vunpack.c.l.b16 %v215
  %v440 = vunpack.c.l.b16 %v216
  %v441 = vunpack.c.l.b16 %v217
  %v442 = vunpack.c.l.b16 %v218
  %v443 = vunpack.c.l.b16 %v219
  %v444 = vunpack.c.l.b16 %v220
  %v445 = vunpack.c.l.b16 %v221
  %v446 = vunpack.c.l.b16 %v222
  %v447 = vunpack.c.l.b16 %v223
  %v448 = vunpack.c.l.b16 %v224
  %v449 = vunpack.c.l.b16 %v225
  %v450 = vunpack.c.l.b16 %v226
  %v451 = vpack.c.b16 %v436, %v435
  %v452 = vpack.c.b16 %v438, %v437
  %v453 = vpack.c.b16 %v440, %v439
  %v454 = vpack.c.b16 %v442, %v441
  %v455 = vpack.c.b16 %v444, %v443
  %v456 = vpack.c.b16 %v446, %v445
  %v457 = vpack.c.b16 %v448, %v447
  %v458 = vpack.c.b16 %v450, %v449
  %467 = vmatprep.subr.bf16.mxu0 0
  %468 = vmatpush1.bf16.msra.mxu0 %v451
  %469 = vmatprep.subr.bf16.mxu0 0
  %470 = vmatpush1.bf16.msra.mxu0 %v452
  %471 = vmatprep.subr.bf16.mxu0 0
  %472 = vmatpush1.bf16.msra.mxu0 %v453
  %473 = vmatprep.subr.bf16.mxu0 0
  %474 = vmatpush1.bf16.msra.mxu0 %v454
  %475 = vmatprep.subr.bf16.mxu0 0
  %476 = vmatpush1.bf16.msra.mxu0 %v455
  %477 = vmatprep.subr.bf16.mxu0 0
  %478 = vmatpush1.bf16.msra.mxu0 %v456
  %479 = vmatprep.subr.bf16.mxu0 0
  %480 = vmatpush1.bf16.msra.mxu0 %v457
  %481 = vmatprep.subr.bf16.mxu0 0
  %482 = vmatpush1.bf16.msra.mxu0 %v458
  %483 = vmatprep.subr.bf16.mxu0 0
  %484 = vmatpush1.bf16.msra.mxu0 0
  %485 = vmatprep.subr.bf16.mxu0 0
  %486 = vmatpush1.bf16.msra.mxu0 0
  %487 = vmatprep.subr.bf16.mxu0 0
  %488 = vmatpush1.bf16.msra.mxu0 0
  %489 = vmatprep.subr.bf16.mxu0 0
  %490 = vmatpush1.bf16.msra.mxu0 0
  %491 = vmatprep.subr.bf16.mxu0 0
  %492 = vmatpush1.bf16.msra.mxu0 0
  %493 = vmatprep.subr.bf16.mxu0 0
  %494 = vmatpush1.bf16.msra.mxu0 0
  %495 = vmatprep.subr.bf16.mxu0 0
  %496 = vmatpush1.bf16.msra.mxu0 0
  %497 = vmatprep.subr.bf16.mxu0 0
  %498 = vmatpush1.bf16.msra.mxu0 0
  %499 = vmatprep.mubr.bf16.mxu0 0
  %500 = vmatmul.mubr.bf16.gmra.mrb[0].mxu0 %v355
  %v501 = vpop.f32.mrb[0].mxu0
  %v502 = vadd.f32 0.0, %v501
  %v503 = vpop.f32.mrb[0].mxu0
  %v504 = vpop.f32.mrb[0].mxu0
  %v505 = vadd.f32 0.0, %v504
  %v506 = vpop.f32.mrb[0].mxu0
  %507 = vmatprep.mubr.bf16.mxu0 0
  %508 = vmatmul.mubr.bf16.gmra.mrb[0].mxu0 %v356
  %v509 = vpop.f32.mrb[0].mxu0
  %v510 = vadd.f32 0.0, %v509
  %v511 = vpop.f32.mrb[0].mxu0
  %v512 = vpop.f32.mrb[0].mxu0
  %v513 = vadd.f32 0.0, %v512
  %v514 = vpop.f32.mrb[0].mxu0
  %515 = vmatprep.mubr.bf16.mxu0 0
  %516 = vmatmul.mubr.bf16.gmra.mrb[0].mxu0 %v357
  %v517 = vpop.f32.mrb[0].mxu0
  %v518 = vadd.f32 0.0, %v517
  %v519 = vpop.f32.mrb[0].mxu0
  %v520 = vpop.f32.mrb[0].mxu0
  %v521 = vadd.f32 0.0, %v520
  %v522 = vpop.f32.mrb[0].mxu0
  %523 = vmatprep.mubr.bf16.mxu0 0
  %524 = vmatmul.mubr.bf16.gmra.mrb[0].mxu0 %v358
  %v525 = vpop.f32.mrb[0].mxu0
  %v526 = vadd.f32 0.0, %v525
  %v527 = vpop.f32.mrb[0].mxu0
  %v528 = vpop.f32.mrb[0].mxu0
  %v529 = vadd.f32 0.0, %v528
  %v530 = vpop.f32.mrb[0].mxu0
  %531 = vmatprep.mubr.bf16.mxu0 0
  %532 = vmatmul.mubr.bf16.gmra.mrb[0].mxu0 %v359
  %v533 = vpop.f32.mrb[0].mxu0
  %v534 = vadd.f32 0.0, %v533
  %v535 = vpop.f32.mrb[0].mxu0
  %v536 = vpop.f32.mrb[0].mxu0
  %v537 = vadd.f32 0.0, %v536
  %v538 = vpop.f32.mrb[0].mxu0
  %539 = vmatprep.mubr.bf16.mxu0 0
  %540 = vmatmul.mubr.bf16.gmra.mrb[0].mxu0 %v360
  %v541 = vpop.f32.mrb[0].mxu0
  %v542 = vadd.f32 0.0, %v541
  %v543 = vpop.f32.mrb[0].mxu0
  %v544 = vpop.f32.mrb[0].mxu0
  %v545 = vadd.f32 0.0, %v544
  %v546 = vpop.f32.mrb[0].mxu0
  %547 = vmatprep.mubr.bf16.mxu0 0
  %548 = vmatmul.mubr.bf16.gmra.mrb[0].mxu0 %v361
  %v549 = vpop.f32.mrb[0].mxu0
  %v550 = vadd.f32 0.0, %v549
  %v551 = vpop.f32.mrb[0].mxu0
  %v552 = vpop.f32.mrb[0].mxu0
  %v553 = vadd.f32 0.0, %v552
  %v554 = vpop.f32.mrb[0].mxu0
  %555 = vmatprep.mubr.bf16.mxu0 0
  %556 = vmatmul.mubr.bf16.gmra.mrb[0].mxu0 %v362
  %v557 = vpop.f32.mrb[0].mxu0
  %v558 = vadd.f32 0.0, %v557
  %v559 = vpop.f32.mrb[0].mxu0
  %v560 = vpop.f32.mrb[0].mxu0
  %v561 = vadd.f32 0.0, %v560
  %v562 = vpop.f32.mrb[0].mxu0
  %563 = vmatprep.mubr.bf16.mxu0 0
  %564 = vmatmul.mubr.bf16.gmra.mrb[0].mxu0 %v363
  %v565 = vpop.f32.mrb[0].mxu0
  %v566 = vadd.f32 0.0, %v565
  %v567 = vpop.f32.mrb[0].mxu0
  %v568 = vpop.f32.mrb[0].mxu0
  %v569 = vadd.f32 0.0, %v568
  %v570 = vpop.f32.mrb[0].mxu0
  %571 = vmatprep.mubr.bf16.mxu0 0
  %572 = vmatmul.mubr.bf16.gmra.mrb[0].mxu0 %v364
  %v573 = vpop.f32.mrb[0].mxu0
  %v574 = vadd.f32 0.0, %v573
  %v575 = vpop.f32.mrb[0].mxu0
  %v576 = vpop.f32.mrb[0].mxu0
  %v577 = vadd.f32 0.0, %v576
  %v578 = vpop.f32.mrb[0].mxu0
  %579 = vmatprep.mubr.bf16.mxu0 0
  %580 = vmatmul.mubr.bf16.gmra.mrb[0].mxu0 %v365
  %v581 = vpop.f32.mrb[0].mxu0
  %v582 = vadd.f32 0.0, %v581
  %v583 = vpop.f32.mrb[0].mxu0
  %v584 = vpop.f32.mrb[0].mxu0
  %v585 = vadd.f32 0.0, %v584
  %v586 = vpop.f32.mrb[0].mxu0
  %587 = vmatprep.mubr.bf16.mxu0 0
  %588 = vmatmul.mubr.bf16.gmra.mrb[0].mxu0 %v366
  %v589 = vpop.f32.mrb[0].mxu0
  %v590 = vadd.f32 0.0, %v589
  %v591 = vpop.f32.mrb[0].mxu0
  %v592 = vpop.f32.mrb[0].mxu0
  %v593 = vadd.f32 0.0, %v592
  %v594 = vpop.f32.mrb[0].mxu0
  %595 = vmatprep.mubr.bf16.mxu0 0
  %596 = vmatmul.mubr.bf16.gmra.mrb[0].mxu0 %v367
  %v597 = vpop.f32.mrb[0].mxu0
  %v598 = vadd.f32 0.0, %v597
  %v599 = vpop.f32.mrb[0].mxu0
  %v600 = vpop.f32.mrb[0].mxu0
  %v601 = vadd.f32 0.0, %v600
  %v602 = vpop.f32.mrb[0].mxu0
  %603 = vmatprep.mubr.bf16.mxu0 0
  %604 = vmatmul.mubr.bf16.gmra.mrb[0].mxu0 %v368
  %v605 = vpop.f32.mrb[0].mxu0
  %v606 = vadd.f32 0.0, %v605
  %v607 = vpop.f32.mrb[0].mxu0
  %v608 = vpop.f32.mrb[0].mxu0
  %v609 = vadd.f32 0.0, %v608
  %v610 = vpop.f32.mrb[0].mxu0
  %611 = vmatprep.mubr.bf16.mxu0 0
  %612 = vmatmul.mubr.bf16.gmra.mrb[0].mxu0 %v369
  %v613 = vpop.f32.mrb[0].mxu0
  %v614 = vadd.f32 0.0, %v613
  %v615 = vpop.f32.mrb[0].mxu0
  %v616 = vpop.f32.mrb[0].mxu0
  %v617 = vadd.f32 0.0, %v616
  %v618 = vpop.f32.mrb[0].mxu0
  %619 = vmatprep.mubr.bf16.mxu0 0
  %620 = vmatmul.mubr.bf16.gmra.mrb[0].mxu0 %v370
  %v621 = vpop.f32.mrb[0].mxu0
  %v622 = vadd.f32 0.0, %v621
  %v623 = vpop.f32.mrb[0].mxu0
  %v624 = vpop.f32.mrb[0].mxu0
  %v625 = vadd.f32 0.0, %v624
  %v626 = vpop.f32.mrb[0].mxu0
  %627 = vmatprep.mubr.bf16.mxu0 0
  %628 = vmatmul.mubr.bf16.gmra.mrb[0].mxu0 %v371
  %v629 = vpop.f32.mrb[0].mxu0
  %v630 = vadd.f32 0.0, %v629
  %v631 = vpop.f32.mrb[0].mxu0
  %v632 = vpop.f32.mrb[0].mxu0
  %v633 = vadd.f32 0.0, %v632
  %v634 = vpop.f32.mrb[0].mxu0
  %635 = vmatprep.mubr.bf16.mxu0 0
  %636 = vmatmul.mubr.bf16.gmra.mrb[0].mxu0 %v372
  %v637 = vpop.f32.mrb[0].mxu0
  %v638 = vadd.f32 0.0, %v637
  %v639 = vpop.f32.mrb[0].mxu0
  %v640 = vpop.f32.mrb[0].mxu0
  %v641 = vadd.f32 0.0, %v640
  %v642 = vpop.f32.mrb[0].mxu0
  %643 = vmatprep.mubr.bf16.mxu0 0
  %644 = vmatmul.mubr.bf16.gmra.mrb[0].mxu0 %v373
  %v645 = vpop.f32.mrb[0].mxu0
  %v646 = vadd.f32 0.0, %v645
  %v647 = vpop.f32.mrb[0].mxu0
  %v648 = vpop.f32.mrb[0].mxu0
  %v649 = vadd.f32 0.0, %v648
  %v650 = vpop.f32.mrb[0].mxu0
  %651 = vmatprep.mubr.bf16.mxu0 0
  %652 = vmatmul.mubr.bf16.gmra.mrb[0].mxu0 %v374
  %v653 = vpop.f32.mrb[0].mxu0
  %v654 = vadd.f32 0.0, %v653
  %v655 = vpop.f32.mrb[0].mxu0
  %v656 = vpop.f32.mrb[0].mxu0
  %v657 = vadd.f32 0.0, %v656
  %v658 = vpop.f32.mrb[0].mxu0
  %659 = vmatprep.mubr.bf16.mxu0 0
  %660 = vmatmul.mubr.bf16.gmra.mrb[0].mxu0 %v375
  %v661 = vpop.f32.mrb[0].mxu0
  %v662 = vadd.f32 0.0, %v661
  %v663 = vpop.f32.mrb[0].mxu0
  %v664 = vpop.f32.mrb[0].mxu0
  %v665 = vadd.f32 0.0, %v664
  %v666 = vpop.f32.mrb[0].mxu0
  %667 = vmatprep.mubr.bf16.mxu0 0
  %668 = vmatmul.mubr.bf16.gmra.mrb[0].mxu0 %v376
  %v669 = vpop.f32.mrb[0].mxu0
  %v670 = vadd.f32 0.0, %v669
  %v671 = vpop.f32.mrb[0].mxu0
  %v672 = vpop.f32.mrb[0].mxu0
  %v673 = vadd.f32 0.0, %v672
  %v674 = vpop.f32.mrb[0].mxu0
  %675 = vmatprep.mubr.bf16.mxu0 0
  %676 = vmatmul.mubr.bf16.gmra.mrb[0].mxu0 %v377
  %v677 = vpop.f32.mrb[0].mxu0
  %v678 = vadd.f32 0.0, %v677
  %v679 = vpop.f32.mrb[0].mxu0
  %v680 = vpop.f32.mrb[0].mxu0
  %v681 = vadd.f32 0.0, %v680
  %v682 = vpop.f32.mrb[0].mxu0
  %683 = vmatprep.mubr.bf16.mxu0 0
  %684 = vmatmul.mubr.bf16.gmra.mrb[0].mxu0 %v378
  %v685 = vpop.f32.mrb[0].mxu0
  %v686 = vadd.f32 0.0, %v685
  %v687 = vpop.f32.mrb[0].mxu0
  %v688 = vpop.f32.mrb[0].mxu0
  %v689 = vadd.f32 0.0, %v688
  %v690 = vpop.f32.mrb[0].mxu0
  %691 = vmatprep.mubr.bf16.mxu0 0
  %692 = vmatmul.mubr.bf16.gmra.mrb[0].mxu0 %v379
  %v693 = vpop.f32.mrb[0].mxu0
  %v694 = vadd.f32 0.0, %v693
  %v695 = vpop.f32.mrb[0].mxu0
  %v696 = vpop.f32.mrb[0].mxu0
  %v697 = vadd.f32 0.0, %v696
  %v698 = vpop.f32.mrb[0].mxu0
  %699 = vmatprep.mubr.bf16.mxu0 0
  %700 = vmatmul.mubr.bf16.gmra.mrb[0].mxu0 %v380
  %v701 = vpop.f32.mrb[0].mxu0
  %v702 = vadd.f32 0.0, %v701
  %v703 = vpop.f32.mrb[0].mxu0
  %v704 = vpop.f32.mrb[0].mxu0
  %v705 = vadd.f32 0.0, %v704
  %v706 = vpop.f32.mrb[0].mxu0
  %707 = vmatprep.mubr.bf16.mxu0 0
  %708 = vmatmul.mubr.bf16.gmra.mrb[0].mxu0 %v381
  %v709 = vpop.f32.mrb[0].mxu0
  %v710 = vadd.f32 0.0, %v709
  %v711 = vpop.f32.mrb[0].mxu0
  %v712 = vpop.f32.mrb[0].mxu0
  %v713 = vadd.f32 0.0, %v712
  %v714 = vpop.f32.mrb[0].mxu0
  %715 = vmatprep.mubr.bf16.mxu0 0
  %716 = vmatmul.mubr.bf16.gmra.mrb[0].mxu0 %v382
  %v717 = vpop.f32.mrb[0].mxu0
  %v718 = vadd.f32 0.0, %v717
  %v719 = vpop.f32.mrb[0].mxu0
  %v720 = vpop.f32.mrb[0].mxu0
  %v721 = vadd.f32 0.0, %v720
  %v722 = vpop.f32.mrb[0].mxu0
  %723 = vmatprep.mubr.bf16.mxu0 0
  %724 = vmatmul.mubr.bf16.gmra.mrb[0].mxu0 %v383
  %v725 = vpop.f32.mrb[0].mxu0
  %v726 = vadd.f32 0.0, %v725
  %v727 = vpop.f32.mrb[0].mxu0
  %v728 = vpop.f32.mrb[0].mxu0
  %v729 = vadd.f32 0.0, %v728
  %v730 = vpop.f32.mrb[0].mxu0
  %731 = vmatprep.mubr.bf16.mxu0 0
  %732 = vmatmul.mubr.bf16.gmra.mrb[0].mxu0 %v384
  %v733 = vpop.f32.mrb[0].mxu0
  %v734 = vadd.f32 0.0, %v733
  %v735 = vpop.f32.mrb[0].mxu0
  %v736 = vpop.f32.mrb[0].mxu0
  %v737 = vadd.f32 0.0, %v736
  %v738 = vpop.f32.mrb[0].mxu0
  %739 = vmatprep.mubr.bf16.mxu0 0
  %740 = vmatmul.mubr.bf16.gmra.mrb[0].mxu0 %v385
  %v741 = vpop.f32.mrb[0].mxu0
  %v742 = vadd.f32 0.0, %v741
  %v743 = vpop.f32.mrb[0].mxu0
  %v744 = vpop.f32.mrb[0].mxu0
  %v745 = vadd.f32 0.0, %v744
  %v746 = vpop.f32.mrb[0].mxu0
  %747 = vmatprep.mubr.bf16.mxu0 0
  %748 = vmatmul.mubr.bf16.gmra.mrb[0].mxu0 %v386
  %v749 = vpop.f32.mrb[0].mxu0
  %v750 = vadd.f32 0.0, %v749
  %v751 = vpop.f32.mrb[0].mxu0
  %v752 = vpop.f32.mrb[0].mxu0
  %v753 = vadd.f32 0.0, %v752
  %v754 = vpop.f32.mrb[0].mxu0
  %755 = vdwg.mxu0
  %v756 = vadd.f32 %v83, %v502
  %v757 = vadd.f32 %v84, %v505
  %v758 = vadd.f32 %v85, %v510
  %v759 = vadd.f32 %v86, %v513
  %v760 = vadd.f32 %v87, %v518
  %v761 = vadd.f32 %v88, %v521
  %v762 = vadd.f32 %v89, %v526
  %v763 = vadd.f32 %v90, %v529
  %v764 = vadd.f32 %v91, %v534
  %v765 = vadd.f32 %v92, %v537
  %v766 = vadd.f32 %v93, %v542
  %v767 = vadd.f32 %v94, %v545
  %v768 = vadd.f32 %v95, %v550
  %v769 = vadd.f32 %v96, %v553
  %v770 = vadd.f32 %v97, %v558
  %v771 = vadd.f32 %v98, %v561
  %v772 = vadd.f32 %v99, %v566
  %v773 = vadd.f32 %v100, %v569
  %v774 = vadd.f32 %v101, %v574
  %v775 = vadd.f32 %v102, %v577
  %v776 = vadd.f32 %v103, %v582
  %v777 = vadd.f32 %v104, %v585
  %v778 = vadd.f32 %v105, %v590
  %v779 = vadd.f32 %v106, %v593
  %v780 = vadd.f32 %v107, %v598
  %v781 = vadd.f32 %v108, %v601
  %v782 = vadd.f32 %v109, %v606
  %v783 = vadd.f32 %v110, %v609
  %v784 = vadd.f32 %v111, %v614
  %v785 = vadd.f32 %v112, %v617
  %v786 = vadd.f32 %v113, %v622
  %v787 = vadd.f32 %v114, %v625
  %v788 = vadd.f32 %v115, %v630
  %v789 = vadd.f32 %v116, %v633
  %v790 = vadd.f32 %v117, %v638
  %v791 = vadd.f32 %v118, %v641
  %v792 = vadd.f32 %v119, %v646
  %v793 = vadd.f32 %v120, %v649
  %v794 = vadd.f32 %v121, %v654
  %v795 = vadd.f32 %v122, %v657
  %v796 = vadd.f32 %v123, %v662
  %v797 = vadd.f32 %v124, %v665
  %v798 = vadd.f32 %v125, %v670
  %v799 = vadd.f32 %v126, %v673
  %v800 = vadd.f32 %v127, %v678
  %v801 = vadd.f32 %v128, %v681
  %v802 = vadd.f32 %v129, %v686
  %v803 = vadd.f32 %v130, %v689
  %v804 = vadd.f32 %v131, %v694
  %v805 = vadd.f32 %v132, %v697
  %v806 = vadd.f32 %v133, %v702
  %v807 = vadd.f32 %v134, %v705
  %v808 = vadd.f32 %v135, %v710
  %v809 = vadd.f32 %v136, %v713
  %v810 = vadd.f32 %v137, %v718
  %v811 = vadd.f32 %v138, %v721
  %v812 = vadd.f32 %v139, %v726
  %v813 = vadd.f32 %v140, %v729
  %v814 = vadd.f32 %v141, %v734
  %v815 = vadd.f32 %v142, %v737
  %v816 = vadd.f32 %v143, %v742
  %v817 = vadd.f32 %v144, %v745
  %v818 = vadd.f32 %v145, %v750
  %v819 = vadd.f32 %v146, %v753
  %820 = vst [vmem:[#allocation2] sm:$0xff] %v756
  %821 = vst [vmem:[#allocation2 + $0x8] sm:$0xff] %v757
  %822 = vst [vmem:[#allocation2 + $0x10] sm:$0xff] %v758
  %823 = vst [vmem:[#allocation2 + $0x18] sm:$0xff] %v759
  %824 = vst [vmem:[#allocation2 + $0x20] sm:$0xff] %v760
  %825 = vst [vmem:[#allocation2 + $0x28] sm:$0xff] %v761
  %826 = vst [vmem:[#allocation2 + $0x30] sm:$0xff] %v762
  %827 = vst [vmem:[#allocation2 + $0x38] sm:$0xff] %v763
  %828 = vst [vmem:[#allocation2 + $0x40] sm:$0xff] %v764
  %829 = vst [vmem:[#allocation2 + $0x48] sm:$0xff] %v765
  %830 = vst [vmem:[#allocation2 + $0x50] sm:$0xff] %v766
  %831 = vst [vmem:[#allocation2 + $0x58] sm:$0xff] %v767
  %832 = vst [vmem:[#allocation2 + $0x60] sm:$0xff] %v768
  %833 = vst [vmem:[#allocation2 + $0x68] sm:$0xff] %v769
  %834 = vst [vmem:[#allocation2 + $0x70] sm:$0xff] %v770
  %835 = vst [vmem:[#allocation2 + $0x78] sm:$0xff] %v771
  %836 = vst [vmem:[#allocation2 + $0x80] sm:$0xff] %v772
  %837 = vst [vmem:[#allocation2 + $0x88] sm:$0xff] %v773
  %838 = vst [vmem:[#allocation2 + $0x90] sm:$0xff] %v774
  %839 = vst [vmem:[#allocation2 + $0x98] sm:$0xff] %v775
  %840 = vst [vmem:[#allocation2 + $0xa0] sm:$0xff] %v776
  %841 = vst [vmem:[#allocation2 + $0xa8] sm:$0xff] %v777
  %842 = vst [vmem:[#allocation2 + $0xb0] sm:$0xff] %v778
  %843 = vst [vmem:[#allocation2 + $0xb8] sm:$0xff] %v779
  %844 = vst [vmem:[#allocation2 + $0xc0] sm:$0xff] %v780
  %845 = vst [vmem:[#allocation2 + $0xc8] sm:$0xff] %v781
  %846 = vst [vmem:[#allocation2 + $0xd0] sm:$0xff] %v782
  %847 = vst [vmem:[#allocation2 + $0xd8] sm:$0xff] %v783
  %848 = vst [vmem:[#allocation2 + $0xe0] sm:$0xff] %v784
  %849 = vst [vmem:[#allocation2 + $0xe8] sm:$0xff] %v785
  %850 = vst [vmem:[#allocation2 + $0xf0] sm:$0xff] %v786
  %851 = vst [vmem:[#allocation2 + $0xf8] sm:$0xff] %v787
  %852 = vst [vmem:[#allocation2 + $0x100] sm:$0xff] %v788
  %853 = vst [vmem:[#allocation2 + $0x108] sm:$0xff] %v789
  %854 = vst [vmem:[#allocation2 + $0x110] sm:$0xff] %v790
  %855 = vst [vmem:[#allocation2 + $0x118] sm:$0xff] %v791
  %856 = vst [vmem:[#allocation2 + $0x120] sm:$0xff] %v792
  %857 = vst [vmem:[#allocation2 + $0x128] sm:$0xff] %v793
  %858 = vst [vmem:[#allocation2 + $0x130] sm:$0xff] %v794
  %859 = vst [vmem:[#allocation2 + $0x138] sm:$0xff] %v795
  %860 = vst [vmem:[#allocation2 + $0x140] sm:$0xff] %v796
  %861 = vst [vmem:[#allocation2 + $0x148] sm:$0xff] %v797
  %862 = vst [vmem:[#allocation2 + $0x150] sm:$0xff] %v798
  %863 = vst [vmem:[#allocation2 + $0x158] sm:$0xff] %v799
  %864 = vst [vmem:[#allocation2 + $0x160] sm:$0xff] %v800
  %865 = vst [vmem:[#allocation2 + $0x168] sm:$0xff] %v801
  %866 = vst [vmem:[#allocation2 + $0x170] sm:$0xff] %v802
  %867 = vst [vmem:[#allocation2 + $0x178] sm:$0xff] %v803
  %868 = vst [vmem:[#allocation2 + $0x180] sm:$0xff] %v804
  %869 = vst [vmem:[#allocation2 + $0x188] sm:$0xff] %v805
  %870 = vst [vmem:[#allocation2 + $0x190] sm:$0xff] %v806
  %871 = vst [vmem:[#allocation2 + $0x198] sm:$0xff] %v807
  %872 = vst [vmem:[#allocation2 + $0x1a0] sm:$0xff] %v808
  %873 = vst [vmem:[#allocation2 + $0x1a8] sm:$0xff] %v809
  %874 = vst [vmem:[#allocation2 + $0x1b0] sm:$0xff] %v810
  %875 = vst [vmem:[#allocation2 + $0x1b8] sm:$0xff] %v811
  %876 = vst [vmem:[#allocation2 + $0x1c0] sm:$0xff] %v812
  %877 = vst [vmem:[#allocation2 + $0x1c8] sm:$0xff] %v813
  %878 = vst [vmem:[#allocation2 + $0x1d0] sm:$0xff] %v814
  %879 = vst [vmem:[#allocation2 + $0x1d8] sm:$0xff] %v815
  %880 = vst [vmem:[#allocation2 + $0x1e0] sm:$0xff] %v816
  %881 = vst [vmem:[#allocation2 + $0x1e8] sm:$0xff] %v817
  %882 = vst [vmem:[#allocation2 + $0x1f0] sm:$0xff] %v818
  %883 = vst [vmem:[#allocation2 + $0x1f8] sm:$0xff] %v819
  // Predicated region
  $region18: #{_lambda_.38} parent=0 // pred_check
    %p884 = pneg %p15
  $region19: #{_lambda_.38} parent=0 // pred_check_branch
    %886 = sbr.rel (%p884) target = $region21
  $region20: #{_lambda_.38} parent=0 // pred_region
    %v887 = vld [vmem:[#allocation2] sm:$0xff]
    %v888 = vld [vmem:[#allocation2 + $0x8] sm:$0xff]
    %v889 = vld [vmem:[#allocation2 + $0x10] sm:$0xff]
    %v890 = vld [vmem:[#allocation2 + $0x18] sm:$0xff]
    %v891 = vld [vmem:[#allocation2 + $0x20] sm:$0xff]
    %v892 = vld [vmem:[#allocation2 + $0x28] sm:$0xff]
    %v893 = vld [vmem:[#allocation2 + $0x30] sm:$0xff]
    %v894 = vld [vmem:[#allocation2 + $0x38] sm:$0xff]
    %v895 = vld [vmem:[#allocation2 + $0x40] sm:$0xff]
    %v896 = vld [vmem:[#allocation2 + $0x48] sm:$0xff]
    %v897 = vld [vmem:[#allocation2 + $0x50] sm:$0xff]
    %v898 = vld [vmem:[#allocation2 + $0x58] sm:$0xff]
    %v899 = vld [vmem:[#allocation2 + $0x60] sm:$0xff]
    %v900 = vld [vmem:[#allocation2 + $0x68] sm:$0xff]
    %v901 = vld [vmem:[#allocation2 + $0x70] sm:$0xff]
    %v902 = vld [vmem:[#allocation2 + $0x78] sm:$0xff]
    %v903 = vld [vmem:[#allocation2 + $0x80] sm:$0xff]
    %v904 = vld [vmem:[#allocation2 + $0x88] sm:$0xff]
    %v905 = vld [vmem:[#allocation2 + $0x90] sm:$0xff]
    %v906 = vld [vmem:[#allocation2 + $0x98] sm:$0xff]
    %v907 = vld [vmem:[#allocation2 + $0xa0] sm:$0xff]
    %v908 = vld [vmem:[#allocation2 + $0xa8] sm:$0xff]
    %v909 = vld [vmem:[#allocation2 + $0xb0] sm:$0xff]
    %v910 = vld [vmem:[#allocation2 + $0xb8] sm:$0xff]
    %v911 = vld [vmem:[#allocation2 + $0xc0] sm:$0xff]
    %v912 = vld [vmem:[#allocation2 + $0xc8] sm:$0xff]
    %v913 = vld [vmem:[#allocation2 + $0xd0] sm:$0xff]
    %v914 = vld [vmem:[#allocation2 + $0xd8] sm:$0xff]
    %v915 = vld [vmem:[#allocation2 + $0xe0] sm:$0xff]
    %v916 = vld [vmem:[#allocation2 + $0xe8] sm:$0xff]
    %v917 = vld [vmem:[#allocation2 + $0xf0] sm:$0xff]
    %v918 = vld [vmem:[#allocation2 + $0xf8] sm:$0xff]
    %v919 = vld [vmem:[#allocation2 + $0x100] sm:$0xff]
    %v920 = vld [vmem:[#allocation2 + $0x108] sm:$0xff]
    %v921 = vld [vmem:[#allocation2 + $0x110] sm:$0xff]
    %v922 = vld [vmem:[#allocation2 + $0x118] sm:$0xff]
    %v923 = vld [vmem:[#allocation2 + $0x120] sm:$0xff]
    %v924 = vld [vmem:[#allocation2 + $0x128] sm:$0xff]
    %v925 = vld [vmem:[#allocation2 + $0x130] sm:$0xff]
    %v926 = vld [vmem:[#allocation2 + $0x138] sm:$0xff]
    %v927 = vld [vmem:[#allocation2 + $0x140] sm:$0xff]
    %v928 = vld [vmem:[#allocation2 + $0x148] sm:$0xff]
    %v929 = vld [vmem:[#allocation2 + $0x150] sm:$0xff]
    %v930 = vld [vmem:[#allocation2 + $0x158] sm:$0xff]
    %v931 = vld [vmem:[#allocation2 + $0x160] sm:$0xff]
    %v932 = vld [vmem:[#allocation2 + $0x168] sm:$0xff]
    %v933 = vld [vmem:[#allocation2 + $0x170] sm:$0xff]
    %v934 = vld [vmem:[#allocation2 + $0x178] sm:$0xff]
    %v935 = vld [vmem:[#allocation2 + $0x180] sm:$0xff]
    %v936 = vld [vmem:[#allocation2 + $0x188] sm:$0xff]
    %v937 = vld [vmem:[#allocation2 + $0x190] sm:$0xff]
    %v938 = vld [vmem:[#allocation2 + $0x198] sm:$0xff]
    %v939 = vld [vmem:[#allocation2 + $0x1a0] sm:$0xff]
    %v940 = vld [vmem:[#allocation2 + $0x1a8] sm:$0xff]
    %v941 = vld [vmem:[#allocation2 + $0x1b0] sm:$0xff]
    %v942 = vld [vmem:[#allocation2 + $0x1b8] sm:$0xff]
    %v943 = vld [vmem:[#allocation2 + $0x1c0] sm:$0xff]
    %v944 = vld [vmem:[#allocation2 + $0x1c8] sm:$0xff]
    %v945 = vld [vmem:[#allocation2 + $0x1d0] sm:$0xff]
    %v946 = vld [vmem:[#allocation2 + $0x1d8] sm:$0xff]
    %v947 = vld [vmem:[#allocation2 + $0x1e0] sm:$0xff]
    %v948 = vld [vmem:[#allocation2 + $0x1e8] sm:$0xff]
    %v949 = vld [vmem:[#allocation2 + $0x1f0] sm:$0xff]
    %v950 = vld [vmem:[#allocation2 + $0x1f8] sm:$0xff]
    %v951 = vld [vmem:[%s2] sm:$0x1]
    %v953 = vlaneseq
    %v954 = vshrl.u32 %v953, 7
    %v955 = vsub.s32 0, %v954
    %v956 = vrot.slane %v951, %v955
    %v958 = vadd.f32 %v887, %v956
    %v959 = vadd.f32 %v888, %v956
    %v960 = vadd.f32 %v889, %v956
    %v961 = vadd.f32 %v890, %v956
    %v962 = vadd.f32 %v891, %v956
    %v963 = vadd.f32 %v892, %v956
    %v964 = vadd.f32 %v893, %v956
    %v965 = vadd.f32 %v894, %v956
    %v966 = vadd.f32 %v895, %v956
    %v967 = vadd.f32 %v896, %v956
    %v968 = vadd.f32 %v897, %v956
    %v969 = vadd.f32 %v898, %v956
    %v970 = vadd.f32 %v899, %v956
    %v971 = vadd.f32 %v900, %v956
    %v972 = vadd.f32 %v901, %v956
    %v973 = vadd.f32 %v902, %v956
    %v974 = vadd.f32 %v903, %v956
    %v975 = vadd.f32 %v904, %v956
    %v976 = vadd.f32 %v905, %v956
    %v977 = vadd.f32 %v906, %v956
    %v978 = vadd.f32 %v907, %v956
    %v979 = vadd.f32 %v908, %v956
    %v980 = vadd.f32 %v909, %v956
    %v981 = vadd.f32 %v910, %v956
    %v982 = vadd.f32 %v911, %v956
    %v983 = vadd.f32 %v912, %v956
    %v984 = vadd.f32 %v913, %v956
    %v985 = vadd.f32 %v914, %v956
    %v986 = vadd.f32 %v915, %v956
    %v987 = vadd.f32 %v916, %v956
    %v988 = vadd.f32 %v917, %v956
    %v989 = vadd.f32 %v918, %v956
    %v990 = vadd.f32 %v919, %v956
    %v991 = vadd.f32 %v920, %v956
    %v992 = vadd.f32 %v921, %v956
    %v993 = vadd.f32 %v922, %v956
    %v994 = vadd.f32 %v923, %v956
    %v995 = vadd.f32 %v924, %v956
    %v996 = vadd.f32 %v925, %v956
    %v997 = vadd.f32 %v926, %v956
    %v998 = vadd.f32 %v927, %v956
    %v999 = vadd.f32 %v928, %v956
    %v1000 = vadd.f32 %v929, %v956
    %v1001 = vadd.f32 %v930, %v956
    %v1002 = vadd.f32 %v931, %v956
    %v1003 = vadd.f32 %v932, %v956
    %v1004 = vadd.f32 %v933, %v956
    %v1005 = vadd.f32 %v934, %v956
    %v1006 = vadd.f32 %v935, %v956
    %v1007 = vadd.f32 %v936, %v956
    %v1008 = vadd.f32 %v937, %v956
    %v1009 = vadd.f32 %v938, %v956
    %v1010 = vadd.f32 %v939, %v956
    %v1011 = vadd.f32 %v940, %v956
    %v1012 = vadd.f32 %v941, %v956
    %v1013 = vadd.f32 %v942, %v956
    %v1014 = vadd.f32 %v943, %v956
    %v1015 = vadd.f32 %v944, %v956
    %v1016 = vadd.f32 %v945, %v956
    %v1017 = vadd.f32 %v946, %v956
    %v1018 = vadd.f32 %v947, %v956
    %v1019 = vadd.f32 %v948, %v956
    %v1020 = vadd.f32 %v949, %v956
    %v1021 = vadd.f32 %v950, %v956
    %1022 = vst [vmem:[%s3] sm:$0xff] %v958
    %1023 = vst [vmem:[%s3 + $0x8] sm:$0xff] %v959
    %1024 = vst [vmem:[%s3 + $0x10] sm:$0xff] %v960
    %1025 = vst [vmem:[%s3 + $0x18] sm:$0xff] %v961
    %1026 = vst [vmem:[%s3 + $0x20] sm:$0xff] %v962
    %1027 = vst [vmem:[%s3 + $0x28] sm:$0xff] %v963
    %1028 = vst [vmem:[%s3 + $0x30] sm:$0xff] %v964
    %1029 = vst [vmem:[%s3 + $0x38] sm:$0xff] %v965
    %1030 = vst [vmem:[%s3 + $0x40] sm:$0xff] %v966
    %1031 = vst [vmem:[%s3 + $0x48] sm:$0xff] %v967
    %1032 = vst [vmem:[%s3 + $0x50] sm:$0xff] %v968
    %1033 = vst [vmem:[%s3 + $0x58] sm:$0xff] %v969
    %1034 = vst [vmem:[%s3 + $0x60] sm:$0xff] %v970
    %1035 = vst [vmem:[%s3 + $0x68] sm:$0xff] %v971
    %1036 = vst [vmem:[%s3 + $0x70] sm:$0xff] %v972
    %1037 = vst [vmem:[%s3 + $0x78] sm:$0xff] %v973
    %1038 = vst [vmem:[%s3 + $0x80] sm:$0xff] %v974
    %1039 = vst [vmem:[%s3 + $0x88] sm:$0xff] %v975
    %1040 = vst [vmem:[%s3 + $0x90] sm:$0xff] %v976
    %1041 = vst [vmem:[%s3 + $0x98] sm:$0xff] %v977
    %1042 = vst [vmem:[%s3 + $0xa0] sm:$0xff] %v978
    %1043 = vst [vmem:[%s3 + $0xa8] sm:$0xff] %v979
    %1044 = vst [vmem:[%s3 + $0xb0] sm:$0xff] %v980
    %1045 = vst [vmem:[%s3 + $0xb8] sm:$0xff] %v981
    %1046 = vst [vmem:[%s3 + $0xc0] sm:$0xff] %v982
    %1047 = vst [vmem:[%s3 + $0xc8] sm:$0xff] %v983
    %1048 = vst [vmem:[%s3 + $0xd0] sm:$0xff] %v984
    %1049 = vst [vmem:[%s3 + $0xd8] sm:$0xff] %v985
    %1050 = vst [vmem:[%s3 + $0xe0] sm:$0xff] %v986
    %1051 = vst [vmem:[%s3 + $0xe8] sm:$0xff] %v987
    %1052 = vst [vmem:[%s3 + $0xf0] sm:$0xff] %v988
    %1053 = vst [vmem:[%s3 + $0xf8] sm:$0xff] %v989
    %1054 = vst [vmem:[%s3 + $0x100] sm:$0xff] %v990
    %1055 = vst [vmem:[%s3 + $0x108] sm:$0xff] %v991
    %1056 = vst [vmem:[%s3 + $0x110] sm:$0xff] %v992
    %1057 = vst [vmem:[%s3 + $0x118] sm:$0xff] %v993
    %1058 = vst [vmem:[%s3 + $0x120] sm:$0xff] %v994
    %1059 = vst [vmem:[%s3 + $0x128] sm:$0xff] %v995
    %1060 = vst [vmem:[%s3 + $0x130] sm:$0xff] %v996
    %1061 = vst [vmem:[%s3 + $0x138] sm:$0xff] %v997
    %1062 = vst [vmem:[%s3 + $0x140] sm:$0xff] %v998
    %1063 = vst [vmem:[%s3 + $0x148] sm:$0xff] %v999
    %1064 = vst [vmem:[%s3 + $0x150] sm:$0xff] %v1000
    %1065 = vst [vmem:[%s3 + $0x158] sm:$0xff] %v1001
    %1066 = vst [vmem:[%s3 + $0x160] sm:$0xff] %v1002
    %1067 = vst [vmem:[%s3 + $0x168] sm:$0xff] %v1003
    %1068 = vst [vmem:[%s3 + $0x170] sm:$0xff] %v1004
    %1069 = vst [vmem:[%s3 + $0x178] sm:$0xff] %v1005
    %1070 = vst [vmem:[%s3 + $0x180] sm:$0xff] %v1006
    %1071 = vst [vmem:[%s3 + $0x188] sm:$0xff] %v1007
    %1072 = vst [vmem:[%s3 + $0x190] sm:$0xff] %v1008
    %1073 = vst [vmem:[%s3 + $0x198] sm:$0xff] %v1009
    %1074 = vst [vmem:[%s3 + $0x1a0] sm:$0xff] %v1010
    %1075 = vst [vmem:[%s3 + $0x1a8] sm:$0xff] %v1011
    %1076 = vst [vmem:[%s3 + $0x1b0] sm:$0xff] %v1012
    %1077 = vst [vmem:[%s3 + $0x1b8] sm:$0xff] %v1013
    %1078 = vst [vmem:[%s3 + $0x1c0] sm:$0xff] %v1014
    %1079 = vst [vmem:[%s3 + $0x1c8] sm:$0xff] %v1015
    %1080 = vst [vmem:[%s3 + $0x1d0] sm:$0xff] %v1016
    %1081 = vst [vmem:[%s3 + $0x1d8] sm:$0xff] %v1017
    %1082 = vst [vmem:[%s3 + $0x1e0] sm:$0xff] %v1018
    %1083 = vst [vmem:[%s3 + $0x1e8] sm:$0xff] %v1019
    %1084 = vst [vmem:[%s3 + $0x1f0] sm:$0xff] %v1020
    %1085 = vst [vmem:[%s3 + $0x1f8] sm:$0xff] %v1021
  $region21: #{_lambda_.38} parent=0 // pred_fallthru
    _
  // Predicated region
  $region22: #{_lambda_.38} parent=0 // pred_check
    _
  $region23: #{_lambda_.38} parent=0 // pred_check_branch
    %1087 = sbr.rel (0) target = $region25
  $region24: #{_lambda_.38} parent=0 // pred_region
    _
  $region25: #{_lambda_.38} parent=0 // pred_fallthru
    _
  // Predicated region
  $region26: #{_lambda_.38} parent=0 // pred_check
    _
  $region27: #{_lambda_.38} parent=0 // pred_check_branch
    %1089 = sbr.rel (0) target = $region29
  $region28: #{_lambda_.38} parent=0 // pred_region
    _
  $region29: #{_lambda_.38} parent=0 // pred_fallthru
    _

// kernel: _lambda_.41
$region0: #{_lambda_.41}
  #allocation0 [shape = 'u32[]', space=smem, size = 0x4, offset = 0x4, fixed_abs, tag = 'smem constant byte address 0x4 - core index']
  #allocation1 [shape = 'u32[144,128]{1,0:T(1,128)}', space=vmem, size = 0x12000, scoped, tag = 'internal scratch']
  #allocation2 [shape = 'f32[128,128]{1,0:T(8,128)}', space=vmem, size = 0x10000, scoped, tag = 'scratch operand']
  %s0 = inlined_call_operand.vmem [shape: bf16[128,256], index: 0, kind: input, shape index: {}]
  %s1 = inlined_call_operand.vmem [shape: bf16[256,128], index: 1, kind: input, shape index: {}]
  %s2 = inlined_call_operand.vmem [shape: f32[1,128], index: 2, kind: input, shape index: {}]
  %s3 = inlined_call_operand.vmem [shape: f32[128,128], index: 3, kind: output, shape index: {}]
  %s4 = sld [smem:[#allocation0]]
  $region30: #{_lambda_.41} parent=0
    _
  %s6 = ssub.s32 1, %s4
  %s7 = scalar_select 0, %s6, %s4
  // Predicated region
  $region2: #{_lambda_.41} parent=0 // pred_check
    _
  $region3: #{_lambda_.41} parent=0 // pred_check_branch
    %9 = sbr.rel (0) target = $region5
  $region4: #{_lambda_.41} parent=0 // pred_region
    _
  $region5: #{_lambda_.41} parent=0 // pred_fallthru
    _
  // Predicated region
  $region6: #{_lambda_.41} parent=0 // pred_check
    _
  $region7: #{_lambda_.41} parent=0 // pred_check_branch
    %11 = sbr.rel (0) target = $region9
  $region8: #{_lambda_.41} parent=0 // pred_region
    _
  $region9: #{_lambda_.41} parent=0 // pred_fallthru
    _
  // Predicated region
  $region10: #{_lambda_.41} parent=0 // pred_check
    _
  $region11: #{_lambda_.41} parent=0 // pred_check_branch
    %13 = sbr.rel (0) target = $region13
  $region12: #{_lambda_.41} parent=0 // pred_region
    _
  $region13: #{_lambda_.41} parent=0 // pred_fallthru
    _
  %p15 = scmp.eq.s32.totalorder 0, 0
  // Predicated region
  $region14: #{_lambda_.41} parent=0 // pred_check
    %p16 = pneg %p15
  $region15: #{_lambda_.41} parent=0 // pred_check_branch
    %18 = sbr.rel (%p16) target = $region17
  $region16: #{_lambda_.41} parent=0 // pred_region
    %19 = vst [vmem:[#allocation2] sm:$0xff] 0.0
    %20 = vst [vmem:[#allocation2 + $0x8] sm:$0xff] 0.0
    %21 = vst [vmem:[#allocation2 + $0x10] sm:$0xff] 0.0
    %22 = vst [vmem:[#allocation2 + $0x18] sm:$0xff] 0.0
    %23 = vst [vmem:[#allocation2 + $0x20] sm:$0xff] 0.0
    %24 = vst [vmem:[#allocation2 + $0x28] sm:$0xff] 0.0
    %25 = vst [vmem:[#allocation2 + $0x30] sm:$0xff] 0.0
    %26 = vst [vmem:[#allocation2 + $0x38] sm:$0xff] 0.0
    %27 = vst [vmem:[#allocation2 + $0x40] sm:$0xff] 0.0
    %28 = vst [vmem:[#allocation2 + $0x48] sm:$0xff] 0.0
    %29 = vst [vmem:[#allocation2 + $0x50] sm:$0xff] 0.0
    %30 = vst [vmem:[#allocation2 + $0x58] sm:$0xff] 0.0
    %31 = vst [vmem:[#allocation2 + $0x60] sm:$0xff] 0.0
    %32 = vst [vmem:[#allocation2 + $0x68] sm:$0xff] 0.0
    %33 = vst [vmem:[#allocation2 + $0x70] sm:$0xff] 0.0
    %34 = vst [vmem:[#allocation2 + $0x78] sm:$0xff] 0.0
  $region17: #{_lambda_.41} parent=0 // pred_fallthru
    _
  %v35 = vld [vmem:[#allocation2] sm:$0xff]
  %v36 = vld [vmem:[#allocation2 + $0x8] sm:$0xff]
  %v37 = vld [vmem:[#allocation2 + $0x10] sm:$0xff]
  %v38 = vld [vmem:[#allocation2 + $0x18] sm:$0xff]
  %v39 = vld [vmem:[#allocation2 + $0x20] sm:$0xff]
  %v40 = vld [vmem:[#allocation2 + $0x28] sm:$0xff]
  %v41 = vld [vmem:[#allocation2 + $0x30] sm:$0xff]
  %v42 = vld [vmem:[#allocation2 + $0x38] sm:$0xff]
  %v43 = vld [vmem:[#allocation2 + $0x40] sm:$0xff]
  %v44 = vld [vmem:[#allocation2 + $0x48] sm:$0xff]
  %v45 = vld [vmem:[#allocation2 + $0x50] sm:$0xff]
  %v46 = vld [vmem:[#allocation2 + $0x58] sm:$0xff]
  %v47 = vld [vmem:[#allocation2 + $0x60] sm:$0xff]
  %v48 = vld [vmem:[#allocation2 + $0x68] sm:$0xff]
  %v49 = vld [vmem:[#allocation2 + $0x70] sm:$0xff]
  %v50 = vld [vmem:[#allocation2 + $0x78] sm:$0xff]
  %v51 = vld [vmem:[%s0] sm:$0xff]
  %v52 = vld [vmem:[%s0 + $0x8] sm:$0xff]
  %v53 = vld [vmem:[%s0 + $0x10] sm:$0xff]
  %v54 = vld [vmem:[%s0 + $0x18] sm:$0xff]
  %v55 = vld [vmem:[%s0 + $0x20] sm:$0xff]
  %v56 = vld [vmem:[%s0 + $0x28] sm:$0xff]
  %v57 = vld [vmem:[%s0 + $0x30] sm:$0xff]
  %v58 = vld [vmem:[%s0 + $0x38] sm:$0xff]
  %v59 = vld [vmem:[%s0 + $0x40] sm:$0xff]
  %v60 = vld [vmem:[%s0 + $0x48] sm:$0xff]
  %v61 = vld [vmem:[%s0 + $0x50] sm:$0xff]
  %v62 = vld [vmem:[%s0 + $0x58] sm:$0xff]
  %v63 = vld [vmem:[%s0 + $0x60] sm:$0xff]
  %v64 = vld [vmem:[%s0 + $0x68] sm:$0xff]
  %v65 = vld [vmem:[%s0 + $0x70] sm:$0xff]
  %v66 = vld [vmem:[%s0 + $0x78] sm:$0xff]
  %v67 = vld [vmem:[%s1] sm:$0xf]
  %v68 = vld [vmem:[%s1 + $0x4] sm:$0xf]
  %v69 = vld [vmem:[%s1 + $0x8] sm:$0xf]
  %v70 = vld [vmem:[%s1 + $0xc] sm:$0xf]
  %v71 = vld [vmem:[%s1 + $0x10] sm:$0xf]
  %v72 = vld [vmem:[%s1 + $0x14] sm:$0xf]
  %v73 = vld [vmem:[%s1 + $0x18] sm:$0xf]
  %v74 = vld [vmem:[%s1 + $0x1c] sm:$0xf]
  %v75 = vld [vmem:[%s1 + $0x20] sm:$0xf]
  %v76 = vld [vmem:[%s1 + $0x24] sm:$0xf]
  %v77 = vld [vmem:[%s1 + $0x28] sm:$0xf]
  %v78 = vld [vmem:[%s1 + $0x2c] sm:$0xf]
  %v79 = vld [vmem:[%s1 + $0x30] sm:$0xf]
  %v80 = vld [vmem:[%s1 + $0x34] sm:$0xf]
  %v81 = vld [vmem:[%s1 + $0x38] sm:$0xf]
  %v82 = vld [vmem:[%s1 + $0x3c] sm:$0xf]
  %v83 = vld [vmem:[%s1 + $0x40] sm:$0xf]
  %v84 = vld [vmem:[%s1 + $0x44] sm:$0xf]
  %v85 = vld [vmem:[%s1 + $0x48] sm:$0xf]
  %v86 = vld [vmem:[%s1 + $0x4c] sm:$0xf]
  %v87 = vld [vmem:[%s1 + $0x50] sm:$0xf]
  %v88 = vld [vmem:[%s1 + $0x54] sm:$0xf]
  %v89 = vld [vmem:[%s1 + $0x58] sm:$0xf]
  %v90 = vld [vmem:[%s1 + $0x5c] sm:$0xf]
  %v91 = vld [vmem:[%s1 + $0x60] sm:$0xf]
  %v92 = vld [vmem:[%s1 + $0x64] sm:$0xf]
  %v93 = vld [vmem:[%s1 + $0x68] sm:$0xf]
  %v94 = vld [vmem:[%s1 + $0x6c] sm:$0xf]
  %v95 = vld [vmem:[%s1 + $0x70] sm:$0xf]
  %v96 = vld [vmem:[%s1 + $0x74] sm:$0xf]
  %v97 = vld [vmem:[%s1 + $0x78] sm:$0xf]
  %v98 = vld [vmem:[%s1 + $0x7c] sm:$0xf]
  %v115 = vunpack.c.l.b16 %v51
  %v116 = vunpack.c.h.b16 %v51
  %v117 = vunpack.c.l.b16 %v52
  %v118 = vunpack.c.h.b16 %v52
  %v119 = vunpack.c.l.b16 %v53
  %v120 = vunpack.c.h.b16 %v53
  %v121 = vunpack.c.l.b16 %v54
  %v122 = vunpack.c.h.b16 %v54
  %v123 = vunpack.c.l.b16 %v55
  %v124 = vunpack.c.h.b16 %v55
  %v125 = vunpack.c.l.b16 %v56
  %v126 = vunpack.c.h.b16 %v56
  %v127 = vunpack.c.l.b16 %v57
  %v128 = vunpack.c.h.b16 %v57
  %v129 = vunpack.c.l.b16 %v58
  %v130 = vunpack.c.h.b16 %v58
  %v131 = vunpack.c.l.b16 %v59
  %v132 = vunpack.c.h.b16 %v59
  %v133 = vunpack.c.l.b16 %v60
  %v134 = vunpack.c.h.b16 %v60
  %v135 = vunpack.c.l.b16 %v61
  %v136 = vunpack.c.h.b16 %v61
  %v137 = vunpack.c.l.b16 %v62
  %v138 = vunpack.c.h.b16 %v62
  %v139 = vunpack.c.l.b16 %v63
  %v140 = vunpack.c.h.b16 %v63
  %v141 = vunpack.c.l.b16 %v64
  %v142 = vunpack.c.h.b16 %v64
  %v143 = vunpack.c.l.b16 %v65
  %v144 = vunpack.c.h.b16 %v65
  %v145 = vunpack.c.l.b16 %v66
  %v146 = vunpack.c.h.b16 %v66
  %v147 = vpack.c.b16 %v117, %v115
  %v148 = vpack.c.b16 %v118, %v116
  %v149 = vpack.c.b16 %v121, %v119
  %v150 = vpack.c.b16 %v122, %v120
  %v151 = vpack.c.b16 %v125, %v123
  %v152 = vpack.c.b16 %v126, %v124
  %v153 = vpack.c.b16 %v129, %v127
  %v154 = vpack.c.b16 %v130, %v128
  %v155 = vpack.c.b16 %v133, %v131
  %v156 = vpack.c.b16 %v134, %v132
  %v157 = vpack.c.b16 %v137, %v135
  %v158 = vpack.c.b16 %v138, %v136
  %v159 = vpack.c.b16 %v141, %v139
  %v160 = vpack.c.b16 %v142, %v140
  %v161 = vpack.c.b16 %v145, %v143
  %v162 = vpack.c.b16 %v146, %v144
  %v211 = vunpack.c.l.b16 %v67
  %v212 = vunpack.c.l.b16 %v68
  %v213 = vunpack.c.l.b16 %v69
  %v214 = vunpack.c.l.b16 %v70
  %v215 = vunpack.c.l.b16 %v71
  %v216 = vunpack.c.l.b16 %v72
  %v217 = vunpack.c.l.b16 %v73
  %v218 = vunpack.c.l.b16 %v74
  %v219 = vunpack.c.l.b16 %v75
  %v220 = vunpack.c.l.b16 %v76
  %v221 = vunpack.c.l.b16 %v77
  %v222 = vunpack.c.l.b16 %v78
  %v223 = vunpack.c.l.b16 %v79
  %v224 = vunpack.c.l.b16 %v80
  %v225 = vunpack.c.l.b16 %v81
  %v226 = vunpack.c.l.b16 %v82
  %v227 = vunpack.c.l.b16 %v83
  %v228 = vunpack.c.l.b16 %v84
  %v229 = vunpack.c.l.b16 %v85
  %v230 = vunpack.c.l.b16 %v86
  %v231 = vunpack.c.l.b16 %v87
  %v232 = vunpack.c.l.b16 %v88
  %v233 = vunpack.c.l.b16 %v89
  %v234 = vunpack.c.l.b16 %v90
  %v235 = vunpack.c.l.b16 %v91
  %v236 = vunpack.c.l.b16 %v92
  %v237 = vunpack.c.l.b16 %v93
  %v238 = vunpack.c.l.b16 %v94
  %v239 = vunpack.c.l.b16 %v95
  %v240 = vunpack.c.l.b16 %v96
  %v241 = vunpack.c.l.b16 %v97
  %v242 = vunpack.c.l.b16 %v98
  %v243 = vpack.c.b16 %v212, %v211
  %v244 = vpack.c.b16 %v214, %v213
  %v245 = vpack.c.b16 %v216, %v215
  %v246 = vpack.c.b16 %v218, %v217
  %v247 = vpack.c.b16 %v220, %v219
  %v248 = vpack.c.b16 %v222, %v221
  %v249 = vpack.c.b16 %v224, %v223
  %v250 = vpack.c.b16 %v226, %v225
  %v251 = vpack.c.b16 %v228, %v227
  %v252 = vpack.c.b16 %v230, %v229
  %v253 = vpack.c.b16 %v232, %v231
  %v254 = vpack.c.b16 %v234, %v233
  %v255 = vpack.c.b16 %v236, %v235
  %v256 = vpack.c.b16 %v238, %v237
  %v257 = vpack.c.b16 %v240, %v239
  %v258 = vpack.c.b16 %v242, %v241
  %275 = vmatprep.subr.bf16.mxu0 0
  %276 = vmatpush1.bf16.msra.mxu0 %v243
  %277 = vmatprep.subr.bf16.mxu0 0
  %278 = vmatpush1.bf16.msra.mxu0 %v244
  %279 = vmatprep.subr.bf16.mxu0 0
  %280 = vmatpush1.bf16.msra.mxu0 %v245
  %281 = vmatprep.subr.bf16.mxu0 0
  %282 = vmatpush1.bf16.msra.mxu0 %v246
  %283 = vmatprep.subr.bf16.mxu0 0
  %284 = vmatpush1.bf16.msra.mxu0 %v247
  %285 = vmatprep.subr.bf16.mxu0 0
  %286 = vmatpush1.bf16.msra.mxu0 %v248
  %287 = vmatprep.subr.bf16.mxu0 0
  %288 = vmatpush1.bf16.msra.mxu0 %v249
  %289 = vmatprep.subr.bf16.mxu0 0
  %290 = vmatpush1.bf16.msra.mxu0 %v250
  %291 = vmatprep.subr.bf16.mxu0 0
  %292 = vmatpush1.bf16.msra.mxu0 %v251
  %293 = vmatprep.subr.bf16.mxu0 0
  %294 = vmatpush1.bf16.msra.mxu0 %v252
  %295 = vmatprep.subr.bf16.mxu0 0
  %296 = vmatpush1.bf16.msra.mxu0 %v253
  %297 = vmatprep.subr.bf16.mxu0 0
  %298 = vmatpush1.bf16.msra.mxu0 %v254
  %299 = vmatprep.subr.bf16.mxu0 0
  %300 = vmatpush1.bf16.msra.mxu0 %v255
  %301 = vmatprep.subr.bf16.mxu0 0
  %302 = vmatpush1.bf16.msra.mxu0 %v256
  %303 = vmatprep.subr.bf16.mxu0 0
  %304 = vmatpush1.bf16.msra.mxu0 %v257
  %305 = vmatprep.subr.bf16.mxu0 0
  %306 = vmatpush1.bf16.msra.mxu0 %v258
  %307 = vmatprep.mubr.bf16.mxu0 %v148
  %308 = vmatmul.mubr.bf16.gmra.mrb[0].mxu0 %v147
  %v309 = vpop.f32.mrb[0].mxu0
  %v310 = vadd.f32 0.0, %v309
  %v311 = vpop.f32.mrb[0].mxu0
  %v312 = vpop.f32.mrb[0].mxu0
  %v313 = vadd.f32 0.0, %v312
  %v314 = vpop.f32.mrb[0].mxu0
  %315 = vmatprep.mubr.bf16.mxu0 %v150
  %316 = vmatmul.mubr.bf16.gmra.mrb[0].mxu0 %v149
  %v317 = vpop.f32.mrb[0].mxu0
  %v318 = vadd.f32 0.0, %v317
  %v319 = vpop.f32.mrb[0].mxu0
  %v320 = vpop.f32.mrb[0].mxu0
  %v321 = vadd.f32 0.0, %v320
  %v322 = vpop.f32.mrb[0].mxu0
  %323 = vmatprep.mubr.bf16.mxu0 %v152
  %324 = vmatmul.mubr.bf16.gmra.mrb[0].mxu0 %v151
  %v325 = vpop.f32.mrb[0].mxu0
  %v326 = vadd.f32 0.0, %v325
  %v327 = vpop.f32.mrb[0].mxu0
  %v328 = vpop.f32.mrb[0].mxu0
  %v329 = vadd.f32 0.0, %v328
  %v330 = vpop.f32.mrb[0].mxu0
  %331 = vmatprep.mubr.bf16.mxu0 %v154
  %332 = vmatmul.mubr.bf16.gmra.mrb[0].mxu0 %v153
  %v333 = vpop.f32.mrb[0].mxu0
  %v334 = vadd.f32 0.0, %v333
  %v335 = vpop.f32.mrb[0].mxu0
  %v336 = vpop.f32.mrb[0].mxu0
  %v337 = vadd.f32 0.0, %v336
  %v338 = vpop.f32.mrb[0].mxu0
  %339 = vmatprep.mubr.bf16.mxu0 %v156
  %340 = vmatmul.mubr.bf16.gmra.mrb[0].mxu0 %v155
  %v341 = vpop.f32.mrb[0].mxu0
  %v342 = vadd.f32 0.0, %v341
  %v343 = vpop.f32.mrb[0].mxu0
  %v344 = vpop.f32.mrb[0].mxu0
  %v345 = vadd.f32 0.0, %v344
  %v346 = vpop.f32.mrb[0].mxu0
  %347 = vmatprep.mubr.bf16.mxu0 %v158
  %348 = vmatmul.mubr.bf16.gmra.mrb[0].mxu0 %v157
  %v349 = vpop.f32.mrb[0].mxu0
  %v350 = vadd.f32 0.0, %v349
  %v351 = vpop.f32.mrb[0].mxu0
  %v352 = vpop.f32.mrb[0].mxu0
  %v353 = vadd.f32 0.0, %v352
  %v354 = vpop.f32.mrb[0].mxu0
  %355 = vmatprep.mubr.bf16.mxu0 %v160
  %356 = vmatmul.mubr.bf16.gmra.mrb[0].mxu0 %v159
  %v357 = vpop.f32.mrb[0].mxu0
  %v358 = vadd.f32 0.0, %v357
  %v359 = vpop.f32.mrb[0].mxu0
  %v360 = vpop.f32.mrb[0].mxu0
  %v361 = vadd.f32 0.0, %v360
  %v362 = vpop.f32.mrb[0].mxu0
  %363 = vmatprep.mubr.bf16.mxu0 %v162
  %364 = vmatmul.mubr.bf16.gmra.mrb[0].mxu0 %v161
  %v365 = vpop.f32.mrb[0].mxu0
  %v366 = vadd.f32 0.0, %v365
  %v367 = vpop.f32.mrb[0].mxu0
  %v368 = vpop.f32.mrb[0].mxu0
  %v369 = vadd.f32 0.0, %v368
  %v370 = vpop.f32.mrb[0].mxu0
  %371 = vdwg.mxu0
  %v372 = vadd.f32 %v35, %v310
  %v373 = vadd.f32 %v36, %v313
  %v374 = vadd.f32 %v37, %v318
  %v375 = vadd.f32 %v38, %v321
  %v376 = vadd.f32 %v39, %v326
  %v377 = vadd.f32 %v40, %v329
  %v378 = vadd.f32 %v41, %v334
  %v379 = vadd.f32 %v42, %v337
  %v380 = vadd.f32 %v43, %v342
  %v381 = vadd.f32 %v44, %v345
  %v382 = vadd.f32 %v45, %v350
  %v383 = vadd.f32 %v46, %v353
  %v384 = vadd.f32 %v47, %v358
  %v385 = vadd.f32 %v48, %v361
  %v386 = vadd.f32 %v49, %v366
  %v387 = vadd.f32 %v50, %v369
  %388 = vst [vmem:[#allocation2] sm:$0xff] %v372
  %389 = vst [vmem:[#allocation2 + $0x8] sm:$0xff] %v373
  %390 = vst [vmem:[#allocation2 + $0x10] sm:$0xff] %v374
  %391 = vst [vmem:[#allocation2 + $0x18] sm:$0xff] %v375
  %392 = vst [vmem:[#allocation2 + $0x20] sm:$0xff] %v376
  %393 = vst [vmem:[#allocation2 + $0x28] sm:$0xff] %v377
  %394 = vst [vmem:[#allocation2 + $0x30] sm:$0xff] %v378
  %395 = vst [vmem:[#allocation2 + $0x38] sm:$0xff] %v379
  %396 = vst [vmem:[#allocation2 + $0x40] sm:$0xff] %v380
  %397 = vst [vmem:[#allocation2 + $0x48] sm:$0xff] %v381
  %398 = vst [vmem:[#allocation2 + $0x50] sm:$0xff] %v382
  %399 = vst [vmem:[#allocation2 + $0x58] sm:$0xff] %v383
  %400 = vst [vmem:[#allocation2 + $0x60] sm:$0xff] %v384
  %401 = vst [vmem:[#allocation2 + $0x68] sm:$0xff] %v385
  %402 = vst [vmem:[#allocation2 + $0x70] sm:$0xff] %v386
  %403 = vst [vmem:[#allocation2 + $0x78] sm:$0xff] %v387
  // Predicated region
  $region18: #{_lambda_.41} parent=0 // pred_check
    %p404 = pneg %p15
  $region19: #{_lambda_.41} parent=0 // pred_check_branch
    %406 = sbr.rel (%p404) target = $region21
  $region20: #{_lambda_.41} parent=0 // pred_region
    %v407 = vld [vmem:[#allocation2] sm:$0xff]
    %v408 = vld [vmem:[#allocation2 + $0x8] sm:$0xff]
    %v409 = vld [vmem:[#allocation2 + $0x10] sm:$0xff]
    %v410 = vld [vmem:[#allocation2 + $0x18] sm:$0xff]
    %v411 = vld [vmem:[#allocation2 + $0x20] sm:$0xff]
    %v412 = vld [vmem:[#allocation2 + $0x28] sm:$0xff]
    %v413 = vld [vmem:[#allocation2 + $0x30] sm:$0xff]
    %v414 = vld [vmem:[#allocation2 + $0x38] sm:$0xff]
    %v415 = vld [vmem:[#allocation2 + $0x40] sm:$0xff]
    %v416 = vld [vmem:[#allocation2 + $0x48] sm:$0xff]
    %v417 = vld [vmem:[#allocation2 + $0x50] sm:$0xff]
    %v418 = vld [vmem:[#allocation2 + $0x58] sm:$0xff]
    %v419 = vld [vmem:[#allocation2 + $0x60] sm:$0xff]
    %v420 = vld [vmem:[#allocation2 + $0x68] sm:$0xff]
    %v421 = vld [vmem:[#allocation2 + $0x70] sm:$0xff]
    %v422 = vld [vmem:[#allocation2 + $0x78] sm:$0xff]
    %v423 = vld [vmem:[%s2] sm:$0x1]
    %v425 = vlaneseq
    %v426 = vshrl.u32 %v425, 7
    %v427 = vsub.s32 0, %v426
    %v428 = vrot.slane %v423, %v427
    %v430 = vadd.f32 %v407, %v428
    %v431 = vadd.f32 %v408, %v428
    %v432 = vadd.f32 %v409, %v428
    %v433 = vadd.f32 %v410, %v428
    %v434 = vadd.f32 %v411, %v428
    %v435 = vadd.f32 %v412, %v428
    %v436 = vadd.f32 %v413, %v428
    %v437 = vadd.f32 %v414, %v428
    %v438 = vadd.f32 %v415, %v428
    %v439 = vadd.f32 %v416, %v428
    %v440 = vadd.f32 %v417, %v428
    %v441 = vadd.f32 %v418, %v428
    %v442 = vadd.f32 %v419, %v428
    %v443 = vadd.f32 %v420, %v428
    %v444 = vadd.f32 %v421, %v428
    %v445 = vadd.f32 %v422, %v428
    %v446 = vmax.f32 %v430, 0.0
    %v447 = vmax.f32 %v431, 0.0
    %v448 = vmax.f32 %v432, 0.0
    %v449 = vmax.f32 %v433, 0.0
    %v450 = vmax.f32 %v434, 0.0
    %v451 = vmax.f32 %v435, 0.0
    %v452 = vmax.f32 %v436, 0.0
    %v453 = vmax.f32 %v437, 0.0
    %v454 = vmax.f32 %v438, 0.0
    %v455 = vmax.f32 %v439, 0.0
    %v456 = vmax.f32 %v440, 0.0
    %v457 = vmax.f32 %v441, 0.0
    %v458 = vmax.f32 %v442, 0.0
    %v459 = vmax.f32 %v443, 0.0
    %v460 = vmax.f32 %v444, 0.0
    %v461 = vmax.f32 %v445, 0.0
    %462 = vst [vmem:[%s3] sm:$0xff] %v446
    %463 = vst [vmem:[%s3 + $0x8] sm:$0xff] %v447
    %464 = vst [vmem:[%s3 + $0x10] sm:$0xff] %v448
    %465 = vst [vmem:[%s3 + $0x18] sm:$0xff] %v449
    %466 = vst [vmem:[%s3 + $0x20] sm:$0xff] %v450
    %467 = vst [vmem:[%s3 + $0x28] sm:$0xff] %v451
    %468 = vst [vmem:[%s3 + $0x30] sm:$0xff] %v452
    %469 = vst [vmem:[%s3 + $0x38] sm:$0xff] %v453
    %470 = vst [vmem:[%s3 + $0x40] sm:$0xff] %v454
    %471 = vst [vmem:[%s3 + $0x48] sm:$0xff] %v455
    %472 = vst [vmem:[%s3 + $0x50] sm:$0xff] %v456
    %473 = vst [vmem:[%s3 + $0x58] sm:$0xff] %v457
    %474 = vst [vmem:[%s3 + $0x60] sm:$0xff] %v458
    %475 = vst [vmem:[%s3 + $0x68] sm:$0xff] %v459
    %476 = vst [vmem:[%s3 + $0x70] sm:$0xff] %v460
    %477 = vst [vmem:[%s3 + $0x78] sm:$0xff] %v461
  $region21: #{_lambda_.41} parent=0 // pred_fallthru
    _
  // Predicated region
  $region22: #{_lambda_.41} parent=0 // pred_check
    _
  $region23: #{_lambda_.41} parent=0 // pred_check_branch
    %479 = sbr.rel (0) target = $region25
  $region24: #{_lambda_.41} parent=0 // pred_region
    _
  $region25: #{_lambda_.41} parent=0 // pred_fallthru
    _
  // Predicated region
  $region26: #{_lambda_.41} parent=0 // pred_check
    _
  $region27: #{_lambda_.41} parent=0 // pred_check_branch
    %481 = sbr.rel (0) target = $region29
  $region28: #{_lambda_.41} parent=0 // pred_region
    _
  $region29: #{_lambda_.41} parent=0 // pred_fallthru
    _

// kernel: _lambda_.43
$region0: #{_lambda_.43}
  #allocation0 [shape = 'u32[]', space=smem, size = 0x4, offset = 0x4, fixed_abs, tag = 'smem constant byte address 0x4 - core index']
  #allocation1 [shape = 'u32[144,128]{1,0:T(1,128)}', space=vmem, size = 0x12000, scoped, tag = 'internal scratch']
  #allocation2 [shape = 'f32[128,128]{1,0:T(8,128)}', space=vmem, size = 0x10000, scoped, tag = 'scratch operand']
  %s0 = inlined_call_operand.vmem [shape: bf16[128,256], index: 0, kind: input, shape index: {}]
  %s1 = inlined_call_operand.vmem [shape: bf16[256,128], index: 1, kind: input, shape index: {}]
  %s2 = inlined_call_operand.vmem [shape: f32[1,128], index: 2, kind: input, shape index: {}]
  %s3 = inlined_call_operand.vmem [shape: f32[128,128], index: 3, kind: output, shape index: {}]
  %s4 = sld [smem:[#allocation0]]
  $region30: #{_lambda_.43} parent=0
    _
  %s6 = ssub.s32 1, %s4
  %s7 = scalar_select 0, %s6, %s4
  // Predicated region
  $region2: #{_lambda_.43} parent=0 // pred_check
    _
  $region3: #{_lambda_.43} parent=0 // pred_check_branch
    %9 = sbr.rel (0) target = $region5
  $region4: #{_lambda_.43} parent=0 // pred_region
    _
  $region5: #{_lambda_.43} parent=0 // pred_fallthru
    _
  // Predicated region
  $region6: #{_lambda_.43} parent=0 // pred_check
    _
  $region7: #{_lambda_.43} parent=0 // pred_check_branch
    %11 = sbr.rel (0) target = $region9
  $region8: #{_lambda_.43} parent=0 // pred_region
    _
  $region9: #{_lambda_.43} parent=0 // pred_fallthru
    _
  // Predicated region
  $region10: #{_lambda_.43} parent=0 // pred_check
    _
  $region11: #{_lambda_.43} parent=0 // pred_check_branch
    %13 = sbr.rel (0) target = $region13
  $region12: #{_lambda_.43} parent=0 // pred_region
    _
  $region13: #{_lambda_.43} parent=0 // pred_fallthru
    _
  %p15 = scmp.eq.s32.totalorder 0, 0
  // Predicated region
  $region14: #{_lambda_.43} parent=0 // pred_check
    %p16 = pneg %p15
  $region15: #{_lambda_.43} parent=0 // pred_check_branch
    %18 = sbr.rel (%p16) target = $region17
  $region16: #{_lambda_.43} parent=0 // pred_region
    %19 = vst [vmem:[#allocation2] sm:$0xff] 0.0
    %20 = vst [vmem:[#allocation2 + $0x8] sm:$0xff] 0.0
    %21 = vst [vmem:[#allocation2 + $0x10] sm:$0xff] 0.0
    %22 = vst [vmem:[#allocation2 + $0x18] sm:$0xff] 0.0
    %23 = vst [vmem:[#allocation2 + $0x20] sm:$0xff] 0.0
    %24 = vst [vmem:[#allocation2 + $0x28] sm:$0xff] 0.0
    %25 = vst [vmem:[#allocation2 + $0x30] sm:$0xff] 0.0
    %26 = vst [vmem:[#allocation2 + $0x38] sm:$0xff] 0.0
    %27 = vst [vmem:[#allocation2 + $0x40] sm:$0xff] 0.0
    %28 = vst [vmem:[#allocation2 + $0x48] sm:$0xff] 0.0
    %29 = vst [vmem:[#allocation2 + $0x50] sm:$0xff] 0.0
    %30 = vst [vmem:[#allocation2 + $0x58] sm:$0xff] 0.0
    %31 = vst [vmem:[#allocation2 + $0x60] sm:$0xff] 0.0
    %32 = vst [vmem:[#allocation2 + $0x68] sm:$0xff] 0.0
    %33 = vst [vmem:[#allocation2 + $0x70] sm:$0xff] 0.0
    %34 = vst [vmem:[#allocation2 + $0x78] sm:$0xff] 0.0
  $region17: #{_lambda_.43} parent=0 // pred_fallthru
    _
  %v35 = vld [vmem:[#allocation2] sm:$0xff]
  %v36 = vld [vmem:[#allocation2 + $0x8] sm:$0xff]
  %v37 = vld [vmem:[#allocation2 + $0x10] sm:$0xff]
  %v38 = vld [vmem:[#allocation2 + $0x18] sm:$0xff]
  %v39 = vld [vmem:[#allocation2 + $0x20] sm:$0xff]
  %v40 = vld [vmem:[#allocation2 + $0x28] sm:$0xff]
  %v41 = vld [vmem:[#allocation2 + $0x30] sm:$0xff]
  %v42 = vld [vmem:[#allocation2 + $0x38] sm:$0xff]
  %v43 = vld [vmem:[#allocation2 + $0x40] sm:$0xff]
  %v44 = vld [vmem:[#allocation2 + $0x48] sm:$0xff]
  %v45 = vld [vmem:[#allocation2 + $0x50] sm:$0xff]
  %v46 = vld [vmem:[#allocation2 + $0x58] sm:$0xff]
  %v47 = vld [vmem:[#allocation2 + $0x60] sm:$0xff]
  %v48 = vld [vmem:[#allocation2 + $0x68] sm:$0xff]
  %v49 = vld [vmem:[#allocation2 + $0x70] sm:$0xff]
  %v50 = vld [vmem:[#allocation2 + $0x78] sm:$0xff]
  %v51 = vld [vmem:[%s0] sm:$0xff]
  %v52 = vld [vmem:[%s0 + $0x8] sm:$0xff]
  %v53 = vld [vmem:[%s0 + $0x10] sm:$0xff]
  %v54 = vld [vmem:[%s0 + $0x18] sm:$0xff]
  %v55 = vld [vmem:[%s0 + $0x20] sm:$0xff]
  %v56 = vld [vmem:[%s0 + $0x28] sm:$0xff]
  %v57 = vld [vmem:[%s0 + $0x30] sm:$0xff]
  %v58 = vld [vmem:[%s0 + $0x38] sm:$0xff]
  %v59 = vld [vmem:[%s0 + $0x40] sm:$0xff]
  %v60 = vld [vmem:[%s0 + $0x48] sm:$0xff]
  %v61 = vld [vmem:[%s0 + $0x50] sm:$0xff]
  %v62 = vld [vmem:[%s0 + $0x58] sm:$0xff]
  %v63 = vld [vmem:[%s0 + $0x60] sm:$0xff]
  %v64 = vld [vmem:[%s0 + $0x68] sm:$0xff]
  %v65 = vld [vmem:[%s0 + $0x70] sm:$0xff]
  %v66 = vld [vmem:[%s0 + $0x78] sm:$0xff]
  %v67 = vld [vmem:[%s1] sm:$0xf]
  %v68 = vld [vmem:[%s1 + $0x4] sm:$0xf]
  %v69 = vld [vmem:[%s1 + $0x8] sm:$0xf]
  %v70 = vld [vmem:[%s1 + $0xc] sm:$0xf]
  %v71 = vld [vmem:[%s1 + $0x10] sm:$0xf]
  %v72 = vld [vmem:[%s1 + $0x14] sm:$0xf]
  %v73 = vld [vmem:[%s1 + $0x18] sm:$0xf]
  %v74 = vld [vmem:[%s1 + $0x1c] sm:$0xf]
  %v75 = vld [vmem:[%s1 + $0x20] sm:$0xf]
  %v76 = vld [vmem:[%s1 + $0x24] sm:$0xf]
  %v77 = vld [vmem:[%s1 + $0x28] sm:$0xf]
  %v78 = vld [vmem:[%s1 + $0x2c] sm:$0xf]
  %v79 = vld [vmem:[%s1 + $0x30] sm:$0xf]
  %v80 = vld [vmem:[%s1 + $0x34] sm:$0xf]
  %v81 = vld [vmem:[%s1 + $0x38] sm:$0xf]
  %v82 = vld [vmem:[%s1 + $0x3c] sm:$0xf]
  %v83 = vld [vmem:[%s1 + $0x40] sm:$0xf]
  %v84 = vld [vmem:[%s1 + $0x44] sm:$0xf]
  %v85 = vld [vmem:[%s1 + $0x48] sm:$0xf]
  %v86 = vld [vmem:[%s1 + $0x4c] sm:$0xf]
  %v87 = vld [vmem:[%s1 + $0x50] sm:$0xf]
  %v88 = vld [vmem:[%s1 + $0x54] sm:$0xf]
  %v89 = vld [vmem:[%s1 + $0x58] sm:$0xf]
  %v90 = vld [vmem:[%s1 + $0x5c] sm:$0xf]
  %v91 = vld [vmem:[%s1 + $0x60] sm:$0xf]
  %v92 = vld [vmem:[%s1 + $0x64] sm:$0xf]
  %v93 = vld [vmem:[%s1 + $0x68] sm:$0xf]
  %v94 = vld [vmem:[%s1 + $0x6c] sm:$0xf]
  %v95 = vld [vmem:[%s1 + $0x70] sm:$0xf]
  %v96 = vld [vmem:[%s1 + $0x74] sm:$0xf]
  %v97 = vld [vmem:[%s1 + $0x78] sm:$0xf]
  %v98 = vld [vmem:[%s1 + $0x7c] sm:$0xf]
  %v115 = vunpack.c.l.b16 %v51
  %v116 = vunpack.c.h.b16 %v51
  %v117 = vunpack.c.l.b16 %v52
  %v118 = vunpack.c.h.b16 %v52
  %v119 = vunpack.c.l.b16 %v53
  %v120 = vunpack.c.h.b16 %v53
  %v121 = vunpack.c.l.b16 %v54
  %v122 = vunpack.c.h.b16 %v54
  %v123 = vunpack.c.l.b16 %v55
  %v124 = vunpack.c.h.b16 %v55
  %v125 = vunpack.c.l.b16 %v56
  %v126 = vunpack.c.h.b16 %v56
  %v127 = vunpack.c.l.b16 %v57
  %v128 = vunpack.c.h.b16 %v57
  %v129 = vunpack.c.l.b16 %v58
  %v130 = vunpack.c.h.b16 %v58
  %v131 = vunpack.c.l.b16 %v59
  %v132 = vunpack.c.h.b16 %v59
  %v133 = vunpack.c.l.b16 %v60
  %v134 = vunpack.c.h.b16 %v60
  %v135 = vunpack.c.l.b16 %v61
  %v136 = vunpack.c.h.b16 %v61
  %v137 = vunpack.c.l.b16 %v62
  %v138 = vunpack.c.h.b16 %v62
  %v139 = vunpack.c.l.b16 %v63
  %v140 = vunpack.c.h.b16 %v63
  %v141 = vunpack.c.l.b16 %v64
  %v142 = vunpack.c.h.b16 %v64
  %v143 = vunpack.c.l.b16 %v65
  %v144 = vunpack.c.h.b16 %v65
  %v145 = vunpack.c.l.b16 %v66
  %v146 = vunpack.c.h.b16 %v66
  %v147 = vpack.c.b16 %v117, %v115
  %v148 = vpack.c.b16 %v118, %v116
  %v149 = vpack.c.b16 %v121, %v119
  %v150 = vpack.c.b16 %v122, %v120
  %v151 = vpack.c.b16 %v125, %v123
  %v152 = vpack.c.b16 %v126, %v124
  %v153 = vpack.c.b16 %v129, %v127
  %v154 = vpack.c.b16 %v130, %v128
  %v155 = vpack.c.b16 %v133, %v131
  %v156 = vpack.c.b16 %v134, %v132
  %v157 = vpack.c.b16 %v137, %v135
  %v158 = vpack.c.b16 %v138, %v136
  %v159 = vpack.c.b16 %v141, %v139
  %v160 = vpack.c.b16 %v142, %v140
  %v161 = vpack.c.b16 %v145, %v143
  %v162 = vpack.c.b16 %v146, %v144
  %v211 = vunpack.c.l.b16 %v67
  %v212 = vunpack.c.l.b16 %v68
  %v213 = vunpack.c.l.b16 %v69
  %v214 = vunpack.c.l.b16 %v70
  %v215 = vunpack.c.l.b16 %v71
  %v216 = vunpack.c.l.b16 %v72
  %v217 = vunpack.c.l.b16 %v73
  %v218 = vunpack.c.l.b16 %v74
  %v219 = vunpack.c.l.b16 %v75
  %v220 = vunpack.c.l.b16 %v76
  %v221 = vunpack.c.l.b16 %v77
  %v222 = vunpack.c.l.b16 %v78
  %v223 = vunpack.c.l.b16 %v79
  %v224 = vunpack.c.l.b16 %v80
  %v225 = vunpack.c.l.b16 %v81
  %v226 = vunpack.c.l.b16 %v82
  %v227 = vunpack.c.l.b16 %v83
  %v228 = vunpack.c.l.b16 %v84
  %v229 = vunpack.c.l.b16 %v85
  %v230 = vunpack.c.l.b16 %v86
  %v231 = vunpack.c.l.b16 %v87
  %v232 = vunpack.c.l.b16 %v88
  %v233 = vunpack.c.l.b16 %v89
  %v234 = vunpack.c.l.b16 %v90
  %v235 = vunpack.c.l.b16 %v91
  %v236 = vunpack.c.l.b16 %v92
  %v237 = vunpack.c.l.b16 %v93
  %v238 = vunpack.c.l.b16 %v94
  %v239 = vunpack.c.l.b16 %v95
  %v240 = vunpack.c.l.b16 %v96
  %v241 = vunpack.c.l.b16 %v97
  %v242 = vunpack.c.l.b16 %v98
  %v243 = vpack.c.b16 %v212, %v211
  %v244 = vpack.c.b16 %v214, %v213
  %v245 = vpack.c.b16 %v216, %v215
  %v246 = vpack.c.b16 %v218, %v217
  %v247 = vpack.c.b16 %v220, %v219
  %v248 = vpack.c.b16 %v222, %v221
  %v249 = vpack.c.b16 %v224, %v223
  %v250 = vpack.c.b16 %v226, %v225
  %v251 = vpack.c.b16 %v228, %v227
  %v252 = vpack.c.b16 %v230, %v229
  %v253 = vpack.c.b16 %v232, %v231
  %v254 = vpack.c.b16 %v234, %v233
  %v255 = vpack.c.b16 %v236, %v235
  %v256 = vpack.c.b16 %v238, %v237
  %v257 = vpack.c.b16 %v240, %v239
  %v258 = vpack.c.b16 %v242, %v241
  %275 = vmatprep.subr.bf16.mxu0 0
  %276 = vmatpush1.bf16.msra.mxu0 %v243
  %277 = vmatprep.subr.bf16.mxu0 0
  %278 = vmatpush1.bf16.msra.mxu0 %v244
  %279 = vmatprep.subr.bf16.mxu0 0
  %280 = vmatpush1.bf16.msra.mxu0 %v245
  %281 = vmatprep.subr.bf16.mxu0 0
  %282 = vmatpush1.bf16.msra.mxu0 %v246
  %283 = vmatprep.subr.bf16.mxu0 0
  %284 = vmatpush1.bf16.msra.mxu0 %v247
  %285 = vmatprep.subr.bf16.mxu0 0
  %286 = vmatpush1.bf16.msra.mxu0 %v248
  %287 = vmatprep.subr.bf16.mxu0 0
  %288 = vmatpush1.bf16.msra.mxu0 %v249
  %289 = vmatprep.subr.bf16.mxu0 0
  %290 = vmatpush1.bf16.msra.mxu0 %v250
  %291 = vmatprep.subr.bf16.mxu0 0
  %292 = vmatpush1.bf16.msra.mxu0 %v251
  %293 = vmatprep.subr.bf16.mxu0 0
  %294 = vmatpush1.bf16.msra.mxu0 %v252
  %295 = vmatprep.subr.bf16.mxu0 0
  %296 = vmatpush1.bf16.msra.mxu0 %v253
  %297 = vmatprep.subr.bf16.mxu0 0
  %298 = vmatpush1.bf16.msra.mxu0 %v254
  %299 = vmatprep.subr.bf16.mxu0 0
  %300 = vmatpush1.bf16.msra.mxu0 %v255
  %301 = vmatprep.subr.bf16.mxu0 0
  %302 = vmatpush1.bf16.msra.mxu0 %v256
  %303 = vmatprep.subr.bf16.mxu0 0
  %304 = vmatpush1.bf16.msra.mxu0 %v257
  %305 = vmatprep.subr.bf16.mxu0 0
  %306 = vmatpush1.bf16.msra.mxu0 %v258
  %307 = vmatprep.mubr.bf16.mxu0 %v148
  %308 = vmatmul.mubr.bf16.gmra.mrb[0].mxu0 %v147
  %v309 = vpop.f32.mrb[0].mxu0
  %v310 = vadd.f32 0.0, %v309
  %v311 = vpop.f32.mrb[0].mxu0
  %v312 = vpop.f32.mrb[0].mxu0
  %v313 = vadd.f32 0.0, %v312
  %v314 = vpop.f32.mrb[0].mxu0
  %315 = vmatprep.mubr.bf16.mxu0 %v150
  %316 = vmatmul.mubr.bf16.gmra.mrb[0].mxu0 %v149
  %v317 = vpop.f32.mrb[0].mxu0
  %v318 = vadd.f32 0.0, %v317
  %v319 = vpop.f32.mrb[0].mxu0
  %v320 = vpop.f32.mrb[0].mxu0
  %v321 = vadd.f32 0.0, %v320
  %v322 = vpop.f32.mrb[0].mxu0
  %323 = vmatprep.mubr.bf16.mxu0 %v152
  %324 = vmatmul.mubr.bf16.gmra.mrb[0].mxu0 %v151
  %v325 = vpop.f32.mrb[0].mxu0
  %v326 = vadd.f32 0.0, %v325
  %v327 = vpop.f32.mrb[0].mxu0
  %v328 = vpop.f32.mrb[0].mxu0
  %v329 = vadd.f32 0.0, %v328
  %v330 = vpop.f32.mrb[0].mxu0
  %331 = vmatprep.mubr.bf16.mxu0 %v154
  %332 = vmatmul.mubr.bf16.gmra.mrb[0].mxu0 %v153
  %v333 = vpop.f32.mrb[0].mxu0
  %v334 = vadd.f32 0.0, %v333
  %v335 = vpop.f32.mrb[0].mxu0
  %v336 = vpop.f32.mrb[0].mxu0
  %v337 = vadd.f32 0.0, %v336
  %v338 = vpop.f32.mrb[0].mxu0
  %339 = vmatprep.mubr.bf16.mxu0 %v156
  %340 = vmatmul.mubr.bf16.gmra.mrb[0].mxu0 %v155
  %v341 = vpop.f32.mrb[0].mxu0
  %v342 = vadd.f32 0.0, %v341
  %v343 = vpop.f32.mrb[0].mxu0
  %v344 = vpop.f32.mrb[0].mxu0
  %v345 = vadd.f32 0.0, %v344
  %v346 = vpop.f32.mrb[0].mxu0
  %347 = vmatprep.mubr.bf16.mxu0 %v158
  %348 = vmatmul.mubr.bf16.gmra.mrb[0].mxu0 %v157
  %v349 = vpop.f32.mrb[0].mxu0
  %v350 = vadd.f32 0.0, %v349
  %v351 = vpop.f32.mrb[0].mxu0
  %v352 = vpop.f32.mrb[0].mxu0
  %v353 = vadd.f32 0.0, %v352
  %v354 = vpop.f32.mrb[0].mxu0
  %355 = vmatprep.mubr.bf16.mxu0 %v160
  %356 = vmatmul.mubr.bf16.gmra.mrb[0].mxu0 %v159
  %v357 = vpop.f32.mrb[0].mxu0
  %v358 = vadd.f32 0.0, %v357
  %v359 = vpop.f32.mrb[0].mxu0
  %v360 = vpop.f32.mrb[0].mxu0
  %v361 = vadd.f32 0.0, %v360
  %v362 = vpop.f32.mrb[0].mxu0
  %363 = vmatprep.mubr.bf16.mxu0 %v162
  %364 = vmatmul.mubr.bf16.gmra.mrb[0].mxu0 %v161
  %v365 = vpop.f32.mrb[0].mxu0
  %v366 = vadd.f32 0.0, %v365
  %v367 = vpop.f32.mrb[0].mxu0
  %v368 = vpop.f32.mrb[0].mxu0
  %v369 = vadd.f32 0.0, %v368
  %v370 = vpop.f32.mrb[0].mxu0
  %371 = vdwg.mxu0
  %v372 = vadd.f32 %v35, %v310
  %v373 = vadd.f32 %v36, %v313
  %v374 = vadd.f32 %v37, %v318
  %v375 = vadd.f32 %v38, %v321
  %v376 = vadd.f32 %v39, %v326
  %v377 = vadd.f32 %v40, %v329
  %v378 = vadd.f32 %v41, %v334
  %v379 = vadd.f32 %v42, %v337
  %v380 = vadd.f32 %v43, %v342
  %v381 = vadd.f32 %v44, %v345
  %v382 = vadd.f32 %v45, %v350
  %v383 = vadd.f32 %v46, %v353
  %v384 = vadd.f32 %v47, %v358
  %v385 = vadd.f32 %v48, %v361
  %v386 = vadd.f32 %v49, %v366
  %v387 = vadd.f32 %v50, %v369
  %388 = vst [vmem:[#allocation2] sm:$0xff] %v372
  %389 = vst [vmem:[#allocation2 + $0x8] sm:$0xff] %v373
  %390 = vst [vmem:[#allocation2 + $0x10] sm:$0xff] %v374
  %391 = vst [vmem:[#allocation2 + $0x18] sm:$0xff] %v375
  %392 = vst [vmem:[#allocation2 + $0x20] sm:$0xff] %v376
  %393 = vst [vmem:[#allocation2 + $0x28] sm:$0xff] %v377
  %394 = vst [vmem:[#allocation2 + $0x30] sm:$0xff] %v378
  %395 = vst [vmem:[#allocation2 + $0x38] sm:$0xff] %v379
  %396 = vst [vmem:[#allocation2 + $0x40] sm:$0xff] %v380
  %397 = vst [vmem:[#allocation2 + $0x48] sm:$0xff] %v381
  %398 = vst [vmem:[#allocation2 + $0x50] sm:$0xff] %v382
  %399 = vst [vmem:[#allocation2 + $0x58] sm:$0xff] %v383
  %400 = vst [vmem:[#allocation2 + $0x60] sm:$0xff] %v384
  %401 = vst [vmem:[#allocation2 + $0x68] sm:$0xff] %v385
  %402 = vst [vmem:[#allocation2 + $0x70] sm:$0xff] %v386
  %403 = vst [vmem:[#allocation2 + $0x78] sm:$0xff] %v387
  // Predicated region
  $region18: #{_lambda_.43} parent=0 // pred_check
    %p404 = pneg %p15
  $region19: #{_lambda_.43} parent=0 // pred_check_branch
    %406 = sbr.rel (%p404) target = $region21
  $region20: #{_lambda_.43} parent=0 // pred_region
    %v407 = vld [vmem:[#allocation2] sm:$0xff]
    %v408 = vld [vmem:[#allocation2 + $0x8] sm:$0xff]
    %v409 = vld [vmem:[#allocation2 + $0x10] sm:$0xff]
    %v410 = vld [vmem:[#allocation2 + $0x18] sm:$0xff]
    %v411 = vld [vmem:[#allocation2 + $0x20] sm:$0xff]
    %v412 = vld [vmem:[#allocation2 + $0x28] sm:$0xff]
    %v413 = vld [vmem:[#allocation2 + $0x30] sm:$0xff]
    %v414 = vld [vmem:[#allocation2 + $0x38] sm:$0xff]
    %v415 = vld [vmem:[#allocation2 + $0x40] sm:$0xff]
    %v416 = vld [vmem:[#allocation2 + $0x48] sm:$0xff]
    %v417 = vld [vmem:[#allocation2 + $0x50] sm:$0xff]
    %v418 = vld [vmem:[#allocation2 + $0x58] sm:$0xff]
    %v419 = vld [vmem:[#allocation2 + $0x60] sm:$0xff]
    %v420 = vld [vmem:[#allocation2 + $0x68] sm:$0xff]
    %v421 = vld [vmem:[#allocation2 + $0x70] sm:$0xff]
    %v422 = vld [vmem:[#allocation2 + $0x78] sm:$0xff]
    %v423 = vld [vmem:[%s2] sm:$0x1]
    %v425 = vlaneseq
    %v426 = vshrl.u32 %v425, 7
    %v427 = vsub.s32 0, %v426
    %v428 = vrot.slane %v423, %v427
    %v430 = vadd.f32 %v407, %v428
    %v431 = vadd.f32 %v408, %v428
    %v432 = vadd.f32 %v409, %v428
    %v433 = vadd.f32 %v410, %v428
    %v434 = vadd.f32 %v411, %v428
    %v435 = vadd.f32 %v412, %v428
    %v436 = vadd.f32 %v413, %v428
    %v437 = vadd.f32 %v414, %v428
    %v438 = vadd.f32 %v415, %v428
    %v439 = vadd.f32 %v416, %v428
    %v440 = vadd.f32 %v417, %v428
    %v441 = vadd.f32 %v418, %v428
    %v442 = vadd.f32 %v419, %v428
    %v443 = vadd.f32 %v420, %v428
    %v444 = vadd.f32 %v421, %v428
    %v445 = vadd.f32 %v422, %v428
    %446 = vst [vmem:[%s3] sm:$0xff] %v430
    %447 = vst [vmem:[%s3 + $0x8] sm:$0xff] %v431
    %448 = vst [vmem:[%s3 + $0x10] sm:$0xff] %v432
    %449 = vst [vmem:[%s3 + $0x18] sm:$0xff] %v433
    %450 = vst [vmem:[%s3 + $0x20] sm:$0xff] %v434
    %451 = vst [vmem:[%s3 + $0x28] sm:$0xff] %v435
    %452 = vst [vmem:[%s3 + $0x30] sm:$0xff] %v436
    %453 = vst [vmem:[%s3 + $0x38] sm:$0xff] %v437
    %454 = vst [vmem:[%s3 + $0x40] sm:$0xff] %v438
    %455 = vst [vmem:[%s3 + $0x48] sm:$0xff] %v439
    %456 = vst [vmem:[%s3 + $0x50] sm:$0xff] %v440
    %457 = vst [vmem:[%s3 + $0x58] sm:$0xff] %v441
    %458 = vst [vmem:[%s3 + $0x60] sm:$0xff] %v442
    %459 = vst [vmem:[%s3 + $0x68] sm:$0xff] %v443
    %460 = vst [vmem:[%s3 + $0x70] sm:$0xff] %v444
    %461 = vst [vmem:[%s3 + $0x78] sm:$0xff] %v445
  $region21: #{_lambda_.43} parent=0 // pred_fallthru
    _
  // Predicated region
  $region22: #{_lambda_.43} parent=0 // pred_check
    _
  $region23: #{_lambda_.43} parent=0 // pred_check_branch
    %463 = sbr.rel (0) target = $region25
  $region24: #{_lambda_.43} parent=0 // pred_region
    _
  $region25: #{_lambda_.43} parent=0 // pred_fallthru
    _
  // Predicated region
  $region26: #{_lambda_.43} parent=0 // pred_check
    _
  $region27: #{_lambda_.43} parent=0 // pred_check_branch
    %465 = sbr.rel (0) target = $region29
  $region28: #{_lambda_.43} parent=0 // pred_region
    _
  $region29: #{_lambda_.43} parent=0 // pred_fallthru
    _

// kernel: _lambda_.46
$region0: #{_lambda_.46}
  #allocation0 [shape = 'u32[]', space=smem, size = 0x4, offset = 0x4, fixed_abs, tag = 'smem constant byte address 0x4 - core index']
  #allocation1 [shape = 'u32[144,128]{1,0:T(1,128)}', space=vmem, size = 0x12000, scoped, tag = 'internal scratch']
  #allocation2 [shape = 'f32[32,128]{1,0:T(8,128)}', space=vmem, size = 0x4000, scoped, tag = 'scratch operand']
  %s0 = inlined_call_operand.vmem [shape: bf16[32,512], index: 0, kind: input, shape index: {}]
  %s1 = inlined_call_operand.vmem [shape: bf16[512,128], index: 1, kind: input, shape index: {}]
  %s2 = inlined_call_operand.vmem [shape: f32[1,128], index: 2, kind: input, shape index: {}]
  %s3 = inlined_call_operand.vmem [shape: f32[32,128], index: 3, kind: output, shape index: {}]
  %s4 = sld [smem:[#allocation0]]
  $region30: #{_lambda_.46} parent=0
    _
  %s6 = ssub.s32 1, %s4
  %s7 = scalar_select 0, %s6, %s4
  // Predicated region
  $region2: #{_lambda_.46} parent=0 // pred_check
    _
  $region3: #{_lambda_.46} parent=0 // pred_check_branch
    %9 = sbr.rel (0) target = $region5
  $region4: #{_lambda_.46} parent=0 // pred_region
    _
  $region5: #{_lambda_.46} parent=0 // pred_fallthru
    _
  // Predicated region
  $region6: #{_lambda_.46} parent=0 // pred_check
    _
  $region7: #{_lambda_.46} parent=0 // pred_check_branch
    %11 = sbr.rel (0) target = $region9
  $region8: #{_lambda_.46} parent=0 // pred_region
    _
  $region9: #{_lambda_.46} parent=0 // pred_fallthru
    _
  // Predicated region
  $region10: #{_lambda_.46} parent=0 // pred_check
    _
  $region11: #{_lambda_.46} parent=0 // pred_check_branch
    %13 = sbr.rel (0) target = $region13
  $region12: #{_lambda_.46} parent=0 // pred_region
    _
  $region13: #{_lambda_.46} parent=0 // pred_fallthru
    _
  %p15 = scmp.eq.s32.totalorder 0, 0
  // Predicated region
  $region14: #{_lambda_.46} parent=0 // pred_check
    %p16 = pneg %p15
  $region15: #{_lambda_.46} parent=0 // pred_check_branch
    %18 = sbr.rel (%p16) target = $region17
  $region16: #{_lambda_.46} parent=0 // pred_region
    %19 = vst [vmem:[#allocation2] sm:$0xff] 0.0
    %20 = vst [vmem:[#allocation2 + $0x8] sm:$0xff] 0.0
    %21 = vst [vmem:[#allocation2 + $0x10] sm:$0xff] 0.0
    %22 = vst [vmem:[#allocation2 + $0x18] sm:$0xff] 0.0
  $region17: #{_lambda_.46} parent=0 // pred_fallthru
    _
  %v23 = vld [vmem:[#allocation2] sm:$0xff]
  %v24 = vld [vmem:[#allocation2 + $0x8] sm:$0xff]
  %v25 = vld [vmem:[#allocation2 + $0x10] sm:$0xff]
  %v26 = vld [vmem:[#allocation2 + $0x18] sm:$0xff]
  %v27 = vld [vmem:[%s0] sm:$0xff]
  %v28 = vld [vmem:[%s0 + $0x8] sm:$0xff]
  %v29 = vld [vmem:[%s0 + $0x10] sm:$0xff]
  %v30 = vld [vmem:[%s0 + $0x18] sm:$0xff]
  %v31 = vld [vmem:[%s0 + $0x20] sm:$0xff]
  %v32 = vld [vmem:[%s0 + $0x28] sm:$0xff]
  %v33 = vld [vmem:[%s0 + $0x30] sm:$0xff]
  %v34 = vld [vmem:[%s0 + $0x38] sm:$0xff]
  %v35 = vld [vmem:[%s1] sm:$0xf]
  %v36 = vld [vmem:[%s1 + $0x4] sm:$0xf]
  %v37 = vld [vmem:[%s1 + $0x8] sm:$0xf]
  %v38 = vld [vmem:[%s1 + $0xc] sm:$0xf]
  %v39 = vld [vmem:[%s1 + $0x10] sm:$0xf]
  %v40 = vld [vmem:[%s1 + $0x14] sm:$0xf]
  %v41 = vld [vmem:[%s1 + $0x18] sm:$0xf]
  %v42 = vld [vmem:[%s1 + $0x1c] sm:$0xf]
  %v43 = vld [vmem:[%s1 + $0x20] sm:$0xf]
  %v44 = vld [vmem:[%s1 + $0x24] sm:$0xf]
  %v45 = vld [vmem:[%s1 + $0x28] sm:$0xf]
  %v46 = vld [vmem:[%s1 + $0x2c] sm:$0xf]
  %v47 = vld [vmem:[%s1 + $0x30] sm:$0xf]
  %v48 = vld [vmem:[%s1 + $0x34] sm:$0xf]
  %v49 = vld [vmem:[%s1 + $0x38] sm:$0xf]
  %v50 = vld [vmem:[%s1 + $0x3c] sm:$0xf]
  %v51 = vld [vmem:[%s1 + $0x40] sm:$0xf]
  %v52 = vld [vmem:[%s1 + $0x44] sm:$0xf]
  %v53 = vld [vmem:[%s1 + $0x48] sm:$0xf]
  %v54 = vld [vmem:[%s1 + $0x4c] sm:$0xf]
  %v55 = vld [vmem:[%s1 + $0x50] sm:$0xf]
  %v56 = vld [vmem:[%s1 + $0x54] sm:$0xf]
  %v57 = vld [vmem:[%s1 + $0x58] sm:$0xf]
  %v58 = vld [vmem:[%s1 + $0x5c] sm:$0xf]
  %v59 = vld [vmem:[%s1 + $0x60] sm:$0xf]
  %v60 = vld [vmem:[%s1 + $0x64] sm:$0xf]
  %v61 = vld [vmem:[%s1 + $0x68] sm:$0xf]
  %v62 = vld [vmem:[%s1 + $0x6c] sm:$0xf]
  %v63 = vld [vmem:[%s1 + $0x70] sm:$0xf]
  %v64 = vld [vmem:[%s1 + $0x74] sm:$0xf]
  %v65 = vld [vmem:[%s1 + $0x78] sm:$0xf]
  %v66 = vld [vmem:[%s1 + $0x7c] sm:$0xf]
  %v67 = vld [vmem:[%s1 + $0x80] sm:$0xf]
  %v68 = vld [vmem:[%s1 + $0x84] sm:$0xf]
  %v69 = vld [vmem:[%s1 + $0x88] sm:$0xf]
  %v70 = vld [vmem:[%s1 + $0x8c] sm:$0xf]
  %v71 = vld [vmem:[%s1 + $0x90] sm:$0xf]
  %v72 = vld [vmem:[%s1 + $0x94] sm:$0xf]
  %v73 = vld [vmem:[%s1 + $0x98] sm:$0xf]
  %v74 = vld [vmem:[%s1 + $0x9c] sm:$0xf]
  %v75 = vld [vmem:[%s1 + $0xa0] sm:$0xf]
  %v76 = vld [vmem:[%s1 + $0xa4] sm:$0xf]
  %v77 = vld [vmem:[%s1 + $0xa8] sm:$0xf]
  %v78 = vld [vmem:[%s1 + $0xac] sm:$0xf]
  %v79 = vld [vmem:[%s1 + $0xb0] sm:$0xf]
  %v80 = vld [vmem:[%s1 + $0xb4] sm:$0xf]
  %v81 = vld [vmem:[%s1 + $0xb8] sm:$0xf]
  %v82 = vld [vmem:[%s1 + $0xbc] sm:$0xf]
  %v83 = vld [vmem:[%s1 + $0xc0] sm:$0xf]
  %v84 = vld [vmem:[%s1 + $0xc4] sm:$0xf]
  %v85 = vld [vmem:[%s1 + $0xc8] sm:$0xf]
  %v86 = vld [vmem:[%s1 + $0xcc] sm:$0xf]
  %v87 = vld [vmem:[%s1 + $0xd0] sm:$0xf]
  %v88 = vld [vmem:[%s1 + $0xd4] sm:$0xf]
  %v89 = vld [vmem:[%s1 + $0xd8] sm:$0xf]
  %v90 = vld [vmem:[%s1 + $0xdc] sm:$0xf]
  %v91 = vld [vmem:[%s1 + $0xe0] sm:$0xf]
  %v92 = vld [vmem:[%s1 + $0xe4] sm:$0xf]
  %v93 = vld [vmem:[%s1 + $0xe8] sm:$0xf]
  %v94 = vld [vmem:[%s1 + $0xec] sm:$0xf]
  %v95 = vld [vmem:[%s1 + $0xf0] sm:$0xf]
  %v96 = vld [vmem:[%s1 + $0xf4] sm:$0xf]
  %v97 = vld [vmem:[%s1 + $0xf8] sm:$0xf]
  %v98 = vld [vmem:[%s1 + $0xfc] sm:$0xf]
  %v107 = vunpack.c.l.b16 %v27
  %v108 = vunpack.c.h.b16 %v27
  %v109 = vunpack.c.l.b16 %v28
  %v110 = vunpack.c.h.b16 %v28
  %v111 = vunpack.c.l.b16 %v29
  %v112 = vunpack.c.h.b16 %v29
  %v113 = vunpack.c.l.b16 %v30
  %v114 = vunpack.c.h.b16 %v30
  %v115 = vunpack.c.l.b16 %v31
  %v116 = vunpack.c.h.b16 %v31
  %v117 = vunpack.c.l.b16 %v32
  %v118 = vunpack.c.h.b16 %v32
  %v119 = vunpack.c.l.b16 %v33
  %v120 = vunpack.c.h.b16 %v33
  %v121 = vunpack.c.l.b16 %v34
  %v122 = vunpack.c.h.b16 %v34
  %v123 = vpack.c.b16 %v111, %v107
  %v124 = vpack.c.b16 %v112, %v108
  %v125 = vpack.c.b16 %v113, %v109
  %v126 = vpack.c.b16 %v114, %v110
  %v127 = vpack.c.b16 %v119, %v115
  %v128 = vpack.c.b16 %v120, %v116
  %v129 = vpack.c.b16 %v121, %v117
  %v130 = vpack.c.b16 %v122, %v118
  %v203 = vunpack.c.l.b16 %v35
  %v204 = vunpack.c.l.b16 %v36
  %v205 = vunpack.c.l.b16 %v37
  %v206 = vunpack.c.l.b16 %v38
  %v207 = vunpack.c.l.b16 %v39
  %v208 = vunpack.c.l.b16 %v40
  %v209 = vunpack.c.l.b16 %v41
  %v210 = vunpack.c.l.b16 %v42
  %v211 = vunpack.c.l.b16 %v43
  %v212 = vunpack.c.l.b16 %v44
  %v213 = vunpack.c.l.b16 %v45
  %v214 = vunpack.c.l.b16 %v46
  %v215 = vunpack.c.l.b16 %v47
  %v216 = vunpack.c.l.b16 %v48
  %v217 = vunpack.c.l.b16 %v49
  %v218 = vunpack.c.l.b16 %v50
  %v219 = vunpack.c.l.b16 %v51
  %v220 = vunpack.c.l.b16 %v52
  %v221 = vunpack.c.l.b16 %v53
  %v222 = vunpack.c.l.b16 %v54
  %v223 = vunpack.c.l.b16 %v55
  %v224 = vunpack.c.l.b16 %v56
  %v225 = vunpack.c.l.b16 %v57
  %v226 = vunpack.c.l.b16 %v58
  %v227 = vunpack.c.l.b16 %v59
  %v228 = vunpack.c.l.b16 %v60
  %v229 = vunpack.c.l.b16 %v61
  %v230 = vunpack.c.l.b16 %v62
  %v231 = vunpack.c.l.b16 %v63
  %v232 = vunpack.c.l.b16 %v64
  %v233 = vunpack.c.l.b16 %v65
  %v234 = vunpack.c.l.b16 %v66
  %v235 = vunpack.c.l.b16 %v67
  %v236 = vunpack.c.l.b16 %v68
  %v237 = vunpack.c.l.b16 %v69
  %v238 = vunpack.c.l.b16 %v70
  %v239 = vunpack.c.l.b16 %v71
  %v240 = vunpack.c.l.b16 %v72
  %v241 = vunpack.c.l.b16 %v73
  %v242 = vunpack.c.l.b16 %v74
  %v243 = vunpack.c.l.b16 %v75
  %v244 = vunpack.c.l.b16 %v76
  %v245 = vunpack.c.l.b16 %v77
  %v246 = vunpack.c.l.b16 %v78
  %v247 = vunpack.c.l.b16 %v79
  %v248 = vunpack.c.l.b16 %v80
  %v249 = vunpack.c.l.b16 %v81
  %v250 = vunpack.c.l.b16 %v82
  %v251 = vunpack.c.l.b16 %v83
  %v252 = vunpack.c.l.b16 %v84
  %v253 = vunpack.c.l.b16 %v85
  %v254 = vunpack.c.l.b16 %v86
  %v255 = vunpack.c.l.b16 %v87
  %v256 = vunpack.c.l.b16 %v88
  %v257 = vunpack.c.l.b16 %v89
  %v258 = vunpack.c.l.b16 %v90
  %v259 = vunpack.c.l.b16 %v91
  %v260 = vunpack.c.l.b16 %v92
  %v261 = vunpack.c.l.b16 %v93
  %v262 = vunpack.c.l.b16 %v94
  %v263 = vunpack.c.l.b16 %v95
  %v264 = vunpack.c.l.b16 %v96
  %v265 = vunpack.c.l.b16 %v97
  %v266 = vunpack.c.l.b16 %v98
  %v267 = vpack.c.b16 %v204, %v203
  %v268 = vpack.c.b16 %v206, %v205
  %v269 = vpack.c.b16 %v208, %v207
  %v270 = vpack.c.b16 %v210, %v209
  %v271 = vpack.c.b16 %v212, %v211
  %v272 = vpack.c.b16 %v214, %v213
  %v273 = vpack.c.b16 %v216, %v215
  %v274 = vpack.c.b16 %v218, %v217
  %v275 = vpack.c.b16 %v220, %v219
  %v276 = vpack.c.b16 %v222, %v221
  %v277 = vpack.c.b16 %v224, %v223
  %v278 = vpack.c.b16 %v226, %v225
  %v279 = vpack.c.b16 %v228, %v227
  %v280 = vpack.c.b16 %v230, %v229
  %v281 = vpack.c.b16 %v232, %v231
  %v282 = vpack.c.b16 %v234, %v233
  %v283 = vpack.c.b16 %v236, %v235
  %v284 = vpack.c.b16 %v238, %v237
  %v285 = vpack.c.b16 %v240, %v239
  %v286 = vpack.c.b16 %v242, %v241
  %v287 = vpack.c.b16 %v244, %v243
  %v288 = vpack.c.b16 %v246, %v245
  %v289 = vpack.c.b16 %v248, %v247
  %v290 = vpack.c.b16 %v250, %v249
  %v291 = vpack.c.b16 %v252, %v251
  %v292 = vpack.c.b16 %v254, %v253
  %v293 = vpack.c.b16 %v256, %v255
  %v294 = vpack.c.b16 %v258, %v257
  %v295 = vpack.c.b16 %v260, %v259
  %v296 = vpack.c.b16 %v262, %v261
  %v297 = vpack.c.b16 %v264, %v263
  %v298 = vpack.c.b16 %v266, %v265
  %331 = vmatprep.subr.bf16.mxu0 0
  %332 = vmatpush1.bf16.msra.mxu0 %v267
  %333 = vmatprep.subr.bf16.mxu0 0
  %334 = vmatpush1.bf16.msra.mxu0 %v268
  %335 = vmatprep.subr.bf16.mxu0 0
  %336 = vmatpush1.bf16.msra.mxu0 %v269
  %337 = vmatprep.subr.bf16.mxu0 0
  %338 = vmatpush1.bf16.msra.mxu0 %v270
  %339 = vmatprep.subr.bf16.mxu0 0
  %340 = vmatpush1.bf16.msra.mxu0 %v271
  %341 = vmatprep.subr.bf16.mxu0 0
  %342 = vmatpush1.bf16.msra.mxu0 %v272
  %343 = vmatprep.subr.bf16.mxu0 0
  %344 = vmatpush1.bf16.msra.mxu0 %v273
  %345 = vmatprep.subr.bf16.mxu0 0
  %346 = vmatpush1.bf16.msra.mxu0 %v274
  %347 = vmatprep.subr.bf16.mxu0 0
  %348 = vmatpush1.bf16.msra.mxu0 %v275
  %349 = vmatprep.subr.bf16.mxu0 0
  %350 = vmatpush1.bf16.msra.mxu0 %v276
  %351 = vmatprep.subr.bf16.mxu0 0
  %352 = vmatpush1.bf16.msra.mxu0 %v277
  %353 = vmatprep.subr.bf16.mxu0 0
  %354 = vmatpush1.bf16.msra.mxu0 %v278
  %355 = vmatprep.subr.bf16.mxu0 0
  %356 = vmatpush1.bf16.msra.mxu0 %v279
  %357 = vmatprep.subr.bf16.mxu0 0
  %358 = vmatpush1.bf16.msra.mxu0 %v280
  %359 = vmatprep.subr.bf16.mxu0 0
  %360 = vmatpush1.bf16.msra.mxu0 %v281
  %361 = vmatprep.subr.bf16.mxu0 0
  %362 = vmatpush1.bf16.msra.mxu0 %v282
  %363 = vmatprep.mubr.bf16.mxu0 %v124
  %364 = vmatmul.mubr.bf16.gmra.mrb[0].mxu0 %v123
  %v365 = vpop.f32.mrb[0].mxu0
  %v366 = vadd.f32 0.0, %v365
  %v367 = vpop.f32.mrb[0].mxu0
  %v368 = vpop.f32.mrb[0].mxu0
  %v369 = vadd.f32 0.0, %v368
  %v370 = vpop.f32.mrb[0].mxu0
  %371 = vmatprep.mubr.bf16.mxu0 %v128
  %372 = vmatmul.mubr.bf16.gmra.mrb[0].mxu0 %v127
  %v373 = vpop.f32.mrb[0].mxu0
  %v374 = vadd.f32 0.0, %v373
  %v375 = vpop.f32.mrb[0].mxu0
  %v376 = vpop.f32.mrb[0].mxu0
  %v377 = vadd.f32 0.0, %v376
  %v378 = vpop.f32.mrb[0].mxu0
  %379 = vdwg.mxu0
  %380 = vmatprep.subr.bf16.mxu0 0
  %381 = vmatpush1.bf16.msra.mxu0 %v283
  %382 = vmatprep.subr.bf16.mxu0 0
  %383 = vmatpush1.bf16.msra.mxu0 %v284
  %384 = vmatprep.subr.bf16.mxu0 0
  %385 = vmatpush1.bf16.msra.mxu0 %v285
  %386 = vmatprep.subr.bf16.mxu0 0
  %387 = vmatpush1.bf16.msra.mxu0 %v286
  %388 = vmatprep.subr.bf16.mxu0 0
  %389 = vmatpush1.bf16.msra.mxu0 %v287
  %390 = vmatprep.subr.bf16.mxu0 0
  %391 = vmatpush1.bf16.msra.mxu0 %v288
  %392 = vmatprep.subr.bf16.mxu0 0
  %393 = vmatpush1.bf16.msra.mxu0 %v289
  %394 = vmatprep.subr.bf16.mxu0 0
  %395 = vmatpush1.bf16.msra.mxu0 %v290
  %396 = vmatprep.subr.bf16.mxu0 0
  %397 = vmatpush1.bf16.msra.mxu0 %v291
  %398 = vmatprep.subr.bf16.mxu0 0
  %399 = vmatpush1.bf16.msra.mxu0 %v292
  %400 = vmatprep.subr.bf16.mxu0 0
  %401 = vmatpush1.bf16.msra.mxu0 %v293
  %402 = vmatprep.subr.bf16.mxu0 0
  %403 = vmatpush1.bf16.msra.mxu0 %v294
  %404 = vmatprep.subr.bf16.mxu0 0
  %405 = vmatpush1.bf16.msra.mxu0 %v295
  %406 = vmatprep.subr.bf16.mxu0 0
  %407 = vmatpush1.bf16.msra.mxu0 %v296
  %408 = vmatprep.subr.bf16.mxu0 0
  %409 = vmatpush1.bf16.msra.mxu0 %v297
  %410 = vmatprep.subr.bf16.mxu0 0
  %411 = vmatpush1.bf16.msra.mxu0 %v298
  %412 = vmatprep.mubr.bf16.mxu0 %v126
  %413 = vmatmul.mubr.bf16.gmra.mrb[0].mxu0 %v125
  %v414 = vpop.f32.mrb[0].mxu0
  %v415 = vadd.f32 %v366, %v414
  %v416 = vpop.f32.mrb[0].mxu0
  %v417 = vpop.f32.mrb[0].mxu0
  %v418 = vadd.f32 %v369, %v417
  %v419 = vpop.f32.mrb[0].mxu0
  %420 = vmatprep.mubr.bf16.mxu0 %v130
  %421 = vmatmul.mubr.bf16.gmra.mrb[0].mxu0 %v129
  %v422 = vpop.f32.mrb[0].mxu0
  %v423 = vadd.f32 %v374, %v422
  %v424 = vpop.f32.mrb[0].mxu0
  %v425 = vpop.f32.mrb[0].mxu0
  %v426 = vadd.f32 %v377, %v425
  %v427 = vpop.f32.mrb[0].mxu0
  %428 = vdwg.mxu0
  %v429 = vadd.f32 %v23, %v415
  %v430 = vadd.f32 %v24, %v418
  %v431 = vadd.f32 %v25, %v423
  %v432 = vadd.f32 %v26, %v426
  %433 = vst [vmem:[#allocation2] sm:$0xff] %v429
  %434 = vst [vmem:[#allocation2 + $0x8] sm:$0xff] %v430
  %435 = vst [vmem:[#allocation2 + $0x10] sm:$0xff] %v431
  %436 = vst [vmem:[#allocation2 + $0x18] sm:$0xff] %v432
  // Predicated region
  $region18: #{_lambda_.46} parent=0 // pred_check
    %p437 = pneg %p15
  $region19: #{_lambda_.46} parent=0 // pred_check_branch
    %439 = sbr.rel (%p437) target = $region21
  $region20: #{_lambda_.46} parent=0 // pred_region
    %v440 = vld [vmem:[#allocation2] sm:$0xff]
    %v441 = vld [vmem:[#allocation2 + $0x8] sm:$0xff]
    %v442 = vld [vmem:[#allocation2 + $0x10] sm:$0xff]
    %v443 = vld [vmem:[#allocation2 + $0x18] sm:$0xff]
    %v444 = vld [vmem:[%s2] sm:$0x1]
    %v446 = vlaneseq
    %v447 = vshrl.u32 %v446, 7
    %v448 = vsub.s32 0, %v447
    %v449 = vrot.slane %v444, %v448
    %v451 = vadd.f32 %v440, %v449
    %v452 = vadd.f32 %v441, %v449
    %v453 = vadd.f32 %v442, %v449
    %v454 = vadd.f32 %v443, %v449
    %v455 = vmax.f32 %v451, 0.0
    %v456 = vmax.f32 %v452, 0.0
    %v457 = vmax.f32 %v453, 0.0
    %v458 = vmax.f32 %v454, 0.0
    %459 = vst [vmem:[%s3] sm:$0xff] %v455
    %460 = vst [vmem:[%s3 + $0x8] sm:$0xff] %v456
    %461 = vst [vmem:[%s3 + $0x10] sm:$0xff] %v457
    %462 = vst [vmem:[%s3 + $0x18] sm:$0xff] %v458
  $region21: #{_lambda_.46} parent=0 // pred_fallthru
    _
  // Predicated region
  $region22: #{_lambda_.46} parent=0 // pred_check
    _
  $region23: #{_lambda_.46} parent=0 // pred_check_branch
    %464 = sbr.rel (0) target = $region25
  $region24: #{_lambda_.46} parent=0 // pred_region
    _
  $region25: #{_lambda_.46} parent=0 // pred_fallthru
    _
  // Predicated region
  $region26: #{_lambda_.46} parent=0 // pred_check
    _
  $region27: #{_lambda_.46} parent=0 // pred_check_branch
    %466 = sbr.rel (0) target = $region29
  $region28: #{_lambda_.46} parent=0 // pred_region
    _
  $region29: #{_lambda_.46} parent=0 // pred_fallthru
    _

// kernel: _lambda_.47
$region0: #{_lambda_.47}
  #allocation0 [shape = 'u32[]', space=smem, size = 0x4, offset = 0x4, fixed_abs, tag = 'smem constant byte address 0x4 - core index']
  #allocation1 [shape = 'u32[144,128]{1,0:T(1,128)}', space=vmem, size = 0x12000, scoped, tag = 'internal scratch']
  #allocation2 [shape = 'f32[32,128]{1,0:T(8,128)}', space=vmem, size = 0x4000, scoped, tag = 'scratch operand']
  %s0 = inlined_call_operand.vmem [shape: bf16[32,384], index: 0, kind: input, shape index: {}]
  %s1 = inlined_call_operand.vmem [shape: bf16[384,128], index: 1, kind: input, shape index: {}]
  %s2 = inlined_call_operand.vmem [shape: f32[1,128], index: 2, kind: input, shape index: {}]
  %s3 = inlined_call_operand.vmem [shape: f32[32,128], index: 3, kind: output, shape index: {}]
  %s4 = sld [smem:[#allocation0]]
  $region30: #{_lambda_.47} parent=0
    _
  %s6 = ssub.s32 1, %s4
  %s7 = scalar_select 0, %s6, %s4
  // Predicated region
  $region2: #{_lambda_.47} parent=0 // pred_check
    _
  $region3: #{_lambda_.47} parent=0 // pred_check_branch
    %9 = sbr.rel (0) target = $region5
  $region4: #{_lambda_.47} parent=0 // pred_region
    _
  $region5: #{_lambda_.47} parent=0 // pred_fallthru
    _
  // Predicated region
  $region6: #{_lambda_.47} parent=0 // pred_check
    _
  $region7: #{_lambda_.47} parent=0 // pred_check_branch
    %11 = sbr.rel (0) target = $region9
  $region8: #{_lambda_.47} parent=0 // pred_region
    _
  $region9: #{_lambda_.47} parent=0 // pred_fallthru
    _
  // Predicated region
  $region10: #{_lambda_.47} parent=0 // pred_check
    _
  $region11: #{_lambda_.47} parent=0 // pred_check_branch
    %13 = sbr.rel (0) target = $region13
  $region12: #{_lambda_.47} parent=0 // pred_region
    _
  $region13: #{_lambda_.47} parent=0 // pred_fallthru
    _
  %p15 = scmp.eq.s32.totalorder 0, 0
  // Predicated region
  $region14: #{_lambda_.47} parent=0 // pred_check
    %p16 = pneg %p15
  $region15: #{_lambda_.47} parent=0 // pred_check_branch
    %18 = sbr.rel (%p16) target = $region17
  $region16: #{_lambda_.47} parent=0 // pred_region
    %19 = vst [vmem:[#allocation2] sm:$0xff] 0.0
    %20 = vst [vmem:[#allocation2 + $0x8] sm:$0xff] 0.0
    %21 = vst [vmem:[#allocation2 + $0x10] sm:$0xff] 0.0
    %22 = vst [vmem:[#allocation2 + $0x18] sm:$0xff] 0.0
  $region17: #{_lambda_.47} parent=0 // pred_fallthru
    _
  %v23 = vld [vmem:[#allocation2] sm:$0xff]
  %v24 = vld [vmem:[#allocation2 + $0x8] sm:$0xff]
  %v25 = vld [vmem:[#allocation2 + $0x10] sm:$0xff]
  %v26 = vld [vmem:[#allocation2 + $0x18] sm:$0xff]
  %v27 = vld [vmem:[%s0] sm:$0xff]
  %v28 = vld [vmem:[%s0 + $0x8] sm:$0xf]
  %v29 = vld [vmem:[%s0 + $0xc] sm:$0xff]
  %v30 = vld [vmem:[%s0 + $0x14] sm:$0xf]
  %v31 = vld [vmem:[%s0 + $0x18] sm:$0xff]
  %v32 = vld [vmem:[%s0 + $0x20] sm:$0xf]
  %v33 = vld [vmem:[%s0 + $0x24] sm:$0xff]
  %v34 = vld [vmem:[%s0 + $0x2c] sm:$0xf]
  %v35 = vld [vmem:[%s1] sm:$0xf]
  %v36 = vld [vmem:[%s1 + $0x4] sm:$0xf]
  %v37 = vld [vmem:[%s1 + $0x8] sm:$0xf]
  %v38 = vld [vmem:[%s1 + $0xc] sm:$0xf]
  %v39 = vld [vmem:[%s1 + $0x10] sm:$0xf]
  %v40 = vld [vmem:[%s1 + $0x14] sm:$0xf]
  %v41 = vld [vmem:[%s1 + $0x18] sm:$0xf]
  %v42 = vld [vmem:[%s1 + $0x1c] sm:$0xf]
  %v43 = vld [vmem:[%s1 + $0x20] sm:$0xf]
  %v44 = vld [vmem:[%s1 + $0x24] sm:$0xf]
  %v45 = vld [vmem:[%s1 + $0x28] sm:$0xf]
  %v46 = vld [vmem:[%s1 + $0x2c] sm:$0xf]
  %v47 = vld [vmem:[%s1 + $0x30] sm:$0xf]
  %v48 = vld [vmem:[%s1 + $0x34] sm:$0xf]
  %v49 = vld [vmem:[%s1 + $0x38] sm:$0xf]
  %v50 = vld [vmem:[%s1 + $0x3c] sm:$0xf]
  %v51 = vld [vmem:[%s1 + $0x40] sm:$0xf]
  %v52 = vld [vmem:[%s1 + $0x44] sm:$0xf]
  %v53 = vld [vmem:[%s1 + $0x48] sm:$0xf]
  %v54 = vld [vmem:[%s1 + $0x4c] sm:$0xf]
  %v55 = vld [vmem:[%s1 + $0x50] sm:$0xf]
  %v56 = vld [vmem:[%s1 + $0x54] sm:$0xf]
  %v57 = vld [vmem:[%s1 + $0x58] sm:$0xf]
  %v58 = vld [vmem:[%s1 + $0x5c] sm:$0xf]
  %v59 = vld [vmem:[%s1 + $0x60] sm:$0xf]
  %v60 = vld [vmem:[%s1 + $0x64] sm:$0xf]
  %v61 = vld [vmem:[%s1 + $0x68] sm:$0xf]
  %v62 = vld [vmem:[%s1 + $0x6c] sm:$0xf]
  %v63 = vld [vmem:[%s1 + $0x70] sm:$0xf]
  %v64 = vld [vmem:[%s1 + $0x74] sm:$0xf]
  %v65 = vld [vmem:[%s1 + $0x78] sm:$0xf]
  %v66 = vld [vmem:[%s1 + $0x7c] sm:$0xf]
  %v67 = vld [vmem:[%s1 + $0x80] sm:$0xf]
  %v68 = vld [vmem:[%s1 + $0x84] sm:$0xf]
  %v69 = vld [vmem:[%s1 + $0x88] sm:$0xf]
  %v70 = vld [vmem:[%s1 + $0x8c] sm:$0xf]
  %v71 = vld [vmem:[%s1 + $0x90] sm:$0xf]
  %v72 = vld [vmem:[%s1 + $0x94] sm:$0xf]
  %v73 = vld [vmem:[%s1 + $0x98] sm:$0xf]
  %v74 = vld [vmem:[%s1 + $0x9c] sm:$0xf]
  %v75 = vld [vmem:[%s1 + $0xa0] sm:$0xf]
  %v76 = vld [vmem:[%s1 + $0xa4] sm:$0xf]
  %v77 = vld [vmem:[%s1 + $0xa8] sm:$0xf]
  %v78 = vld [vmem:[%s1 + $0xac] sm:$0xf]
  %v79 = vld [vmem:[%s1 + $0xb0] sm:$0xf]
  %v80 = vld [vmem:[%s1 + $0xb4] sm:$0xf]
  %v81 = vld [vmem:[%s1 + $0xb8] sm:$0xf]
  %v82 = vld [vmem:[%s1 + $0xbc] sm:$0xf]
  %v91 = vunpack.c.l.b16 %v27
  %v92 = vunpack.c.h.b16 %v27
  %v93 = vunpack.c.l.b16 %v28
  %v94 = vunpack.c.l.b16 %v29
  %v95 = vunpack.c.h.b16 %v29
  %v96 = vunpack.c.l.b16 %v30
  %v97 = vunpack.c.l.b16 %v31
  %v98 = vunpack.c.h.b16 %v31
  %v99 = vunpack.c.l.b16 %v32
  %v100 = vunpack.c.l.b16 %v33
  %v101 = vunpack.c.h.b16 %v33
  %v102 = vunpack.c.l.b16 %v34
  %v103 = vpack.c.b16 %v94, %v91
  %v104 = vpack.c.b16 %v95, %v92
  %v105 = vpack.c.b16 %v96, %v93
  %v106 = vpack.c.b16 %v100, %v97
  %v107 = vpack.c.b16 %v101, %v98
  %v108 = vpack.c.b16 %v102, %v99
  %v163 = vunpack.c.l.b16 %v35
  %v164 = vunpack.c.l.b16 %v36
  %v165 = vunpack.c.l.b16 %v37
  %v166 = vunpack.c.l.b16 %v38
  %v167 = vunpack.c.l.b16 %v39
  %v168 = vunpack.c.l.b16 %v40
  %v169 = vunpack.c.l.b16 %v41
  %v170 = vunpack.c.l.b16 %v42
  %v171 = vunpack.c.l.b16 %v43
  %v172 = vunpack.c.l.b16 %v44
  %v173 = vunpack.c.l.b16 %v45
  %v174 = vunpack.c.l.b16 %v46
  %v175 = vunpack.c.l.b16 %v47
  %v176 = vunpack.c.l.b16 %v48
  %v177 = vunpack.c.l.b16 %v49
  %v178 = vunpack.c.l.b16 %v50
  %v179 = vunpack.c.l.b16 %v51
  %v180 = vunpack.c.l.b16 %v52
  %v181 = vunpack.c.l.b16 %v53
  %v182 = vunpack.c.l.b16 %v54
  %v183 = vunpack.c.l.b16 %v55
  %v184 = vunpack.c.l.b16 %v56
  %v185 = vunpack.c.l.b16 %v57
  %v186 = vunpack.c.l.b16 %v58
  %v187 = vunpack.c.l.b16 %v59
  %v188 = vunpack.c.l.b16 %v60
  %v189 = vunpack.c.l.b16 %v61
  %v190 = vunpack.c.l.b16 %v62
  %v191 = vunpack.c.l.b16 %v63
  %v192 = vunpack.c.l.b16 %v64
  %v193 = vunpack.c.l.b16 %v65
  %v194 = vunpack.c.l.b16 %v66
  %v195 = vunpack.c.l.b16 %v67
  %v196 = vunpack.c.l.b16 %v68
  %v197 = vunpack.c.l.b16 %v69
  %v198 = vunpack.c.l.b16 %v70
  %v199 = vunpack.c.l.b16 %v71
  %v200 = vunpack.c.l.b16 %v72
  %v201 = vunpack.c.l.b16 %v73
  %v202 = vunpack.c.l.b16 %v74
  %v203 = vunpack.c.l.b16 %v75
  %v204 = vunpack.c.l.b16 %v76
  %v205 = vunpack.c.l.b16 %v77
  %v206 = vunpack.c.l.b16 %v78
  %v207 = vunpack.c.l.b16 %v79
  %v208 = vunpack.c.l.b16 %v80
  %v209 = vunpack.c.l.b16 %v81
  %v210 = vunpack.c.l.b16 %v82
  %v211 = vpack.c.b16 %v164, %v163
  %v212 = vpack.c.b16 %v166, %v165
  %v213 = vpack.c.b16 %v168, %v167
  %v214 = vpack.c.b16 %v170, %v169
  %v215 = vpack.c.b16 %v172, %v171
  %v216 = vpack.c.b16 %v174, %v173
  %v217 = vpack.c.b16 %v176, %v175
  %v218 = vpack.c.b16 %v178, %v177
  %v219 = vpack.c.b16 %v180, %v179
  %v220 = vpack.c.b16 %v182, %v181
  %v221 = vpack.c.b16 %v184, %v183
  %v222 = vpack.c.b16 %v186, %v185
  %v223 = vpack.c.b16 %v188, %v187
  %v224 = vpack.c.b16 %v190, %v189
  %v225 = vpack.c.b16 %v192, %v191
  %v226 = vpack.c.b16 %v194, %v193
  %v227 = vpack.c.b16 %v196, %v195
  %v228 = vpack.c.b16 %v198, %v197
  %v229 = vpack.c.b16 %v200, %v199
  %v230 = vpack.c.b16 %v202, %v201
  %v231 = vpack.c.b16 %v204, %v203
  %v232 = vpack.c.b16 %v206, %v205
  %v233 = vpack.c.b16 %v208, %v207
  %v234 = vpack.c.b16 %v210, %v209
  %259 = vmatprep.subr.bf16.mxu0 0
  %260 = vmatpush1.bf16.msra.mxu0 %v211
  %261 = vmatprep.subr.bf16.mxu0 0
  %262 = vmatpush1.bf16.msra.mxu0 %v212
  %263 = vmatprep.subr.bf16.mxu0 0
  %264 = vmatpush1.bf16.msra.mxu0 %v213
  %265 = vmatprep.subr.bf16.mxu0 0
  %266 = vmatpush1.bf16.msra.mxu0 %v214
  %267 = vmatprep.subr.bf16.mxu0 0
  %268 = vmatpush1.bf16.msra.mxu0 %v215
  %269 = vmatprep.subr.bf16.mxu0 0
  %270 = vmatpush1.bf16.msra.mxu0 %v216
  %271 = vmatprep.subr.bf16.mxu0 0
  %272 = vmatpush1.bf16.msra.mxu0 %v217
  %273 = vmatprep.subr.bf16.mxu0 0
  %274 = vmatpush1.bf16.msra.mxu0 %v218
  %275 = vmatprep.subr.bf16.mxu0 0
  %276 = vmatpush1.bf16.msra.mxu0 %v219
  %277 = vmatprep.subr.bf16.mxu0 0
  %278 = vmatpush1.bf16.msra.mxu0 %v220
  %279 = vmatprep.subr.bf16.mxu0 0
  %280 = vmatpush1.bf16.msra.mxu0 %v221
  %281 = vmatprep.subr.bf16.mxu0 0
  %282 = vmatpush1.bf16.msra.mxu0 %v222
  %283 = vmatprep.subr.bf16.mxu0 0
  %284 = vmatpush1.bf16.msra.mxu0 %v223
  %285 = vmatprep.subr.bf16.mxu0 0
  %286 = vmatpush1.bf16.msra.mxu0 %v224
  %287 = vmatprep.subr.bf16.mxu0 0
  %288 = vmatpush1.bf16.msra.mxu0 %v225
  %289 = vmatprep.subr.bf16.mxu0 0
  %290 = vmatpush1.bf16.msra.mxu0 %v226
  %291 = vmatprep.mubr.bf16.mxu0 %v104
  %292 = vmatmul.mubr.bf16.gmra.mrb[0].mxu0 %v103
  %v293 = vpop.f32.mrb[0].mxu0
  %v294 = vadd.f32 0.0, %v293
  %v295 = vpop.f32.mrb[0].mxu0
  %v296 = vpop.f32.mrb[0].mxu0
  %v297 = vadd.f32 0.0, %v296
  %v298 = vpop.f32.mrb[0].mxu0
  %299 = vmatprep.mubr.bf16.mxu0 %v107
  %300 = vmatmul.mubr.bf16.gmra.mrb[0].mxu0 %v106
  %v301 = vpop.f32.mrb[0].mxu0
  %v302 = vadd.f32 0.0, %v301
  %v303 = vpop.f32.mrb[0].mxu0
  %v304 = vpop.f32.mrb[0].mxu0
  %v305 = vadd.f32 0.0, %v304
  %v306 = vpop.f32.mrb[0].mxu0
  %307 = vdwg.mxu0
  %308 = vmatprep.subr.bf16.mxu0 0
  %309 = vmatpush1.bf16.msra.mxu0 %v227
  %310 = vmatprep.subr.bf16.mxu0 0
  %311 = vmatpush1.bf16.msra.mxu0 %v228
  %312 = vmatprep.subr.bf16.mxu0 0
  %313 = vmatpush1.bf16.msra.mxu0 %v229
  %314 = vmatprep.subr.bf16.mxu0 0
  %315 = vmatpush1.bf16.msra.mxu0 %v230
  %316 = vmatprep.subr.bf16.mxu0 0
  %317 = vmatpush1.bf16.msra.mxu0 %v231
  %318 = vmatprep.subr.bf16.mxu0 0
  %319 = vmatpush1.bf16.msra.mxu0 %v232
  %320 = vmatprep.subr.bf16.mxu0 0
  %321 = vmatpush1.bf16.msra.mxu0 %v233
  %322 = vmatprep.subr.bf16.mxu0 0
  %323 = vmatpush1.bf16.msra.mxu0 %v234
  %324 = vmatprep.subr.bf16.mxu0 0
  %325 = vmatpush1.bf16.msra.mxu0 0
  %326 = vmatprep.subr.bf16.mxu0 0
  %327 = vmatpush1.bf16.msra.mxu0 0
  %328 = vmatprep.subr.bf16.mxu0 0
  %329 = vmatpush1.bf16.msra.mxu0 0
  %330 = vmatprep.subr.bf16.mxu0 0
  %331 = vmatpush1.bf16.msra.mxu0 0
  %332 = vmatprep.subr.bf16.mxu0 0
  %333 = vmatpush1.bf16.msra.mxu0 0
  %334 = vmatprep.subr.bf16.mxu0 0
  %335 = vmatpush1.bf16.msra.mxu0 0
  %336 = vmatprep.subr.bf16.mxu0 0
  %337 = vmatpush1.bf16.msra.mxu0 0
  %338 = vmatprep.subr.bf16.mxu0 0
  %339 = vmatpush1.bf16.msra.mxu0 0
  %340 = vmatprep.mubr.bf16.mxu0 0
  %341 = vmatmul.mubr.bf16.gmra.mrb[0].mxu0 %v105
  %v342 = vpop.f32.mrb[0].mxu0
  %v343 = vadd.f32 %v294, %v342
  %v344 = vpop.f32.mrb[0].mxu0
  %v345 = vpop.f32.mrb[0].mxu0
  %v346 = vadd.f32 %v297, %v345
  %v347 = vpop.f32.mrb[0].mxu0
  %348 = vmatprep.mubr.bf16.mxu0 0
  %349 = vmatmul.mubr.bf16.gmra.mrb[0].mxu0 %v108
  %v350 = vpop.f32.mrb[0].mxu0
  %v351 = vadd.f32 %v302, %v350
  %v352 = vpop.f32.mrb[0].mxu0
  %v353 = vpop.f32.mrb[0].mxu0
  %v354 = vadd.f32 %v305, %v353
  %v355 = vpop.f32.mrb[0].mxu0
  %356 = vdwg.mxu0
  %v357 = vadd.f32 %v23, %v343
  %v358 = vadd.f32 %v24, %v346
  %v359 = vadd.f32 %v25, %v351
  %v360 = vadd.f32 %v26, %v354
  %361 = vst [vmem:[#allocation2] sm:$0xff] %v357
  %362 = vst [vmem:[#allocation2 + $0x8] sm:$0xff] %v358
  %363 = vst [vmem:[#allocation2 + $0x10] sm:$0xff] %v359
  %364 = vst [vmem:[#allocation2 + $0x18] sm:$0xff] %v360
  // Predicated region
  $region18: #{_lambda_.47} parent=0 // pred_check
    %p365 = pneg %p15
  $region19: #{_lambda_.47} parent=0 // pred_check_branch
    %367 = sbr.rel (%p365) target = $region21
  $region20: #{_lambda_.47} parent=0 // pred_region
    %v368 = vld [vmem:[#allocation2] sm:$0xff]
    %v369 = vld [vmem:[#allocation2 + $0x8] sm:$0xff]
    %v370 = vld [vmem:[#allocation2 + $0x10] sm:$0xff]
    %v371 = vld [vmem:[#allocation2 + $0x18] sm:$0xff]
    %v372 = vld [vmem:[%s2] sm:$0x1]
    %v374 = vlaneseq
    %v375 = vshrl.u32 %v374, 7
    %v376 = vsub.s32 0, %v375
    %v377 = vrot.slane %v372, %v376
    %v379 = vadd.f32 %v368, %v377
    %v380 = vadd.f32 %v369, %v377
    %v381 = vadd.f32 %v370, %v377
    %v382 = vadd.f32 %v371, %v377
    %v383 = vmax.f32 %v379, 0.0
    %v384 = vmax.f32 %v380, 0.0
    %v385 = vmax.f32 %v381, 0.0
    %v386 = vmax.f32 %v382, 0.0
    %387 = vst [vmem:[%s3] sm:$0xff] %v383
    %388 = vst [vmem:[%s3 + $0x8] sm:$0xff] %v384
    %389 = vst [vmem:[%s3 + $0x10] sm:$0xff] %v385
    %390 = vst [vmem:[%s3 + $0x18] sm:$0xff] %v386
  $region21: #{_lambda_.47} parent=0 // pred_fallthru
    _
  // Predicated region
  $region22: #{_lambda_.47} parent=0 // pred_check
    _
  $region23: #{_lambda_.47} parent=0 // pred_check_branch
    %392 = sbr.rel (0) target = $region25
  $region24: #{_lambda_.47} parent=0 // pred_region
    _
  $region25: #{_lambda_.47} parent=0 // pred_fallthru
    _
  // Predicated region
  $region26: #{_lambda_.47} parent=0 // pred_check
    _
  $region27: #{_lambda_.47} parent=0 // pred_check_branch
    %394 = sbr.rel (0) target = $region29
  $region28: #{_lambda_.47} parent=0 // pred_region
    _
  $region29: #{_lambda_.47} parent=0 // pred_fallthru
    _

// kernel: _lambda_.48
$region0: #{_lambda_.48}
  #allocation0 [shape = 'u32[]', space=smem, size = 0x4, offset = 0x4, fixed_abs, tag = 'smem constant byte address 0x4 - core index']
  #allocation1 [shape = 'u32[144,128]{1,0:T(1,128)}', space=vmem, size = 0x12000, scoped, tag = 'internal scratch']
  #allocation2 [shape = 'f32[32,128]{1,0:T(8,128)}', space=vmem, size = 0x4000, scoped, tag = 'scratch operand']
  %s0 = inlined_call_operand.vmem [shape: bf16[32,384], index: 0, kind: input, shape index: {}]
  %s1 = inlined_call_operand.vmem [shape: bf16[384,128], index: 1, kind: input, shape index: {}]
  %s2 = inlined_call_operand.vmem [shape: f32[1,128], index: 2, kind: input, shape index: {}]
  %s3 = inlined_call_operand.vmem [shape: f32[32,128], index: 3, kind: output, shape index: {}]
  %s4 = sld [smem:[#allocation0]]
  $region30: #{_lambda_.48} parent=0
    _
  %s6 = ssub.s32 1, %s4
  %s7 = scalar_select 0, %s6, %s4
  // Predicated region
  $region2: #{_lambda_.48} parent=0 // pred_check
    _
  $region3: #{_lambda_.48} parent=0 // pred_check_branch
    %9 = sbr.rel (0) target = $region5
  $region4: #{_lambda_.48} parent=0 // pred_region
    _
  $region5: #{_lambda_.48} parent=0 // pred_fallthru
    _
  // Predicated region
  $region6: #{_lambda_.48} parent=0 // pred_check
    _
  $region7: #{_lambda_.48} parent=0 // pred_check_branch
    %11 = sbr.rel (0) target = $region9
  $region8: #{_lambda_.48} parent=0 // pred_region
    _
  $region9: #{_lambda_.48} parent=0 // pred_fallthru
    _
  // Predicated region
  $region10: #{_lambda_.48} parent=0 // pred_check
    _
  $region11: #{_lambda_.48} parent=0 // pred_check_branch
    %13 = sbr.rel (0) target = $region13
  $region12: #{_lambda_.48} parent=0 // pred_region
    _
  $region13: #{_lambda_.48} parent=0 // pred_fallthru
    _
  %p15 = scmp.eq.s32.totalorder 0, 0
  // Predicated region
  $region14: #{_lambda_.48} parent=0 // pred_check
    %p16 = pneg %p15
  $region15: #{_lambda_.48} parent=0 // pred_check_branch
    %18 = sbr.rel (%p16) target = $region17
  $region16: #{_lambda_.48} parent=0 // pred_region
    %19 = vst [vmem:[#allocation2] sm:$0xff] 0.0
    %20 = vst [vmem:[#allocation2 + $0x8] sm:$0xff] 0.0
    %21 = vst [vmem:[#allocation2 + $0x10] sm:$0xff] 0.0
    %22 = vst [vmem:[#allocation2 + $0x18] sm:$0xff] 0.0
  $region17: #{_lambda_.48} parent=0 // pred_fallthru
    _
  %v23 = vld [vmem:[#allocation2] sm:$0xff]
  %v24 = vld [vmem:[#allocation2 + $0x8] sm:$0xff]
  %v25 = vld [vmem:[#allocation2 + $0x10] sm:$0xff]
  %v26 = vld [vmem:[#allocation2 + $0x18] sm:$0xff]
  %v27 = vld [vmem:[%s0] sm:$0xff]
  %v28 = vld [vmem:[%s0 + $0x8] sm:$0xf]
  %v29 = vld [vmem:[%s0 + $0xc] sm:$0xff]
  %v30 = vld [vmem:[%s0 + $0x14] sm:$0xf]
  %v31 = vld [vmem:[%s0 + $0x18] sm:$0xff]
  %v32 = vld [vmem:[%s0 + $0x20] sm:$0xf]
  %v33 = vld [vmem:[%s0 + $0x24] sm:$0xff]
  %v34 = vld [vmem:[%s0 + $0x2c] sm:$0xf]
  %v35 = vld [vmem:[%s1] sm:$0xf]
  %v36 = vld [vmem:[%s1 + $0x4] sm:$0xf]
  %v37 = vld [vmem:[%s1 + $0x8] sm:$0xf]
  %v38 = vld [vmem:[%s1 + $0xc] sm:$0xf]
  %v39 = vld [vmem:[%s1 + $0x10] sm:$0xf]
  %v40 = vld [vmem:[%s1 + $0x14] sm:$0xf]
  %v41 = vld [vmem:[%s1 + $0x18] sm:$0xf]
  %v42 = vld [vmem:[%s1 + $0x1c] sm:$0xf]
  %v43 = vld [vmem:[%s1 + $0x20] sm:$0xf]
  %v44 = vld [vmem:[%s1 + $0x24] sm:$0xf]
  %v45 = vld [vmem:[%s1 + $0x28] sm:$0xf]
  %v46 = vld [vmem:[%s1 + $0x2c] sm:$0xf]
  %v47 = vld [vmem:[%s1 + $0x30] sm:$0xf]
  %v48 = vld [vmem:[%s1 + $0x34] sm:$0xf]
  %v49 = vld [vmem:[%s1 + $0x38] sm:$0xf]
  %v50 = vld [vmem:[%s1 + $0x3c] sm:$0xf]
  %v51 = vld [vmem:[%s1 + $0x40] sm:$0xf]
  %v52 = vld [vmem:[%s1 + $0x44] sm:$0xf]
  %v53 = vld [vmem:[%s1 + $0x48] sm:$0xf]
  %v54 = vld [vmem:[%s1 + $0x4c] sm:$0xf]
  %v55 = vld [vmem:[%s1 + $0x50] sm:$0xf]
  %v56 = vld [vmem:[%s1 + $0x54] sm:$0xf]
  %v57 = vld [vmem:[%s1 + $0x58] sm:$0xf]
  %v58 = vld [vmem:[%s1 + $0x5c] sm:$0xf]
  %v59 = vld [vmem:[%s1 + $0x60] sm:$0xf]
  %v60 = vld [vmem:[%s1 + $0x64] sm:$0xf]
  %v61 = vld [vmem:[%s1 + $0x68] sm:$0xf]
  %v62 = vld [vmem:[%s1 + $0x6c] sm:$0xf]
  %v63 = vld [vmem:[%s1 + $0x70] sm:$0xf]
  %v64 = vld [vmem:[%s1 + $0x74] sm:$0xf]
  %v65 = vld [vmem:[%s1 + $0x78] sm:$0xf]
  %v66 = vld [vmem:[%s1 + $0x7c] sm:$0xf]
  %v67 = vld [vmem:[%s1 + $0x80] sm:$0xf]
  %v68 = vld [vmem:[%s1 + $0x84] sm:$0xf]
  %v69 = vld [vmem:[%s1 + $0x88] sm:$0xf]
  %v70 = vld [vmem:[%s1 + $0x8c] sm:$0xf]
  %v71 = vld [vmem:[%s1 + $0x90] sm:$0xf]
  %v72 = vld [vmem:[%s1 + $0x94] sm:$0xf]
  %v73 = vld [vmem:[%s1 + $0x98] sm:$0xf]
  %v74 = vld [vmem:[%s1 + $0x9c] sm:$0xf]
  %v75 = vld [vmem:[%s1 + $0xa0] sm:$0xf]
  %v76 = vld [vmem:[%s1 + $0xa4] sm:$0xf]
  %v77 = vld [vmem:[%s1 + $0xa8] sm:$0xf]
  %v78 = vld [vmem:[%s1 + $0xac] sm:$0xf]
  %v79 = vld [vmem:[%s1 + $0xb0] sm:$0xf]
  %v80 = vld [vmem:[%s1 + $0xb4] sm:$0xf]
  %v81 = vld [vmem:[%s1 + $0xb8] sm:$0xf]
  %v82 = vld [vmem:[%s1 + $0xbc] sm:$0xf]
  %v91 = vunpack.c.l.b16 %v27
  %v92 = vunpack.c.h.b16 %v27
  %v93 = vunpack.c.l.b16 %v28
  %v94 = vunpack.c.l.b16 %v29
  %v95 = vunpack.c.h.b16 %v29
  %v96 = vunpack.c.l.b16 %v30
  %v97 = vunpack.c.l.b16 %v31
  %v98 = vunpack.c.h.b16 %v31
  %v99 = vunpack.c.l.b16 %v32
  %v100 = vunpack.c.l.b16 %v33
  %v101 = vunpack.c.h.b16 %v33
  %v102 = vunpack.c.l.b16 %v34
  %v103 = vpack.c.b16 %v94, %v91
  %v104 = vpack.c.b16 %v95, %v92
  %v105 = vpack.c.b16 %v96, %v93
  %v106 = vpack.c.b16 %v100, %v97
  %v107 = vpack.c.b16 %v101, %v98
  %v108 = vpack.c.b16 %v102, %v99
  %v163 = vunpack.c.l.b16 %v35
  %v164 = vunpack.c.l.b16 %v36
  %v165 = vunpack.c.l.b16 %v37
  %v166 = vunpack.c.l.b16 %v38
  %v167 = vunpack.c.l.b16 %v39
  %v168 = vunpack.c.l.b16 %v40
  %v169 = vunpack.c.l.b16 %v41
  %v170 = vunpack.c.l.b16 %v42
  %v171 = vunpack.c.l.b16 %v43
  %v172 = vunpack.c.l.b16 %v44
  %v173 = vunpack.c.l.b16 %v45
  %v174 = vunpack.c.l.b16 %v46
  %v175 = vunpack.c.l.b16 %v47
  %v176 = vunpack.c.l.b16 %v48
  %v177 = vunpack.c.l.b16 %v49
  %v178 = vunpack.c.l.b16 %v50
  %v179 = vunpack.c.l.b16 %v51
  %v180 = vunpack.c.l.b16 %v52
  %v181 = vunpack.c.l.b16 %v53
  %v182 = vunpack.c.l.b16 %v54
  %v183 = vunpack.c.l.b16 %v55
  %v184 = vunpack.c.l.b16 %v56
  %v185 = vunpack.c.l.b16 %v57
  %v186 = vunpack.c.l.b16 %v58
  %v187 = vunpack.c.l.b16 %v59
  %v188 = vunpack.c.l.b16 %v60
  %v189 = vunpack.c.l.b16 %v61
  %v190 = vunpack.c.l.b16 %v62
  %v191 = vunpack.c.l.b16 %v63
  %v192 = vunpack.c.l.b16 %v64
  %v193 = vunpack.c.l.b16 %v65
  %v194 = vunpack.c.l.b16 %v66
  %v195 = vunpack.c.l.b16 %v67
  %v196 = vunpack.c.l.b16 %v68
  %v197 = vunpack.c.l.b16 %v69
  %v198 = vunpack.c.l.b16 %v70
  %v199 = vunpack.c.l.b16 %v71
  %v200 = vunpack.c.l.b16 %v72
  %v201 = vunpack.c.l.b16 %v73
  %v202 = vunpack.c.l.b16 %v74
  %v203 = vunpack.c.l.b16 %v75
  %v204 = vunpack.c.l.b16 %v76
  %v205 = vunpack.c.l.b16 %v77
  %v206 = vunpack.c.l.b16 %v78
  %v207 = vunpack.c.l.b16 %v79
  %v208 = vunpack.c.l.b16 %v80
  %v209 = vunpack.c.l.b16 %v81
  %v210 = vunpack.c.l.b16 %v82
  %v211 = vpack.c.b16 %v164, %v163
  %v212 = vpack.c.b16 %v166, %v165
  %v213 = vpack.c.b16 %v168, %v167
  %v214 = vpack.c.b16 %v170, %v169
  %v215 = vpack.c.b16 %v172, %v171
  %v216 = vpack.c.b16 %v174, %v173
  %v217 = vpack.c.b16 %v176, %v175
  %v218 = vpack.c.b16 %v178, %v177
  %v219 = vpack.c.b16 %v180, %v179
  %v220 = vpack.c.b16 %v182, %v181
  %v221 = vpack.c.b16 %v184, %v183
  %v222 = vpack.c.b16 %v186, %v185
  %v223 = vpack.c.b16 %v188, %v187
  %v224 = vpack.c.b16 %v190, %v189
  %v225 = vpack.c.b16 %v192, %v191
  %v226 = vpack.c.b16 %v194, %v193
  %v227 = vpack.c.b16 %v196, %v195
  %v228 = vpack.c.b16 %v198, %v197
  %v229 = vpack.c.b16 %v200, %v199
  %v230 = vpack.c.b16 %v202, %v201
  %v231 = vpack.c.b16 %v204, %v203
  %v232 = vpack.c.b16 %v206, %v205
  %v233 = vpack.c.b16 %v208, %v207
  %v234 = vpack.c.b16 %v210, %v209
  %259 = vmatprep.subr.bf16.mxu0 0
  %260 = vmatpush1.bf16.msra.mxu0 %v211
  %261 = vmatprep.subr.bf16.mxu0 0
  %262 = vmatpush1.bf16.msra.mxu0 %v212
  %263 = vmatprep.subr.bf16.mxu0 0
  %264 = vmatpush1.bf16.msra.mxu0 %v213
  %265 = vmatprep.subr.bf16.mxu0 0
  %266 = vmatpush1.bf16.msra.mxu0 %v214
  %267 = vmatprep.subr.bf16.mxu0 0
  %268 = vmatpush1.bf16.msra.mxu0 %v215
  %269 = vmatprep.subr.bf16.mxu0 0
  %270 = vmatpush1.bf16.msra.mxu0 %v216
  %271 = vmatprep.subr.bf16.mxu0 0
  %272 = vmatpush1.bf16.msra.mxu0 %v217
  %273 = vmatprep.subr.bf16.mxu0 0
  %274 = vmatpush1.bf16.msra.mxu0 %v218
  %275 = vmatprep.subr.bf16.mxu0 0
  %276 = vmatpush1.bf16.msra.mxu0 %v219
  %277 = vmatprep.subr.bf16.mxu0 0
  %278 = vmatpush1.bf16.msra.mxu0 %v220
  %279 = vmatprep.subr.bf16.mxu0 0
  %280 = vmatpush1.bf16.msra.mxu0 %v221
  %281 = vmatprep.subr.bf16.mxu0 0
  %282 = vmatpush1.bf16.msra.mxu0 %v222
  %283 = vmatprep.subr.bf16.mxu0 0
  %284 = vmatpush1.bf16.msra.mxu0 %v223
  %285 = vmatprep.subr.bf16.mxu0 0
  %286 = vmatpush1.bf16.msra.mxu0 %v224
  %287 = vmatprep.subr.bf16.mxu0 0
  %288 = vmatpush1.bf16.msra.mxu0 %v225
  %289 = vmatprep.subr.bf16.mxu0 0
  %290 = vmatpush1.bf16.msra.mxu0 %v226
  %291 = vmatprep.mubr.bf16.mxu0 %v104
  %292 = vmatmul.mubr.bf16.gmra.mrb[0].mxu0 %v103
  %v293 = vpop.f32.mrb[0].mxu0
  %v294 = vadd.f32 0.0, %v293
  %v295 = vpop.f32.mrb[0].mxu0
  %v296 = vpop.f32.mrb[0].mxu0
  %v297 = vadd.f32 0.0, %v296
  %v298 = vpop.f32.mrb[0].mxu0
  %299 = vmatprep.mubr.bf16.mxu0 %v107
  %300 = vmatmul.mubr.bf16.gmra.mrb[0].mxu0 %v106
  %v301 = vpop.f32.mrb[0].mxu0
  %v302 = vadd.f32 0.0, %v301
  %v303 = vpop.f32.mrb[0].mxu0
  %v304 = vpop.f32.mrb[0].mxu0
  %v305 = vadd.f32 0.0, %v304
  %v306 = vpop.f32.mrb[0].mxu0
  %307 = vdwg.mxu0
  %308 = vmatprep.subr.bf16.mxu0 0
  %309 = vmatpush1.bf16.msra.mxu0 %v227
  %310 = vmatprep.subr.bf16.mxu0 0
  %311 = vmatpush1.bf16.msra.mxu0 %v228
  %312 = vmatprep.subr.bf16.mxu0 0
  %313 = vmatpush1.bf16.msra.mxu0 %v229
  %314 = vmatprep.subr.bf16.mxu0 0
  %315 = vmatpush1.bf16.msra.mxu0 %v230
  %316 = vmatprep.subr.bf16.mxu0 0
  %317 = vmatpush1.bf16.msra.mxu0 %v231
  %318 = vmatprep.subr.bf16.mxu0 0
  %319 = vmatpush1.bf16.msra.mxu0 %v232
  %320 = vmatprep.subr.bf16.mxu0 0
  %321 = vmatpush1.bf16.msra.mxu0 %v233
  %322 = vmatprep.subr.bf16.mxu0 0
  %323 = vmatpush1.bf16.msra.mxu0 %v234
  %324 = vmatprep.subr.bf16.mxu0 0
  %325 = vmatpush1.bf16.msra.mxu0 0
  %326 = vmatprep.subr.bf16.mxu0 0
  %327 = vmatpush1.bf16.msra.mxu0 0
  %328 = vmatprep.subr.bf16.mxu0 0
  %329 = vmatpush1.bf16.msra.mxu0 0
  %330 = vmatprep.subr.bf16.mxu0 0
  %331 = vmatpush1.bf16.msra.mxu0 0
  %332 = vmatprep.subr.bf16.mxu0 0
  %333 = vmatpush1.bf16.msra.mxu0 0
  %334 = vmatprep.subr.bf16.mxu0 0
  %335 = vmatpush1.bf16.msra.mxu0 0
  %336 = vmatprep.subr.bf16.mxu0 0
  %337 = vmatpush1.bf16.msra.mxu0 0
  %338 = vmatprep.subr.bf16.mxu0 0
  %339 = vmatpush1.bf16.msra.mxu0 0
  %340 = vmatprep.mubr.bf16.mxu0 0
  %341 = vmatmul.mubr.bf16.gmra.mrb[0].mxu0 %v105
  %v342 = vpop.f32.mrb[0].mxu0
  %v343 = vadd.f32 %v294, %v342
  %v344 = vpop.f32.mrb[0].mxu0
  %v345 = vpop.f32.mrb[0].mxu0
  %v346 = vadd.f32 %v297, %v345
  %v347 = vpop.f32.mrb[0].mxu0
  %348 = vmatprep.mubr.bf16.mxu0 0
  %349 = vmatmul.mubr.bf16.gmra.mrb[0].mxu0 %v108
  %v350 = vpop.f32.mrb[0].mxu0
  %v351 = vadd.f32 %v302, %v350
  %v352 = vpop.f32.mrb[0].mxu0
  %v353 = vpop.f32.mrb[0].mxu0
  %v354 = vadd.f32 %v305, %v353
  %v355 = vpop.f32.mrb[0].mxu0
  %356 = vdwg.mxu0
  %v357 = vadd.f32 %v23, %v343
  %v358 = vadd.f32 %v24, %v346
  %v359 = vadd.f32 %v25, %v351
  %v360 = vadd.f32 %v26, %v354
  %361 = vst [vmem:[#allocation2] sm:$0xff] %v357
  %362 = vst [vmem:[#allocation2 + $0x8] sm:$0xff] %v358
  %363 = vst [vmem:[#allocation2 + $0x10] sm:$0xff] %v359
  %364 = vst [vmem:[#allocation2 + $0x18] sm:$0xff] %v360
  // Predicated region
  $region18: #{_lambda_.48} parent=0 // pred_check
    %p365 = pneg %p15
  $region19: #{_lambda_.48} parent=0 // pred_check_branch
    %367 = sbr.rel (%p365) target = $region21
  $region20: #{_lambda_.48} parent=0 // pred_region
    %v368 = vld [vmem:[#allocation2] sm:$0xff]
    %v369 = vld [vmem:[#allocation2 + $0x8] sm:$0xff]
    %v370 = vld [vmem:[#allocation2 + $0x10] sm:$0xff]
    %v371 = vld [vmem:[#allocation2 + $0x18] sm:$0xff]
    %v372 = vld [vmem:[%s2] sm:$0x1]
    %v374 = vlaneseq
    %v375 = vshrl.u32 %v374, 7
    %v376 = vsub.s32 0, %v375
    %v377 = vrot.slane %v372, %v376
    %v379 = vadd.f32 %v368, %v377
    %v380 = vadd.f32 %v369, %v377
    %v381 = vadd.f32 %v370, %v377
    %v382 = vadd.f32 %v371, %v377
    %383 = vst [vmem:[%s3] sm:$0xff] %v379
    %384 = vst [vmem:[%s3 + $0x8] sm:$0xff] %v380
    %385 = vst [vmem:[%s3 + $0x10] sm:$0xff] %v381
    %386 = vst [vmem:[%s3 + $0x18] sm:$0xff] %v382
  $region21: #{_lambda_.48} parent=0 // pred_fallthru
    _
  // Predicated region
  $region22: #{_lambda_.48} parent=0 // pred_check
    _
  $region23: #{_lambda_.48} parent=0 // pred_check_branch
    %388 = sbr.rel (0) target = $region25
  $region24: #{_lambda_.48} parent=0 // pred_region
    _
  $region25: #{_lambda_.48} parent=0 // pred_fallthru
    _
  // Predicated region
  $region26: #{_lambda_.48} parent=0 // pred_check
    _
  $region27: #{_lambda_.48} parent=0 // pred_check_branch
    %390 = sbr.rel (0) target = $region29
  $region28: #{_lambda_.48} parent=0 // pred_region
    _
  $region29: #{_lambda_.48} parent=0 // pred_fallthru
    _

// kernel: _lambda_.56
$region0: #{_lambda_.56}
  #allocation0 [shape = 'u32[]', space=smem, size = 0x4, offset = 0x4, fixed_abs, tag = 'smem constant byte address 0x4 - core index']
  #allocation1 [shape = 'u32[144,128]{1,0:T(1,128)}', space=vmem, size = 0x12000, scoped, tag = 'internal scratch']
  #allocation2 [shape = 'f32[32,128]{1,0:T(8,128)}', space=vmem, size = 0x4000, scoped, tag = 'scratch operand']
  %s0 = inlined_call_operand.vmem [shape: bf16[32,128], index: 0, kind: input, shape index: {}]
  %s1 = inlined_call_operand.vmem [shape: bf16[128,128], index: 1, kind: input, shape index: {}]
  %s2 = inlined_call_operand.vmem [shape: f32[1,128], index: 2, kind: input, shape index: {}]
  %s3 = inlined_call_operand.vmem [shape: f32[32,128], index: 3, kind: output, shape index: {}]
  %s4 = sld [smem:[#allocation0]]
  $region30: #{_lambda_.56} parent=0
    _
  %s6 = ssub.s32 1, %s4
  %s7 = scalar_select 0, %s6, %s4
  // Predicated region
  $region2: #{_lambda_.56} parent=0 // pred_check
    _
  $region3: #{_lambda_.56} parent=0 // pred_check_branch
    %9 = sbr.rel (0) target = $region5
  $region4: #{_lambda_.56} parent=0 // pred_region
    _
  $region5: #{_lambda_.56} parent=0 // pred_fallthru
    _
  // Predicated region
  $region6: #{_lambda_.56} parent=0 // pred_check
    _
  $region7: #{_lambda_.56} parent=0 // pred_check_branch
    %11 = sbr.rel (0) target = $region9
  $region8: #{_lambda_.56} parent=0 // pred_region
    _
  $region9: #{_lambda_.56} parent=0 // pred_fallthru
    _
  // Predicated region
  $region10: #{_lambda_.56} parent=0 // pred_check
    _
  $region11: #{_lambda_.56} parent=0 // pred_check_branch
    %13 = sbr.rel (0) target = $region13
  $region12: #{_lambda_.56} parent=0 // pred_region
    _
  $region13: #{_lambda_.56} parent=0 // pred_fallthru
    _
  %p15 = scmp.eq.s32.totalorder 0, 0
  // Predicated region
  $region14: #{_lambda_.56} parent=0 // pred_check
    %p16 = pneg %p15
  $region15: #{_lambda_.56} parent=0 // pred_check_branch
    %18 = sbr.rel (%p16) target = $region17
  $region16: #{_lambda_.56} parent=0 // pred_region
    %19 = vst [vmem:[#allocation2] sm:$0xff] 0.0
    %20 = vst [vmem:[#allocation2 + $0x8] sm:$0xff] 0.0
    %21 = vst [vmem:[#allocation2 + $0x10] sm:$0xff] 0.0
    %22 = vst [vmem:[#allocation2 + $0x18] sm:$0xff] 0.0
  $region17: #{_lambda_.56} parent=0 // pred_fallthru
    _
  %v23 = vld [vmem:[#allocation2] sm:$0xff]
  %v24 = vld [vmem:[#allocation2 + $0x8] sm:$0xff]
  %v25 = vld [vmem:[#allocation2 + $0x10] sm:$0xff]
  %v26 = vld [vmem:[#allocation2 + $0x18] sm:$0xff]
  %v27 = vld [vmem:[%s0] sm:$0xf]
  %v28 = vld [vmem:[%s0 + $0x4] sm:$0xf]
  %v29 = vld [vmem:[%s0 + $0x8] sm:$0xf]
  %v30 = vld [vmem:[%s0 + $0xc] sm:$0xf]
  %v31 = vld [vmem:[%s1] sm:$0xf]
  %v32 = vld [vmem:[%s1 + $0x4] sm:$0xf]
  %v33 = vld [vmem:[%s1 + $0x8] sm:$0xf]
  %v34 = vld [vmem:[%s1 + $0xc] sm:$0xf]
  %v35 = vld [vmem:[%s1 + $0x10] sm:$0xf]
  %v36 = vld [vmem:[%s1 + $0x14] sm:$0xf]
  %v37 = vld [vmem:[%s1 + $0x18] sm:$0xf]
  %v38 = vld [vmem:[%s1 + $0x1c] sm:$0xf]
  %v39 = vld [vmem:[%s1 + $0x20] sm:$0xf]
  %v40 = vld [vmem:[%s1 + $0x24] sm:$0xf]
  %v41 = vld [vmem:[%s1 + $0x28] sm:$0xf]
  %v42 = vld [vmem:[%s1 + $0x2c] sm:$0xf]
  %v43 = vld [vmem:[%s1 + $0x30] sm:$0xf]
  %v44 = vld [vmem:[%s1 + $0x34] sm:$0xf]
  %v45 = vld [vmem:[%s1 + $0x38] sm:$0xf]
  %v46 = vld [vmem:[%s1 + $0x3c] sm:$0xf]
  %v51 = vunpack.c.l.b16 %v27
  %v52 = vunpack.c.l.b16 %v28
  %v53 = vunpack.c.l.b16 %v29
  %v54 = vunpack.c.l.b16 %v30
  %v55 = vpack.c.b16 %v52, %v51
  %v56 = vpack.c.b16 %v54, %v53
  %v75 = vunpack.c.l.b16 %v31
  %v76 = vunpack.c.l.b16 %v32
  %v77 = vunpack.c.l.b16 %v33
  %v78 = vunpack.c.l.b16 %v34
  %v79 = vunpack.c.l.b16 %v35
  %v80 = vunpack.c.l.b16 %v36
  %v81 = vunpack.c.l.b16 %v37
  %v82 = vunpack.c.l.b16 %v38
  %v83 = vunpack.c.l.b16 %v39
  %v84 = vunpack.c.l.b16 %v40
  %v85 = vunpack.c.l.b16 %v41
  %v86 = vunpack.c.l.b16 %v42
  %v87 = vunpack.c.l.b16 %v43
  %v88 = vunpack.c.l.b16 %v44
  %v89 = vunpack.c.l.b16 %v45
  %v90 = vunpack.c.l.b16 %v46
  %v91 = vpack.c.b16 %v76, %v75
  %v92 = vpack.c.b16 %v78, %v77
  %v93 = vpack.c.b16 %v80, %v79
  %v94 = vpack.c.b16 %v82, %v81
  %v95 = vpack.c.b16 %v84, %v83
  %v96 = vpack.c.b16 %v86, %v85
  %v97 = vpack.c.b16 %v88, %v87
  %v98 = vpack.c.b16 %v90, %v89
  %107 = vmatprep.subr.bf16.mxu0 0
  %108 = vmatpush1.bf16.msra.mxu0 %v91
  %109 = vmatprep.subr.bf16.mxu0 0
  %110 = vmatpush1.bf16.msra.mxu0 %v92
  %111 = vmatprep.subr.bf16.mxu0 0
  %112 = vmatpush1.bf16.msra.mxu0 %v93
  %113 = vmatprep.subr.bf16.mxu0 0
  %114 = vmatpush1.bf16.msra.mxu0 %v94
  %115 = vmatprep.subr.bf16.mxu0 0
  %116 = vmatpush1.bf16.msra.mxu0 %v95
  %117 = vmatprep.subr.bf16.mxu0 0
  %118 = vmatpush1.bf16.msra.mxu0 %v96
  %119 = vmatprep.subr.bf16.mxu0 0
  %120 = vmatpush1.bf16.msra.mxu0 %v97
  %121 = vmatprep.subr.bf16.mxu0 0
  %122 = vmatpush1.bf16.msra.mxu0 %v98
  %123 = vmatprep.subr.bf16.mxu0 0
  %124 = vmatpush1.bf16.msra.mxu0 0
  %125 = vmatprep.subr.bf16.mxu0 0
  %126 = vmatpush1.bf16.msra.mxu0 0
  %127 = vmatprep.subr.bf16.mxu0 0
  %128 = vmatpush1.bf16.msra.mxu0 0
  %129 = vmatprep.subr.bf16.mxu0 0
  %130 = vmatpush1.bf16.msra.mxu0 0
  %131 = vmatprep.subr.bf16.mxu0 0
  %132 = vmatpush1.bf16.msra.mxu0 0
  %133 = vmatprep.subr.bf16.mxu0 0
  %134 = vmatpush1.bf16.msra.mxu0 0
  %135 = vmatprep.subr.bf16.mxu0 0
  %136 = vmatpush1.bf16.msra.mxu0 0
  %137 = vmatprep.subr.bf16.mxu0 0
  %138 = vmatpush1.bf16.msra.mxu0 0
  %139 = vmatprep.mubr.bf16.mxu0 0
  %140 = vmatmul.mubr.bf16.gmra.mrb[0].mxu0 %v55
  %v141 = vpop.f32.mrb[0].mxu0
  %v142 = vadd.f32 0.0, %v141
  %v143 = vpop.f32.mrb[0].mxu0
  %v144 = vpop.f32.mrb[0].mxu0
  %v145 = vadd.f32 0.0, %v144
  %v146 = vpop.f32.mrb[0].mxu0
  %147 = vmatprep.mubr.bf16.mxu0 0
  %148 = vmatmul.mubr.bf16.gmra.mrb[0].mxu0 %v56
  %v149 = vpop.f32.mrb[0].mxu0
  %v150 = vadd.f32 0.0, %v149
  %v151 = vpop.f32.mrb[0].mxu0
  %v152 = vpop.f32.mrb[0].mxu0
  %v153 = vadd.f32 0.0, %v152
  %v154 = vpop.f32.mrb[0].mxu0
  %155 = vdwg.mxu0
  %v156 = vadd.f32 %v23, %v142
  %v157 = vadd.f32 %v24, %v145
  %v158 = vadd.f32 %v25, %v150
  %v159 = vadd.f32 %v26, %v153
  %160 = vst [vmem:[#allocation2] sm:$0xff] %v156
  %161 = vst [vmem:[#allocation2 + $0x8] sm:$0xff] %v157
  %162 = vst [vmem:[#allocation2 + $0x10] sm:$0xff] %v158
  %163 = vst [vmem:[#allocation2 + $0x18] sm:$0xff] %v159
  // Predicated region
  $region18: #{_lambda_.56} parent=0 // pred_check
    %p164 = pneg %p15
  $region19: #{_lambda_.56} parent=0 // pred_check_branch
    %166 = sbr.rel (%p164) target = $region21
  $region20: #{_lambda_.56} parent=0 // pred_region
    %v167 = vld [vmem:[#allocation2] sm:$0xff]
    %v168 = vld [vmem:[#allocation2 + $0x8] sm:$0xff]
    %v169 = vld [vmem:[#allocation2 + $0x10] sm:$0xff]
    %v170 = vld [vmem:[#allocation2 + $0x18] sm:$0xff]
    %v171 = vld [vmem:[%s2] sm:$0x1]
    %v173 = vlaneseq
    %v174 = vshrl.u32 %v173, 7
    %v175 = vsub.s32 0, %v174
    %v176 = vrot.slane %v171, %v175
    %v178 = vadd.f32 %v167, %v176
    %v179 = vadd.f32 %v168, %v176
    %v180 = vadd.f32 %v169, %v176
    %v181 = vadd.f32 %v170, %v176
    %v182 = vmax.f32 %v178, 0.0
    %v183 = vmax.f32 %v179, 0.0
    %v184 = vmax.f32 %v180, 0.0
    %v185 = vmax.f32 %v181, 0.0
    %186 = vst [vmem:[%s3] sm:$0xff] %v182
    %187 = vst [vmem:[%s3 + $0x8] sm:$0xff] %v183
    %188 = vst [vmem:[%s3 + $0x10] sm:$0xff] %v184
    %189 = vst [vmem:[%s3 + $0x18] sm:$0xff] %v185
  $region21: #{_lambda_.56} parent=0 // pred_fallthru
    _
  // Predicated region
  $region22: #{_lambda_.56} parent=0 // pred_check
    _
  $region23: #{_lambda_.56} parent=0 // pred_check_branch
    %191 = sbr.rel (0) target = $region25
  $region24: #{_lambda_.56} parent=0 // pred_region
    _
  $region25: #{_lambda_.56} parent=0 // pred_fallthru
    _
  // Predicated region
  $region26: #{_lambda_.56} parent=0 // pred_check
    _
  $region27: #{_lambda_.56} parent=0 // pred_check_branch
    %193 = sbr.rel (0) target = $region29
  $region28: #{_lambda_.56} parent=0 // pred_region
    _
  $region29: #{_lambda_.56} parent=0 // pred_fallthru
    _

// kernel: _lambda_.64
$region0: #{_lambda_.64}
  #allocation0 [shape = 'u32[]', space=smem, size = 0x4, offset = 0x4, fixed_abs, tag = 'smem constant byte address 0x4 - core index']
  #allocation1 [shape = 'u32[144,128]{1,0:T(1,128)}', space=vmem, size = 0x12000, scoped, tag = 'internal scratch']
  #allocation2 [shape = 'f32[128,128]{1,0:T(8,128)}', space=vmem, size = 0x10000, scoped, tag = 'scratch operand']
  %s0 = inlined_call_operand.vmem [shape: bf16[128,128], index: 0, kind: input, shape index: {}]
  %s1 = inlined_call_operand.vmem [shape: bf16[128,128], index: 1, kind: input, shape index: {}]
  %s2 = inlined_call_operand.vmem [shape: f32[1,128], index: 2, kind: input, shape index: {}]
  %s3 = inlined_call_operand.vmem [shape: f32[128,128], index: 3, kind: output, shape index: {}]
  %s4 = sld [smem:[#allocation0]]
  $region30: #{_lambda_.64} parent=0
    _
  %s6 = ssub.s32 1, %s4
  %s7 = scalar_select 0, %s6, %s4
  // Predicated region
  $region2: #{_lambda_.64} parent=0 // pred_check
    _
  $region3: #{_lambda_.64} parent=0 // pred_check_branch
    %9 = sbr.rel (0) target = $region5
  $region4: #{_lambda_.64} parent=0 // pred_region
    _
  $region5: #{_lambda_.64} parent=0 // pred_fallthru
    _
  // Predicated region
  $region6: #{_lambda_.64} parent=0 // pred_check
    _
  $region7: #{_lambda_.64} parent=0 // pred_check_branch
    %11 = sbr.rel (0) target = $region9
  $region8: #{_lambda_.64} parent=0 // pred_region
    _
  $region9: #{_lambda_.64} parent=0 // pred_fallthru
    _
  // Predicated region
  $region10: #{_lambda_.64} parent=0 // pred_check
    _
  $region11: #{_lambda_.64} parent=0 // pred_check_branch
    %13 = sbr.rel (0) target = $region13
  $region12: #{_lambda_.64} parent=0 // pred_region
    _
  $region13: #{_lambda_.64} parent=0 // pred_fallthru
    _
  %p15 = scmp.eq.s32.totalorder 0, 0
  // Predicated region
  $region14: #{_lambda_.64} parent=0 // pred_check
    %p16 = pneg %p15
  $region15: #{_lambda_.64} parent=0 // pred_check_branch
    %18 = sbr.rel (%p16) target = $region17
  $region16: #{_lambda_.64} parent=0 // pred_region
    %19 = vst [vmem:[#allocation2] sm:$0xff] 0.0
    %20 = vst [vmem:[#allocation2 + $0x8] sm:$0xff] 0.0
    %21 = vst [vmem:[#allocation2 + $0x10] sm:$0xff] 0.0
    %22 = vst [vmem:[#allocation2 + $0x18] sm:$0xff] 0.0
    %23 = vst [vmem:[#allocation2 + $0x20] sm:$0xff] 0.0
    %24 = vst [vmem:[#allocation2 + $0x28] sm:$0xff] 0.0
    %25 = vst [vmem:[#allocation2 + $0x30] sm:$0xff] 0.0
    %26 = vst [vmem:[#allocation2 + $0x38] sm:$0xff] 0.0
    %27 = vst [vmem:[#allocation2 + $0x40] sm:$0xff] 0.0
    %28 = vst [vmem:[#allocation2 + $0x48] sm:$0xff] 0.0
    %29 = vst [vmem:[#allocation2 + $0x50] sm:$0xff] 0.0
    %30 = vst [vmem:[#allocation2 + $0x58] sm:$0xff] 0.0
    %31 = vst [vmem:[#allocation2 + $0x60] sm:$0xff] 0.0
    %32 = vst [vmem:[#allocation2 + $0x68] sm:$0xff] 0.0
    %33 = vst [vmem:[#allocation2 + $0x70] sm:$0xff] 0.0
    %34 = vst [vmem:[#allocation2 + $0x78] sm:$0xff] 0.0
  $region17: #{_lambda_.64} parent=0 // pred_fallthru
    _
  %v35 = vld [vmem:[#allocation2] sm:$0xff]
  %v36 = vld [vmem:[#allocation2 + $0x8] sm:$0xff]
  %v37 = vld [vmem:[#allocation2 + $0x10] sm:$0xff]
  %v38 = vld [vmem:[#allocation2 + $0x18] sm:$0xff]
  %v39 = vld [vmem:[#allocation2 + $0x20] sm:$0xff]
  %v40 = vld [vmem:[#allocation2 + $0x28] sm:$0xff]
  %v41 = vld [vmem:[#allocation2 + $0x30] sm:$0xff]
  %v42 = vld [vmem:[#allocation2 + $0x38] sm:$0xff]
  %v43 = vld [vmem:[#allocation2 + $0x40] sm:$0xff]
  %v44 = vld [vmem:[#allocation2 + $0x48] sm:$0xff]
  %v45 = vld [vmem:[#allocation2 + $0x50] sm:$0xff]
  %v46 = vld [vmem:[#allocation2 + $0x58] sm:$0xff]
  %v47 = vld [vmem:[#allocation2 + $0x60] sm:$0xff]
  %v48 = vld [vmem:[#allocation2 + $0x68] sm:$0xff]
  %v49 = vld [vmem:[#allocation2 + $0x70] sm:$0xff]
  %v50 = vld [vmem:[#allocation2 + $0x78] sm:$0xff]
  %v51 = vld [vmem:[%s0] sm:$0xf]
  %v52 = vld [vmem:[%s0 + $0x4] sm:$0xf]
  %v53 = vld [vmem:[%s0 + $0x8] sm:$0xf]
  %v54 = vld [vmem:[%s0 + $0xc] sm:$0xf]
  %v55 = vld [vmem:[%s0 + $0x10] sm:$0xf]
  %v56 = vld [vmem:[%s0 + $0x14] sm:$0xf]
  %v57 = vld [vmem:[%s0 + $0x18] sm:$0xf]
  %v58 = vld [vmem:[%s0 + $0x1c] sm:$0xf]
  %v59 = vld [vmem:[%s0 + $0x20] sm:$0xf]
  %v60 = vld [vmem:[%s0 + $0x24] sm:$0xf]
  %v61 = vld [vmem:[%s0 + $0x28] sm:$0xf]
  %v62 = vld [vmem:[%s0 + $0x2c] sm:$0xf]
  %v63 = vld [vmem:[%s0 + $0x30] sm:$0xf]
  %v64 = vld [vmem:[%s0 + $0x34] sm:$0xf]
  %v65 = vld [vmem:[%s0 + $0x38] sm:$0xf]
  %v66 = vld [vmem:[%s0 + $0x3c] sm:$0xf]
  %v67 = vld [vmem:[%s1] sm:$0xf]
  %v68 = vld [vmem:[%s1 + $0x4] sm:$0xf]
  %v69 = vld [vmem:[%s1 + $0x8] sm:$0xf]
  %v70 = vld [vmem:[%s1 + $0xc] sm:$0xf]
  %v71 = vld [vmem:[%s1 + $0x10] sm:$0xf]
  %v72 = vld [vmem:[%s1 + $0x14] sm:$0xf]
  %v73 = vld [vmem:[%s1 + $0x18] sm:$0xf]
  %v74 = vld [vmem:[%s1 + $0x1c] sm:$0xf]
  %v75 = vld [vmem:[%s1 + $0x20] sm:$0xf]
  %v76 = vld [vmem:[%s1 + $0x24] sm:$0xf]
  %v77 = vld [vmem:[%s1 + $0x28] sm:$0xf]
  %v78 = vld [vmem:[%s1 + $0x2c] sm:$0xf]
  %v79 = vld [vmem:[%s1 + $0x30] sm:$0xf]
  %v80 = vld [vmem:[%s1 + $0x34] sm:$0xf]
  %v81 = vld [vmem:[%s1 + $0x38] sm:$0xf]
  %v82 = vld [vmem:[%s1 + $0x3c] sm:$0xf]
  %v99 = vunpack.c.l.b16 %v51
  %v100 = vunpack.c.l.b16 %v52
  %v101 = vunpack.c.l.b16 %v53
  %v102 = vunpack.c.l.b16 %v54
  %v103 = vunpack.c.l.b16 %v55
  %v104 = vunpack.c.l.b16 %v56
  %v105 = vunpack.c.l.b16 %v57
  %v106 = vunpack.c.l.b16 %v58
  %v107 = vunpack.c.l.b16 %v59
  %v108 = vunpack.c.l.b16 %v60
  %v109 = vunpack.c.l.b16 %v61
  %v110 = vunpack.c.l.b16 %v62
  %v111 = vunpack.c.l.b16 %v63
  %v112 = vunpack.c.l.b16 %v64
  %v113 = vunpack.c.l.b16 %v65
  %v114 = vunpack.c.l.b16 %v66
  %v115 = vpack.c.b16 %v100, %v99
  %v116 = vpack.c.b16 %v102, %v101
  %v117 = vpack.c.b16 %v104, %v103
  %v118 = vpack.c.b16 %v106, %v105
  %v119 = vpack.c.b16 %v108, %v107
  %v120 = vpack.c.b16 %v110, %v109
  %v121 = vpack.c.b16 %v112, %v111
  %v122 = vpack.c.b16 %v114, %v113
  %v147 = vunpack.c.l.b16 %v67
  %v148 = vunpack.c.l.b16 %v68
  %v149 = vunpack.c.l.b16 %v69
  %v150 = vunpack.c.l.b16 %v70
  %v151 = vunpack.c.l.b16 %v71
  %v152 = vunpack.c.l.b16 %v72
  %v153 = vunpack.c.l.b16 %v73
  %v154 = vunpack.c.l.b16 %v74
  %v155 = vunpack.c.l.b16 %v75
  %v156 = vunpack.c.l.b16 %v76
  %v157 = vunpack.c.l.b16 %v77
  %v158 = vunpack.c.l.b16 %v78
  %v159 = vunpack.c.l.b16 %v79
  %v160 = vunpack.c.l.b16 %v80
  %v161 = vunpack.c.l.b16 %v81
  %v162 = vunpack.c.l.b16 %v82
  %v163 = vpack.c.b16 %v148, %v147
  %v164 = vpack.c.b16 %v150, %v149
  %v165 = vpack.c.b16 %v152, %v151
  %v166 = vpack.c.b16 %v154, %v153
  %v167 = vpack.c.b16 %v156, %v155
  %v168 = vpack.c.b16 %v158, %v157
  %v169 = vpack.c.b16 %v160, %v159
  %v170 = vpack.c.b16 %v162, %v161
  %179 = vmatprep.subr.bf16.mxu0 0
  %180 = vmatpush1.bf16.msra.mxu0 %v163
  %181 = vmatprep.subr.bf16.mxu0 0
  %182 = vmatpush1.bf16.msra.mxu0 %v164
  %183 = vmatprep.subr.bf16.mxu0 0
  %184 = vmatpush1.bf16.msra.mxu0 %v165
  %185 = vmatprep.subr.bf16.mxu0 0
  %186 = vmatpush1.bf16.msra.mxu0 %v166
  %187 = vmatprep.subr.bf16.mxu0 0
  %188 = vmatpush1.bf16.msra.mxu0 %v167
  %189 = vmatprep.subr.bf16.mxu0 0
  %190 = vmatpush1.bf16.msra.mxu0 %v168
  %191 = vmatprep.subr.bf16.mxu0 0
  %192 = vmatpush1.bf16.msra.mxu0 %v169
  %193 = vmatprep.subr.bf16.mxu0 0
  %194 = vmatpush1.bf16.msra.mxu0 %v170
  %195 = vmatprep.subr.bf16.mxu0 0
  %196 = vmatpush1.bf16.msra.mxu0 0
  %197 = vmatprep.subr.bf16.mxu0 0
  %198 = vmatpush1.bf16.msra.mxu0 0
  %199 = vmatprep.subr.bf16.mxu0 0
  %200 = vmatpush1.bf16.msra.mxu0 0
  %201 = vmatprep.subr.bf16.mxu0 0
  %202 = vmatpush1.bf16.msra.mxu0 0
  %203 = vmatprep.subr.bf16.mxu0 0
  %204 = vmatpush1.bf16.msra.mxu0 0
  %205 = vmatprep.subr.bf16.mxu0 0
  %206 = vmatpush1.bf16.msra.mxu0 0
  %207 = vmatprep.subr.bf16.mxu0 0
  %208 = vmatpush1.bf16.msra.mxu0 0
  %209 = vmatprep.subr.bf16.mxu0 0
  %210 = vmatpush1.bf16.msra.mxu0 0
  %211 = vmatprep.mubr.bf16.mxu0 0
  %212 = vmatmul.mubr.bf16.gmra.mrb[0].mxu0 %v115
  %v213 = vpop.f32.mrb[0].mxu0
  %v214 = vadd.f32 0.0, %v213
  %v215 = vpop.f32.mrb[0].mxu0
  %v216 = vpop.f32.mrb[0].mxu0
  %v217 = vadd.f32 0.0, %v216
  %v218 = vpop.f32.mrb[0].mxu0
  %219 = vmatprep.mubr.bf16.mxu0 0
  %220 = vmatmul.mubr.bf16.gmra.mrb[0].mxu0 %v116
  %v221 = vpop.f32.mrb[0].mxu0
  %v222 = vadd.f32 0.0, %v221
  %v223 = vpop.f32.mrb[0].mxu0
  %v224 = vpop.f32.mrb[0].mxu0
  %v225 = vadd.f32 0.0, %v224
  %v226 = vpop.f32.mrb[0].mxu0
  %227 = vmatprep.mubr.bf16.mxu0 0
  %228 = vmatmul.mubr.bf16.gmra.mrb[0].mxu0 %v117
  %v229 = vpop.f32.mrb[0].mxu0
  %v230 = vadd.f32 0.0, %v229
  %v231 = vpop.f32.mrb[0].mxu0
  %v232 = vpop.f32.mrb[0].mxu0
  %v233 = vadd.f32 0.0, %v232
  %v234 = vpop.f32.mrb[0].mxu0
  %235 = vmatprep.mubr.bf16.mxu0 0
  %236 = vmatmul.mubr.bf16.gmra.mrb[0].mxu0 %v118
  %v237 = vpop.f32.mrb[0].mxu0
  %v238 = vadd.f32 0.0, %v237
  %v239 = vpop.f32.mrb[0].mxu0
  %v240 = vpop.f32.mrb[0].mxu0
  %v241 = vadd.f32 0.0, %v240
  %v242 = vpop.f32.mrb[0].mxu0
  %243 = vmatprep.mubr.bf16.mxu0 0
  %244 = vmatmul.mubr.bf16.gmra.mrb[0].mxu0 %v119
  %v245 = vpop.f32.mrb[0].mxu0
  %v246 = vadd.f32 0.0, %v245
  %v247 = vpop.f32.mrb[0].mxu0
  %v248 = vpop.f32.mrb[0].mxu0
  %v249 = vadd.f32 0.0, %v248
  %v250 = vpop.f32.mrb[0].mxu0
  %251 = vmatprep.mubr.bf16.mxu0 0
  %252 = vmatmul.mubr.bf16.gmra.mrb[0].mxu0 %v120
  %v253 = vpop.f32.mrb[0].mxu0
  %v254 = vadd.f32 0.0, %v253
  %v255 = vpop.f32.mrb[0].mxu0
  %v256 = vpop.f32.mrb[0].mxu0
  %v257 = vadd.f32 0.0, %v256
  %v258 = vpop.f32.mrb[0].mxu0
  %259 = vmatprep.mubr.bf16.mxu0 0
  %260 = vmatmul.mubr.bf16.gmra.mrb[0].mxu0 %v121
  %v261 = vpop.f32.mrb[0].mxu0
  %v262 = vadd.f32 0.0, %v261
  %v263 = vpop.f32.mrb[0].mxu0
  %v264 = vpop.f32.mrb[0].mxu0
  %v265 = vadd.f32 0.0, %v264
  %v266 = vpop.f32.mrb[0].mxu0
  %267 = vmatprep.mubr.bf16.mxu0 0
  %268 = vmatmul.mubr.bf16.gmra.mrb[0].mxu0 %v122
  %v269 = vpop.f32.mrb[0].mxu0
  %v270 = vadd.f32 0.0, %v269
  %v271 = vpop.f32.mrb[0].mxu0
  %v272 = vpop.f32.mrb[0].mxu0
  %v273 = vadd.f32 0.0, %v272
  %v274 = vpop.f32.mrb[0].mxu0
  %275 = vdwg.mxu0
  %v276 = vadd.f32 %v35, %v214
  %v277 = vadd.f32 %v36, %v217
  %v278 = vadd.f32 %v37, %v222
  %v279 = vadd.f32 %v38, %v225
  %v280 = vadd.f32 %v39, %v230
  %v281 = vadd.f32 %v40, %v233
  %v282 = vadd.f32 %v41, %v238
  %v283 = vadd.f32 %v42, %v241
  %v284 = vadd.f32 %v43, %v246
  %v285 = vadd.f32 %v44, %v249
  %v286 = vadd.f32 %v45, %v254
  %v287 = vadd.f32 %v46, %v257
  %v288 = vadd.f32 %v47, %v262
  %v289 = vadd.f32 %v48, %v265
  %v290 = vadd.f32 %v49, %v270
  %v291 = vadd.f32 %v50, %v273
  %292 = vst [vmem:[#allocation2] sm:$0xff] %v276
  %293 = vst [vmem:[#allocation2 + $0x8] sm:$0xff] %v277
  %294 = vst [vmem:[#allocation2 + $0x10] sm:$0xff] %v278
  %295 = vst [vmem:[#allocation2 + $0x18] sm:$0xff] %v279
  %296 = vst [vmem:[#allocation2 + $0x20] sm:$0xff] %v280
  %297 = vst [vmem:[#allocation2 + $0x28] sm:$0xff] %v281
  %298 = vst [vmem:[#allocation2 + $0x30] sm:$0xff] %v282
  %299 = vst [vmem:[#allocation2 + $0x38] sm:$0xff] %v283
  %300 = vst [vmem:[#allocation2 + $0x40] sm:$0xff] %v284
  %301 = vst [vmem:[#allocation2 + $0x48] sm:$0xff] %v285
  %302 = vst [vmem:[#allocation2 + $0x50] sm:$0xff] %v286
  %303 = vst [vmem:[#allocation2 + $0x58] sm:$0xff] %v287
  %304 = vst [vmem:[#allocation2 + $0x60] sm:$0xff] %v288
  %305 = vst [vmem:[#allocation2 + $0x68] sm:$0xff] %v289
  %306 = vst [vmem:[#allocation2 + $0x70] sm:$0xff] %v290
  %307 = vst [vmem:[#allocation2 + $0x78] sm:$0xff] %v291
  // Predicated region
  $region18: #{_lambda_.64} parent=0 // pred_check
    %p308 = pneg %p15
  $region19: #{_lambda_.64} parent=0 // pred_check_branch
    %310 = sbr.rel (%p308) target = $region21
  $region20: #{_lambda_.64} parent=0 // pred_region
    %v311 = vld [vmem:[#allocation2] sm:$0xff]
    %v312 = vld [vmem:[#allocation2 + $0x8] sm:$0xff]
    %v313 = vld [vmem:[#allocation2 + $0x10] sm:$0xff]
    %v314 = vld [vmem:[#allocation2 + $0x18] sm:$0xff]
    %v315 = vld [vmem:[#allocation2 + $0x20] sm:$0xff]
    %v316 = vld [vmem:[#allocation2 + $0x28] sm:$0xff]
    %v317 = vld [vmem:[#allocation2 + $0x30] sm:$0xff]
    %v318 = vld [vmem:[#allocation2 + $0x38] sm:$0xff]
    %v319 = vld [vmem:[#allocation2 + $0x40] sm:$0xff]
    %v320 = vld [vmem:[#allocation2 + $0x48] sm:$0xff]
    %v321 = vld [vmem:[#allocation2 + $0x50] sm:$0xff]
    %v322 = vld [vmem:[#allocation2 + $0x58] sm:$0xff]
    %v323 = vld [vmem:[#allocation2 + $0x60] sm:$0xff]
    %v324 = vld [vmem:[#allocation2 + $0x68] sm:$0xff]
    %v325 = vld [vmem:[#allocation2 + $0x70] sm:$0xff]
    %v326 = vld [vmem:[#allocation2 + $0x78] sm:$0xff]
    %v327 = vld [vmem:[%s2] sm:$0x1]
    %v329 = vlaneseq
    %v330 = vshrl.u32 %v329, 7
    %v331 = vsub.s32 0, %v330
    %v332 = vrot.slane %v327, %v331
    %v334 = vadd.f32 %v311, %v332
    %v335 = vadd.f32 %v312, %v332
    %v336 = vadd.f32 %v313, %v332
    %v337 = vadd.f32 %v314, %v332
    %v338 = vadd.f32 %v315, %v332
    %v339 = vadd.f32 %v316, %v332
    %v340 = vadd.f32 %v317, %v332
    %v341 = vadd.f32 %v318, %v332
    %v342 = vadd.f32 %v319, %v332
    %v343 = vadd.f32 %v320, %v332
    %v344 = vadd.f32 %v321, %v332
    %v345 = vadd.f32 %v322, %v332
    %v346 = vadd.f32 %v323, %v332
    %v347 = vadd.f32 %v324, %v332
    %v348 = vadd.f32 %v325, %v332
    %v349 = vadd.f32 %v326, %v332
    %v350 = vmax.f32 %v334, 0.0
    %v351 = vmax.f32 %v335, 0.0
    %v352 = vmax.f32 %v336, 0.0
    %v353 = vmax.f32 %v337, 0.0
    %v354 = vmax.f32 %v338, 0.0
    %v355 = vmax.f32 %v339, 0.0
    %v356 = vmax.f32 %v340, 0.0
    %v357 = vmax.f32 %v341, 0.0
    %v358 = vmax.f32 %v342, 0.0
    %v359 = vmax.f32 %v343, 0.0
    %v360 = vmax.f32 %v344, 0.0
    %v361 = vmax.f32 %v345, 0.0
    %v362 = vmax.f32 %v346, 0.0
    %v363 = vmax.f32 %v347, 0.0
    %v364 = vmax.f32 %v348, 0.0
    %v365 = vmax.f32 %v349, 0.0
    %366 = vst [vmem:[%s3] sm:$0xff] %v350
    %367 = vst [vmem:[%s3 + $0x8] sm:$0xff] %v351
    %368 = vst [vmem:[%s3 + $0x10] sm:$0xff] %v352
    %369 = vst [vmem:[%s3 + $0x18] sm:$0xff] %v353
    %370 = vst [vmem:[%s3 + $0x20] sm:$0xff] %v354
    %371 = vst [vmem:[%s3 + $0x28] sm:$0xff] %v355
    %372 = vst [vmem:[%s3 + $0x30] sm:$0xff] %v356
    %373 = vst [vmem:[%s3 + $0x38] sm:$0xff] %v357
    %374 = vst [vmem:[%s3 + $0x40] sm:$0xff] %v358
    %375 = vst [vmem:[%s3 + $0x48] sm:$0xff] %v359
    %376 = vst [vmem:[%s3 + $0x50] sm:$0xff] %v360
    %377 = vst [vmem:[%s3 + $0x58] sm:$0xff] %v361
    %378 = vst [vmem:[%s3 + $0x60] sm:$0xff] %v362
    %379 = vst [vmem:[%s3 + $0x68] sm:$0xff] %v363
    %380 = vst [vmem:[%s3 + $0x70] sm:$0xff] %v364
    %381 = vst [vmem:[%s3 + $0x78] sm:$0xff] %v365
  $region21: #{_lambda_.64} parent=0 // pred_fallthru
    _
  // Predicated region
  $region22: #{_lambda_.64} parent=0 // pred_check
    _
  $region23: #{_lambda_.64} parent=0 // pred_check_branch
    %383 = sbr.rel (0) target = $region25
  $region24: #{_lambda_.64} parent=0 // pred_region
    _
  $region25: #{_lambda_.64} parent=0 // pred_fallthru
    _
  // Predicated region
  $region26: #{_lambda_.64} parent=0 // pred_check
    _
  $region27: #{_lambda_.64} parent=0 // pred_check_branch
    %385 = sbr.rel (0) target = $region29
  $region28: #{_lambda_.64} parent=0 // pred_region
    _
  $region29: #{_lambda_.64} parent=0 // pred_fallthru
    _

// kernel: _lambda_.71
$region0: #{_lambda_.71}
  #allocation0 [shape = 'u32[]', space=smem, size = 0x4, offset = 0x4, fixed_abs, tag = 'smem constant byte address 0x4 - core index']
  #allocation1 [shape = 'u32[144,128]{1,0:T(1,128)}', space=vmem, size = 0x12000, scoped, tag = 'internal scratch']
  #allocation2 [shape = 'f32[512,128]{1,0:T(8,128)}', space=vmem, size = 0x40000, scoped, tag = 'scratch operand']
  %s0 = inlined_call_operand.vmem [shape: bf16[512,256], index: 0, kind: input, shape index: {}]
  %s1 = inlined_call_operand.vmem [shape: bf16[256,128], index: 1, kind: input, shape index: {}]
  %s2 = inlined_call_operand.vmem [shape: f32[1,128], index: 2, kind: input, shape index: {}]
  %s3 = inlined_call_operand.vmem [shape: f32[512,128], index: 3, kind: output, shape index: {}]
  %s4 = sld [smem:[#allocation0]]
  $region30: #{_lambda_.71} parent=0
    _
  %s6 = ssub.s32 1, %s4
  %s7 = scalar_select 0, %s6, %s4
  // Predicated region
  $region2: #{_lambda_.71} parent=0 // pred_check
    _
  $region3: #{_lambda_.71} parent=0 // pred_check_branch
    %9 = sbr.rel (0) target = $region5
  $region4: #{_lambda_.71} parent=0 // pred_region
    _
  $region5: #{_lambda_.71} parent=0 // pred_fallthru
    _
  // Predicated region
  $region6: #{_lambda_.71} parent=0 // pred_check
    _
  $region7: #{_lambda_.71} parent=0 // pred_check_branch
    %11 = sbr.rel (0) target = $region9
  $region8: #{_lambda_.71} parent=0 // pred_region
    _
  $region9: #{_lambda_.71} parent=0 // pred_fallthru
    _
  // Predicated region
  $region10: #{_lambda_.71} parent=0 // pred_check
    _
  $region11: #{_lambda_.71} parent=0 // pred_check_branch
    %13 = sbr.rel (0) target = $region13
  $region12: #{_lambda_.71} parent=0 // pred_region
    _
  $region13: #{_lambda_.71} parent=0 // pred_fallthru
    _
  %p15 = scmp.eq.s32.totalorder 0, 0
  // Predicated region
  $region14: #{_lambda_.71} parent=0 // pred_check
    %p16 = pneg %p15
  $region15: #{_lambda_.71} parent=0 // pred_check_branch
    %18 = sbr.rel (%p16) target = $region17
  $region16: #{_lambda_.71} parent=0 // pred_region
    %19 = vst [vmem:[#allocation2] sm:$0xff] 0.0
    %20 = vst [vmem:[#allocation2 + $0x8] sm:$0xff] 0.0
    %21 = vst [vmem:[#allocation2 + $0x10] sm:$0xff] 0.0
    %22 = vst [vmem:[#allocation2 + $0x18] sm:$0xff] 0.0
    %23 = vst [vmem:[#allocation2 + $0x20] sm:$0xff] 0.0
    %24 = vst [vmem:[#allocation2 + $0x28] sm:$0xff] 0.0
    %25 = vst [vmem:[#allocation2 + $0x30] sm:$0xff] 0.0
    %26 = vst [vmem:[#allocation2 + $0x38] sm:$0xff] 0.0
    %27 = vst [vmem:[#allocation2 + $0x40] sm:$0xff] 0.0
    %28 = vst [vmem:[#allocation2 + $0x48] sm:$0xff] 0.0
    %29 = vst [vmem:[#allocation2 + $0x50] sm:$0xff] 0.0
    %30 = vst [vmem:[#allocation2 + $0x58] sm:$0xff] 0.0
    %31 = vst [vmem:[#allocation2 + $0x60] sm:$0xff] 0.0
    %32 = vst [vmem:[#allocation2 + $0x68] sm:$0xff] 0.0
    %33 = vst [vmem:[#allocation2 + $0x70] sm:$0xff] 0.0
    %34 = vst [vmem:[#allocation2 + $0x78] sm:$0xff] 0.0
    %35 = vst [vmem:[#allocation2 + $0x80] sm:$0xff] 0.0
    %36 = vst [vmem:[#allocation2 + $0x88] sm:$0xff] 0.0
    %37 = vst [vmem:[#allocation2 + $0x90] sm:$0xff] 0.0
    %38 = vst [vmem:[#allocation2 + $0x98] sm:$0xff] 0.0
    %39 = vst [vmem:[#allocation2 + $0xa0] sm:$0xff] 0.0
    %40 = vst [vmem:[#allocation2 + $0xa8] sm:$0xff] 0.0
    %41 = vst [vmem:[#allocation2 + $0xb0] sm:$0xff] 0.0
    %42 = vst [vmem:[#allocation2 + $0xb8] sm:$0xff] 0.0
    %43 = vst [vmem:[#allocation2 + $0xc0] sm:$0xff] 0.0
    %44 = vst [vmem:[#allocation2 + $0xc8] sm:$0xff] 0.0
    %45 = vst [vmem:[#allocation2 + $0xd0] sm:$0xff] 0.0
    %46 = vst [vmem:[#allocation2 + $0xd8] sm:$0xff] 0.0
    %47 = vst [vmem:[#allocation2 + $0xe0] sm:$0xff] 0.0
    %48 = vst [vmem:[#allocation2 + $0xe8] sm:$0xff] 0.0
    %49 = vst [vmem:[#allocation2 + $0xf0] sm:$0xff] 0.0
    %50 = vst [vmem:[#allocation2 + $0xf8] sm:$0xff] 0.0
    %51 = vst [vmem:[#allocation2 + $0x100] sm:$0xff] 0.0
    %52 = vst [vmem:[#allocation2 + $0x108] sm:$0xff] 0.0
    %53 = vst [vmem:[#allocation2 + $0x110] sm:$0xff] 0.0
    %54 = vst [vmem:[#allocation2 + $0x118] sm:$0xff] 0.0
    %55 = vst [vmem:[#allocation2 + $0x120] sm:$0xff] 0.0
    %56 = vst [vmem:[#allocation2 + $0x128] sm:$0xff] 0.0
    %57 = vst [vmem:[#allocation2 + $0x130] sm:$0xff] 0.0
    %58 = vst [vmem:[#allocation2 + $0x138] sm:$0xff] 0.0
    %59 = vst [vmem:[#allocation2 + $0x140] sm:$0xff] 0.0
    %60 = vst [vmem:[#allocation2 + $0x148] sm:$0xff] 0.0
    %61 = vst [vmem:[#allocation2 + $0x150] sm:$0xff] 0.0
    %62 = vst [vmem:[#allocation2 + $0x158] sm:$0xff] 0.0
    %63 = vst [vmem:[#allocation2 + $0x160] sm:$0xff] 0.0
    %64 = vst [vmem:[#allocation2 + $0x168] sm:$0xff] 0.0
    %65 = vst [vmem:[#allocation2 + $0x170] sm:$0xff] 0.0
    %66 = vst [vmem:[#allocation2 + $0x178] sm:$0xff] 0.0
    %67 = vst [vmem:[#allocation2 + $0x180] sm:$0xff] 0.0
    %68 = vst [vmem:[#allocation2 + $0x188] sm:$0xff] 0.0
    %69 = vst [vmem:[#allocation2 + $0x190] sm:$0xff] 0.0
    %70 = vst [vmem:[#allocation2 + $0x198] sm:$0xff] 0.0
    %71 = vst [vmem:[#allocation2 + $0x1a0] sm:$0xff] 0.0
    %72 = vst [vmem:[#allocation2 + $0x1a8] sm:$0xff] 0.0
    %73 = vst [vmem:[#allocation2 + $0x1b0] sm:$0xff] 0.0
    %74 = vst [vmem:[#allocation2 + $0x1b8] sm:$0xff] 0.0
    %75 = vst [vmem:[#allocation2 + $0x1c0] sm:$0xff] 0.0
    %76 = vst [vmem:[#allocation2 + $0x1c8] sm:$0xff] 0.0
    %77 = vst [vmem:[#allocation2 + $0x1d0] sm:$0xff] 0.0
    %78 = vst [vmem:[#allocation2 + $0x1d8] sm:$0xff] 0.0
    %79 = vst [vmem:[#allocation2 + $0x1e0] sm:$0xff] 0.0
    %80 = vst [vmem:[#allocation2 + $0x1e8] sm:$0xff] 0.0
    %81 = vst [vmem:[#allocation2 + $0x1f0] sm:$0xff] 0.0
    %82 = vst [vmem:[#allocation2 + $0x1f8] sm:$0xff] 0.0
  $region17: #{_lambda_.71} parent=0 // pred_fallthru
    _
  %v83 = vld [vmem:[#allocation2] sm:$0xff]
  %v84 = vld [vmem:[#allocation2 + $0x8] sm:$0xff]
  %v85 = vld [vmem:[#allocation2 + $0x10] sm:$0xff]
  %v86 = vld [vmem:[#allocation2 + $0x18] sm:$0xff]
  %v87 = vld [vmem:[#allocation2 + $0x20] sm:$0xff]
  %v88 = vld [vmem:[#allocation2 + $0x28] sm:$0xff]
  %v89 = vld [vmem:[#allocation2 + $0x30] sm:$0xff]
  %v90 = vld [vmem:[#allocation2 + $0x38] sm:$0xff]
  %v91 = vld [vmem:[#allocation2 + $0x40] sm:$0xff]
  %v92 = vld [vmem:[#allocation2 + $0x48] sm:$0xff]
  %v93 = vld [vmem:[#allocation2 + $0x50] sm:$0xff]
  %v94 = vld [vmem:[#allocation2 + $0x58] sm:$0xff]
  %v95 = vld [vmem:[#allocation2 + $0x60] sm:$0xff]
  %v96 = vld [vmem:[#allocation2 + $0x68] sm:$0xff]
  %v97 = vld [vmem:[#allocation2 + $0x70] sm:$0xff]
  %v98 = vld [vmem:[#allocation2 + $0x78] sm:$0xff]
  %v99 = vld [vmem:[#allocation2 + $0x80] sm:$0xff]
  %v100 = vld [vmem:[#allocation2 + $0x88] sm:$0xff]
  %v101 = vld [vmem:[#allocation2 + $0x90] sm:$0xff]
  %v102 = vld [vmem:[#allocation2 + $0x98] sm:$0xff]
  %v103 = vld [vmem:[#allocation2 + $0xa0] sm:$0xff]
  %v104 = vld [vmem:[#allocation2 + $0xa8] sm:$0xff]
  %v105 = vld [vmem:[#allocation2 + $0xb0] sm:$0xff]
  %v106 = vld [vmem:[#allocation2 + $0xb8] sm:$0xff]
  %v107 = vld [vmem:[#allocation2 + $0xc0] sm:$0xff]
  %v108 = vld [vmem:[#allocation2 + $0xc8] sm:$0xff]
  %v109 = vld [vmem:[#allocation2 + $0xd0] sm:$0xff]
  %v110 = vld [vmem:[#allocation2 + $0xd8] sm:$0xff]
  %v111 = vld [vmem:[#allocation2 + $0xe0] sm:$0xff]
  %v112 = vld [vmem:[#allocation2 + $0xe8] sm:$0xff]
  %v113 = vld [vmem:[#allocation2 + $0xf0] sm:$0xff]
  %v114 = vld [vmem:[#allocation2 + $0xf8] sm:$0xff]
  %v115 = vld [vmem:[#allocation2 + $0x100] sm:$0xff]
  %v116 = vld [vmem:[#allocation2 + $0x108] sm:$0xff]
  %v117 = vld [vmem:[#allocation2 + $0x110] sm:$0xff]
  %v118 = vld [vmem:[#allocation2 + $0x118] sm:$0xff]
  %v119 = vld [vmem:[#allocation2 + $0x120] sm:$0xff]
  %v120 = vld [vmem:[#allocation2 + $0x128] sm:$0xff]
  %v121 = vld [vmem:[#allocation2 + $0x130] sm:$0xff]
  %v122 = vld [vmem:[#allocation2 + $0x138] sm:$0xff]
  %v123 = vld [vmem:[#allocation2 + $0x140] sm:$0xff]
  %v124 = vld [vmem:[#allocation2 + $0x148] sm:$0xff]
  %v125 = vld [vmem:[#allocation2 + $0x150] sm:$0xff]
  %v126 = vld [vmem:[#allocation2 + $0x158] sm:$0xff]
  %v127 = vld [vmem:[#allocation2 + $0x160] sm:$0xff]
  %v128 = vld [vmem:[#allocation2 + $0x168] sm:$0xff]
  %v129 = vld [vmem:[#allocation2 + $0x170] sm:$0xff]
  %v130 = vld [vmem:[#allocation2 + $0x178] sm:$0xff]
  %v131 = vld [vmem:[#allocation2 + $0x180] sm:$0xff]
  %v132 = vld [vmem:[#allocation2 + $0x188] sm:$0xff]
  %v133 = vld [vmem:[#allocation2 + $0x190] sm:$0xff]
  %v134 = vld [vmem:[#allocation2 + $0x198] sm:$0xff]
  %v135 = vld [vmem:[#allocation2 + $0x1a0] sm:$0xff]
  %v136 = vld [vmem:[#allocation2 + $0x1a8] sm:$0xff]
  %v137 = vld [vmem:[#allocation2 + $0x1b0] sm:$0xff]
  %v138 = vld [vmem:[#allocation2 + $0x1b8] sm:$0xff]
  %v139 = vld [vmem:[#allocation2 + $0x1c0] sm:$0xff]
  %v140 = vld [vmem:[#allocation2 + $0x1c8] sm:$0xff]
  %v141 = vld [vmem:[#allocation2 + $0x1d0] sm:$0xff]
  %v142 = vld [vmem:[#allocation2 + $0x1d8] sm:$0xff]
  %v143 = vld [vmem:[#allocation2 + $0x1e0] sm:$0xff]
  %v144 = vld [vmem:[#allocation2 + $0x1e8] sm:$0xff]
  %v145 = vld [vmem:[#allocation2 + $0x1f0] sm:$0xff]
  %v146 = vld [vmem:[#allocation2 + $0x1f8] sm:$0xff]
  %v147 = vld [vmem:[%s0] sm:$0xff]
  %v148 = vld [vmem:[%s0 + $0x8] sm:$0xff]
  %v149 = vld [vmem:[%s0 + $0x10] sm:$0xff]
  %v150 = vld [vmem:[%s0 + $0x18] sm:$0xff]
  %v151 = vld [vmem:[%s0 + $0x20] sm:$0xff]
  %v152 = vld [vmem:[%s0 + $0x28] sm:$0xff]
  %v153 = vld [vmem:[%s0 + $0x30] sm:$0xff]
  %v154 = vld [vmem:[%s0 + $0x38] sm:$0xff]
  %v155 = vld [vmem:[%s0 + $0x40] sm:$0xff]
  %v156 = vld [vmem:[%s0 + $0x48] sm:$0xff]
  %v157 = vld [vmem:[%s0 + $0x50] sm:$0xff]
  %v158 = vld [vmem:[%s0 + $0x58] sm:$0xff]
  %v159 = vld [vmem:[%s0 + $0x60] sm:$0xff]
  %v160 = vld [vmem:[%s0 + $0x68] sm:$0xff]
  %v161 = vld [vmem:[%s0 + $0x70] sm:$0xff]
  %v162 = vld [vmem:[%s0 + $0x78] sm:$0xff]
  %v163 = vld [vmem:[%s0 + $0x80] sm:$0xff]
  %v164 = vld [vmem:[%s0 + $0x88] sm:$0xff]
  %v165 = vld [vmem:[%s0 + $0x90] sm:$0xff]
  %v166 = vld [vmem:[%s0 + $0x98] sm:$0xff]
  %v167 = vld [vmem:[%s0 + $0xa0] sm:$0xff]
  %v168 = vld [vmem:[%s0 + $0xa8] sm:$0xff]
  %v169 = vld [vmem:[%s0 + $0xb0] sm:$0xff]
  %v170 = vld [vmem:[%s0 + $0xb8] sm:$0xff]
  %v171 = vld [vmem:[%s0 + $0xc0] sm:$0xff]
  %v172 = vld [vmem:[%s0 + $0xc8] sm:$0xff]
  %v173 = vld [vmem:[%s0 + $0xd0] sm:$0xff]
  %v174 = vld [vmem:[%s0 + $0xd8] sm:$0xff]
  %v175 = vld [vmem:[%s0 + $0xe0] sm:$0xff]
  %v176 = vld [vmem:[%s0 + $0xe8] sm:$0xff]
  %v177 = vld [vmem:[%s0 + $0xf0] sm:$0xff]
  %v178 = vld [vmem:[%s0 + $0xf8] sm:$0xff]
  %v179 = vld [vmem:[%s0 + $0x100] sm:$0xff]
  %v180 = vld [vmem:[%s0 + $0x108] sm:$0xff]
  %v181 = vld [vmem:[%s0 + $0x110] sm:$0xff]
  %v182 = vld [vmem:[%s0 + $0x118] sm:$0xff]
  %v183 = vld [vmem:[%s0 + $0x120] sm:$0xff]
  %v184 = vld [vmem:[%s0 + $0x128] sm:$0xff]
  %v185 = vld [vmem:[%s0 + $0x130] sm:$0xff]
  %v186 = vld [vmem:[%s0 + $0x138] sm:$0xff]
  %v187 = vld [vmem:[%s0 + $0x140] sm:$0xff]
  %v188 = vld [vmem:[%s0 + $0x148] sm:$0xff]
  %v189 = vld [vmem:[%s0 + $0x150] sm:$0xff]
  %v190 = vld [vmem:[%s0 + $0x158] sm:$0xff]
  %v191 = vld [vmem:[%s0 + $0x160] sm:$0xff]
  %v192 = vld [vmem:[%s0 + $0x168] sm:$0xff]
  %v193 = vld [vmem:[%s0 + $0x170] sm:$0xff]
  %v194 = vld [vmem:[%s0 + $0x178] sm:$0xff]
  %v195 = vld [vmem:[%s0 + $0x180] sm:$0xff]
  %v196 = vld [vmem:[%s0 + $0x188] sm:$0xff]
  %v197 = vld [vmem:[%s0 + $0x190] sm:$0xff]
  %v198 = vld [vmem:[%s0 + $0x198] sm:$0xff]
  %v199 = vld [vmem:[%s0 + $0x1a0] sm:$0xff]
  %v200 = vld [vmem:[%s0 + $0x1a8] sm:$0xff]
  %v201 = vld [vmem:[%s0 + $0x1b0] sm:$0xff]
  %v202 = vld [vmem:[%s0 + $0x1b8] sm:$0xff]
  %v203 = vld [vmem:[%s0 + $0x1c0] sm:$0xff]
  %v204 = vld [vmem:[%s0 + $0x1c8] sm:$0xff]
  %v205 = vld [vmem:[%s0 + $0x1d0] sm:$0xff]
  %v206 = vld [vmem:[%s0 + $0x1d8] sm:$0xff]
  %v207 = vld [vmem:[%s0 + $0x1e0] sm:$0xff]
  %v208 = vld [vmem:[%s0 + $0x1e8] sm:$0xff]
  %v209 = vld [vmem:[%s0 + $0x1f0] sm:$0xff]
  %v210 = vld [vmem:[%s0 + $0x1f8] sm:$0xff]
  %v211 = vld [vmem:[%s1] sm:$0xf]
  %v212 = vld [vmem:[%s1 + $0x4] sm:$0xf]
  %v213 = vld [vmem:[%s1 + $0x8] sm:$0xf]
  %v214 = vld [vmem:[%s1 + $0xc] sm:$0xf]
  %v215 = vld [vmem:[%s1 + $0x10] sm:$0xf]
  %v216 = vld [vmem:[%s1 + $0x14] sm:$0xf]
  %v217 = vld [vmem:[%s1 + $0x18] sm:$0xf]
  %v218 = vld [vmem:[%s1 + $0x1c] sm:$0xf]
  %v219 = vld [vmem:[%s1 + $0x20] sm:$0xf]
  %v220 = vld [vmem:[%s1 + $0x24] sm:$0xf]
  %v221 = vld [vmem:[%s1 + $0x28] sm:$0xf]
  %v222 = vld [vmem:[%s1 + $0x2c] sm:$0xf]
  %v223 = vld [vmem:[%s1 + $0x30] sm:$0xf]
  %v224 = vld [vmem:[%s1 + $0x34] sm:$0xf]
  %v225 = vld [vmem:[%s1 + $0x38] sm:$0xf]
  %v226 = vld [vmem:[%s1 + $0x3c] sm:$0xf]
  %v227 = vld [vmem:[%s1 + $0x40] sm:$0xf]
  %v228 = vld [vmem:[%s1 + $0x44] sm:$0xf]
  %v229 = vld [vmem:[%s1 + $0x48] sm:$0xf]
  %v230 = vld [vmem:[%s1 + $0x4c] sm:$0xf]
  %v231 = vld [vmem:[%s1 + $0x50] sm:$0xf]
  %v232 = vld [vmem:[%s1 + $0x54] sm:$0xf]
  %v233 = vld [vmem:[%s1 + $0x58] sm:$0xf]
  %v234 = vld [vmem:[%s1 + $0x5c] sm:$0xf]
  %v235 = vld [vmem:[%s1 + $0x60] sm:$0xf]
  %v236 = vld [vmem:[%s1 + $0x64] sm:$0xf]
  %v237 = vld [vmem:[%s1 + $0x68] sm:$0xf]
  %v238 = vld [vmem:[%s1 + $0x6c] sm:$0xf]
  %v239 = vld [vmem:[%s1 + $0x70] sm:$0xf]
  %v240 = vld [vmem:[%s1 + $0x74] sm:$0xf]
  %v241 = vld [vmem:[%s1 + $0x78] sm:$0xf]
  %v242 = vld [vmem:[%s1 + $0x7c] sm:$0xf]
  %v307 = vunpack.c.l.b16 %v147
  %v308 = vunpack.c.h.b16 %v147
  %v309 = vunpack.c.l.b16 %v148
  %v310 = vunpack.c.h.b16 %v148
  %v311 = vunpack.c.l.b16 %v149
  %v312 = vunpack.c.h.b16 %v149
  %v313 = vunpack.c.l.b16 %v150
  %v314 = vunpack.c.h.b16 %v150
  %v315 = vunpack.c.l.b16 %v151
  %v316 = vunpack.c.h.b16 %v151
  %v317 = vunpack.c.l.b16 %v152
  %v318 = vunpack.c.h.b16 %v152
  %v319 = vunpack.c.l.b16 %v153
  %v320 = vunpack.c.h.b16 %v153
  %v321 = vunpack.c.l.b16 %v154
  %v322 = vunpack.c.h.b16 %v154
  %v323 = vunpack.c.l.b16 %v155
  %v324 = vunpack.c.h.b16 %v155
  %v325 = vunpack.c.l.b16 %v156
  %v326 = vunpack.c.h.b16 %v156
  %v327 = vunpack.c.l.b16 %v157
  %v328 = vunpack.c.h.b16 %v157
  %v329 = vunpack.c.l.b16 %v158
  %v330 = vunpack.c.h.b16 %v158
  %v331 = vunpack.c.l.b16 %v159
  %v332 = vunpack.c.h.b16 %v159
  %v333 = vunpack.c.l.b16 %v160
  %v334 = vunpack.c.h.b16 %v160
  %v335 = vunpack.c.l.b16 %v161
  %v336 = vunpack.c.h.b16 %v161
  %v337 = vunpack.c.l.b16 %v162
  %v338 = vunpack.c.h.b16 %v162
  %v339 = vunpack.c.l.b16 %v163
  %v340 = vunpack.c.h.b16 %v163
  %v341 = vunpack.c.l.b16 %v164
  %v342 = vunpack.c.h.b16 %v164
  %v343 = vunpack.c.l.b16 %v165
  %v344 = vunpack.c.h.b16 %v165
  %v345 = vunpack.c.l.b16 %v166
  %v346 = vunpack.c.h.b16 %v166
  %v347 = vunpack.c.l.b16 %v167
  %v348 = vunpack.c.h.b16 %v167
  %v349 = vunpack.c.l.b16 %v168
  %v350 = vunpack.c.h.b16 %v168
  %v351 = vunpack.c.l.b16 %v169
  %v352 = vunpack.c.h.b16 %v169
  %v353 = vunpack.c.l.b16 %v170
  %v354 = vunpack.c.h.b16 %v170
  %v355 = vunpack.c.l.b16 %v171
  %v356 = vunpack.c.h.b16 %v171
  %v357 = vunpack.c.l.b16 %v172
  %v358 = vunpack.c.h.b16 %v172
  %v359 = vunpack.c.l.b16 %v173
  %v360 = vunpack.c.h.b16 %v173
  %v361 = vunpack.c.l.b16 %v174
  %v362 = vunpack.c.h.b16 %v174
  %v363 = vunpack.c.l.b16 %v175
  %v364 = vunpack.c.h.b16 %v175
  %v365 = vunpack.c.l.b16 %v176
  %v366 = vunpack.c.h.b16 %v176
  %v367 = vunpack.c.l.b16 %v177
  %v368 = vunpack.c.h.b16 %v177
  %v369 = vunpack.c.l.b16 %v178
  %v370 = vunpack.c.h.b16 %v178
  %v371 = vunpack.c.l.b16 %v179
  %v372 = vunpack.c.h.b16 %v179
  %v373 = vunpack.c.l.b16 %v180
  %v374 = vunpack.c.h.b16 %v180
  %v375 = vunpack.c.l.b16 %v181
  %v376 = vunpack.c.h.b16 %v181
  %v377 = vunpack.c.l.b16 %v182
  %v378 = vunpack.c.h.b16 %v182
  %v379 = vunpack.c.l.b16 %v183
  %v380 = vunpack.c.h.b16 %v183
  %v381 = vunpack.c.l.b16 %v184
  %v382 = vunpack.c.h.b16 %v184
  %v383 = vunpack.c.l.b16 %v185
  %v384 = vunpack.c.h.b16 %v185
  %v385 = vunpack.c.l.b16 %v186
  %v386 = vunpack.c.h.b16 %v186
  %v387 = vunpack.c.l.b16 %v187
  %v388 = vunpack.c.h.b16 %v187
  %v389 = vunpack.c.l.b16 %v188
  %v390 = vunpack.c.h.b16 %v188
  %v391 = vunpack.c.l.b16 %v189
  %v392 = vunpack.c.h.b16 %v189
  %v393 = vunpack.c.l.b16 %v190
  %v394 = vunpack.c.h.b16 %v190
  %v395 = vunpack.c.l.b16 %v191
  %v396 = vunpack.c.h.b16 %v191
  %v397 = vunpack.c.l.b16 %v192
  %v398 = vunpack.c.h.b16 %v192
  %v399 = vunpack.c.l.b16 %v193
  %v400 = vunpack.c.h.b16 %v193
  %v401 = vunpack.c.l.b16 %v194
  %v402 = vunpack.c.h.b16 %v194
  %v403 = vunpack.c.l.b16 %v195
  %v404 = vunpack.c.h.b16 %v195
  %v405 = vunpack.c.l.b16 %v196
  %v406 = vunpack.c.h.b16 %v196
  %v407 = vunpack.c.l.b16 %v197
  %v408 = vunpack.c.h.b16 %v197
  %v409 = vunpack.c.l.b16 %v198
  %v410 = vunpack.c.h.b16 %v198
  %v411 = vunpack.c.l.b16 %v199
  %v412 = vunpack.c.h.b16 %v199
  %v413 = vunpack.c.l.b16 %v200
  %v414 = vunpack.c.h.b16 %v200
  %v415 = vunpack.c.l.b16 %v201
  %v416 = vunpack.c.h.b16 %v201
  %v417 = vunpack.c.l.b16 %v202
  %v418 = vunpack.c.h.b16 %v202
  %v419 = vunpack.c.l.b16 %v203
  %v420 = vunpack.c.h.b16 %v203
  %v421 = vunpack.c.l.b16 %v204
  %v422 = vunpack.c.h.b16 %v204
  %v423 = vunpack.c.l.b16 %v205
  %v424 = vunpack.c.h.b16 %v205
  %v425 = vunpack.c.l.b16 %v206
  %v426 = vunpack.c.h.b16 %v206
  %v427 = vunpack.c.l.b16 %v207
  %v428 = vunpack.c.h.b16 %v207
  %v429 = vunpack.c.l.b16 %v208
  %v430 = vunpack.c.h.b16 %v208
  %v431 = vunpack.c.l.b16 %v209
  %v432 = vunpack.c.h.b16 %v209
  %v433 = vunpack.c.l.b16 %v210
  %v434 = vunpack.c.h.b16 %v210
  %v435 = vpack.c.b16 %v309, %v307
  %v436 = vpack.c.b16 %v310, %v308
  %v437 = vpack.c.b16 %v313, %v311
  %v438 = vpack.c.b16 %v314, %v312
  %v439 = vpack.c.b16 %v317, %v315
  %v440 = vpack.c.b16 %v318, %v316
  %v441 = vpack.c.b16 %v321, %v319
  %v442 = vpack.c.b16 %v322, %v320
  %v443 = vpack.c.b16 %v325, %v323
  %v444 = vpack.c.b16 %v326, %v324
  %v445 = vpack.c.b16 %v329, %v327
  %v446 = vpack.c.b16 %v330, %v328
  %v447 = vpack.c.b16 %v333, %v331
  %v448 = vpack.c.b16 %v334, %v332
  %v449 = vpack.c.b16 %v337, %v335
  %v450 = vpack.c.b16 %v338, %v336
  %v451 = vpack.c.b16 %v341, %v339
  %v452 = vpack.c.b16 %v342, %v340
  %v453 = vpack.c.b16 %v345, %v343
  %v454 = vpack.c.b16 %v346, %v344
  %v455 = vpack.c.b16 %v349, %v347
  %v456 = vpack.c.b16 %v350, %v348
  %v457 = vpack.c.b16 %v353, %v351
  %v458 = vpack.c.b16 %v354, %v352
  %v459 = vpack.c.b16 %v357, %v355
  %v460 = vpack.c.b16 %v358, %v356
  %v461 = vpack.c.b16 %v361, %v359
  %v462 = vpack.c.b16 %v362, %v360
  %v463 = vpack.c.b16 %v365, %v363
  %v464 = vpack.c.b16 %v366, %v364
  %v465 = vpack.c.b16 %v369, %v367
  %v466 = vpack.c.b16 %v370, %v368
  %v467 = vpack.c.b16 %v373, %v371
  %v468 = vpack.c.b16 %v374, %v372
  %v469 = vpack.c.b16 %v377, %v375
  %v470 = vpack.c.b16 %v378, %v376
  %v471 = vpack.c.b16 %v381, %v379
  %v472 = vpack.c.b16 %v382, %v380
  %v473 = vpack.c.b16 %v385, %v383
  %v474 = vpack.c.b16 %v386, %v384
  %v475 = vpack.c.b16 %v389, %v387
  %v476 = vpack.c.b16 %v390, %v388
  %v477 = vpack.c.b16 %v393, %v391
  %v478 = vpack.c.b16 %v394, %v392
  %v479 = vpack.c.b16 %v397, %v395
  %v480 = vpack.c.b16 %v398, %v396
  %v481 = vpack.c.b16 %v401, %v399
  %v482 = vpack.c.b16 %v402, %v400
  %v483 = vpack.c.b16 %v405, %v403
  %v484 = vpack.c.b16 %v406, %v404
  %v485 = vpack.c.b16 %v409, %v407
  %v486 = vpack.c.b16 %v410, %v408
  %v487 = vpack.c.b16 %v413, %v411
  %v488 = vpack.c.b16 %v414, %v412
  %v489 = vpack.c.b16 %v417, %v415
  %v490 = vpack.c.b16 %v418, %v416
  %v491 = vpack.c.b16 %v421, %v419
  %v492 = vpack.c.b16 %v422, %v420
  %v493 = vpack.c.b16 %v425, %v423
  %v494 = vpack.c.b16 %v426, %v424
  %v495 = vpack.c.b16 %v429, %v427
  %v496 = vpack.c.b16 %v430, %v428
  %v497 = vpack.c.b16 %v433, %v431
  %v498 = vpack.c.b16 %v434, %v432
  %v595 = vunpack.c.l.b16 %v211
  %v596 = vunpack.c.l.b16 %v212
  %v597 = vunpack.c.l.b16 %v213
  %v598 = vunpack.c.l.b16 %v214
  %v599 = vunpack.c.l.b16 %v215
  %v600 = vunpack.c.l.b16 %v216
  %v601 = vunpack.c.l.b16 %v217
  %v602 = vunpack.c.l.b16 %v218
  %v603 = vunpack.c.l.b16 %v219
  %v604 = vunpack.c.l.b16 %v220
  %v605 = vunpack.c.l.b16 %v221
  %v606 = vunpack.c.l.b16 %v222
  %v607 = vunpack.c.l.b16 %v223
  %v608 = vunpack.c.l.b16 %v224
  %v609 = vunpack.c.l.b16 %v225
  %v610 = vunpack.c.l.b16 %v226
  %v611 = vunpack.c.l.b16 %v227
  %v612 = vunpack.c.l.b16 %v228
  %v613 = vunpack.c.l.b16 %v229
  %v614 = vunpack.c.l.b16 %v230
  %v615 = vunpack.c.l.b16 %v231
  %v616 = vunpack.c.l.b16 %v232
  %v617 = vunpack.c.l.b16 %v233
  %v618 = vunpack.c.l.b16 %v234
  %v619 = vunpack.c.l.b16 %v235
  %v620 = vunpack.c.l.b16 %v236
  %v621 = vunpack.c.l.b16 %v237
  %v622 = vunpack.c.l.b16 %v238
  %v623 = vunpack.c.l.b16 %v239
  %v624 = vunpack.c.l.b16 %v240
  %v625 = vunpack.c.l.b16 %v241
  %v626 = vunpack.c.l.b16 %v242
  %v627 = vpack.c.b16 %v596, %v595
  %v628 = vpack.c.b16 %v598, %v597
  %v629 = vpack.c.b16 %v600, %v599
  %v630 = vpack.c.b16 %v602, %v601
  %v631 = vpack.c.b16 %v604, %v603
  %v632 = vpack.c.b16 %v606, %v605
  %v633 = vpack.c.b16 %v608, %v607
  %v634 = vpack.c.b16 %v610, %v609
  %v635 = vpack.c.b16 %v612, %v611
  %v636 = vpack.c.b16 %v614, %v613
  %v637 = vpack.c.b16 %v616, %v615
  %v638 = vpack.c.b16 %v618, %v617
  %v639 = vpack.c.b16 %v620, %v619
  %v640 = vpack.c.b16 %v622, %v621
  %v641 = vpack.c.b16 %v624, %v623
  %v642 = vpack.c.b16 %v626, %v625
  %659 = vmatprep.subr.bf16.mxu0 0
  %660 = vmatpush1.bf16.msra.mxu0 %v627
  %661 = vmatprep.subr.bf16.mxu0 0
  %662 = vmatpush1.bf16.msra.mxu0 %v628
  %663 = vmatprep.subr.bf16.mxu0 0
  %664 = vmatpush1.bf16.msra.mxu0 %v629
  %665 = vmatprep.subr.bf16.mxu0 0
  %666 = vmatpush1.bf16.msra.mxu0 %v630
  %667 = vmatprep.subr.bf16.mxu0 0
  %668 = vmatpush1.bf16.msra.mxu0 %v631
  %669 = vmatprep.subr.bf16.mxu0 0
  %670 = vmatpush1.bf16.msra.mxu0 %v632
  %671 = vmatprep.subr.bf16.mxu0 0
  %672 = vmatpush1.bf16.msra.mxu0 %v633
  %673 = vmatprep.subr.bf16.mxu0 0
  %674 = vmatpush1.bf16.msra.mxu0 %v634
  %675 = vmatprep.subr.bf16.mxu0 0
  %676 = vmatpush1.bf16.msra.mxu0 %v635
  %677 = vmatprep.subr.bf16.mxu0 0
  %678 = vmatpush1.bf16.msra.mxu0 %v636
  %679 = vmatprep.subr.bf16.mxu0 0
  %680 = vmatpush1.bf16.msra.mxu0 %v637
  %681 = vmatprep.subr.bf16.mxu0 0
  %682 = vmatpush1.bf16.msra.mxu0 %v638
  %683 = vmatprep.subr.bf16.mxu0 0
  %684 = vmatpush1.bf16.msra.mxu0 %v639
  %685 = vmatprep.subr.bf16.mxu0 0
  %686 = vmatpush1.bf16.msra.mxu0 %v640
  %687 = vmatprep.subr.bf16.mxu0 0
  %688 = vmatpush1.bf16.msra.mxu0 %v641
  %689 = vmatprep.subr.bf16.mxu0 0
  %690 = vmatpush1.bf16.msra.mxu0 %v642
  %691 = vmatprep.mubr.bf16.mxu0 %v436
  %692 = vmatmul.mubr.bf16.gmra.mrb[0].mxu0 %v435
  %v693 = vpop.f32.mrb[0].mxu0
  %v694 = vadd.f32 0.0, %v693
  %v695 = vpop.f32.mrb[0].mxu0
  %v696 = vpop.f32.mrb[0].mxu0
  %v697 = vadd.f32 0.0, %v696
  %v698 = vpop.f32.mrb[0].mxu0
  %699 = vmatprep.mubr.bf16.mxu0 %v438
  %700 = vmatmul.mubr.bf16.gmra.mrb[0].mxu0 %v437
  %v701 = vpop.f32.mrb[0].mxu0
  %v702 = vadd.f32 0.0, %v701
  %v703 = vpop.f32.mrb[0].mxu0
  %v704 = vpop.f32.mrb[0].mxu0
  %v705 = vadd.f32 0.0, %v704
  %v706 = vpop.f32.mrb[0].mxu0
  %707 = vmatprep.mubr.bf16.mxu0 %v440
  %708 = vmatmul.mubr.bf16.gmra.mrb[0].mxu0 %v439
  %v709 = vpop.f32.mrb[0].mxu0
  %v710 = vadd.f32 0.0, %v709
  %v711 = vpop.f32.mrb[0].mxu0
  %v712 = vpop.f32.mrb[0].mxu0
  %v713 = vadd.f32 0.0, %v712
  %v714 = vpop.f32.mrb[0].mxu0
  %715 = vmatprep.mubr.bf16.mxu0 %v442
  %716 = vmatmul.mubr.bf16.gmra.mrb[0].mxu0 %v441
  %v717 = vpop.f32.mrb[0].mxu0
  %v718 = vadd.f32 0.0, %v717
  %v719 = vpop.f32.mrb[0].mxu0
  %v720 = vpop.f32.mrb[0].mxu0
  %v721 = vadd.f32 0.0, %v720
  %v722 = vpop.f32.mrb[0].mxu0
  %723 = vmatprep.mubr.bf16.mxu0 %v444
  %724 = vmatmul.mubr.bf16.gmra.mrb[0].mxu0 %v443
  %v725 = vpop.f32.mrb[0].mxu0
  %v726 = vadd.f32 0.0, %v725
  %v727 = vpop.f32.mrb[0].mxu0
  %v728 = vpop.f32.mrb[0].mxu0
  %v729 = vadd.f32 0.0, %v728
  %v730 = vpop.f32.mrb[0].mxu0
  %731 = vmatprep.mubr.bf16.mxu0 %v446
  %732 = vmatmul.mubr.bf16.gmra.mrb[0].mxu0 %v445
  %v733 = vpop.f32.mrb[0].mxu0
  %v734 = vadd.f32 0.0, %v733
  %v735 = vpop.f32.mrb[0].mxu0
  %v736 = vpop.f32.mrb[0].mxu0
  %v737 = vadd.f32 0.0, %v736
  %v738 = vpop.f32.mrb[0].mxu0
  %739 = vmatprep.mubr.bf16.mxu0 %v448
  %740 = vmatmul.mubr.bf16.gmra.mrb[0].mxu0 %v447
  %v741 = vpop.f32.mrb[0].mxu0
  %v742 = vadd.f32 0.0, %v741
  %v743 = vpop.f32.mrb[0].mxu0
  %v744 = vpop.f32.mrb[0].mxu0
  %v745 = vadd.f32 0.0, %v744
  %v746 = vpop.f32.mrb[0].mxu0
  %747 = vmatprep.mubr.bf16.mxu0 %v450
  %748 = vmatmul.mubr.bf16.gmra.mrb[0].mxu0 %v449
  %v749 = vpop.f32.mrb[0].mxu0
  %v750 = vadd.f32 0.0, %v749
  %v751 = vpop.f32.mrb[0].mxu0
  %v752 = vpop.f32.mrb[0].mxu0
  %v753 = vadd.f32 0.0, %v752
  %v754 = vpop.f32.mrb[0].mxu0
  %755 = vmatprep.mubr.bf16.mxu0 %v452
  %756 = vmatmul.mubr.bf16.gmra.mrb[0].mxu0 %v451
  %v757 = vpop.f32.mrb[0].mxu0
  %v758 = vadd.f32 0.0, %v757
  %v759 = vpop.f32.mrb[0].mxu0
  %v760 = vpop.f32.mrb[0].mxu0
  %v761 = vadd.f32 0.0, %v760
  %v762 = vpop.f32.mrb[0].mxu0
  %763 = vmatprep.mubr.bf16.mxu0 %v454
  %764 = vmatmul.mubr.bf16.gmra.mrb[0].mxu0 %v453
  %v765 = vpop.f32.mrb[0].mxu0
  %v766 = vadd.f32 0.0, %v765
  %v767 = vpop.f32.mrb[0].mxu0
  %v768 = vpop.f32.mrb[0].mxu0
  %v769 = vadd.f32 0.0, %v768
  %v770 = vpop.f32.mrb[0].mxu0
  %771 = vmatprep.mubr.bf16.mxu0 %v456
  %772 = vmatmul.mubr.bf16.gmra.mrb[0].mxu0 %v455
  %v773 = vpop.f32.mrb[0].mxu0
  %v774 = vadd.f32 0.0, %v773
  %v775 = vpop.f32.mrb[0].mxu0
  %v776 = vpop.f32.mrb[0].mxu0
  %v777 = vadd.f32 0.0, %v776
  %v778 = vpop.f32.mrb[0].mxu0
  %779 = vmatprep.mubr.bf16.mxu0 %v458
  %780 = vmatmul.mubr.bf16.gmra.mrb[0].mxu0 %v457
  %v781 = vpop.f32.mrb[0].mxu0
  %v782 = vadd.f32 0.0, %v781
  %v783 = vpop.f32.mrb[0].mxu0
  %v784 = vpop.f32.mrb[0].mxu0
  %v785 = vadd.f32 0.0, %v784
  %v786 = vpop.f32.mrb[0].mxu0
  %787 = vmatprep.mubr.bf16.mxu0 %v460
  %788 = vmatmul.mubr.bf16.gmra.mrb[0].mxu0 %v459
  %v789 = vpop.f32.mrb[0].mxu0
  %v790 = vadd.f32 0.0, %v789
  %v791 = vpop.f32.mrb[0].mxu0
  %v792 = vpop.f32.mrb[0].mxu0
  %v793 = vadd.f32 0.0, %v792
  %v794 = vpop.f32.mrb[0].mxu0
  %795 = vmatprep.mubr.bf16.mxu0 %v462
  %796 = vmatmul.mubr.bf16.gmra.mrb[0].mxu0 %v461
  %v797 = vpop.f32.mrb[0].mxu0
  %v798 = vadd.f32 0.0, %v797
  %v799 = vpop.f32.mrb[0].mxu0
  %v800 = vpop.f32.mrb[0].mxu0
  %v801 = vadd.f32 0.0, %v800
  %v802 = vpop.f32.mrb[0].mxu0
  %803 = vmatprep.mubr.bf16.mxu0 %v464
  %804 = vmatmul.mubr.bf16.gmra.mrb[0].mxu0 %v463
  %v805 = vpop.f32.mrb[0].mxu0
  %v806 = vadd.f32 0.0, %v805
  %v807 = vpop.f32.mrb[0].mxu0
  %v808 = vpop.f32.mrb[0].mxu0
  %v809 = vadd.f32 0.0, %v808
  %v810 = vpop.f32.mrb[0].mxu0
  %811 = vmatprep.mubr.bf16.mxu0 %v466
  %812 = vmatmul.mubr.bf16.gmra.mrb[0].mxu0 %v465
  %v813 = vpop.f32.mrb[0].mxu0
  %v814 = vadd.f32 0.0, %v813
  %v815 = vpop.f32.mrb[0].mxu0
  %v816 = vpop.f32.mrb[0].mxu0
  %v817 = vadd.f32 0.0, %v816
  %v818 = vpop.f32.mrb[0].mxu0
  %819 = vmatprep.mubr.bf16.mxu0 %v468
  %820 = vmatmul.mubr.bf16.gmra.mrb[0].mxu0 %v467
  %v821 = vpop.f32.mrb[0].mxu0
  %v822 = vadd.f32 0.0, %v821
  %v823 = vpop.f32.mrb[0].mxu0
  %v824 = vpop.f32.mrb[0].mxu0
  %v825 = vadd.f32 0.0, %v824
  %v826 = vpop.f32.mrb[0].mxu0
  %827 = vmatprep.mubr.bf16.mxu0 %v470
  %828 = vmatmul.mubr.bf16.gmra.mrb[0].mxu0 %v469
  %v829 = vpop.f32.mrb[0].mxu0
  %v830 = vadd.f32 0.0, %v829
  %v831 = vpop.f32.mrb[0].mxu0
  %v832 = vpop.f32.mrb[0].mxu0
  %v833 = vadd.f32 0.0, %v832
  %v834 = vpop.f32.mrb[0].mxu0
  %835 = vmatprep.mubr.bf16.mxu0 %v472
  %836 = vmatmul.mubr.bf16.gmra.mrb[0].mxu0 %v471
  %v837 = vpop.f32.mrb[0].mxu0
  %v838 = vadd.f32 0.0, %v837
  %v839 = vpop.f32.mrb[0].mxu0
  %v840 = vpop.f32.mrb[0].mxu0
  %v841 = vadd.f32 0.0, %v840
  %v842 = vpop.f32.mrb[0].mxu0
  %843 = vmatprep.mubr.bf16.mxu0 %v474
  %844 = vmatmul.mubr.bf16.gmra.mrb[0].mxu0 %v473
  %v845 = vpop.f32.mrb[0].mxu0
  %v846 = vadd.f32 0.0, %v845
  %v847 = vpop.f32.mrb[0].mxu0
  %v848 = vpop.f32.mrb[0].mxu0
  %v849 = vadd.f32 0.0, %v848
  %v850 = vpop.f32.mrb[0].mxu0
  %851 = vmatprep.mubr.bf16.mxu0 %v476
  %852 = vmatmul.mubr.bf16.gmra.mrb[0].mxu0 %v475
  %v853 = vpop.f32.mrb[0].mxu0
  %v854 = vadd.f32 0.0, %v853
  %v855 = vpop.f32.mrb[0].mxu0
  %v856 = vpop.f32.mrb[0].mxu0
  %v857 = vadd.f32 0.0, %v856
  %v858 = vpop.f32.mrb[0].mxu0
  %859 = vmatprep.mubr.bf16.mxu0 %v478
  %860 = vmatmul.mubr.bf16.gmra.mrb[0].mxu0 %v477
  %v861 = vpop.f32.mrb[0].mxu0
  %v862 = vadd.f32 0.0, %v861
  %v863 = vpop.f32.mrb[0].mxu0
  %v864 = vpop.f32.mrb[0].mxu0
  %v865 = vadd.f32 0.0, %v864
  %v866 = vpop.f32.mrb[0].mxu0
  %867 = vmatprep.mubr.bf16.mxu0 %v480
  %868 = vmatmul.mubr.bf16.gmra.mrb[0].mxu0 %v479
  %v869 = vpop.f32.mrb[0].mxu0
  %v870 = vadd.f32 0.0, %v869
  %v871 = vpop.f32.mrb[0].mxu0
  %v872 = vpop.f32.mrb[0].mxu0
  %v873 = vadd.f32 0.0, %v872
  %v874 = vpop.f32.mrb[0].mxu0
  %875 = vmatprep.mubr.bf16.mxu0 %v482
  %876 = vmatmul.mubr.bf16.gmra.mrb[0].mxu0 %v481
  %v877 = vpop.f32.mrb[0].mxu0
  %v878 = vadd.f32 0.0, %v877
  %v879 = vpop.f32.mrb[0].mxu0
  %v880 = vpop.f32.mrb[0].mxu0
  %v881 = vadd.f32 0.0, %v880
  %v882 = vpop.f32.mrb[0].mxu0
  %883 = vmatprep.mubr.bf16.mxu0 %v484
  %884 = vmatmul.mubr.bf16.gmra.mrb[0].mxu0 %v483
  %v885 = vpop.f32.mrb[0].mxu0
  %v886 = vadd.f32 0.0, %v885
  %v887 = vpop.f32.mrb[0].mxu0
  %v888 = vpop.f32.mrb[0].mxu0
  %v889 = vadd.f32 0.0, %v888
  %v890 = vpop.f32.mrb[0].mxu0
  %891 = vmatprep.mubr.bf16.mxu0 %v486
  %892 = vmatmul.mubr.bf16.gmra.mrb[0].mxu0 %v485
  %v893 = vpop.f32.mrb[0].mxu0
  %v894 = vadd.f32 0.0, %v893
  %v895 = vpop.f32.mrb[0].mxu0
  %v896 = vpop.f32.mrb[0].mxu0
  %v897 = vadd.f32 0.0, %v896
  %v898 = vpop.f32.mrb[0].mxu0
  %899 = vmatprep.mubr.bf16.mxu0 %v488
  %900 = vmatmul.mubr.bf16.gmra.mrb[0].mxu0 %v487
  %v901 = vpop.f32.mrb[0].mxu0
  %v902 = vadd.f32 0.0, %v901
  %v903 = vpop.f32.mrb[0].mxu0
  %v904 = vpop.f32.mrb[0].mxu0
  %v905 = vadd.f32 0.0, %v904
  %v906 = vpop.f32.mrb[0].mxu0
  %907 = vmatprep.mubr.bf16.mxu0 %v490
  %908 = vmatmul.mubr.bf16.gmra.mrb[0].mxu0 %v489
  %v909 = vpop.f32.mrb[0].mxu0
  %v910 = vadd.f32 0.0, %v909
  %v911 = vpop.f32.mrb[0].mxu0
  %v912 = vpop.f32.mrb[0].mxu0
  %v913 = vadd.f32 0.0, %v912
  %v914 = vpop.f32.mrb[0].mxu0
  %915 = vmatprep.mubr.bf16.mxu0 %v492
  %916 = vmatmul.mubr.bf16.gmra.mrb[0].mxu0 %v491
  %v917 = vpop.f32.mrb[0].mxu0
  %v918 = vadd.f32 0.0, %v917
  %v919 = vpop.f32.mrb[0].mxu0
  %v920 = vpop.f32.mrb[0].mxu0
  %v921 = vadd.f32 0.0, %v920
  %v922 = vpop.f32.mrb[0].mxu0
  %923 = vmatprep.mubr.bf16.mxu0 %v494
  %924 = vmatmul.mubr.bf16.gmra.mrb[0].mxu0 %v493
  %v925 = vpop.f32.mrb[0].mxu0
  %v926 = vadd.f32 0.0, %v925
  %v927 = vpop.f32.mrb[0].mxu0
  %v928 = vpop.f32.mrb[0].mxu0
  %v929 = vadd.f32 0.0, %v928
  %v930 = vpop.f32.mrb[0].mxu0
  %931 = vmatprep.mubr.bf16.mxu0 %v496
  %932 = vmatmul.mubr.bf16.gmra.mrb[0].mxu0 %v495
  %v933 = vpop.f32.mrb[0].mxu0
  %v934 = vadd.f32 0.0, %v933
  %v935 = vpop.f32.mrb[0].mxu0
  %v936 = vpop.f32.mrb[0].mxu0
  %v937 = vadd.f32 0.0, %v936
  %v938 = vpop.f32.mrb[0].mxu0
  %939 = vmatprep.mubr.bf16.mxu0 %v498
  %940 = vmatmul.mubr.bf16.gmra.mrb[0].mxu0 %v497
  %v941 = vpop.f32.mrb[0].mxu0
  %v942 = vadd.f32 0.0, %v941
  %v943 = vpop.f32.mrb[0].mxu0
  %v944 = vpop.f32.mrb[0].mxu0
  %v945 = vadd.f32 0.0, %v944
  %v946 = vpop.f32.mrb[0].mxu0
  %947 = vdwg.mxu0
  %v948 = vadd.f32 %v83, %v694
  %v949 = vadd.f32 %v84, %v697
  %v950 = vadd.f32 %v85, %v702
  %v951 = vadd.f32 %v86, %v705
  %v952 = vadd.f32 %v87, %v710
  %v953 = vadd.f32 %v88, %v713
  %v954 = vadd.f32 %v89, %v718
  %v955 = vadd.f32 %v90, %v721
  %v956 = vadd.f32 %v91, %v726
  %v957 = vadd.f32 %v92, %v729
  %v958 = vadd.f32 %v93, %v734
  %v959 = vadd.f32 %v94, %v737
  %v960 = vadd.f32 %v95, %v742
  %v961 = vadd.f32 %v96, %v745
  %v962 = vadd.f32 %v97, %v750
  %v963 = vadd.f32 %v98, %v753
  %v964 = vadd.f32 %v99, %v758
  %v965 = vadd.f32 %v100, %v761
  %v966 = vadd.f32 %v101, %v766
  %v967 = vadd.f32 %v102, %v769
  %v968 = vadd.f32 %v103, %v774
  %v969 = vadd.f32 %v104, %v777
  %v970 = vadd.f32 %v105, %v782
  %v971 = vadd.f32 %v106, %v785
  %v972 = vadd.f32 %v107, %v790
  %v973 = vadd.f32 %v108, %v793
  %v974 = vadd.f32 %v109, %v798
  %v975 = vadd.f32 %v110, %v801
  %v976 = vadd.f32 %v111, %v806
  %v977 = vadd.f32 %v112, %v809
  %v978 = vadd.f32 %v113, %v814
  %v979 = vadd.f32 %v114, %v817
  %v980 = vadd.f32 %v115, %v822
  %v981 = vadd.f32 %v116, %v825
  %v982 = vadd.f32 %v117, %v830
  %v983 = vadd.f32 %v118, %v833
  %v984 = vadd.f32 %v119, %v838
  %v985 = vadd.f32 %v120, %v841
  %v986 = vadd.f32 %v121, %v846
  %v987 = vadd.f32 %v122, %v849
  %v988 = vadd.f32 %v123, %v854
  %v989 = vadd.f32 %v124, %v857
  %v990 = vadd.f32 %v125, %v862
  %v991 = vadd.f32 %v126, %v865
  %v992 = vadd.f32 %v127, %v870
  %v993 = vadd.f32 %v128, %v873
  %v994 = vadd.f32 %v129, %v878
  %v995 = vadd.f32 %v130, %v881
  %v996 = vadd.f32 %v131, %v886
  %v997 = vadd.f32 %v132, %v889
  %v998 = vadd.f32 %v133, %v894
  %v999 = vadd.f32 %v134, %v897
  %v1000 = vadd.f32 %v135, %v902
  %v1001 = vadd.f32 %v136, %v905
  %v1002 = vadd.f32 %v137, %v910
  %v1003 = vadd.f32 %v138, %v913
  %v1004 = vadd.f32 %v139, %v918
  %v1005 = vadd.f32 %v140, %v921
  %v1006 = vadd.f32 %v141, %v926
  %v1007 = vadd.f32 %v142, %v929
  %v1008 = vadd.f32 %v143, %v934
  %v1009 = vadd.f32 %v144, %v937
  %v1010 = vadd.f32 %v145, %v942
  %v1011 = vadd.f32 %v146, %v945
  %1012 = vst [vmem:[#allocation2] sm:$0xff] %v948
  %1013 = vst [vmem:[#allocation2 + $0x8] sm:$0xff] %v949
  %1014 = vst [vmem:[#allocation2 + $0x10] sm:$0xff] %v950
  %1015 = vst [vmem:[#allocation2 + $0x18] sm:$0xff] %v951
  %1016 = vst [vmem:[#allocation2 + $0x20] sm:$0xff] %v952
  %1017 = vst [vmem:[#allocation2 + $0x28] sm:$0xff] %v953
  %1018 = vst [vmem:[#allocation2 + $0x30] sm:$0xff] %v954
  %1019 = vst [vmem:[#allocation2 + $0x38] sm:$0xff] %v955
  %1020 = vst [vmem:[#allocation2 + $0x40] sm:$0xff] %v956
  %1021 = vst [vmem:[#allocation2 + $0x48] sm:$0xff] %v957
  %1022 = vst [vmem:[#allocation2 + $0x50] sm:$0xff] %v958
  %1023 = vst [vmem:[#allocation2 + $0x58] sm:$0xff] %v959
  %1024 = vst [vmem:[#allocation2 + $0x60] sm:$0xff] %v960
  %1025 = vst [vmem:[#allocation2 + $0x68] sm:$0xff] %v961
  %1026 = vst [vmem:[#allocation2 + $0x70] sm:$0xff] %v962
  %1027 = vst [vmem:[#allocation2 + $0x78] sm:$0xff] %v963
  %1028 = vst [vmem:[#allocation2 + $0x80] sm:$0xff] %v964
  %1029 = vst [vmem:[#allocation2 + $0x88] sm:$0xff] %v965
  %1030 = vst [vmem:[#allocation2 + $0x90] sm:$0xff] %v966
  %1031 = vst [vmem:[#allocation2 + $0x98] sm:$0xff] %v967
  %1032 = vst [vmem:[#allocation2 + $0xa0] sm:$0xff] %v968
  %1033 = vst [vmem:[#allocation2 + $0xa8] sm:$0xff] %v969
  %1034 = vst [vmem:[#allocation2 + $0xb0] sm:$0xff] %v970
  %1035 = vst [vmem:[#allocation2 + $0xb8] sm:$0xff] %v971
  %1036 = vst [vmem:[#allocation2 + $0xc0] sm:$0xff] %v972
  %1037 = vst [vmem:[#allocation2 + $0xc8] sm:$0xff] %v973
  %1038 = vst [vmem:[#allocation2 + $0xd0] sm:$0xff] %v974
  %1039 = vst [vmem:[#allocation2 + $0xd8] sm:$0xff] %v975
  %1040 = vst [vmem:[#allocation2 + $0xe0] sm:$0xff] %v976
  %1041 = vst [vmem:[#allocation2 + $0xe8] sm:$0xff] %v977
  %1042 = vst [vmem:[#allocation2 + $0xf0] sm:$0xff] %v978
  %1043 = vst [vmem:[#allocation2 + $0xf8] sm:$0xff] %v979
  %1044 = vst [vmem:[#allocation2 + $0x100] sm:$0xff] %v980
  %1045 = vst [vmem:[#allocation2 + $0x108] sm:$0xff] %v981
  %1046 = vst [vmem:[#allocation2 + $0x110] sm:$0xff] %v982
  %1047 = vst [vmem:[#allocation2 + $0x118] sm:$0xff] %v983
  %1048 = vst [vmem:[#allocation2 + $0x120] sm:$0xff] %v984
  %1049 = vst [vmem:[#allocation2 + $0x128] sm:$0xff] %v985
  %1050 = vst [vmem:[#allocation2 + $0x130] sm:$0xff] %v986
  %1051 = vst [vmem:[#allocation2 + $0x138] sm:$0xff] %v987
  %1052 = vst [vmem:[#allocation2 + $0x140] sm:$0xff] %v988
  %1053 = vst [vmem:[#allocation2 + $0x148] sm:$0xff] %v989
  %1054 = vst [vmem:[#allocation2 + $0x150] sm:$0xff] %v990
  %1055 = vst [vmem:[#allocation2 + $0x158] sm:$0xff] %v991
  %1056 = vst [vmem:[#allocation2 + $0x160] sm:$0xff] %v992
  %1057 = vst [vmem:[#allocation2 + $0x168] sm:$0xff] %v993
  %1058 = vst [vmem:[#allocation2 + $0x170] sm:$0xff] %v994
  %1059 = vst [vmem:[#allocation2 + $0x178] sm:$0xff] %v995
  %1060 = vst [vmem:[#allocation2 + $0x180] sm:$0xff] %v996
  %1061 = vst [vmem:[#allocation2 + $0x188] sm:$0xff] %v997
  %1062 = vst [vmem:[#allocation2 + $0x190] sm:$0xff] %v998
  %1063 = vst [vmem:[#allocation2 + $0x198] sm:$0xff] %v999
  %1064 = vst [vmem:[#allocation2 + $0x1a0] sm:$0xff] %v1000
  %1065 = vst [vmem:[#allocation2 + $0x1a8] sm:$0xff] %v1001
  %1066 = vst [vmem:[#allocation2 + $0x1b0] sm:$0xff] %v1002
  %1067 = vst [vmem:[#allocation2 + $0x1b8] sm:$0xff] %v1003
  %1068 = vst [vmem:[#allocation2 + $0x1c0] sm:$0xff] %v1004
  %1069 = vst [vmem:[#allocation2 + $0x1c8] sm:$0xff] %v1005
  %1070 = vst [vmem:[#allocation2 + $0x1d0] sm:$0xff] %v1006
  %1071 = vst [vmem:[#allocation2 + $0x1d8] sm:$0xff] %v1007
  %1072 = vst [vmem:[#allocation2 + $0x1e0] sm:$0xff] %v1008
  %1073 = vst [vmem:[#allocation2 + $0x1e8] sm:$0xff] %v1009
  %1074 = vst [vmem:[#allocation2 + $0x1f0] sm:$0xff] %v1010
  %1075 = vst [vmem:[#allocation2 + $0x1f8] sm:$0xff] %v1011
  // Predicated region
  $region18: #{_lambda_.71} parent=0 // pred_check
    %p1076 = pneg %p15
  $region19: #{_lambda_.71} parent=0 // pred_check_branch
    %1078 = sbr.rel (%p1076) target = $region21
  $region20: #{_lambda_.71} parent=0 // pred_region
    %v1079 = vld [vmem:[#allocation2] sm:$0xff]
    %v1080 = vld [vmem:[#allocation2 + $0x8] sm:$0xff]
    %v1081 = vld [vmem:[#allocation2 + $0x10] sm:$0xff]
    %v1082 = vld [vmem:[#allocation2 + $0x18] sm:$0xff]
    %v1083 = vld [vmem:[#allocation2 + $0x20] sm:$0xff]
    %v1084 = vld [vmem:[#allocation2 + $0x28] sm:$0xff]
    %v1085 = vld [vmem:[#allocation2 + $0x30] sm:$0xff]
    %v1086 = vld [vmem:[#allocation2 + $0x38] sm:$0xff]
    %v1087 = vld [vmem:[#allocation2 + $0x40] sm:$0xff]
    %v1088 = vld [vmem:[#allocation2 + $0x48] sm:$0xff]
    %v1089 = vld [vmem:[#allocation2 + $0x50] sm:$0xff]
    %v1090 = vld [vmem:[#allocation2 + $0x58] sm:$0xff]
    %v1091 = vld [vmem:[#allocation2 + $0x60] sm:$0xff]
    %v1092 = vld [vmem:[#allocation2 + $0x68] sm:$0xff]
    %v1093 = vld [vmem:[#allocation2 + $0x70] sm:$0xff]
    %v1094 = vld [vmem:[#allocation2 + $0x78] sm:$0xff]
    %v1095 = vld [vmem:[#allocation2 + $0x80] sm:$0xff]
    %v1096 = vld [vmem:[#allocation2 + $0x88] sm:$0xff]
    %v1097 = vld [vmem:[#allocation2 + $0x90] sm:$0xff]
    %v1098 = vld [vmem:[#allocation2 + $0x98] sm:$0xff]
    %v1099 = vld [vmem:[#allocation2 + $0xa0] sm:$0xff]
    %v1100 = vld [vmem:[#allocation2 + $0xa8] sm:$0xff]
    %v1101 = vld [vmem:[#allocation2 + $0xb0] sm:$0xff]
    %v1102 = vld [vmem:[#allocation2 + $0xb8] sm:$0xff]
    %v1103 = vld [vmem:[#allocation2 + $0xc0] sm:$0xff]
    %v1104 = vld [vmem:[#allocation2 + $0xc8] sm:$0xff]
    %v1105 = vld [vmem:[#allocation2 + $0xd0] sm:$0xff]
    %v1106 = vld [vmem:[#allocation2 + $0xd8] sm:$0xff]
    %v1107 = vld [vmem:[#allocation2 + $0xe0] sm:$0xff]
    %v1108 = vld [vmem:[#allocation2 + $0xe8] sm:$0xff]
    %v1109 = vld [vmem:[#allocation2 + $0xf0] sm:$0xff]
    %v1110 = vld [vmem:[#allocation2 + $0xf8] sm:$0xff]
    %v1111 = vld [vmem:[#allocation2 + $0x100] sm:$0xff]
    %v1112 = vld [vmem:[#allocation2 + $0x108] sm:$0xff]
    %v1113 = vld [vmem:[#allocation2 + $0x110] sm:$0xff]
    %v1114 = vld [vmem:[#allocation2 + $0x118] sm:$0xff]
    %v1115 = vld [vmem:[#allocation2 + $0x120] sm:$0xff]
    %v1116 = vld [vmem:[#allocation2 + $0x128] sm:$0xff]
    %v1117 = vld [vmem:[#allocation2 + $0x130] sm:$0xff]
    %v1118 = vld [vmem:[#allocation2 + $0x138] sm:$0xff]
    %v1119 = vld [vmem:[#allocation2 + $0x140] sm:$0xff]
    %v1120 = vld [vmem:[#allocation2 + $0x148] sm:$0xff]
    %v1121 = vld [vmem:[#allocation2 + $0x150] sm:$0xff]
    %v1122 = vld [vmem:[#allocation2 + $0x158] sm:$0xff]
    %v1123 = vld [vmem:[#allocation2 + $0x160] sm:$0xff]
    %v1124 = vld [vmem:[#allocation2 + $0x168] sm:$0xff]
    %v1125 = vld [vmem:[#allocation2 + $0x170] sm:$0xff]
    %v1126 = vld [vmem:[#allocation2 + $0x178] sm:$0xff]
    %v1127 = vld [vmem:[#allocation2 + $0x180] sm:$0xff]
    %v1128 = vld [vmem:[#allocation2 + $0x188] sm:$0xff]
    %v1129 = vld [vmem:[#allocation2 + $0x190] sm:$0xff]
    %v1130 = vld [vmem:[#allocation2 + $0x198] sm:$0xff]
    %v1131 = vld [vmem:[#allocation2 + $0x1a0] sm:$0xff]
    %v1132 = vld [vmem:[#allocation2 + $0x1a8] sm:$0xff]
    %v1133 = vld [vmem:[#allocation2 + $0x1b0] sm:$0xff]
    %v1134 = vld [vmem:[#allocation2 + $0x1b8] sm:$0xff]
    %v1135 = vld [vmem:[#allocation2 + $0x1c0] sm:$0xff]
    %v1136 = vld [vmem:[#allocation2 + $0x1c8] sm:$0xff]
    %v1137 = vld [vmem:[#allocation2 + $0x1d0] sm:$0xff]
    %v1138 = vld [vmem:[#allocation2 + $0x1d8] sm:$0xff]
    %v1139 = vld [vmem:[#allocation2 + $0x1e0] sm:$0xff]
    %v1140 = vld [vmem:[#allocation2 + $0x1e8] sm:$0xff]
    %v1141 = vld [vmem:[#allocation2 + $0x1f0] sm:$0xff]
    %v1142 = vld [vmem:[#allocation2 + $0x1f8] sm:$0xff]
    %v1143 = vld [vmem:[%s2] sm:$0x1]
    %v1145 = vlaneseq
    %v1146 = vshrl.u32 %v1145, 7
    %v1147 = vsub.s32 0, %v1146
    %v1148 = vrot.slane %v1143, %v1147
    %v1150 = vadd.f32 %v1079, %v1148
    %v1151 = vadd.f32 %v1080, %v1148
    %v1152 = vadd.f32 %v1081, %v1148
    %v1153 = vadd.f32 %v1082, %v1148
    %v1154 = vadd.f32 %v1083, %v1148
    %v1155 = vadd.f32 %v1084, %v1148
    %v1156 = vadd.f32 %v1085, %v1148
    %v1157 = vadd.f32 %v1086, %v1148
    %v1158 = vadd.f32 %v1087, %v1148
    %v1159 = vadd.f32 %v1088, %v1148
    %v1160 = vadd.f32 %v1089, %v1148
    %v1161 = vadd.f32 %v1090, %v1148
    %v1162 = vadd.f32 %v1091, %v1148
    %v1163 = vadd.f32 %v1092, %v1148
    %v1164 = vadd.f32 %v1093, %v1148
    %v1165 = vadd.f32 %v1094, %v1148
    %v1166 = vadd.f32 %v1095, %v1148
    %v1167 = vadd.f32 %v1096, %v1148
    %v1168 = vadd.f32 %v1097, %v1148
    %v1169 = vadd.f32 %v1098, %v1148
    %v1170 = vadd.f32 %v1099, %v1148
    %v1171 = vadd.f32 %v1100, %v1148
    %v1172 = vadd.f32 %v1101, %v1148
    %v1173 = vadd.f32 %v1102, %v1148
    %v1174 = vadd.f32 %v1103, %v1148
    %v1175 = vadd.f32 %v1104, %v1148
    %v1176 = vadd.f32 %v1105, %v1148
    %v1177 = vadd.f32 %v1106, %v1148
    %v1178 = vadd.f32 %v1107, %v1148
    %v1179 = vadd.f32 %v1108, %v1148
    %v1180 = vadd.f32 %v1109, %v1148
    %v1181 = vadd.f32 %v1110, %v1148
    %v1182 = vadd.f32 %v1111, %v1148
    %v1183 = vadd.f32 %v1112, %v1148
    %v1184 = vadd.f32 %v1113, %v1148
    %v1185 = vadd.f32 %v1114, %v1148
    %v1186 = vadd.f32 %v1115, %v1148
    %v1187 = vadd.f32 %v1116, %v1148
    %v1188 = vadd.f32 %v1117, %v1148
    %v1189 = vadd.f32 %v1118, %v1148
    %v1190 = vadd.f32 %v1119, %v1148
    %v1191 = vadd.f32 %v1120, %v1148
    %v1192 = vadd.f32 %v1121, %v1148
    %v1193 = vadd.f32 %v1122, %v1148
    %v1194 = vadd.f32 %v1123, %v1148
    %v1195 = vadd.f32 %v1124, %v1148
    %v1196 = vadd.f32 %v1125, %v1148
    %v1197 = vadd.f32 %v1126, %v1148
    %v1198 = vadd.f32 %v1127, %v1148
    %v1199 = vadd.f32 %v1128, %v1148
    %v1200 = vadd.f32 %v1129, %v1148
    %v1201 = vadd.f32 %v1130, %v1148
    %v1202 = vadd.f32 %v1131, %v1148
    %v1203 = vadd.f32 %v1132, %v1148
    %v1204 = vadd.f32 %v1133, %v1148
    %v1205 = vadd.f32 %v1134, %v1148
    %v1206 = vadd.f32 %v1135, %v1148
    %v1207 = vadd.f32 %v1136, %v1148
    %v1208 = vadd.f32 %v1137, %v1148
    %v1209 = vadd.f32 %v1138, %v1148
    %v1210 = vadd.f32 %v1139, %v1148
    %v1211 = vadd.f32 %v1140, %v1148
    %v1212 = vadd.f32 %v1141, %v1148
    %v1213 = vadd.f32 %v1142, %v1148
    %v1214 = vsub.f32 0.0, %v1150
    %v1215 = vsub.f32 0.0, %v1151
    %v1216 = vsub.f32 0.0, %v1152
    %v1217 = vsub.f32 0.0, %v1153
    %v1218 = vsub.f32 0.0, %v1154
    %v1219 = vsub.f32 0.0, %v1155
    %v1220 = vsub.f32 0.0, %v1156
    %v1221 = vsub.f32 0.0, %v1157
    %v1222 = vsub.f32 0.0, %v1158
    %v1223 = vsub.f32 0.0, %v1159
    %v1224 = vsub.f32 0.0, %v1160
    %v1225 = vsub.f32 0.0, %v1161
    %v1226 = vsub.f32 0.0, %v1162
    %v1227 = vsub.f32 0.0, %v1163
    %v1228 = vsub.f32 0.0, %v1164
    %v1229 = vsub.f32 0.0, %v1165
    %v1230 = vsub.f32 0.0, %v1166
    %v1231 = vsub.f32 0.0, %v1167
    %v1232 = vsub.f32 0.0, %v1168
    %v1233 = vsub.f32 0.0, %v1169
    %v1234 = vsub.f32 0.0, %v1170
    %v1235 = vsub.f32 0.0, %v1171
    %v1236 = vsub.f32 0.0, %v1172
    %v1237 = vsub.f32 0.0, %v1173
    %v1238 = vsub.f32 0.0, %v1174
    %v1239 = vsub.f32 0.0, %v1175
    %v1240 = vsub.f32 0.0, %v1176
    %v1241 = vsub.f32 0.0, %v1177
    %v1242 = vsub.f32 0.0, %v1178
    %v1243 = vsub.f32 0.0, %v1179
    %v1244 = vsub.f32 0.0, %v1180
    %v1245 = vsub.f32 0.0, %v1181
    %v1246 = vsub.f32 0.0, %v1182
    %v1247 = vsub.f32 0.0, %v1183
    %v1248 = vsub.f32 0.0, %v1184
    %v1249 = vsub.f32 0.0, %v1185
    %v1250 = vsub.f32 0.0, %v1186
    %v1251 = vsub.f32 0.0, %v1187
    %v1252 = vsub.f32 0.0, %v1188
    %v1253 = vsub.f32 0.0, %v1189
    %v1254 = vsub.f32 0.0, %v1190
    %v1255 = vsub.f32 0.0, %v1191
    %v1256 = vsub.f32 0.0, %v1192
    %v1257 = vsub.f32 0.0, %v1193
    %v1258 = vsub.f32 0.0, %v1194
    %v1259 = vsub.f32 0.0, %v1195
    %v1260 = vsub.f32 0.0, %v1196
    %v1261 = vsub.f32 0.0, %v1197
    %v1262 = vsub.f32 0.0, %v1198
    %v1263 = vsub.f32 0.0, %v1199
    %v1264 = vsub.f32 0.0, %v1200
    %v1265 = vsub.f32 0.0, %v1201
    %v1266 = vsub.f32 0.0, %v1202
    %v1267 = vsub.f32 0.0, %v1203
    %v1268 = vsub.f32 0.0, %v1204
    %v1269 = vsub.f32 0.0, %v1205
    %v1270 = vsub.f32 0.0, %v1206
    %v1271 = vsub.f32 0.0, %v1207
    %v1272 = vsub.f32 0.0, %v1208
    %v1273 = vsub.f32 0.0, %v1209
    %v1274 = vsub.f32 0.0, %v1210
    %v1275 = vsub.f32 0.0, %v1211
    %v1276 = vsub.f32 0.0, %v1212
    %v1277 = vsub.f32 0.0, %v1213
    %v1278 = vmul.f32 %v1214, 1.442695
    %v1279 = vpow.pop %v1278
    %v1280 = vmul.f32 %v1215, 1.442695
    %v1281 = vpow.pop %v1280
    %v1282 = vmul.f32 %v1216, 1.442695
    %v1283 = vpow.pop %v1282
    %v1284 = vmul.f32 %v1217, 1.442695
    %v1285 = vpow.pop %v1284
    %v1286 = vmul.f32 %v1218, 1.442695
    %v1287 = vpow.pop %v1286
    %v1288 = vmul.f32 %v1219, 1.442695
    %v1289 = vpow.pop %v1288
    %v1290 = vmul.f32 %v1220, 1.442695
    %v1291 = vpow.pop %v1290
    %v1292 = vmul.f32 %v1221, 1.442695
    %v1293 = vpow.pop %v1292
    %v1294 = vmul.f32 %v1222, 1.442695
    %v1295 = vpow.pop %v1294
    %v1296 = vmul.f32 %v1223, 1.442695
    %v1297 = vpow.pop %v1296
    %v1298 = vmul.f32 %v1224, 1.442695
    %v1299 = vpow.pop %v1298
    %v1300 = vmul.f32 %v1225, 1.442695
    %v1301 = vpow.pop %v1300
    %v1302 = vmul.f32 %v1226, 1.442695
    %v1303 = vpow.pop %v1302
    %v1304 = vmul.f32 %v1227, 1.442695
    %v1305 = vpow.pop %v1304
    %v1306 = vmul.f32 %v1228, 1.442695
    %v1307 = vpow.pop %v1306
    %v1308 = vmul.f32 %v1229, 1.442695
    %v1309 = vpow.pop %v1308
    %v1310 = vmul.f32 %v1230, 1.442695
    %v1311 = vpow.pop %v1310
    %v1312 = vmul.f32 %v1231, 1.442695
    %v1313 = vpow.pop %v1312
    %v1314 = vmul.f32 %v1232, 1.442695
    %v1315 = vpow.pop %v1314
    %v1316 = vmul.f32 %v1233, 1.442695
    %v1317 = vpow.pop %v1316
    %v1318 = vmul.f32 %v1234, 1.442695
    %v1319 = vpow.pop %v1318
    %v1320 = vmul.f32 %v1235, 1.442695
    %v1321 = vpow.pop %v1320
    %v1322 = vmul.f32 %v1236, 1.442695
    %v1323 = vpow.pop %v1322
    %v1324 = vmul.f32 %v1237, 1.442695
    %v1325 = vpow.pop %v1324
    %v1326 = vmul.f32 %v1238, 1.442695
    %v1327 = vpow.pop %v1326
    %v1328 = vmul.f32 %v1239, 1.442695
    %v1329 = vpow.pop %v1328
    %v1330 = vmul.f32 %v1240, 1.442695
    %v1331 = vpow.pop %v1330
    %v1332 = vmul.f32 %v1241, 1.442695
    %v1333 = vpow.pop %v1332
    %v1334 = vmul.f32 %v1242, 1.442695
    %v1335 = vpow.pop %v1334
    %v1336 = vmul.f32 %v1243, 1.442695
    %v1337 = vpow.pop %v1336
    %v1338 = vmul.f32 %v1244, 1.442695
    %v1339 = vpow.pop %v1338
    %v1340 = vmul.f32 %v1245, 1.442695
    %v1341 = vpow.pop %v1340
    %v1342 = vmul.f32 %v1246, 1.442695
    %v1343 = vpow.pop %v1342
    %v1344 = vmul.f32 %v1247, 1.442695
    %v1345 = vpow.pop %v1344
    %v1346 = vmul.f32 %v1248, 1.442695
    %v1347 = vpow.pop %v1346
    %v1348 = vmul.f32 %v1249, 1.442695
    %v1349 = vpow.pop %v1348
    %v1350 = vmul.f32 %v1250, 1.442695
    %v1351 = vpow.pop %v1350
    %v1352 = vmul.f32 %v1251, 1.442695
    %v1353 = vpow.pop %v1352
    %v1354 = vmul.f32 %v1252, 1.442695
    %v1355 = vpow.pop %v1354
    %v1356 = vmul.f32 %v1253, 1.442695
    %v1357 = vpow.pop %v1356
    %v1358 = vmul.f32 %v1254, 1.442695
    %v1359 = vpow.pop %v1358
    %v1360 = vmul.f32 %v1255, 1.442695
    %v1361 = vpow.pop %v1360
    %v1362 = vmul.f32 %v1256, 1.442695
    %v1363 = vpow.pop %v1362
    %v1364 = vmul.f32 %v1257, 1.442695
    %v1365 = vpow.pop %v1364
    %v1366 = vmul.f32 %v1258, 1.442695
    %v1367 = vpow.pop %v1366
    %v1368 = vmul.f32 %v1259, 1.442695
    %v1369 = vpow.pop %v1368
    %v1370 = vmul.f32 %v1260, 1.442695
    %v1371 = vpow.pop %v1370
    %v1372 = vmul.f32 %v1261, 1.442695
    %v1373 = vpow.pop %v1372
    %v1374 = vmul.f32 %v1262, 1.442695
    %v1375 = vpow.pop %v1374
    %v1376 = vmul.f32 %v1263, 1.442695
    %v1377 = vpow.pop %v1376
    %v1378 = vmul.f32 %v1264, 1.442695
    %v1379 = vpow.pop %v1378
    %v1380 = vmul.f32 %v1265, 1.442695
    %v1381 = vpow.pop %v1380
    %v1382 = vmul.f32 %v1266, 1.442695
    %v1383 = vpow.pop %v1382
    %v1384 = vmul.f32 %v1267, 1.442695
    %v1385 = vpow.pop %v1384
    %v1386 = vmul.f32 %v1268, 1.442695
    %v1387 = vpow.pop %v1386
    %v1388 = vmul.f32 %v1269, 1.442695
    %v1389 = vpow.pop %v1388
    %v1390 = vmul.f32 %v1270, 1.442695
    %v1391 = vpow.pop %v1390
    %v1392 = vmul.f32 %v1271, 1.442695
    %v1393 = vpow.pop %v1392
    %v1394 = vmul.f32 %v1272, 1.442695
    %v1395 = vpow.pop %v1394
    %v1396 = vmul.f32 %v1273, 1.442695
    %v1397 = vpow.pop %v1396
    %v1398 = vmul.f32 %v1274, 1.442695
    %v1399 = vpow.pop %v1398
    %v1400 = vmul.f32 %v1275, 1.442695
    %v1401 = vpow.pop %v1400
    %v1402 = vmul.f32 %v1276, 1.442695
    %v1403 = vpow.pop %v1402
    %v1404 = vmul.f32 %v1277, 1.442695
    %v1405 = vpow.pop %v1404
    %v1406 = vadd.f32 %v1279, 1.0
    %v1407 = vadd.f32 %v1281, 1.0
    %v1408 = vadd.f32 %v1283, 1.0
    %v1409 = vadd.f32 %v1285, 1.0
    %v1410 = vadd.f32 %v1287, 1.0
    %v1411 = vadd.f32 %v1289, 1.0
    %v1412 = vadd.f32 %v1291, 1.0
    %v1413 = vadd.f32 %v1293, 1.0
    %v1414 = vadd.f32 %v1295, 1.0
    %v1415 = vadd.f32 %v1297, 1.0
    %v1416 = vadd.f32 %v1299, 1.0
    %v1417 = vadd.f32 %v1301, 1.0
    %v1418 = vadd.f32 %v1303, 1.0
    %v1419 = vadd.f32 %v1305, 1.0
    %v1420 = vadd.f32 %v1307, 1.0
    %v1421 = vadd.f32 %v1309, 1.0
    %v1422 = vadd.f32 %v1311, 1.0
    %v1423 = vadd.f32 %v1313, 1.0
    %v1424 = vadd.f32 %v1315, 1.0
    %v1425 = vadd.f32 %v1317, 1.0
    %v1426 = vadd.f32 %v1319, 1.0
    %v1427 = vadd.f32 %v1321, 1.0
    %v1428 = vadd.f32 %v1323, 1.0
    %v1429 = vadd.f32 %v1325, 1.0
    %v1430 = vadd.f32 %v1327, 1.0
    %v1431 = vadd.f32 %v1329, 1.0
    %v1432 = vadd.f32 %v1331, 1.0
    %v1433 = vadd.f32 %v1333, 1.0
    %v1434 = vadd.f32 %v1335, 1.0
    %v1435 = vadd.f32 %v1337, 1.0
    %v1436 = vadd.f32 %v1339, 1.0
    %v1437 = vadd.f32 %v1341, 1.0
    %v1438 = vadd.f32 %v1343, 1.0
    %v1439 = vadd.f32 %v1345, 1.0
    %v1440 = vadd.f32 %v1347, 1.0
    %v1441 = vadd.f32 %v1349, 1.0
    %v1442 = vadd.f32 %v1351, 1.0
    %v1443 = vadd.f32 %v1353, 1.0
    %v1444 = vadd.f32 %v1355, 1.0
    %v1445 = vadd.f32 %v1357, 1.0
    %v1446 = vadd.f32 %v1359, 1.0
    %v1447 = vadd.f32 %v1361, 1.0
    %v1448 = vadd.f32 %v1363, 1.0
    %v1449 = vadd.f32 %v1365, 1.0
    %v1450 = vadd.f32 %v1367, 1.0
    %v1451 = vadd.f32 %v1369, 1.0
    %v1452 = vadd.f32 %v1371, 1.0
    %v1453 = vadd.f32 %v1373, 1.0
    %v1454 = vadd.f32 %v1375, 1.0
    %v1455 = vadd.f32 %v1377, 1.0
    %v1456 = vadd.f32 %v1379, 1.0
    %v1457 = vadd.f32 %v1381, 1.0
    %v1458 = vadd.f32 %v1383, 1.0
    %v1459 = vadd.f32 %v1385, 1.0
    %v1460 = vadd.f32 %v1387, 1.0
    %v1461 = vadd.f32 %v1389, 1.0
    %v1462 = vadd.f32 %v1391, 1.0
    %v1463 = vadd.f32 %v1393, 1.0
    %v1464 = vadd.f32 %v1395, 1.0
    %v1465 = vadd.f32 %v1397, 1.0
    %v1466 = vadd.f32 %v1399, 1.0
    %v1467 = vadd.f32 %v1401, 1.0
    %v1468 = vadd.f32 %v1403, 1.0
    %v1469 = vadd.f32 %v1405, 1.0
    %v1470 = vrcp.pop %v1406
    %v1471 = vmul.f32 1.0, %v1470
    %v1472 = vrcp.pop %v1407
    %v1473 = vmul.f32 1.0, %v1472
    %v1474 = vrcp.pop %v1408
    %v1475 = vmul.f32 1.0, %v1474
    %v1476 = vrcp.pop %v1409
    %v1477 = vmul.f32 1.0, %v1476
    %v1478 = vrcp.pop %v1410
    %v1479 = vmul.f32 1.0, %v1478
    %v1480 = vrcp.pop %v1411
    %v1481 = vmul.f32 1.0, %v1480
    %v1482 = vrcp.pop %v1412
    %v1483 = vmul.f32 1.0, %v1482
    %v1484 = vrcp.pop %v1413
    %v1485 = vmul.f32 1.0, %v1484
    %v1486 = vrcp.pop %v1414
    %v1487 = vmul.f32 1.0, %v1486
    %v1488 = vrcp.pop %v1415
    %v1489 = vmul.f32 1.0, %v1488
    %v1490 = vrcp.pop %v1416
    %v1491 = vmul.f32 1.0, %v1490
    %v1492 = vrcp.pop %v1417
    %v1493 = vmul.f32 1.0, %v1492
    %v1494 = vrcp.pop %v1418
    %v1495 = vmul.f32 1.0, %v1494
    %v1496 = vrcp.pop %v1419
    %v1497 = vmul.f32 1.0, %v1496
    %v1498 = vrcp.pop %v1420
    %v1499 = vmul.f32 1.0, %v1498
    %v1500 = vrcp.pop %v1421
    %v1501 = vmul.f32 1.0, %v1500
    %v1502 = vrcp.pop %v1422
    %v1503 = vmul.f32 1.0, %v1502
    %v1504 = vrcp.pop %v1423
    %v1505 = vmul.f32 1.0, %v1504
    %v1506 = vrcp.pop %v1424
    %v1507 = vmul.f32 1.0, %v1506
    %v1508 = vrcp.pop %v1425
    %v1509 = vmul.f32 1.0, %v1508
    %v1510 = vrcp.pop %v1426
    %v1511 = vmul.f32 1.0, %v1510
    %v1512 = vrcp.pop %v1427
    %v1513 = vmul.f32 1.0, %v1512
    %v1514 = vrcp.pop %v1428
    %v1515 = vmul.f32 1.0, %v1514
    %v1516 = vrcp.pop %v1429
    %v1517 = vmul.f32 1.0, %v1516
    %v1518 = vrcp.pop %v1430
    %v1519 = vmul.f32 1.0, %v1518
    %v1520 = vrcp.pop %v1431
    %v1521 = vmul.f32 1.0, %v1520
    %v1522 = vrcp.pop %v1432
    %v1523 = vmul.f32 1.0, %v1522
    %v1524 = vrcp.pop %v1433
    %v1525 = vmul.f32 1.0, %v1524
    %v1526 = vrcp.pop %v1434
    %v1527 = vmul.f32 1.0, %v1526
    %v1528 = vrcp.pop %v1435
    %v1529 = vmul.f32 1.0, %v1528
    %v1530 = vrcp.pop %v1436
    %v1531 = vmul.f32 1.0, %v1530
    %v1532 = vrcp.pop %v1437
    %v1533 = vmul.f32 1.0, %v1532
    %v1534 = vrcp.pop %v1438
    %v1535 = vmul.f32 1.0, %v1534
    %v1536 = vrcp.pop %v1439
    %v1537 = vmul.f32 1.0, %v1536
    %v1538 = vrcp.pop %v1440
    %v1539 = vmul.f32 1.0, %v1538
    %v1540 = vrcp.pop %v1441
    %v1541 = vmul.f32 1.0, %v1540
    %v1542 = vrcp.pop %v1442
    %v1543 = vmul.f32 1.0, %v1542
    %v1544 = vrcp.pop %v1443
    %v1545 = vmul.f32 1.0, %v1544
    %v1546 = vrcp.pop %v1444
    %v1547 = vmul.f32 1.0, %v1546
    %v1548 = vrcp.pop %v1445
    %v1549 = vmul.f32 1.0, %v1548
    %v1550 = vrcp.pop %v1446
    %v1551 = vmul.f32 1.0, %v1550
    %v1552 = vrcp.pop %v1447
    %v1553 = vmul.f32 1.0, %v1552
    %v1554 = vrcp.pop %v1448
    %v1555 = vmul.f32 1.0, %v1554
    %v1556 = vrcp.pop %v1449
    %v1557 = vmul.f32 1.0, %v1556
    %v1558 = vrcp.pop %v1450
    %v1559 = vmul.f32 1.0, %v1558
    %v1560 = vrcp.pop %v1451
    %v1561 = vmul.f32 1.0, %v1560
    %v1562 = vrcp.pop %v1452
    %v1563 = vmul.f32 1.0, %v1562
    %v1564 = vrcp.pop %v1453
    %v1565 = vmul.f32 1.0, %v1564
    %v1566 = vrcp.pop %v1454
    %v1567 = vmul.f32 1.0, %v1566
    %v1568 = vrcp.pop %v1455
    %v1569 = vmul.f32 1.0, %v1568
    %v1570 = vrcp.pop %v1456
    %v1571 = vmul.f32 1.0, %v1570
    %v1572 = vrcp.pop %v1457
    %v1573 = vmul.f32 1.0, %v1572
    %v1574 = vrcp.pop %v1458
    %v1575 = vmul.f32 1.0, %v1574
    %v1576 = vrcp.pop %v1459
    %v1577 = vmul.f32 1.0, %v1576
    %v1578 = vrcp.pop %v1460
    %v1579 = vmul.f32 1.0, %v1578
    %v1580 = vrcp.pop %v1461
    %v1581 = vmul.f32 1.0, %v1580
    %v1582 = vrcp.pop %v1462
    %v1583 = vmul.f32 1.0, %v1582
    %v1584 = vrcp.pop %v1463
    %v1585 = vmul.f32 1.0, %v1584
    %v1586 = vrcp.pop %v1464
    %v1587 = vmul.f32 1.0, %v1586
    %v1588 = vrcp.pop %v1465
    %v1589 = vmul.f32 1.0, %v1588
    %v1590 = vrcp.pop %v1466
    %v1591 = vmul.f32 1.0, %v1590
    %v1592 = vrcp.pop %v1467
    %v1593 = vmul.f32 1.0, %v1592
    %v1594 = vrcp.pop %v1468
    %v1595 = vmul.f32 1.0, %v1594
    %v1596 = vrcp.pop %v1469
    %v1597 = vmul.f32 1.0, %v1596
    %vm1598 = vcmp.gt.f32.partialorder %v1471, 0.0
    %vm1599 = vcmp.gt.f32.partialorder %v1473, 0.0
    %vm1600 = vcmp.gt.f32.partialorder %v1475, 0.0
    %vm1601 = vcmp.gt.f32.partialorder %v1477, 0.0
    %vm1602 = vcmp.gt.f32.partialorder %v1479, 0.0
    %vm1603 = vcmp.gt.f32.partialorder %v1481, 0.0
    %vm1604 = vcmp.gt.f32.partialorder %v1483, 0.0
    %vm1605 = vcmp.gt.f32.partialorder %v1485, 0.0
    %vm1606 = vcmp.gt.f32.partialorder %v1487, 0.0
    %vm1607 = vcmp.gt.f32.partialorder %v1489, 0.0
    %vm1608 = vcmp.gt.f32.partialorder %v1491, 0.0
    %vm1609 = vcmp.gt.f32.partialorder %v1493, 0.0
    %vm1610 = vcmp.gt.f32.partialorder %v1495, 0.0
    %vm1611 = vcmp.gt.f32.partialorder %v1497, 0.0
    %vm1612 = vcmp.gt.f32.partialorder %v1499, 0.0
    %vm1613 = vcmp.gt.f32.partialorder %v1501, 0.0
    %vm1614 = vcmp.gt.f32.partialorder %v1503, 0.0
    %vm1615 = vcmp.gt.f32.partialorder %v1505, 0.0
    %vm1616 = vcmp.gt.f32.partialorder %v1507, 0.0
    %vm1617 = vcmp.gt.f32.partialorder %v1509, 0.0
    %vm1618 = vcmp.gt.f32.partialorder %v1511, 0.0
    %vm1619 = vcmp.gt.f32.partialorder %v1513, 0.0
    %vm1620 = vcmp.gt.f32.partialorder %v1515, 0.0
    %vm1621 = vcmp.gt.f32.partialorder %v1517, 0.0
    %vm1622 = vcmp.gt.f32.partialorder %v1519, 0.0
    %vm1623 = vcmp.gt.f32.partialorder %v1521, 0.0
    %vm1624 = vcmp.gt.f32.partialorder %v1523, 0.0
    %vm1625 = vcmp.gt.f32.partialorder %v1525, 0.0
    %vm1626 = vcmp.gt.f32.partialorder %v1527, 0.0
    %vm1627 = vcmp.gt.f32.partialorder %v1529, 0.0
    %vm1628 = vcmp.gt.f32.partialorder %v1531, 0.0
    %vm1629 = vcmp.gt.f32.partialorder %v1533, 0.0
    %vm1630 = vcmp.gt.f32.partialorder %v1535, 0.0
    %vm1631 = vcmp.gt.f32.partialorder %v1537, 0.0
    %vm1632 = vcmp.gt.f32.partialorder %v1539, 0.0
    %vm1633 = vcmp.gt.f32.partialorder %v1541, 0.0
    %vm1634 = vcmp.gt.f32.partialorder %v1543, 0.0
    %vm1635 = vcmp.gt.f32.partialorder %v1545, 0.0
    %vm1636 = vcmp.gt.f32.partialorder %v1547, 0.0
    %vm1637 = vcmp.gt.f32.partialorder %v1549, 0.0
    %vm1638 = vcmp.gt.f32.partialorder %v1551, 0.0
    %vm1639 = vcmp.gt.f32.partialorder %v1553, 0.0
    %vm1640 = vcmp.gt.f32.partialorder %v1555, 0.0
    %vm1641 = vcmp.gt.f32.partialorder %v1557, 0.0
    %vm1642 = vcmp.gt.f32.partialorder %v1559, 0.0
    %vm1643 = vcmp.gt.f32.partialorder %v1561, 0.0
    %vm1644 = vcmp.gt.f32.partialorder %v1563, 0.0
    %vm1645 = vcmp.gt.f32.partialorder %v1565, 0.0
    %vm1646 = vcmp.gt.f32.partialorder %v1567, 0.0
    %vm1647 = vcmp.gt.f32.partialorder %v1569, 0.0
    %vm1648 = vcmp.gt.f32.partialorder %v1571, 0.0
    %vm1649 = vcmp.gt.f32.partialorder %v1573, 0.0
    %vm1650 = vcmp.gt.f32.partialorder %v1575, 0.0
    %vm1651 = vcmp.gt.f32.partialorder %v1577, 0.0
    %vm1652 = vcmp.gt.f32.partialorder %v1579, 0.0
    %vm1653 = vcmp.gt.f32.partialorder %v1581, 0.0
    %vm1654 = vcmp.gt.f32.partialorder %v1583, 0.0
    %vm1655 = vcmp.gt.f32.partialorder %v1585, 0.0
    %vm1656 = vcmp.gt.f32.partialorder %v1587, 0.0
    %vm1657 = vcmp.gt.f32.partialorder %v1589, 0.0
    %vm1658 = vcmp.gt.f32.partialorder %v1591, 0.0
    %vm1659 = vcmp.gt.f32.partialorder %v1593, 0.0
    %vm1660 = vcmp.gt.f32.partialorder %v1595, 0.0
    %vm1661 = vcmp.gt.f32.partialorder %v1597, 0.0
    %v1662 = vsel %vm1598, %v1471, 1e-08
    %v1663 = vsel %vm1599, %v1473, 1e-08
    %v1664 = vsel %vm1600, %v1475, 1e-08
    %v1665 = vsel %vm1601, %v1477, 1e-08
    %v1666 = vsel %vm1602, %v1479, 1e-08
    %v1667 = vsel %vm1603, %v1481, 1e-08
    %v1668 = vsel %vm1604, %v1483, 1e-08
    %v1669 = vsel %vm1605, %v1485, 1e-08
    %v1670 = vsel %vm1606, %v1487, 1e-08
    %v1671 = vsel %vm1607, %v1489, 1e-08
    %v1672 = vsel %vm1608, %v1491, 1e-08
    %v1673 = vsel %vm1609, %v1493, 1e-08
    %v1674 = vsel %vm1610, %v1495, 1e-08
    %v1675 = vsel %vm1611, %v1497, 1e-08
    %v1676 = vsel %vm1612, %v1499, 1e-08
    %v1677 = vsel %vm1613, %v1501, 1e-08
    %v1678 = vsel %vm1614, %v1503, 1e-08
    %v1679 = vsel %vm1615, %v1505, 1e-08
    %v1680 = vsel %vm1616, %v1507, 1e-08
    %v1681 = vsel %vm1617, %v1509, 1e-08
    %v1682 = vsel %vm1618, %v1511, 1e-08
    %v1683 = vsel %vm1619, %v1513, 1e-08
    %v1684 = vsel %vm1620, %v1515, 1e-08
    %v1685 = vsel %vm1621, %v1517, 1e-08
    %v1686 = vsel %vm1622, %v1519, 1e-08
    %v1687 = vsel %vm1623, %v1521, 1e-08
    %v1688 = vsel %vm1624, %v1523, 1e-08
    %v1689 = vsel %vm1625, %v1525, 1e-08
    %v1690 = vsel %vm1626, %v1527, 1e-08
    %v1691 = vsel %vm1627, %v1529, 1e-08
    %v1692 = vsel %vm1628, %v1531, 1e-08
    %v1693 = vsel %vm1629, %v1533, 1e-08
    %v1694 = vsel %vm1630, %v1535, 1e-08
    %v1695 = vsel %vm1631, %v1537, 1e-08
    %v1696 = vsel %vm1632, %v1539, 1e-08
    %v1697 = vsel %vm1633, %v1541, 1e-08
    %v1698 = vsel %vm1634, %v1543, 1e-08
    %v1699 = vsel %vm1635, %v1545, 1e-08
    %v1700 = vsel %vm1636, %v1547, 1e-08
    %v1701 = vsel %vm1637, %v1549, 1e-08
    %v1702 = vsel %vm1638, %v1551, 1e-08
    %v1703 = vsel %vm1639, %v1553, 1e-08
    %v1704 = vsel %vm1640, %v1555, 1e-08
    %v1705 = vsel %vm1641, %v1557, 1e-08
    %v1706 = vsel %vm1642, %v1559, 1e-08
    %v1707 = vsel %vm1643, %v1561, 1e-08
    %v1708 = vsel %vm1644, %v1563, 1e-08
    %v1709 = vsel %vm1645, %v1565, 1e-08
    %v1710 = vsel %vm1646, %v1567, 1e-08
    %v1711 = vsel %vm1647, %v1569, 1e-08
    %v1712 = vsel %vm1648, %v1571, 1e-08
    %v1713 = vsel %vm1649, %v1573, 1e-08
    %v1714 = vsel %vm1650, %v1575, 1e-08
    %v1715 = vsel %vm1651, %v1577, 1e-08
    %v1716 = vsel %vm1652, %v1579, 1e-08
    %v1717 = vsel %vm1653, %v1581, 1e-08
    %v1718 = vsel %vm1654, %v1583, 1e-08
    %v1719 = vsel %vm1655, %v1585, 1e-08
    %v1720 = vsel %vm1656, %v1587, 1e-08
    %v1721 = vsel %vm1657, %v1589, 1e-08
    %v1722 = vsel %vm1658, %v1591, 1e-08
    %v1723 = vsel %vm1659, %v1593, 1e-08
    %v1724 = vsel %vm1660, %v1595, 1e-08
    %v1725 = vsel %vm1661, %v1597, 1e-08
    %vm1726 = vcmp.lt.f32.partialorder %v1662, 1.0
    %vm1727 = vcmp.lt.f32.partialorder %v1663, 1.0
    %vm1728 = vcmp.lt.f32.partialorder %v1664, 1.0
    %vm1729 = vcmp.lt.f32.partialorder %v1665, 1.0
    %vm1730 = vcmp.lt.f32.partialorder %v1666, 1.0
    %vm1731 = vcmp.lt.f32.partialorder %v1667, 1.0
    %vm1732 = vcmp.lt.f32.partialorder %v1668, 1.0
    %vm1733 = vcmp.lt.f32.partialorder %v1669, 1.0
    %vm1734 = vcmp.lt.f32.partialorder %v1670, 1.0
    %vm1735 = vcmp.lt.f32.partialorder %v1671, 1.0
    %vm1736 = vcmp.lt.f32.partialorder %v1672, 1.0
    %vm1737 = vcmp.lt.f32.partialorder %v1673, 1.0
    %vm1738 = vcmp.lt.f32.partialorder %v1674, 1.0
    %vm1739 = vcmp.lt.f32.partialorder %v1675, 1.0
    %vm1740 = vcmp.lt.f32.partialorder %v1676, 1.0
    %vm1741 = vcmp.lt.f32.partialorder %v1677, 1.0
    %vm1742 = vcmp.lt.f32.partialorder %v1678, 1.0
    %vm1743 = vcmp.lt.f32.partialorder %v1679, 1.0
    %vm1744 = vcmp.lt.f32.partialorder %v1680, 1.0
    %vm1745 = vcmp.lt.f32.partialorder %v1681, 1.0
    %vm1746 = vcmp.lt.f32.partialorder %v1682, 1.0
    %vm1747 = vcmp.lt.f32.partialorder %v1683, 1.0
    %vm1748 = vcmp.lt.f32.partialorder %v1684, 1.0
    %vm1749 = vcmp.lt.f32.partialorder %v1685, 1.0
    %vm1750 = vcmp.lt.f32.partialorder %v1686, 1.0
    %vm1751 = vcmp.lt.f32.partialorder %v1687, 1.0
    %vm1752 = vcmp.lt.f32.partialorder %v1688, 1.0
    %vm1753 = vcmp.lt.f32.partialorder %v1689, 1.0
    %vm1754 = vcmp.lt.f32.partialorder %v1690, 1.0
    %vm1755 = vcmp.lt.f32.partialorder %v1691, 1.0
    %vm1756 = vcmp.lt.f32.partialorder %v1692, 1.0
    %vm1757 = vcmp.lt.f32.partialorder %v1693, 1.0
    %vm1758 = vcmp.lt.f32.partialorder %v1694, 1.0
    %vm1759 = vcmp.lt.f32.partialorder %v1695, 1.0
    %vm1760 = vcmp.lt.f32.partialorder %v1696, 1.0
    %vm1761 = vcmp.lt.f32.partialorder %v1697, 1.0
    %vm1762 = vcmp.lt.f32.partialorder %v1698, 1.0
    %vm1763 = vcmp.lt.f32.partialorder %v1699, 1.0
    %vm1764 = vcmp.lt.f32.partialorder %v1700, 1.0
    %vm1765 = vcmp.lt.f32.partialorder %v1701, 1.0
    %vm1766 = vcmp.lt.f32.partialorder %v1702, 1.0
    %vm1767 = vcmp.lt.f32.partialorder %v1703, 1.0
    %vm1768 = vcmp.lt.f32.partialorder %v1704, 1.0
    %vm1769 = vcmp.lt.f32.partialorder %v1705, 1.0
    %vm1770 = vcmp.lt.f32.partialorder %v1706, 1.0
    %vm1771 = vcmp.lt.f32.partialorder %v1707, 1.0
    %vm1772 = vcmp.lt.f32.partialorder %v1708, 1.0
    %vm1773 = vcmp.lt.f32.partialorder %v1709, 1.0
    %vm1774 = vcmp.lt.f32.partialorder %v1710, 1.0
    %vm1775 = vcmp.lt.f32.partialorder %v1711, 1.0
    %vm1776 = vcmp.lt.f32.partialorder %v1712, 1.0
    %vm1777 = vcmp.lt.f32.partialorder %v1713, 1.0
    %vm1778 = vcmp.lt.f32.partialorder %v1714, 1.0
    %vm1779 = vcmp.lt.f32.partialorder %v1715, 1.0
    %vm1780 = vcmp.lt.f32.partialorder %v1716, 1.0
    %vm1781 = vcmp.lt.f32.partialorder %v1717, 1.0
    %vm1782 = vcmp.lt.f32.partialorder %v1718, 1.0
    %vm1783 = vcmp.lt.f32.partialorder %v1719, 1.0
    %vm1784 = vcmp.lt.f32.partialorder %v1720, 1.0
    %vm1785 = vcmp.lt.f32.partialorder %v1721, 1.0
    %vm1786 = vcmp.lt.f32.partialorder %v1722, 1.0
    %vm1787 = vcmp.lt.f32.partialorder %v1723, 1.0
    %vm1788 = vcmp.lt.f32.partialorder %v1724, 1.0
    %vm1789 = vcmp.lt.f32.partialorder %v1725, 1.0
    %v1790 = vsel %vm1726, %v1662, 1.0
    %v1791 = vsel %vm1727, %v1663, 1.0
    %v1792 = vsel %vm1728, %v1664, 1.0
    %v1793 = vsel %vm1729, %v1665, 1.0
    %v1794 = vsel %vm1730, %v1666, 1.0
    %v1795 = vsel %vm1731, %v1667, 1.0
    %v1796 = vsel %vm1732, %v1668, 1.0
    %v1797 = vsel %vm1733, %v1669, 1.0
    %v1798 = vsel %vm1734, %v1670, 1.0
    %v1799 = vsel %vm1735, %v1671, 1.0
    %v1800 = vsel %vm1736, %v1672, 1.0
    %v1801 = vsel %vm1737, %v1673, 1.0
    %v1802 = vsel %vm1738, %v1674, 1.0
    %v1803 = vsel %vm1739, %v1675, 1.0
    %v1804 = vsel %vm1740, %v1676, 1.0
    %v1805 = vsel %vm1741, %v1677, 1.0
    %v1806 = vsel %vm1742, %v1678, 1.0
    %v1807 = vsel %vm1743, %v1679, 1.0
    %v1808 = vsel %vm1744, %v1680, 1.0
    %v1809 = vsel %vm1745, %v1681, 1.0
    %v1810 = vsel %vm1746, %v1682, 1.0
    %v1811 = vsel %vm1747, %v1683, 1.0
    %v1812 = vsel %vm1748, %v1684, 1.0
    %v1813 = vsel %vm1749, %v1685, 1.0
    %v1814 = vsel %vm1750, %v1686, 1.0
    %v1815 = vsel %vm1751, %v1687, 1.0
    %v1816 = vsel %vm1752, %v1688, 1.0
    %v1817 = vsel %vm1753, %v1689, 1.0
    %v1818 = vsel %vm1754, %v1690, 1.0
    %v1819 = vsel %vm1755, %v1691, 1.0
    %v1820 = vsel %vm1756, %v1692, 1.0
    %v1821 = vsel %vm1757, %v1693, 1.0
    %v1822 = vsel %vm1758, %v1694, 1.0
    %v1823 = vsel %vm1759, %v1695, 1.0
    %v1824 = vsel %vm1760, %v1696, 1.0
    %v1825 = vsel %vm1761, %v1697, 1.0
    %v1826 = vsel %vm1762, %v1698, 1.0
    %v1827 = vsel %vm1763, %v1699, 1.0
    %v1828 = vsel %vm1764, %v1700, 1.0
    %v1829 = vsel %vm1765, %v1701, 1.0
    %v1830 = vsel %vm1766, %v1702, 1.0
    %v1831 = vsel %vm1767, %v1703, 1.0
    %v1832 = vsel %vm1768, %v1704, 1.0
    %v1833 = vsel %vm1769, %v1705, 1.0
    %v1834 = vsel %vm1770, %v1706, 1.0
    %v1835 = vsel %vm1771, %v1707, 1.0
    %v1836 = vsel %vm1772, %v1708, 1.0
    %v1837 = vsel %vm1773, %v1709, 1.0
    %v1838 = vsel %vm1774, %v1710, 1.0
    %v1839 = vsel %vm1775, %v1711, 1.0
    %v1840 = vsel %vm1776, %v1712, 1.0
    %v1841 = vsel %vm1777, %v1713, 1.0
    %v1842 = vsel %vm1778, %v1714, 1.0
    %v1843 = vsel %vm1779, %v1715, 1.0
    %v1844 = vsel %vm1780, %v1716, 1.0
    %v1845 = vsel %vm1781, %v1717, 1.0
    %v1846 = vsel %vm1782, %v1718, 1.0
    %v1847 = vsel %vm1783, %v1719, 1.0
    %v1848 = vsel %vm1784, %v1720, 1.0
    %v1849 = vsel %vm1785, %v1721, 1.0
    %v1850 = vsel %vm1786, %v1722, 1.0
    %v1851 = vsel %vm1787, %v1723, 1.0
    %v1852 = vsel %vm1788, %v1724, 1.0
    %v1853 = vsel %vm1789, %v1725, 1.0
    %1854 = vst [vmem:[%s3] sm:$0xff] %v1790
    %1855 = vst [vmem:[%s3 + $0x8] sm:$0xff] %v1791
    %1856 = vst [vmem:[%s3 + $0x10] sm:$0xff] %v1792
    %1857 = vst [vmem:[%s3 + $0x18] sm:$0xff] %v1793
    %1858 = vst [vmem:[%s3 + $0x20] sm:$0xff] %v1794
    %1859 = vst [vmem:[%s3 + $0x28] sm:$0xff] %v1795
    %1860 = vst [vmem:[%s3 + $0x30] sm:$0xff] %v1796
    %1861 = vst [vmem:[%s3 + $0x38] sm:$0xff] %v1797
    %1862 = vst [vmem:[%s3 + $0x40] sm:$0xff] %v1798
    %1863 = vst [vmem:[%s3 + $0x48] sm:$0xff] %v1799
    %1864 = vst [vmem:[%s3 + $0x50] sm:$0xff] %v1800
    %1865 = vst [vmem:[%s3 + $0x58] sm:$0xff] %v1801
    %1866 = vst [vmem:[%s3 + $0x60] sm:$0xff] %v1802
    %1867 = vst [vmem:[%s3 + $0x68] sm:$0xff] %v1803
    %1868 = vst [vmem:[%s3 + $0x70] sm:$0xff] %v1804
    %1869 = vst [vmem:[%s3 + $0x78] sm:$0xff] %v1805
    %1870 = vst [vmem:[%s3 + $0x80] sm:$0xff] %v1806
    %1871 = vst [vmem:[%s3 + $0x88] sm:$0xff] %v1807
    %1872 = vst [vmem:[%s3 + $0x90] sm:$0xff] %v1808
    %1873 = vst [vmem:[%s3 + $0x98] sm:$0xff] %v1809
    %1874 = vst [vmem:[%s3 + $0xa0] sm:$0xff] %v1810
    %1875 = vst [vmem:[%s3 + $0xa8] sm:$0xff] %v1811
    %1876 = vst [vmem:[%s3 + $0xb0] sm:$0xff] %v1812
    %1877 = vst [vmem:[%s3 + $0xb8] sm:$0xff] %v1813
    %1878 = vst [vmem:[%s3 + $0xc0] sm:$0xff] %v1814
    %1879 = vst [vmem:[%s3 + $0xc8] sm:$0xff] %v1815
    %1880 = vst [vmem:[%s3 + $0xd0] sm:$0xff] %v1816
    %1881 = vst [vmem:[%s3 + $0xd8] sm:$0xff] %v1817
    %1882 = vst [vmem:[%s3 + $0xe0] sm:$0xff] %v1818
    %1883 = vst [vmem:[%s3 + $0xe8] sm:$0xff] %v1819
    %1884 = vst [vmem:[%s3 + $0xf0] sm:$0xff] %v1820
    %1885 = vst [vmem:[%s3 + $0xf8] sm:$0xff] %v1821
    %1886 = vst [vmem:[%s3 + $0x100] sm:$0xff] %v1822
    %1887 = vst [vmem:[%s3 + $0x108] sm:$0xff] %v1823
    %1888 = vst [vmem:[%s3 + $0x110] sm:$0xff] %v1824
    %1889 = vst [vmem:[%s3 + $0x118] sm:$0xff] %v1825
    %1890 = vst [vmem:[%s3 + $0x120] sm:$0xff] %v1826
    %1891 = vst [vmem:[%s3 + $0x128] sm:$0xff] %v1827
    %1892 = vst [vmem:[%s3 + $0x130] sm:$0xff] %v1828
    %1893 = vst [vmem:[%s3 + $0x138] sm:$0xff] %v1829
    %1894 = vst [vmem:[%s3 + $0x140] sm:$0xff] %v1830
    %1895 = vst [vmem:[%s3 + $0x148] sm:$0xff] %v1831
    %1896 = vst [vmem:[%s3 + $0x150] sm:$0xff] %v1832
    %1897 = vst [vmem:[%s3 + $0x158] sm:$0xff] %v1833
    %1898 = vst [vmem:[%s3 + $0x160] sm:$0xff] %v1834
    %1899 = vst [vmem:[%s3 + $0x168] sm:$0xff] %v1835
    %1900 = vst [vmem:[%s3 + $0x170] sm:$0xff] %v1836
    %1901 = vst [vmem:[%s3 + $0x178] sm:$0xff] %v1837
    %1902 = vst [vmem:[%s3 + $0x180] sm:$0xff] %v1838
    %1903 = vst [vmem:[%s3 + $0x188] sm:$0xff] %v1839
    %1904 = vst [vmem:[%s3 + $0x190] sm:$0xff] %v1840
    %1905 = vst [vmem:[%s3 + $0x198] sm:$0xff] %v1841
    %1906 = vst [vmem:[%s3 + $0x1a0] sm:$0xff] %v1842
    %1907 = vst [vmem:[%s3 + $0x1a8] sm:$0xff] %v1843
    %1908 = vst [vmem:[%s3 + $0x1b0] sm:$0xff] %v1844
    %1909 = vst [vmem:[%s3 + $0x1b8] sm:$0xff] %v1845
    %1910 = vst [vmem:[%s3 + $0x1c0] sm:$0xff] %v1846
    %1911 = vst [vmem:[%s3 + $0x1c8] sm:$0xff] %v1847
    %1912 = vst [vmem:[%s3 + $0x1d0] sm:$0xff] %v1848
    %1913 = vst [vmem:[%s3 + $0x1d8] sm:$0xff] %v1849
    %1914 = vst [vmem:[%s3 + $0x1e0] sm:$0xff] %v1850
    %1915 = vst [vmem:[%s3 + $0x1e8] sm:$0xff] %v1851
    %1916 = vst [vmem:[%s3 + $0x1f0] sm:$0xff] %v1852
    %1917 = vst [vmem:[%s3 + $0x1f8] sm:$0xff] %v1853
  $region21: #{_lambda_.71} parent=0 // pred_fallthru
    _
  // Predicated region
  $region22: #{_lambda_.71} parent=0 // pred_check
    _
  $region23: #{_lambda_.71} parent=0 // pred_check_branch
    %1919 = sbr.rel (0) target = $region25
  $region24: #{_lambda_.71} parent=0 // pred_region
    _
  $region25: #{_lambda_.71} parent=0 // pred_fallthru
    _
  // Predicated region
  $region26: #{_lambda_.71} parent=0 // pred_check
    _
  $region27: #{_lambda_.71} parent=0 // pred_check_branch
    %1921 = sbr.rel (0) target = $region29
  $region28: #{_lambda_.71} parent=0 // pred_region
    _
  $region29: #{_lambda_.71} parent=0 // pred_fallthru
    _

</llo_original>
